<compile_context>
chip_gen: v5e
topology: v5e:2x2
jax: 0.10.0
libtpu: 0.0.40
codegen_flags: <defaults>
</compile_context>

<pallas_src>
import numpy as np

import jax
import jax.numpy as jnp
from jax.experimental import pallas as pl
from jax.experimental.pallas import tpu as pltpu

_LANE = 128
_TAPS = [(dy, dx) for dy in (-1, 0, 1) for dx in (-1, 0, 1)]


def _use_roll(h, w):
    """Use pltpu.roll only when the flattened spatial dim is a multiple of the
    128-lane vreg width (the well-supported lane-rotate regime); smaller
    levels fall back to tiny 0/1 shift-matrix matmuls."""
    return (h * w) % _LANE == 0


# ----------------------------------------------------------------------------
# Constant matrices (built once on the host with numpy).
# ----------------------------------------------------------------------------
def _tap_masks(h, w):
    """(9, 1, h*w) 0/1 validity masks for the roll-based 3x3 taps."""
    s = h * w
    m = np.zeros((9, 1, s), np.float32)
    for t, (dy, dx) in enumerate(_TAPS):
        for i in range(h):
            for j in range(w):
                if 0 <= i + dy < h and 0 <= j + dx < w:
                    m[t, 0, i * w + j] = 1.0
    return m


def _shift_mats(h, w):
    """(9, h*w, h*w): a @ D[t] shifts the flattened (C, h*w) image by the t-th
    3x3 tap offset with zero padding (only used at sub-128-lane levels)."""
    s = h * w
    mats = np.zeros((9, s, s), np.float32)
    for t, (dy, dx) in enumerate(_TAPS):
        for i in range(h):
            for j in range(w):
                ii, jj = i + dy, j + dx
                if 0 <= ii < h and 0 <= jj < w:
                    mats[t, ii * w + jj, i * w + j] = 1.0
    return mats


def _pool_sels(h, w):
    """(4, h*w, (h//2)*(w//2)) 0/1 selection matrices; child k=(ky,kx) of each
    2x2 max-pool window.  The roll-based pool only uses child 0 (top-left)."""
    ho, wo = h // 2, w // 2
    sel = np.zeros((4, h * w, ho * wo), np.float32)
    kids = [(ky, kx) for ky in (0, 1) for kx in (0, 1)]
    for k, (ky, kx) in enumerate(kids):
        for oi in range(ho):
            for oj in range(wo):
                sel[k, (2 * oi + ky) * w + (2 * oj + kx), oi * wo + oj] = 1.0
    return sel


def _interp1d(n_in, n_out):
    m = np.zeros((n_out, n_in), np.float32)
    for o in range(n_out):
        src = o * (n_in - 1) / (n_out - 1)
        i0 = int(np.floor(src))
        i1 = min(i0 + 1, n_in - 1)
        f = src - i0
        m[o, i0] += 1.0 - f
        m[o, i1] += f
    return m


def _upsample_mat(h, w):
    """(h*w, 4*h*w): right-multiplying a (C, h*w) tile performs the x2 bilinear
    align_corners=True upsample (matches F.interpolate(..., align_corners=True))."""
    u = np.kron(_interp1d(h, 2 * h), _interp1d(w, 2 * w))   # (4hw, hw)
    return np.ascontiguousarray(u.T.astype(np.float32))     # (hw, 4hw)


def build_constants(H, W):
    """All constant matrices consumed by the fused kernel, in kernel-arg order:
    4 per-level tap constants (masks or shift mats), 3 pool selections,
    3 upsample matrices (from levels 3, 2, 1)."""
    consts = []
    for lvl in range(4):
        h, w = H >> lvl, W >> lvl
        if _use_roll(h, w):
            consts.append(jnp.asarray(_tap_masks(h, w)))      # (9, 1, h*w)
        else:
            consts.append(jnp.asarray(_shift_mats(h, w)))     # (9, h*w, h*w)
    for lvl in range(3):
        consts.append(jnp.asarray(_pool_sels(H >> lvl, W >> lvl)))
    for lvl in (3, 2, 1):
        consts.append(jnp.asarray(_upsample_mat(H >> lvl, W >> lvl)))
    return consts


# ----------------------------------------------------------------------------
# Parameters.  Canonical layout (used by the JAX reference):
#   per conv:  w = (9, Cout, Cin) f32, b = (Cout, 1) f32
#   final   :  fw = (O, hidden) f32, fb = (O, 1) f32
# ----------------------------------------------------------------------------
def init_params(key, input_dim=7, output_dim=1, hidden_dim=8):
    """PyTorch-style U(-1/sqrt(fan_in), 1/sqrt(fan_in)) init; the first conv's
    Cin is zero-padded up to a multiple of 8 (the input is padded to match)."""
    cin_pad = -(-input_dim // 8) * 8
    blocks = [
        (input_dim, hidden_dim),            # enc1
        (hidden_dim, hidden_dim * 2),       # enc2
        (hidden_dim * 2, hidden_dim * 4),   # enc3
        (hidden_dim * 4, hidden_dim * 8),   # bottleneck
        (hidden_dim * 8, hidden_dim * 4),   # dec3
        (hidden_dim * 4, hidden_dim * 2),   # dec2
        (hidden_dim * 2, hidden_dim),       # dec1
    ]
    params = []
    for bi, (cin, cout) in enumerate(blocks):
        for ci in range(2):
            c_in = cin if ci == 0 else cout
            key, kw, kb = jax.random.split(key, 3)
            bound = 1.0 / float(c_in * 9) ** 0.5
            w = jax.random.uniform(kw, (9, cout, c_in), jnp.float32, -bound, bound)
            b = jax.random.uniform(kb, (cout, 1), jnp.float32, -bound, bound)
            if bi == 0 and ci == 0 and c_in < cin_pad:
                w = jnp.pad(w, ((0, 0), (0, 0), (0, cin_pad - c_in)))
            params += [w, b]
    key, kw, kb = jax.random.split(key, 3)
    bound = 1.0 / float(hidden_dim) ** 0.5
    params += [
        jax.random.uniform(kw, (output_dim, hidden_dim), jnp.float32, -bound, bound),
        jax.random.uniform(kb, (output_dim, 1), jnp.float32, -bound, bound),
    ]
    return params


def kernel_params(params):
    """Convert canonical params into the kernel layout:
    fused bf16 conv weights (Cout, 9*Cin) + f32 biases, then fw^T (hidden, O) f32, fb."""
    kp = []
    for i in range(14):
        w9, b = params[2 * i], params[2 * i + 1]
        cout, cin = w9.shape[1], w9.shape[2]
        w_fused = jnp.transpose(w9, (1, 0, 2)).reshape(cout, 9 * cin)
        kp += [w_fused.astype(jnp.bfloat16), b]
    fw, fb = params[28], params[29]
    kp += [jnp.transpose(fw), fb]
    return kp


# ----------------------------------------------------------------------------
# The fused Pallas kernel (one batch element per grid step).
# ----------------------------------------------------------------------------
def make_kernel(H, W):
    lvl_hw = [(H >> l, W >> l) for l in range(4)]
    lvl_s = [h * w for h, w in lvl_hw]
    roll_ok = [_use_roll(h, w) for h, w in lvl_hw]
    f32 = jnp.float32
    bf16 = jnp.bfloat16

    def tap_stack(a, lvl, tap_ref):
        # a: (Cin, S) f32.  Returns the (9*Cin, S) stack of shifted taps.
        h, w = lvl_hw[lvl]
        s = lvl_s[lvl]
        pieces = []
        for t, (dy, dx) in enumerate(_TAPS):
            if roll_ok[lvl]:
                off = dy * w + dx
                if off == 0:
                    pieces.append(a)                                   # center tap
                else:
                    rolled = pltpu.roll(a, (-off) % s, axis=1)         # XLU
                    pieces.append(rolled * tap_ref[t])                 # 0/1 mask (1, S)
            else:
                pieces.append(jnp.dot(a, tap_ref[t],
                                      preferred_element_type=f32))     # tiny shift matmul
        return jnp.concatenate(pieces, axis=0)

    def conv3x3(a, w_ref, b_ref, tap_ref, lvl):
        stacked = tap_stack(a, lvl, tap_ref).astype(bf16)              # (9*Cin, S)
        y = jnp.dot(w_ref[...], stacked, preferred_element_type=f32)   # one MXU push
        return jnp.maximum(y + b_ref[...], 0.0)

    def conv_block(a, wb, tap_ref, lvl):
        w1, b1, w2, b2 = wb
        return conv3x3(conv3x3(a, w1, b1, tap_ref, lvl), w2, b2, tap_ref, lvl)

    def maxpool(a, sel_ref, lvl):
        _, w = lvl_hw[lvl]
        s = lvl_s[lvl]
        if roll_ok[lvl]:
            # pairwise max in x then y, then select the (even,even) anchors.
            m = jnp.maximum(a, pltpu.roll(a, (s - 1) % s, axis=1))
            m = jnp.maximum(m, pltpu.roll(m, (s - w) % s, axis=1))
            return jnp.dot(m, sel_ref[0], preferred_element_type=f32)
        m = jnp.dot(a, sel_ref[0], preferred_element_type=f32)
        for k in range(1, 4):
            m = jnp.maximum(m, jnp.dot(a, sel_ref[k], preferred_element_type=f32))
        return m

    def up_add(a, up_ref, skip):
        up = jnp.dot(a, up_ref[...], preferred_element_type=f32)       # (2C, 4S)
        c = skip.shape[0]
        # TODO(synk): the PyTorch module adds a 2C-channel upsample to a
        # C-channel skip, which raises in PyTorch; add into the first C
        # channels and pass the remaining C channels through unchanged.
        return jnp.concatenate([up[:c, :] + skip, up[c:, :]], axis=0)

    def kernel(*refs):
        x_ref = refs[0]
        wrefs = refs[1:29]                     # 14 convs x (w_fused, b)
        fwt_ref, fb_ref = refs[29], refs[30]   # (hidden, O), (O, 1)
        tap_refs = refs[31:35]                 # per-level masks / shift mats
        pool_refs = refs[35:38]                # per-level pool selections
        up_refs = refs[38:41]                  # upsample from levels 3, 2, 1
        o_ref = refs[41]

        def wb(i):
            return wrefs[4 * i:4 * i + 4]

        x = x_ref[0]                                                   # (Cin_pad, S0)
        e1 = conv_block(x, wb(0), tap_refs[0], 0)
        e2 = conv_block(maxpool(e1, pool_refs[0], 0), wb(1), tap_refs[1], 1)
        e3 = conv_block(maxpool(e2, pool_refs[1], 1), wb(2), tap_refs[2], 2)
        bt = conv_block(maxpool(e3, pool_refs[2], 2), wb(3), tap_refs[3], 3)
        d3 = conv_block(up_add(bt, up_refs[0], e3), wb(4), tap_refs[2], 2)
        d2 = conv_block(up_add(d3, up_refs[1], e2), wb(5), tap_refs[1], 1)
        d1 = conv_block(up_add(d2, up_refs[2], e1), wb(6), tap_refs[0], 0)

        # Final 1x1 conv on the VPU (broadcast-mul + sublane reduce), tanh on EUP.
        fwv = fwt_ref[...]                       # (hidden, O)
        fbv = fb_ref[...]                        # (O, 1)
        out_dim = fwv.shape[1]
        rows = []
        for o in range(out_dim):
            pre = jnp.sum(fwv[:, o:o + 1] * d1, axis=0, keepdims=True)  # (1, S0)
            rows.append(pre + fbv[o:o + 1, :])
        pre_all = rows[0] if out_dim == 1 else jnp.concatenate(rows, axis=0)
        o_ref[0] = jnp.tanh(pre_all).astype(o_ref.dtype)

    return kernel


# ----------------------------------------------------------------------------
# Host wrapper.
# ----------------------------------------------------------------------------
def risk_pred_unet(x_nchw, params, consts):
    """x_nchw: (N, Cin, H, W) -> (N, output_dim, H, W), matching RiskPredUNet.forward."""
    N, Cin, H, W = x_nchw.shape
    assert H % 8 == 0 and W % 8 == 0, "spatial dims must survive 3 pooling levels"
    cin_pad = params[0].shape[2]
    out_dim = params[28].shape[0]
    S = H * W

    x = x_nchw.reshape(N, Cin, S)                # flattened NCHW == (C, S) layout
    if Cin < cin_pad:
        x = jnp.pad(x, ((0, 0), (0, cin_pad - Cin), (0, 0)))

    inputs = [x] + kernel_params(params) + list(consts)
    in_specs = [pl.BlockSpec((1, cin_pad, S), lambda n: (n, 0, 0))]
    for a in inputs[1:]:
        # Grid-invariant weights/constants (< 1 MiB total); default buffering
        # is fine, so no pl.Buffered(1) needed.
        in_specs.append(pl.BlockSpec(a.shape, lambda n, nd=a.ndim: (0,) * nd))

    out = pl.pallas_call(
        make_kernel(H, W),
        out_shape=jax.ShapeDtypeStruct((N, out_dim, S), jnp.float32),
        grid=(N,),
        in_specs=in_specs,
        out_specs=pl.BlockSpec((1, out_dim, S), lambda n: (n, 0, 0)),
        compiler_params=pltpu.CompilerParams(
            dimension_semantics=("parallel",),   # batch over both TCs on v7x
        ),
    )(*inputs)
    return out.reshape(N, out_dim, H, W)


# ----------------------------------------------------------------------------
# Plain-JAX reference of the same forward pass (sanity check only).
# ----------------------------------------------------------------------------
def reference_forward(x_nchw, params):
    conv_p = [params[i:i + 4] for i in range(0, 28, 4)]
    fw, fb = params[28], params[29]

    def to_oihw(w):
        _, cout, cin = w.shape
        return jnp.transpose(w.reshape(3, 3, cout, cin), (2, 3, 0, 1))

    def conv(x, w, b):
        y = jax.lax.conv_general_dilated(
            x, to_oihw(w), (1, 1), "SAME",
            dimension_numbers=("NCHW", "OIHW", "NCHW"),
            precision=jax.lax.Precision.HIGHEST)
        return jnp.maximum(y + b[:, 0][None, :, None, None], 0.0)

    def block(x, p):
        w1, b1, w2, b2 = p
        return conv(conv(x, w1, b1), w2, b2)

    def pool(x):
        n, c, h, w = x.shape
        return x.reshape(n, c, h // 2, 2, w // 2, 2).max(axis=(3, 5))

    def up(x):
        n, c, h, w = x.shape
        u = jnp.asarray(_upsample_mat(h, w))
        return (x.reshape(n, c, h * w) @ u).reshape(n, c, 2 * h, 2 * w)

    def skip(u_, e_):
        return u_ + jnp.concatenate([e_, jnp.zeros_like(e_)], axis=1)

    cin_pad = params[0].shape[2]
    n, c, h, w = x_nchw.shape
    if c < cin_pad:
        x_nchw = jnp.pad(x_nchw, ((0, 0), (0, cin_pad - c), (0, 0), (0, 0)))

    e1 = block(x_nchw, conv_p[0])
    e2 = block(pool(e1), conv_p[1])
    e3 = block(pool(e2), conv_p[2])
    bt = block(pool(e3), conv_p[3])
    d3 = block(skip(up(bt), e3), conv_p[4])
    d2 = block(skip(up(d3), e2), conv_p[5])
    d1 = block(skip(up(d2), e1), conv_p[6])
    out = jax.lax.conv_general_dilated(
        d1, fw[:, :, None, None], (1, 1), "SAME",
        dimension_numbers=("NCHW", "OIHW", "NCHW"),
        precision=jax.lax.Precision.HIGHEST)
    return jnp.tanh(out + fb[:, 0][None, :, None, None])


# ----------------------------------------------------------------------------
# Main.
# ----------------------------------------------------------------------------
if __name__ == "__main__":
    key = jax.random.PRNGKey(0)
    kx, kp = jax.random.split(key)

    # Small shapes consistent with the module: batch=2, input_dim=7,
    # output_dim=1, hidden_dim=8, spatial 16x16 (3 pooling levels -> 2x2).
    N, Cin, H, W = 2, 7, 16, 16
    hidden_dim = 8

    x = jax.random.normal(kx, (N, Cin, H, W), jnp.float32)
    params = init_params(kp, input_dim=Cin, output_dim=1, hidden_dim=hidden_dim)
    consts = build_constants(H, W)

    fwd = jax.jit(risk_pred_unet)
    out = fwd(x, params, consts)
    jax.block_until_ready(out)

    assert out.shape == (N, 1, H, W), out.shape
    assert bool(jnp.all(jnp.isfinite(out)))

    # Sanity check against a plain-JAX/XLA f32 reference.  The kernel now uses
    # bf16 operands in the 28 conv matmuls (f32 accumulation), which drifts a
    # few 1e-3 relative per layer; 5e-2 absolute on the tanh outputs keeps the
    # check meaningful while covering bf16 rounding across 15 layers.
    ref = jax.jit(reference_forward)(x, params)
    err = float(jnp.max(jnp.abs(out - ref)))
    assert err <= 5e-2, ("kernel vs reference mismatch", err)

    print("KERNEL_OK")
</pallas_src>

<mosaic_0001>
module attributes {stable_mosaic.version = 11 : i64} {
  func.func @kernel(%arg0: i32, %arg1: memref<1x8x256xf32, #tpu.memory_space<vmem>>, %arg2: memref<8x72xbf16, #tpu.memory_space<vmem>>, %arg3: memref<8x1xf32, #tpu.memory_space<vmem>>, %arg4: memref<8x72xbf16, #tpu.memory_space<vmem>>, %arg5: memref<8x1xf32, #tpu.memory_space<vmem>>, %arg6: memref<16x72xbf16, #tpu.memory_space<vmem>>, %arg7: memref<16x1xf32, #tpu.memory_space<vmem>>, %arg8: memref<16x144xbf16, #tpu.memory_space<vmem>>, %arg9: memref<16x1xf32, #tpu.memory_space<vmem>>, %arg10: memref<32x144xbf16, #tpu.memory_space<vmem>>, %arg11: memref<32x1xf32, #tpu.memory_space<vmem>>, %arg12: memref<32x288xbf16, #tpu.memory_space<vmem>>, %arg13: memref<32x1xf32, #tpu.memory_space<vmem>>, %arg14: memref<64x288xbf16, #tpu.memory_space<vmem>>, %arg15: memref<64x1xf32, #tpu.memory_space<vmem>>, %arg16: memref<64x576xbf16, #tpu.memory_space<vmem>>, %arg17: memref<64x1xf32, #tpu.memory_space<vmem>>, %arg18: memref<32x576xbf16, #tpu.memory_space<vmem>>, %arg19: memref<32x1xf32, #tpu.memory_space<vmem>>, %arg20: memref<32x288xbf16, #tpu.memory_space<vmem>>, %arg21: memref<32x1xf32, #tpu.memory_space<vmem>>, %arg22: memref<16x288xbf16, #tpu.memory_space<vmem>>, %arg23: memref<16x1xf32, #tpu.memory_space<vmem>>, %arg24: memref<16x144xbf16, #tpu.memory_space<vmem>>, %arg25: memref<16x1xf32, #tpu.memory_space<vmem>>, %arg26: memref<8x144xbf16, #tpu.memory_space<vmem>>, %arg27: memref<8x1xf32, #tpu.memory_space<vmem>>, %arg28: memref<8x72xbf16, #tpu.memory_space<vmem>>, %arg29: memref<8x1xf32, #tpu.memory_space<vmem>>, %arg30: memref<8x1xf32, #tpu.memory_space<vmem>>, %arg31: memref<1x1xf32, #tpu.memory_space<vmem>>, %arg32: memref<9x1x256xf32, #tpu.memory_space<vmem>>, %arg33: memref<9x64x64xf32, #tpu.memory_space<vmem>>, %arg34: memref<9x16x16xf32, #tpu.memory_space<vmem>>, %arg35: memref<9x4x4xf32, #tpu.memory_space<vmem>>, %arg36: memref<4x256x64xf32, #tpu.memory_space<vmem>>, %arg37: memref<4x64x16xf32, #tpu.memory_space<vmem>>, %arg38: memref<4x16x4xf32, #tpu.memory_space<vmem>>, %arg39: memref<4x16xf32, #tpu.memory_space<vmem>>, %arg40: memref<16x64xf32, #tpu.memory_space<vmem>>, %arg41: memref<64x256xf32, #tpu.memory_space<vmem>>, %arg42: memref<1x1x256xf32, #tpu.memory_space<vmem>>) attributes {dimension_semantics = [#tpu.dimension_semantics<parallel>], iteration_bounds = array<i64: 2>, scalar_prefetch = 0 : i64, scratch_operands = 0 : i64, tpu.core_type = #tpu.core_type<tc>, window_params = [{transform_indices = @transform_0, window_bounds = array<i64: 1, 8, 256>}, {pipeline_mode = #tpu.pipeline_mode<synchronous>, transform_indices = @transform_1, window_bounds = array<i64: 8, 72>}, {pipeline_mode = #tpu.pipeline_mode<synchronous>, transform_indices = @transform_2, window_bounds = array<i64: 8, 1>}, {pipeline_mode = #tpu.pipeline_mode<synchronous>, transform_indices = @transform_3, window_bounds = array<i64: 8, 72>}, {pipeline_mode = #tpu.pipeline_mode<synchronous>, transform_indices = @transform_4, window_bounds = array<i64: 8, 1>}, {pipeline_mode = #tpu.pipeline_mode<synchronous>, transform_indices = @transform_5, window_bounds = array<i64: 16, 72>}, {pipeline_mode = #tpu.pipeline_mode<synchronous>, transform_indices = @transform_6, window_bounds = array<i64: 16, 1>}, {pipeline_mode = #tpu.pipeline_mode<synchronous>, transform_indices = @transform_7, window_bounds = array<i64: 16, 144>}, {pipeline_mode = #tpu.pipeline_mode<synchronous>, transform_indices = @transform_8, window_bounds = array<i64: 16, 1>}, {pipeline_mode = #tpu.pipeline_mode<synchronous>, transform_indices = @transform_9, window_bounds = array<i64: 32, 144>}, {pipeline_mode = #tpu.pipeline_mode<synchronous>, transform_indices = @transform_10, window_bounds = array<i64: 32, 1>}, {pipeline_mode = #tpu.pipeline_mode<synchronous>, transform_indices = @transform_11, window_bounds = array<i64: 32, 288>}, {pipeline_mode = #tpu.pipeline_mode<synchronous>, transform_indices = @transform_12, window_bounds = array<i64: 32, 1>}, {pipeline_mode = #tpu.pipeline_mode<synchronous>, transform_indices = @transform_13, window_bounds = array<i64: 64, 288>}, {pipeline_mode = #tpu.pipeline_mode<synchronous>, transform_indices = @transform_14, window_bounds = array<i64: 64, 1>}, {pipeline_mode = #tpu.pipeline_mode<synchronous>, transform_indices = @transform_15, window_bounds = array<i64: 64, 576>}, {pipeline_mode = #tpu.pipeline_mode<synchronous>, transform_indices = @transform_16, window_bounds = array<i64: 64, 1>}, {pipeline_mode = #tpu.pipeline_mode<synchronous>, transform_indices = @transform_17, window_bounds = array<i64: 32, 576>}, {pipeline_mode = #tpu.pipeline_mode<synchronous>, transform_indices = @transform_18, window_bounds = array<i64: 32, 1>}, {pipeline_mode = #tpu.pipeline_mode<synchronous>, transform_indices = @transform_19, window_bounds = array<i64: 32, 288>}, {pipeline_mode = #tpu.pipeline_mode<synchronous>, transform_indices = @transform_20, window_bounds = array<i64: 32, 1>}, {pipeline_mode = #tpu.pipeline_mode<synchronous>, transform_indices = @transform_21, window_bounds = array<i64: 16, 288>}, {pipeline_mode = #tpu.pipeline_mode<synchronous>, transform_indices = @transform_22, window_bounds = array<i64: 16, 1>}, {pipeline_mode = #tpu.pipeline_mode<synchronous>, transform_indices = @transform_23, window_bounds = array<i64: 16, 144>}, {pipeline_mode = #tpu.pipeline_mode<synchronous>, transform_indices = @transform_24, window_bounds = array<i64: 16, 1>}, {pipeline_mode = #tpu.pipeline_mode<synchronous>, transform_indices = @transform_25, window_bounds = array<i64: 8, 144>}, {pipeline_mode = #tpu.pipeline_mode<synchronous>, transform_indices = @transform_26, window_bounds = array<i64: 8, 1>}, {pipeline_mode = #tpu.pipeline_mode<synchronous>, transform_indices = @transform_27, window_bounds = array<i64: 8, 72>}, {pipeline_mode = #tpu.pipeline_mode<synchronous>, transform_indices = @transform_28, window_bounds = array<i64: 8, 1>}, {pipeline_mode = #tpu.pipeline_mode<synchronous>, transform_indices = @transform_29, window_bounds = array<i64: 8, 1>}, {pipeline_mode = #tpu.pipeline_mode<synchronous>, transform_indices = @transform_30, window_bounds = array<i64: 1, 1>}, {pipeline_mode = #tpu.pipeline_mode<synchronous>, transform_indices = @transform_31, window_bounds = array<i64: 9, 1, 256>}, {pipeline_mode = #tpu.pipeline_mode<synchronous>, transform_indices = @transform_32, window_bounds = array<i64: 9, 64, 64>}, {pipeline_mode = #tpu.pipeline_mode<synchronous>, transform_indices = @transform_33, window_bounds = array<i64: 9, 16, 16>}, {pipeline_mode = #tpu.pipeline_mode<synchronous>, transform_indices = @transform_34, window_bounds = array<i64: 9, 4, 4>}, {pipeline_mode = #tpu.pipeline_mode<synchronous>, transform_indices = @transform_35, window_bounds = array<i64: 4, 256, 64>}, {pipeline_mode = #tpu.pipeline_mode<synchronous>, transform_indices = @transform_36, window_bounds = array<i64: 4, 64, 16>}, {pipeline_mode = #tpu.pipeline_mode<synchronous>, transform_indices = @transform_37, window_bounds = array<i64: 4, 16, 4>}, {pipeline_mode = #tpu.pipeline_mode<synchronous>, transform_indices = @transform_38, window_bounds = array<i64: 4, 16>}, {pipeline_mode = #tpu.pipeline_mode<synchronous>, transform_indices = @transform_39, window_bounds = array<i64: 16, 64>}, {pipeline_mode = #tpu.pipeline_mode<synchronous>, transform_indices = @transform_40, window_bounds = array<i64: 64, 256>}, {transform_indices = @transform_41, window_bounds = array<i64: 1, 1, 256>}]} {
    %c0 = arith.constant 0 : index
    %c0_0 = arith.constant 0 : index
    %c0_1 = arith.constant 0 : index
    %0 = vector.load %arg1[%c0, %c0_0, %c0_1] : memref<1x8x256xf32, #tpu.memory_space<vmem>>, vector<1x8x256xf32>
    %1 = vector.shape_cast %0 : vector<1x8x256xf32> to vector<8x256xf32>
    %c17_i32 = arith.constant 17 : i32
    %2 = tpu.dynamic_rotate %1 by %c17_i32 dim 1 : vector<8x256xf32>, i32 -> vector<8x256xf32>
    %c0_2 = arith.constant 0 : index
    %c0_3 = arith.constant 0 : index
    %c0_4 = arith.constant 0 : index
    %3 = vector.load %arg32[%c0_2, %c0_3, %c0_4] : memref<9x1x256xf32, #tpu.memory_space<vmem>>, vector<1x1x256xf32>
    %4 = vector.shape_cast %3 : vector<1x1x256xf32> to vector<1x256xf32>
    %5 = vector.broadcast %4 : vector<1x256xf32> to vector<8x256xf32>
    %6 = arith.mulf %2, %5 : vector<8x256xf32>
    %c16_i32 = arith.constant 16 : i32
    %7 = tpu.dynamic_rotate %1 by %c16_i32 dim 1 : vector<8x256xf32>, i32 -> vector<8x256xf32>
    %c1 = arith.constant 1 : index
    %c0_5 = arith.constant 0 : index
    %c0_6 = arith.constant 0 : index
    %8 = vector.load %arg32[%c1, %c0_5, %c0_6] : memref<9x1x256xf32, #tpu.memory_space<vmem>>, vector<1x1x256xf32>
    %9 = vector.shape_cast %8 : vector<1x1x256xf32> to vector<1x256xf32>
    %10 = vector.broadcast %9 : vector<1x256xf32> to vector<8x256xf32>
    %11 = arith.mulf %7, %10 : vector<8x256xf32>
    %c15_i32 = arith.constant 15 : i32
    %12 = tpu.dynamic_rotate %1 by %c15_i32 dim 1 : vector<8x256xf32>, i32 -> vector<8x256xf32>
    %c2 = arith.constant 2 : index
    %c0_7 = arith.constant 0 : index
    %c0_8 = arith.constant 0 : index
    %13 = vector.load %arg32[%c2, %c0_7, %c0_8] : memref<9x1x256xf32, #tpu.memory_space<vmem>>, vector<1x1x256xf32>
    %14 = vector.shape_cast %13 : vector<1x1x256xf32> to vector<1x256xf32>
    %15 = vector.broadcast %14 : vector<1x256xf32> to vector<8x256xf32>
    %16 = arith.mulf %12, %15 : vector<8x256xf32>
    %c1_i32 = arith.constant 1 : i32
    %17 = tpu.dynamic_rotate %1 by %c1_i32 dim 1 : vector<8x256xf32>, i32 -> vector<8x256xf32>
    %c3 = arith.constant 3 : index
    %c0_9 = arith.constant 0 : index
    %c0_10 = arith.constant 0 : index
    %18 = vector.load %arg32[%c3, %c0_9, %c0_10] : memref<9x1x256xf32, #tpu.memory_space<vmem>>, vector<1x1x256xf32>
    %19 = vector.shape_cast %18 : vector<1x1x256xf32> to vector<1x256xf32>
    %20 = vector.broadcast %19 : vector<1x256xf32> to vector<8x256xf32>
    %21 = arith.mulf %17, %20 : vector<8x256xf32>
    %c255_i32 = arith.constant 255 : i32
    %22 = tpu.dynamic_rotate %1 by %c255_i32 dim 1 : vector<8x256xf32>, i32 -> vector<8x256xf32>
    %c5 = arith.constant 5 : index
    %c0_11 = arith.constant 0 : index
    %c0_12 = arith.constant 0 : index
    %23 = vector.load %arg32[%c5, %c0_11, %c0_12] : memref<9x1x256xf32, #tpu.memory_space<vmem>>, vector<1x1x256xf32>
    %24 = vector.shape_cast %23 : vector<1x1x256xf32> to vector<1x256xf32>
    %25 = vector.broadcast %24 : vector<1x256xf32> to vector<8x256xf32>
    %26 = arith.mulf %22, %25 : vector<8x256xf32>
    %c241_i32 = arith.constant 241 : i32
    %27 = tpu.dynamic_rotate %1 by %c241_i32 dim 1 : vector<8x256xf32>, i32 -> vector<8x256xf32>
    %c6 = arith.constant 6 : index
    %c0_13 = arith.constant 0 : index
    %c0_14 = arith.constant 0 : index
    %28 = vector.load %arg32[%c6, %c0_13, %c0_14] : memref<9x1x256xf32, #tpu.memory_space<vmem>>, vector<1x1x256xf32>
    %29 = vector.shape_cast %28 : vector<1x1x256xf32> to vector<1x256xf32>
    %30 = vector.broadcast %29 : vector<1x256xf32> to vector<8x256xf32>
    %31 = arith.mulf %27, %30 : vector<8x256xf32>
    %c240_i32 = arith.constant 240 : i32
    %32 = tpu.dynamic_rotate %1 by %c240_i32 dim 1 : vector<8x256xf32>, i32 -> vector<8x256xf32>
    %c7 = arith.constant 7 : index
    %c0_15 = arith.constant 0 : index
    %c0_16 = arith.constant 0 : index
    %33 = vector.load %arg32[%c7, %c0_15, %c0_16] : memref<9x1x256xf32, #tpu.memory_space<vmem>>, vector<1x1x256xf32>
    %34 = vector.shape_cast %33 : vector<1x1x256xf32> to vector<1x256xf32>
    %35 = vector.broadcast %34 : vector<1x256xf32> to vector<8x256xf32>
    %36 = arith.mulf %32, %35 : vector<8x256xf32>
    %c239_i32 = arith.constant 239 : i32
    %37 = tpu.dynamic_rotate %1 by %c239_i32 dim 1 : vector<8x256xf32>, i32 -> vector<8x256xf32>
    %c8 = arith.constant 8 : index
    %c0_17 = arith.constant 0 : index
    %c0_18 = arith.constant 0 : index
    %38 = vector.load %arg32[%c8, %c0_17, %c0_18] : memref<9x1x256xf32, #tpu.memory_space<vmem>>, vector<1x1x256xf32>
    %39 = vector.shape_cast %38 : vector<1x1x256xf32> to vector<1x256xf32>
    %40 = vector.broadcast %39 : vector<1x256xf32> to vector<8x256xf32>
    %41 = arith.mulf %37, %40 : vector<8x256xf32>
    %42 = tpu.concatenate %6, %11, %16, %21, %1, %26, %31, %36, %41 in 0 : vector<8x256xf32>, vector<8x256xf32>, vector<8x256xf32>, vector<8x256xf32>, vector<8x256xf32>, vector<8x256xf32>, vector<8x256xf32>, vector<8x256xf32>, vector<8x256xf32> -> vector<72x256xf32>
    %43 = arith.truncf %42 : vector<72x256xf32> to vector<72x256xbf16>
    %c0_19 = arith.constant 0 : index
    %c0_20 = arith.constant 0 : index
    %44 = vector.load %arg2[%c0_19, %c0_20] : memref<8x72xbf16, #tpu.memory_space<vmem>>, vector<8x72xbf16>
    %cst = arith.constant dense<0.000000e+00> : vector<8x256xf32>
    %45 = tpu.matmul %44, %43, %cst {dimension_numbers = #tpu.dot_dimension_numbers<[1], [0], [0], [1], [0, 0, 1, 1], [], []>} : vector<8x72xbf16>, vector<72x256xbf16>, vector<8x256xf32> -> vector<8x256xf32>
    %c0_21 = arith.constant 0 : index
    %c0_22 = arith.constant 0 : index
    %46 = vector.load %arg3[%c0_21, %c0_22] : memref<8x1xf32, #tpu.memory_space<vmem>>, vector<8x1xf32>
    %47 = vector.broadcast %46 : vector<8x1xf32> to vector<8x256xf32>
    %48 = arith.addf %45, %47 : vector<8x256xf32>
    %cst_23 = arith.constant 0.000000e+00 : f32
    %49 = vector.broadcast %cst_23 : f32 to vector<8x256xf32>
    %50 = arith.maximumf %48, %49 : vector<8x256xf32>
    %c17_i32_24 = arith.constant 17 : i32
    %51 = tpu.dynamic_rotate %50 by %c17_i32_24 dim 1 : vector<8x256xf32>, i32 -> vector<8x256xf32>
    %c0_25 = arith.constant 0 : index
    %c0_26 = arith.constant 0 : index
    %c0_27 = arith.constant 0 : index
    %52 = vector.load %arg32[%c0_25, %c0_26, %c0_27] : memref<9x1x256xf32, #tpu.memory_space<vmem>>, vector<1x1x256xf32>
    %53 = vector.shape_cast %52 : vector<1x1x256xf32> to vector<1x256xf32>
    %54 = vector.broadcast %53 : vector<1x256xf32> to vector<8x256xf32>
    %55 = arith.mulf %51, %54 : vector<8x256xf32>
    %c16_i32_28 = arith.constant 16 : i32
    %56 = tpu.dynamic_rotate %50 by %c16_i32_28 dim 1 : vector<8x256xf32>, i32 -> vector<8x256xf32>
    %c1_29 = arith.constant 1 : index
    %c0_30 = arith.constant 0 : index
    %c0_31 = arith.constant 0 : index
    %57 = vector.load %arg32[%c1_29, %c0_30, %c0_31] : memref<9x1x256xf32, #tpu.memory_space<vmem>>, vector<1x1x256xf32>
    %58 = vector.shape_cast %57 : vector<1x1x256xf32> to vector<1x256xf32>
    %59 = vector.broadcast %58 : vector<1x256xf32> to vector<8x256xf32>
    %60 = arith.mulf %56, %59 : vector<8x256xf32>
    %c15_i32_32 = arith.constant 15 : i32
    %61 = tpu.dynamic_rotate %50 by %c15_i32_32 dim 1 : vector<8x256xf32>, i32 -> vector<8x256xf32>
    %c2_33 = arith.constant 2 : index
    %c0_34 = arith.constant 0 : index
    %c0_35 = arith.constant 0 : index
    %62 = vector.load %arg32[%c2_33, %c0_34, %c0_35] : memref<9x1x256xf32, #tpu.memory_space<vmem>>, vector<1x1x256xf32>
    %63 = vector.shape_cast %62 : vector<1x1x256xf32> to vector<1x256xf32>
    %64 = vector.broadcast %63 : vector<1x256xf32> to vector<8x256xf32>
    %65 = arith.mulf %61, %64 : vector<8x256xf32>
    %c1_i32_36 = arith.constant 1 : i32
    %66 = tpu.dynamic_rotate %50 by %c1_i32_36 dim 1 : vector<8x256xf32>, i32 -> vector<8x256xf32>
    %c3_37 = arith.constant 3 : index
    %c0_38 = arith.constant 0 : index
    %c0_39 = arith.constant 0 : index
    %67 = vector.load %arg32[%c3_37, %c0_38, %c0_39] : memref<9x1x256xf32, #tpu.memory_space<vmem>>, vector<1x1x256xf32>
    %68 = vector.shape_cast %67 : vector<1x1x256xf32> to vector<1x256xf32>
    %69 = vector.broadcast %68 : vector<1x256xf32> to vector<8x256xf32>
    %70 = arith.mulf %66, %69 : vector<8x256xf32>
    %c255_i32_40 = arith.constant 255 : i32
    %71 = tpu.dynamic_rotate %50 by %c255_i32_40 dim 1 : vector<8x256xf32>, i32 -> vector<8x256xf32>
    %c5_41 = arith.constant 5 : index
    %c0_42 = arith.constant 0 : index
    %c0_43 = arith.constant 0 : index
    %72 = vector.load %arg32[%c5_41, %c0_42, %c0_43] : memref<9x1x256xf32, #tpu.memory_space<vmem>>, vector<1x1x256xf32>
    %73 = vector.shape_cast %72 : vector<1x1x256xf32> to vector<1x256xf32>
    %74 = vector.broadcast %73 : vector<1x256xf32> to vector<8x256xf32>
    %75 = arith.mulf %71, %74 : vector<8x256xf32>
    %c241_i32_44 = arith.constant 241 : i32
    %76 = tpu.dynamic_rotate %50 by %c241_i32_44 dim 1 : vector<8x256xf32>, i32 -> vector<8x256xf32>
    %c6_45 = arith.constant 6 : index
    %c0_46 = arith.constant 0 : index
    %c0_47 = arith.constant 0 : index
    %77 = vector.load %arg32[%c6_45, %c0_46, %c0_47] : memref<9x1x256xf32, #tpu.memory_space<vmem>>, vector<1x1x256xf32>
    %78 = vector.shape_cast %77 : vector<1x1x256xf32> to vector<1x256xf32>
    %79 = vector.broadcast %78 : vector<1x256xf32> to vector<8x256xf32>
    %80 = arith.mulf %76, %79 : vector<8x256xf32>
    %c240_i32_48 = arith.constant 240 : i32
    %81 = tpu.dynamic_rotate %50 by %c240_i32_48 dim 1 : vector<8x256xf32>, i32 -> vector<8x256xf32>
    %c7_49 = arith.constant 7 : index
    %c0_50 = arith.constant 0 : index
    %c0_51 = arith.constant 0 : index
    %82 = vector.load %arg32[%c7_49, %c0_50, %c0_51] : memref<9x1x256xf32, #tpu.memory_space<vmem>>, vector<1x1x256xf32>
    %83 = vector.shape_cast %82 : vector<1x1x256xf32> to vector<1x256xf32>
    %84 = vector.broadcast %83 : vector<1x256xf32> to vector<8x256xf32>
    %85 = arith.mulf %81, %84 : vector<8x256xf32>
    %c239_i32_52 = arith.constant 239 : i32
    %86 = tpu.dynamic_rotate %50 by %c239_i32_52 dim 1 : vector<8x256xf32>, i32 -> vector<8x256xf32>
    %c8_53 = arith.constant 8 : index
    %c0_54 = arith.constant 0 : index
    %c0_55 = arith.constant 0 : index
    %87 = vector.load %arg32[%c8_53, %c0_54, %c0_55] : memref<9x1x256xf32, #tpu.memory_space<vmem>>, vector<1x1x256xf32>
    %88 = vector.shape_cast %87 : vector<1x1x256xf32> to vector<1x256xf32>
    %89 = vector.broadcast %88 : vector<1x256xf32> to vector<8x256xf32>
    %90 = arith.mulf %86, %89 : vector<8x256xf32>
    %91 = tpu.concatenate %55, %60, %65, %70, %50, %75, %80, %85, %90 in 0 : vector<8x256xf32>, vector<8x256xf32>, vector<8x256xf32>, vector<8x256xf32>, vector<8x256xf32>, vector<8x256xf32>, vector<8x256xf32>, vector<8x256xf32>, vector<8x256xf32> -> vector<72x256xf32>
    %92 = arith.truncf %91 : vector<72x256xf32> to vector<72x256xbf16>
    %c0_56 = arith.constant 0 : index
    %c0_57 = arith.constant 0 : index
    %93 = vector.load %arg4[%c0_56, %c0_57] : memref<8x72xbf16, #tpu.memory_space<vmem>>, vector<8x72xbf16>
    %cst_58 = arith.constant dense<0.000000e+00> : vector<8x256xf32>
    %94 = tpu.matmul %93, %92, %cst_58 {dimension_numbers = #tpu.dot_dimension_numbers<[1], [0], [0], [1], [0, 0, 1, 1], [], []>} : vector<8x72xbf16>, vector<72x256xbf16>, vector<8x256xf32> -> vector<8x256xf32>
    %c0_59 = arith.constant 0 : index
    %c0_60 = arith.constant 0 : index
    %95 = vector.load %arg5[%c0_59, %c0_60] : memref<8x1xf32, #tpu.memory_space<vmem>>, vector<8x1xf32>
    %96 = vector.broadcast %95 : vector<8x1xf32> to vector<8x256xf32>
    %97 = arith.addf %94, %96 : vector<8x256xf32>
    %cst_61 = arith.constant 0.000000e+00 : f32
    %98 = vector.broadcast %cst_61 : f32 to vector<8x256xf32>
    %99 = arith.maximumf %97, %98 : vector<8x256xf32>
    %c255_i32_62 = arith.constant 255 : i32
    %100 = tpu.dynamic_rotate %99 by %c255_i32_62 dim 1 : vector<8x256xf32>, i32 -> vector<8x256xf32>
    %101 = arith.maximumf %99, %100 : vector<8x256xf32>
    %c240_i32_63 = arith.constant 240 : i32
    %102 = tpu.dynamic_rotate %101 by %c240_i32_63 dim 1 : vector<8x256xf32>, i32 -> vector<8x256xf32>
    %103 = arith.maximumf %101, %102 : vector<8x256xf32>
    %c0_64 = arith.constant 0 : index
    %c0_65 = arith.constant 0 : index
    %c0_66 = arith.constant 0 : index
    %104 = vector.load %arg36[%c0_64, %c0_65, %c0_66] : memref<4x256x64xf32, #tpu.memory_space<vmem>>, vector<1x256x64xf32>
    %105 = vector.shape_cast %104 : vector<1x256x64xf32> to vector<256x64xf32>
    %cst_67 = arith.constant dense<0.000000e+00> : vector<8x64xf32>
    %106 = tpu.matmul %103, %105, %cst_67 {dimension_numbers = #tpu.dot_dimension_numbers<[1], [0], [0], [1], [0, 0, 1, 1], [], []>} : vector<8x256xf32>, vector<256x64xf32>, vector<8x64xf32> -> vector<8x64xf32>
    %c0_68 = arith.constant 0 : index
    %c0_69 = arith.constant 0 : index
    %c0_70 = arith.constant 0 : index
    %107 = vector.load %arg33[%c0_68, %c0_69, %c0_70] : memref<9x64x64xf32, #tpu.memory_space<vmem>>, vector<1x64x64xf32>
    %108 = vector.shape_cast %107 : vector<1x64x64xf32> to vector<64x64xf32>
    %cst_71 = arith.constant dense<0.000000e+00> : vector<8x64xf32>
    %109 = tpu.matmul %106, %108, %cst_71 {dimension_numbers = #tpu.dot_dimension_numbers<[1], [0], [0], [1], [0, 0, 1, 1], [], []>} : vector<8x64xf32>, vector<64x64xf32>, vector<8x64xf32> -> vector<8x64xf32>
    %c1_72 = arith.constant 1 : index
    %c0_73 = arith.constant 0 : index
    %c0_74 = arith.constant 0 : index
    %110 = vector.load %arg33[%c1_72, %c0_73, %c0_74] : memref<9x64x64xf32, #tpu.memory_space<vmem>>, vector<1x64x64xf32>
    %111 = vector.shape_cast %110 : vector<1x64x64xf32> to vector<64x64xf32>
    %cst_75 = arith.constant dense<0.000000e+00> : vector<8x64xf32>
    %112 = tpu.matmul %106, %111, %cst_75 {dimension_numbers = #tpu.dot_dimension_numbers<[1], [0], [0], [1], [0, 0, 1, 1], [], []>} : vector<8x64xf32>, vector<64x64xf32>, vector<8x64xf32> -> vector<8x64xf32>
    %c2_76 = arith.constant 2 : index
    %c0_77 = arith.constant 0 : index
    %c0_78 = arith.constant 0 : index
    %113 = vector.load %arg33[%c2_76, %c0_77, %c0_78] : memref<9x64x64xf32, #tpu.memory_space<vmem>>, vector<1x64x64xf32>
    %114 = vector.shape_cast %113 : vector<1x64x64xf32> to vector<64x64xf32>
    %cst_79 = arith.constant dense<0.000000e+00> : vector<8x64xf32>
    %115 = tpu.matmul %106, %114, %cst_79 {dimension_numbers = #tpu.dot_dimension_numbers<[1], [0], [0], [1], [0, 0, 1, 1], [], []>} : vector<8x64xf32>, vector<64x64xf32>, vector<8x64xf32> -> vector<8x64xf32>
    %c3_80 = arith.constant 3 : index
    %c0_81 = arith.constant 0 : index
    %c0_82 = arith.constant 0 : index
    %116 = vector.load %arg33[%c3_80, %c0_81, %c0_82] : memref<9x64x64xf32, #tpu.memory_space<vmem>>, vector<1x64x64xf32>
    %117 = vector.shape_cast %116 : vector<1x64x64xf32> to vector<64x64xf32>
    %cst_83 = arith.constant dense<0.000000e+00> : vector<8x64xf32>
    %118 = tpu.matmul %106, %117, %cst_83 {dimension_numbers = #tpu.dot_dimension_numbers<[1], [0], [0], [1], [0, 0, 1, 1], [], []>} : vector<8x64xf32>, vector<64x64xf32>, vector<8x64xf32> -> vector<8x64xf32>
    %c4 = arith.constant 4 : index
    %c0_84 = arith.constant 0 : index
    %c0_85 = arith.constant 0 : index
    %119 = vector.load %arg33[%c4, %c0_84, %c0_85] : memref<9x64x64xf32, #tpu.memory_space<vmem>>, vector<1x64x64xf32>
    %120 = vector.shape_cast %119 : vector<1x64x64xf32> to vector<64x64xf32>
    %cst_86 = arith.constant dense<0.000000e+00> : vector<8x64xf32>
    %121 = tpu.matmul %106, %120, %cst_86 {dimension_numbers = #tpu.dot_dimension_numbers<[1], [0], [0], [1], [0, 0, 1, 1], [], []>} : vector<8x64xf32>, vector<64x64xf32>, vector<8x64xf32> -> vector<8x64xf32>
    %c5_87 = arith.constant 5 : index
    %c0_88 = arith.constant 0 : index
    %c0_89 = arith.constant 0 : index
    %122 = vector.load %arg33[%c5_87, %c0_88, %c0_89] : memref<9x64x64xf32, #tpu.memory_space<vmem>>, vector<1x64x64xf32>
    %123 = vector.shape_cast %122 : vector<1x64x64xf32> to vector<64x64xf32>
    %cst_90 = arith.constant dense<0.000000e+00> : vector<8x64xf32>
    %124 = tpu.matmul %106, %123, %cst_90 {dimension_numbers = #tpu.dot_dimension_numbers<[1], [0], [0], [1], [0, 0, 1, 1], [], []>} : vector<8x64xf32>, vector<64x64xf32>, vector<8x64xf32> -> vector<8x64xf32>
    %c6_91 = arith.constant 6 : index
    %c0_92 = arith.constant 0 : index
    %c0_93 = arith.constant 0 : index
    %125 = vector.load %arg33[%c6_91, %c0_92, %c0_93] : memref<9x64x64xf32, #tpu.memory_space<vmem>>, vector<1x64x64xf32>
    %126 = vector.shape_cast %125 : vector<1x64x64xf32> to vector<64x64xf32>
    %cst_94 = arith.constant dense<0.000000e+00> : vector<8x64xf32>
    %127 = tpu.matmul %106, %126, %cst_94 {dimension_numbers = #tpu.dot_dimension_numbers<[1], [0], [0], [1], [0, 0, 1, 1], [], []>} : vector<8x64xf32>, vector<64x64xf32>, vector<8x64xf32> -> vector<8x64xf32>
    %c7_95 = arith.constant 7 : index
    %c0_96 = arith.constant 0 : index
    %c0_97 = arith.constant 0 : index
    %128 = vector.load %arg33[%c7_95, %c0_96, %c0_97] : memref<9x64x64xf32, #tpu.memory_space<vmem>>, vector<1x64x64xf32>
    %129 = vector.shape_cast %128 : vector<1x64x64xf32> to vector<64x64xf32>
    %cst_98 = arith.constant dense<0.000000e+00> : vector<8x64xf32>
    %130 = tpu.matmul %106, %129, %cst_98 {dimension_numbers = #tpu.dot_dimension_numbers<[1], [0], [0], [1], [0, 0, 1, 1], [], []>} : vector<8x64xf32>, vector<64x64xf32>, vector<8x64xf32> -> vector<8x64xf32>
    %c8_99 = arith.constant 8 : index
    %c0_100 = arith.constant 0 : index
    %c0_101 = arith.constant 0 : index
    %131 = vector.load %arg33[%c8_99, %c0_100, %c0_101] : memref<9x64x64xf32, #tpu.memory_space<vmem>>, vector<1x64x64xf32>
    %132 = vector.shape_cast %131 : vector<1x64x64xf32> to vector<64x64xf32>
    %cst_102 = arith.constant dense<0.000000e+00> : vector<8x64xf32>
    %133 = tpu.matmul %106, %132, %cst_102 {dimension_numbers = #tpu.dot_dimension_numbers<[1], [0], [0], [1], [0, 0, 1, 1], [], []>} : vector<8x64xf32>, vector<64x64xf32>, vector<8x64xf32> -> vector<8x64xf32>
    %134 = tpu.concatenate %109, %112, %115, %118, %121, %124, %127, %130, %133 in 0 : vector<8x64xf32>, vector<8x64xf32>, vector<8x64xf32>, vector<8x64xf32>, vector<8x64xf32>, vector<8x64xf32>, vector<8x64xf32>, vector<8x64xf32>, vector<8x64xf32> -> vector<72x64xf32>
    %135 = arith.truncf %134 : vector<72x64xf32> to vector<72x64xbf16>
    %c0_103 = arith.constant 0 : index
    %c0_104 = arith.constant 0 : index
    %136 = vector.load %arg6[%c0_103, %c0_104] : memref<16x72xbf16, #tpu.memory_space<vmem>>, vector<16x72xbf16>
    %cst_105 = arith.constant dense<0.000000e+00> : vector<16x64xf32>
    %137 = tpu.matmul %136, %135, %cst_105 {dimension_numbers = #tpu.dot_dimension_numbers<[1], [0], [0], [1], [0, 0, 1, 1], [], []>} : vector<16x72xbf16>, vector<72x64xbf16>, vector<16x64xf32> -> vector<16x64xf32>
    %c0_106 = arith.constant 0 : index
    %c0_107 = arith.constant 0 : index
    %138 = vector.load %arg7[%c0_106, %c0_107] : memref<16x1xf32, #tpu.memory_space<vmem>>, vector<16x1xf32>
    %139 = vector.broadcast %138 : vector<16x1xf32> to vector<16x64xf32>
    %140 = arith.addf %137, %139 : vector<16x64xf32>
    %cst_108 = arith.constant 0.000000e+00 : f32
    %141 = vector.broadcast %cst_108 : f32 to vector<16x64xf32>
    %142 = arith.maximumf %140, %141 : vector<16x64xf32>
    %c0_109 = arith.constant 0 : index
    %c0_110 = arith.constant 0 : index
    %c0_111 = arith.constant 0 : index
    %143 = vector.load %arg33[%c0_109, %c0_110, %c0_111] : memref<9x64x64xf32, #tpu.memory_space<vmem>>, vector<1x64x64xf32>
    %144 = vector.shape_cast %143 : vector<1x64x64xf32> to vector<64x64xf32>
    %cst_112 = arith.constant dense<0.000000e+00> : vector<16x64xf32>
    %145 = tpu.matmul %142, %144, %cst_112 {dimension_numbers = #tpu.dot_dimension_numbers<[1], [0], [0], [1], [0, 0, 1, 1], [], []>} : vector<16x64xf32>, vector<64x64xf32>, vector<16x64xf32> -> vector<16x64xf32>
    %c1_113 = arith.constant 1 : index
    %c0_114 = arith.constant 0 : index
    %c0_115 = arith.constant 0 : index
    %146 = vector.load %arg33[%c1_113, %c0_114, %c0_115] : memref<9x64x64xf32, #tpu.memory_space<vmem>>, vector<1x64x64xf32>
    %147 = vector.shape_cast %146 : vector<1x64x64xf32> to vector<64x64xf32>
    %cst_116 = arith.constant dense<0.000000e+00> : vector<16x64xf32>
    %148 = tpu.matmul %142, %147, %cst_116 {dimension_numbers = #tpu.dot_dimension_numbers<[1], [0], [0], [1], [0, 0, 1, 1], [], []>} : vector<16x64xf32>, vector<64x64xf32>, vector<16x64xf32> -> vector<16x64xf32>
    %c2_117 = arith.constant 2 : index
    %c0_118 = arith.constant 0 : index
    %c0_119 = arith.constant 0 : index
    %149 = vector.load %arg33[%c2_117, %c0_118, %c0_119] : memref<9x64x64xf32, #tpu.memory_space<vmem>>, vector<1x64x64xf32>
    %150 = vector.shape_cast %149 : vector<1x64x64xf32> to vector<64x64xf32>
    %cst_120 = arith.constant dense<0.000000e+00> : vector<16x64xf32>
    %151 = tpu.matmul %142, %150, %cst_120 {dimension_numbers = #tpu.dot_dimension_numbers<[1], [0], [0], [1], [0, 0, 1, 1], [], []>} : vector<16x64xf32>, vector<64x64xf32>, vector<16x64xf32> -> vector<16x64xf32>
    %c3_121 = arith.constant 3 : index
    %c0_122 = arith.constant 0 : index
    %c0_123 = arith.constant 0 : index
    %152 = vector.load %arg33[%c3_121, %c0_122, %c0_123] : memref<9x64x64xf32, #tpu.memory_space<vmem>>, vector<1x64x64xf32>
    %153 = vector.shape_cast %152 : vector<1x64x64xf32> to vector<64x64xf32>
    %cst_124 = arith.constant dense<0.000000e+00> : vector<16x64xf32>
    %154 = tpu.matmul %142, %153, %cst_124 {dimension_numbers = #tpu.dot_dimension_numbers<[1], [0], [0], [1], [0, 0, 1, 1], [], []>} : vector<16x64xf32>, vector<64x64xf32>, vector<16x64xf32> -> vector<16x64xf32>
    %c4_125 = arith.constant 4 : index
    %c0_126 = arith.constant 0 : index
    %c0_127 = arith.constant 0 : index
    %155 = vector.load %arg33[%c4_125, %c0_126, %c0_127] : memref<9x64x64xf32, #tpu.memory_space<vmem>>, vector<1x64x64xf32>
    %156 = vector.shape_cast %155 : vector<1x64x64xf32> to vector<64x64xf32>
    %cst_128 = arith.constant dense<0.000000e+00> : vector<16x64xf32>
    %157 = tpu.matmul %142, %156, %cst_128 {dimension_numbers = #tpu.dot_dimension_numbers<[1], [0], [0], [1], [0, 0, 1, 1], [], []>} : vector<16x64xf32>, vector<64x64xf32>, vector<16x64xf32> -> vector<16x64xf32>
    %c5_129 = arith.constant 5 : index
    %c0_130 = arith.constant 0 : index
    %c0_131 = arith.constant 0 : index
    %158 = vector.load %arg33[%c5_129, %c0_130, %c0_131] : memref<9x64x64xf32, #tpu.memory_space<vmem>>, vector<1x64x64xf32>
    %159 = vector.shape_cast %158 : vector<1x64x64xf32> to vector<64x64xf32>
    %cst_132 = arith.constant dense<0.000000e+00> : vector<16x64xf32>
    %160 = tpu.matmul %142, %159, %cst_132 {dimension_numbers = #tpu.dot_dimension_numbers<[1], [0], [0], [1], [0, 0, 1, 1], [], []>} : vector<16x64xf32>, vector<64x64xf32>, vector<16x64xf32> -> vector<16x64xf32>
    %c6_133 = arith.constant 6 : index
    %c0_134 = arith.constant 0 : index
    %c0_135 = arith.constant 0 : index
    %161 = vector.load %arg33[%c6_133, %c0_134, %c0_135] : memref<9x64x64xf32, #tpu.memory_space<vmem>>, vector<1x64x64xf32>
    %162 = vector.shape_cast %161 : vector<1x64x64xf32> to vector<64x64xf32>
    %cst_136 = arith.constant dense<0.000000e+00> : vector<16x64xf32>
    %163 = tpu.matmul %142, %162, %cst_136 {dimension_numbers = #tpu.dot_dimension_numbers<[1], [0], [0], [1], [0, 0, 1, 1], [], []>} : vector<16x64xf32>, vector<64x64xf32>, vector<16x64xf32> -> vector<16x64xf32>
    %c7_137 = arith.constant 7 : index
    %c0_138 = arith.constant 0 : index
    %c0_139 = arith.constant 0 : index
    %164 = vector.load %arg33[%c7_137, %c0_138, %c0_139] : memref<9x64x64xf32, #tpu.memory_space<vmem>>, vector<1x64x64xf32>
    %165 = vector.shape_cast %164 : vector<1x64x64xf32> to vector<64x64xf32>
    %cst_140 = arith.constant dense<0.000000e+00> : vector<16x64xf32>
    %166 = tpu.matmul %142, %165, %cst_140 {dimension_numbers = #tpu.dot_dimension_numbers<[1], [0], [0], [1], [0, 0, 1, 1], [], []>} : vector<16x64xf32>, vector<64x64xf32>, vector<16x64xf32> -> vector<16x64xf32>
    %c8_141 = arith.constant 8 : index
    %c0_142 = arith.constant 0 : index
    %c0_143 = arith.constant 0 : index
    %167 = vector.load %arg33[%c8_141, %c0_142, %c0_143] : memref<9x64x64xf32, #tpu.memory_space<vmem>>, vector<1x64x64xf32>
    %168 = vector.shape_cast %167 : vector<1x64x64xf32> to vector<64x64xf32>
    %cst_144 = arith.constant dense<0.000000e+00> : vector<16x64xf32>
    %169 = tpu.matmul %142, %168, %cst_144 {dimension_numbers = #tpu.dot_dimension_numbers<[1], [0], [0], [1], [0, 0, 1, 1], [], []>} : vector<16x64xf32>, vector<64x64xf32>, vector<16x64xf32> -> vector<16x64xf32>
    %170 = tpu.concatenate %145, %148, %151, %154, %157, %160, %163, %166, %169 in 0 : vector<16x64xf32>, vector<16x64xf32>, vector<16x64xf32>, vector<16x64xf32>, vector<16x64xf32>, vector<16x64xf32>, vector<16x64xf32>, vector<16x64xf32>, vector<16x64xf32> -> vector<144x64xf32>
    %171 = arith.truncf %170 : vector<144x64xf32> to vector<144x64xbf16>
    %c0_145 = arith.constant 0 : index
    %c0_146 = arith.constant 0 : index
    %172 = vector.load %arg8[%c0_145, %c0_146] : memref<16x144xbf16, #tpu.memory_space<vmem>>, vector<16x144xbf16>
    %cst_147 = arith.constant dense<0.000000e+00> : vector<16x64xf32>
    %173 = tpu.matmul %172, %171, %cst_147 {dimension_numbers = #tpu.dot_dimension_numbers<[1], [0], [0], [1], [0, 0, 1, 1], [], []>} : vector<16x144xbf16>, vector<144x64xbf16>, vector<16x64xf32> -> vector<16x64xf32>
    %c0_148 = arith.constant 0 : index
    %c0_149 = arith.constant 0 : index
    %174 = vector.load %arg9[%c0_148, %c0_149] : memref<16x1xf32, #tpu.memory_space<vmem>>, vector<16x1xf32>
    %175 = vector.broadcast %174 : vector<16x1xf32> to vector<16x64xf32>
    %176 = arith.addf %173, %175 : vector<16x64xf32>
    %cst_150 = arith.constant 0.000000e+00 : f32
    %177 = vector.broadcast %cst_150 : f32 to vector<16x64xf32>
    %178 = arith.maximumf %176, %177 : vector<16x64xf32>
    %c0_151 = arith.constant 0 : index
    %c0_152 = arith.constant 0 : index
    %c0_153 = arith.constant 0 : index
    %179 = vector.load %arg37[%c0_151, %c0_152, %c0_153] : memref<4x64x16xf32, #tpu.memory_space<vmem>>, vector<1x64x16xf32>
    %180 = vector.shape_cast %179 : vector<1x64x16xf32> to vector<64x16xf32>
    %cst_154 = arith.constant dense<0.000000e+00> : vector<16x16xf32>
    %181 = tpu.matmul %178, %180, %cst_154 {dimension_numbers = #tpu.dot_dimension_numbers<[1], [0], [0], [1], [0, 0, 1, 1], [], []>} : vector<16x64xf32>, vector<64x16xf32>, vector<16x16xf32> -> vector<16x16xf32>
    %c1_155 = arith.constant 1 : index
    %c0_156 = arith.constant 0 : index
    %c0_157 = arith.constant 0 : index
    %182 = vector.load %arg37[%c1_155, %c0_156, %c0_157] : memref<4x64x16xf32, #tpu.memory_space<vmem>>, vector<1x64x16xf32>
    %183 = vector.shape_cast %182 : vector<1x64x16xf32> to vector<64x16xf32>
    %cst_158 = arith.constant dense<0.000000e+00> : vector<16x16xf32>
    %184 = tpu.matmul %178, %183, %cst_158 {dimension_numbers = #tpu.dot_dimension_numbers<[1], [0], [0], [1], [0, 0, 1, 1], [], []>} : vector<16x64xf32>, vector<64x16xf32>, vector<16x16xf32> -> vector<16x16xf32>
    %185 = arith.maximumf %181, %184 : vector<16x16xf32>
    %c2_159 = arith.constant 2 : index
    %c0_160 = arith.constant 0 : index
    %c0_161 = arith.constant 0 : index
    %186 = vector.load %arg37[%c2_159, %c0_160, %c0_161] : memref<4x64x16xf32, #tpu.memory_space<vmem>>, vector<1x64x16xf32>
    %187 = vector.shape_cast %186 : vector<1x64x16xf32> to vector<64x16xf32>
    %cst_162 = arith.constant dense<0.000000e+00> : vector<16x16xf32>
    %188 = tpu.matmul %178, %187, %cst_162 {dimension_numbers = #tpu.dot_dimension_numbers<[1], [0], [0], [1], [0, 0, 1, 1], [], []>} : vector<16x64xf32>, vector<64x16xf32>, vector<16x16xf32> -> vector<16x16xf32>
    %189 = arith.maximumf %185, %188 : vector<16x16xf32>
    %c3_163 = arith.constant 3 : index
    %c0_164 = arith.constant 0 : index
    %c0_165 = arith.constant 0 : index
    %190 = vector.load %arg37[%c3_163, %c0_164, %c0_165] : memref<4x64x16xf32, #tpu.memory_space<vmem>>, vector<1x64x16xf32>
    %191 = vector.shape_cast %190 : vector<1x64x16xf32> to vector<64x16xf32>
    %cst_166 = arith.constant dense<0.000000e+00> : vector<16x16xf32>
    %192 = tpu.matmul %178, %191, %cst_166 {dimension_numbers = #tpu.dot_dimension_numbers<[1], [0], [0], [1], [0, 0, 1, 1], [], []>} : vector<16x64xf32>, vector<64x16xf32>, vector<16x16xf32> -> vector<16x16xf32>
    %193 = arith.maximumf %189, %192 : vector<16x16xf32>
    %c0_167 = arith.constant 0 : index
    %c0_168 = arith.constant 0 : index
    %c0_169 = arith.constant 0 : index
    %194 = vector.load %arg34[%c0_167, %c0_168, %c0_169] : memref<9x16x16xf32, #tpu.memory_space<vmem>>, vector<1x16x16xf32>
    %195 = vector.shape_cast %194 : vector<1x16x16xf32> to vector<16x16xf32>
    %cst_170 = arith.constant dense<0.000000e+00> : vector<16x16xf32>
    %196 = tpu.matmul %193, %195, %cst_170 {dimension_numbers = #tpu.dot_dimension_numbers<[1], [0], [0], [1], [0, 0, 1, 1], [], []>} : vector<16x16xf32>, vector<16x16xf32>, vector<16x16xf32> -> vector<16x16xf32>
    %c1_171 = arith.constant 1 : index
    %c0_172 = arith.constant 0 : index
    %c0_173 = arith.constant 0 : index
    %197 = vector.load %arg34[%c1_171, %c0_172, %c0_173] : memref<9x16x16xf32, #tpu.memory_space<vmem>>, vector<1x16x16xf32>
    %198 = vector.shape_cast %197 : vector<1x16x16xf32> to vector<16x16xf32>
    %cst_174 = arith.constant dense<0.000000e+00> : vector<16x16xf32>
    %199 = tpu.matmul %193, %198, %cst_174 {dimension_numbers = #tpu.dot_dimension_numbers<[1], [0], [0], [1], [0, 0, 1, 1], [], []>} : vector<16x16xf32>, vector<16x16xf32>, vector<16x16xf32> -> vector<16x16xf32>
    %c2_175 = arith.constant 2 : index
    %c0_176 = arith.constant 0 : index
    %c0_177 = arith.constant 0 : index
    %200 = vector.load %arg34[%c2_175, %c0_176, %c0_177] : memref<9x16x16xf32, #tpu.memory_space<vmem>>, vector<1x16x16xf32>
    %201 = vector.shape_cast %200 : vector<1x16x16xf32> to vector<16x16xf32>
    %cst_178 = arith.constant dense<0.000000e+00> : vector<16x16xf32>
    %202 = tpu.matmul %193, %201, %cst_178 {dimension_numbers = #tpu.dot_dimension_numbers<[1], [0], [0], [1], [0, 0, 1, 1], [], []>} : vector<16x16xf32>, vector<16x16xf32>, vector<16x16xf32> -> vector<16x16xf32>
    %c3_179 = arith.constant 3 : index
    %c0_180 = arith.constant 0 : index
    %c0_181 = arith.constant 0 : index
    %203 = vector.load %arg34[%c3_179, %c0_180, %c0_181] : memref<9x16x16xf32, #tpu.memory_space<vmem>>, vector<1x16x16xf32>
    %204 = vector.shape_cast %203 : vector<1x16x16xf32> to vector<16x16xf32>
    %cst_182 = arith.constant dense<0.000000e+00> : vector<16x16xf32>
    %205 = tpu.matmul %193, %204, %cst_182 {dimension_numbers = #tpu.dot_dimension_numbers<[1], [0], [0], [1], [0, 0, 1, 1], [], []>} : vector<16x16xf32>, vector<16x16xf32>, vector<16x16xf32> -> vector<16x16xf32>
    %c4_183 = arith.constant 4 : index
    %c0_184 = arith.constant 0 : index
    %c0_185 = arith.constant 0 : index
    %206 = vector.load %arg34[%c4_183, %c0_184, %c0_185] : memref<9x16x16xf32, #tpu.memory_space<vmem>>, vector<1x16x16xf32>
    %207 = vector.shape_cast %206 : vector<1x16x16xf32> to vector<16x16xf32>
    %cst_186 = arith.constant dense<0.000000e+00> : vector<16x16xf32>
    %208 = tpu.matmul %193, %207, %cst_186 {dimension_numbers = #tpu.dot_dimension_numbers<[1], [0], [0], [1], [0, 0, 1, 1], [], []>} : vector<16x16xf32>, vector<16x16xf32>, vector<16x16xf32> -> vector<16x16xf32>
    %c5_187 = arith.constant 5 : index
    %c0_188 = arith.constant 0 : index
    %c0_189 = arith.constant 0 : index
    %209 = vector.load %arg34[%c5_187, %c0_188, %c0_189] : memref<9x16x16xf32, #tpu.memory_space<vmem>>, vector<1x16x16xf32>
    %210 = vector.shape_cast %209 : vector<1x16x16xf32> to vector<16x16xf32>
    %cst_190 = arith.constant dense<0.000000e+00> : vector<16x16xf32>
    %211 = tpu.matmul %193, %210, %cst_190 {dimension_numbers = #tpu.dot_dimension_numbers<[1], [0], [0], [1], [0, 0, 1, 1], [], []>} : vector<16x16xf32>, vector<16x16xf32>, vector<16x16xf32> -> vector<16x16xf32>
    %c6_191 = arith.constant 6 : index
    %c0_192 = arith.constant 0 : index
    %c0_193 = arith.constant 0 : index
    %212 = vector.load %arg34[%c6_191, %c0_192, %c0_193] : memref<9x16x16xf32, #tpu.memory_space<vmem>>, vector<1x16x16xf32>
    %213 = vector.shape_cast %212 : vector<1x16x16xf32> to vector<16x16xf32>
    %cst_194 = arith.constant dense<0.000000e+00> : vector<16x16xf32>
    %214 = tpu.matmul %193, %213, %cst_194 {dimension_numbers = #tpu.dot_dimension_numbers<[1], [0], [0], [1], [0, 0, 1, 1], [], []>} : vector<16x16xf32>, vector<16x16xf32>, vector<16x16xf32> -> vector<16x16xf32>
    %c7_195 = arith.constant 7 : index
    %c0_196 = arith.constant 0 : index
    %c0_197 = arith.constant 0 : index
    %215 = vector.load %arg34[%c7_195, %c0_196, %c0_197] : memref<9x16x16xf32, #tpu.memory_space<vmem>>, vector<1x16x16xf32>
    %216 = vector.shape_cast %215 : vector<1x16x16xf32> to vector<16x16xf32>
    %cst_198 = arith.constant dense<0.000000e+00> : vector<16x16xf32>
    %217 = tpu.matmul %193, %216, %cst_198 {dimension_numbers = #tpu.dot_dimension_numbers<[1], [0], [0], [1], [0, 0, 1, 1], [], []>} : vector<16x16xf32>, vector<16x16xf32>, vector<16x16xf32> -> vector<16x16xf32>
    %c8_199 = arith.constant 8 : index
    %c0_200 = arith.constant 0 : index
    %c0_201 = arith.constant 0 : index
    %218 = vector.load %arg34[%c8_199, %c0_200, %c0_201] : memref<9x16x16xf32, #tpu.memory_space<vmem>>, vector<1x16x16xf32>
    %219 = vector.shape_cast %218 : vector<1x16x16xf32> to vector<16x16xf32>
    %cst_202 = arith.constant dense<0.000000e+00> : vector<16x16xf32>
    %220 = tpu.matmul %193, %219, %cst_202 {dimension_numbers = #tpu.dot_dimension_numbers<[1], [0], [0], [1], [0, 0, 1, 1], [], []>} : vector<16x16xf32>, vector<16x16xf32>, vector<16x16xf32> -> vector<16x16xf32>
    %221 = tpu.concatenate %196, %199, %202, %205, %208, %211, %214, %217, %220 in 0 : vector<16x16xf32>, vector<16x16xf32>, vector<16x16xf32>, vector<16x16xf32>, vector<16x16xf32>, vector<16x16xf32>, vector<16x16xf32>, vector<16x16xf32>, vector<16x16xf32> -> vector<144x16xf32>
    %222 = arith.truncf %221 : vector<144x16xf32> to vector<144x16xbf16>
    %c0_203 = arith.constant 0 : index
    %c0_204 = arith.constant 0 : index
    %223 = vector.load %arg10[%c0_203, %c0_204] : memref<32x144xbf16, #tpu.memory_space<vmem>>, vector<32x144xbf16>
    %cst_205 = arith.constant dense<0.000000e+00> : vector<32x16xf32>
    %224 = tpu.matmul %223, %222, %cst_205 {dimension_numbers = #tpu.dot_dimension_numbers<[1], [0], [0], [1], [0, 0, 1, 1], [], []>} : vector<32x144xbf16>, vector<144x16xbf16>, vector<32x16xf32> -> vector<32x16xf32>
    %c0_206 = arith.constant 0 : index
    %c0_207 = arith.constant 0 : index
    %225 = vector.load %arg11[%c0_206, %c0_207] : memref<32x1xf32, #tpu.memory_space<vmem>>, vector<32x1xf32>
    %226 = vector.broadcast %225 : vector<32x1xf32> to vector<32x16xf32>
    %227 = arith.addf %224, %226 : vector<32x16xf32>
    %cst_208 = arith.constant 0.000000e+00 : f32
    %228 = vector.broadcast %cst_208 : f32 to vector<32x16xf32>
    %229 = arith.maximumf %227, %228 : vector<32x16xf32>
    %c0_209 = arith.constant 0 : index
    %c0_210 = arith.constant 0 : index
    %c0_211 = arith.constant 0 : index
    %230 = vector.load %arg34[%c0_209, %c0_210, %c0_211] : memref<9x16x16xf32, #tpu.memory_space<vmem>>, vector<1x16x16xf32>
    %231 = vector.shape_cast %230 : vector<1x16x16xf32> to vector<16x16xf32>
    %cst_212 = arith.constant dense<0.000000e+00> : vector<32x16xf32>
    %232 = tpu.matmul %229, %231, %cst_212 {dimension_numbers = #tpu.dot_dimension_numbers<[1], [0], [0], [1], [0, 0, 1, 1], [], []>} : vector<32x16xf32>, vector<16x16xf32>, vector<32x16xf32> -> vector<32x16xf32>
    %c1_213 = arith.constant 1 : index
    %c0_214 = arith.constant 0 : index
    %c0_215 = arith.constant 0 : index
    %233 = vector.load %arg34[%c1_213, %c0_214, %c0_215] : memref<9x16x16xf32, #tpu.memory_space<vmem>>, vector<1x16x16xf32>
    %234 = vector.shape_cast %233 : vector<1x16x16xf32> to vector<16x16xf32>
    %cst_216 = arith.constant dense<0.000000e+00> : vector<32x16xf32>
    %235 = tpu.matmul %229, %234, %cst_216 {dimension_numbers = #tpu.dot_dimension_numbers<[1], [0], [0], [1], [0, 0, 1, 1], [], []>} : vector<32x16xf32>, vector<16x16xf32>, vector<32x16xf32> -> vector<32x16xf32>
    %c2_217 = arith.constant 2 : index
    %c0_218 = arith.constant 0 : index
    %c0_219 = arith.constant 0 : index
    %236 = vector.load %arg34[%c2_217, %c0_218, %c0_219] : memref<9x16x16xf32, #tpu.memory_space<vmem>>, vector<1x16x16xf32>
    %237 = vector.shape_cast %236 : vector<1x16x16xf32> to vector<16x16xf32>
    %cst_220 = arith.constant dense<0.000000e+00> : vector<32x16xf32>
    %238 = tpu.matmul %229, %237, %cst_220 {dimension_numbers = #tpu.dot_dimension_numbers<[1], [0], [0], [1], [0, 0, 1, 1], [], []>} : vector<32x16xf32>, vector<16x16xf32>, vector<32x16xf32> -> vector<32x16xf32>
    %c3_221 = arith.constant 3 : index
    %c0_222 = arith.constant 0 : index
    %c0_223 = arith.constant 0 : index
    %239 = vector.load %arg34[%c3_221, %c0_222, %c0_223] : memref<9x16x16xf32, #tpu.memory_space<vmem>>, vector<1x16x16xf32>
    %240 = vector.shape_cast %239 : vector<1x16x16xf32> to vector<16x16xf32>
    %cst_224 = arith.constant dense<0.000000e+00> : vector<32x16xf32>
    %241 = tpu.matmul %229, %240, %cst_224 {dimension_numbers = #tpu.dot_dimension_numbers<[1], [0], [0], [1], [0, 0, 1, 1], [], []>} : vector<32x16xf32>, vector<16x16xf32>, vector<32x16xf32> -> vector<32x16xf32>
    %c4_225 = arith.constant 4 : index
    %c0_226 = arith.constant 0 : index
    %c0_227 = arith.constant 0 : index
    %242 = vector.load %arg34[%c4_225, %c0_226, %c0_227] : memref<9x16x16xf32, #tpu.memory_space<vmem>>, vector<1x16x16xf32>
    %243 = vector.shape_cast %242 : vector<1x16x16xf32> to vector<16x16xf32>
    %cst_228 = arith.constant dense<0.000000e+00> : vector<32x16xf32>
    %244 = tpu.matmul %229, %243, %cst_228 {dimension_numbers = #tpu.dot_dimension_numbers<[1], [0], [0], [1], [0, 0, 1, 1], [], []>} : vector<32x16xf32>, vector<16x16xf32>, vector<32x16xf32> -> vector<32x16xf32>
    %c5_229 = arith.constant 5 : index
    %c0_230 = arith.constant 0 : index
    %c0_231 = arith.constant 0 : index
    %245 = vector.load %arg34[%c5_229, %c0_230, %c0_231] : memref<9x16x16xf32, #tpu.memory_space<vmem>>, vector<1x16x16xf32>
    %246 = vector.shape_cast %245 : vector<1x16x16xf32> to vector<16x16xf32>
    %cst_232 = arith.constant dense<0.000000e+00> : vector<32x16xf32>
    %247 = tpu.matmul %229, %246, %cst_232 {dimension_numbers = #tpu.dot_dimension_numbers<[1], [0], [0], [1], [0, 0, 1, 1], [], []>} : vector<32x16xf32>, vector<16x16xf32>, vector<32x16xf32> -> vector<32x16xf32>
    %c6_233 = arith.constant 6 : index
    %c0_234 = arith.constant 0 : index
    %c0_235 = arith.constant 0 : index
    %248 = vector.load %arg34[%c6_233, %c0_234, %c0_235] : memref<9x16x16xf32, #tpu.memory_space<vmem>>, vector<1x16x16xf32>
    %249 = vector.shape_cast %248 : vector<1x16x16xf32> to vector<16x16xf32>
    %cst_236 = arith.constant dense<0.000000e+00> : vector<32x16xf32>
    %250 = tpu.matmul %229, %249, %cst_236 {dimension_numbers = #tpu.dot_dimension_numbers<[1], [0], [0], [1], [0, 0, 1, 1], [], []>} : vector<32x16xf32>, vector<16x16xf32>, vector<32x16xf32> -> vector<32x16xf32>
    %c7_237 = arith.constant 7 : index
    %c0_238 = arith.constant 0 : index
    %c0_239 = arith.constant 0 : index
    %251 = vector.load %arg34[%c7_237, %c0_238, %c0_239] : memref<9x16x16xf32, #tpu.memory_space<vmem>>, vector<1x16x16xf32>
    %252 = vector.shape_cast %251 : vector<1x16x16xf32> to vector<16x16xf32>
    %cst_240 = arith.constant dense<0.000000e+00> : vector<32x16xf32>
    %253 = tpu.matmul %229, %252, %cst_240 {dimension_numbers = #tpu.dot_dimension_numbers<[1], [0], [0], [1], [0, 0, 1, 1], [], []>} : vector<32x16xf32>, vector<16x16xf32>, vector<32x16xf32> -> vector<32x16xf32>
    %c8_241 = arith.constant 8 : index
    %c0_242 = arith.constant 0 : index
    %c0_243 = arith.constant 0 : index
    %254 = vector.load %arg34[%c8_241, %c0_242, %c0_243] : memref<9x16x16xf32, #tpu.memory_space<vmem>>, vector<1x16x16xf32>
    %255 = vector.shape_cast %254 : vector<1x16x16xf32> to vector<16x16xf32>
    %cst_244 = arith.constant dense<0.000000e+00> : vector<32x16xf32>
    %256 = tpu.matmul %229, %255, %cst_244 {dimension_numbers = #tpu.dot_dimension_numbers<[1], [0], [0], [1], [0, 0, 1, 1], [], []>} : vector<32x16xf32>, vector<16x16xf32>, vector<32x16xf32> -> vector<32x16xf32>
    %257 = tpu.concatenate %232, %235, %238, %241, %244, %247, %250, %253, %256 in 0 : vector<32x16xf32>, vector<32x16xf32>, vector<32x16xf32>, vector<32x16xf32>, vector<32x16xf32>, vector<32x16xf32>, vector<32x16xf32>, vector<32x16xf32>, vector<32x16xf32> -> vector<288x16xf32>
    %258 = arith.truncf %257 : vector<288x16xf32> to vector<288x16xbf16>
    %c0_245 = arith.constant 0 : index
    %c0_246 = arith.constant 0 : index
    %259 = vector.load %arg12[%c0_245, %c0_246] : memref<32x288xbf16, #tpu.memory_space<vmem>>, vector<32x288xbf16>
    %cst_247 = arith.constant dense<0.000000e+00> : vector<32x16xf32>
    %260 = tpu.matmul %259, %258, %cst_247 {dimension_numbers = #tpu.dot_dimension_numbers<[1], [0], [0], [1], [0, 0, 1, 1], [], []>} : vector<32x288xbf16>, vector<288x16xbf16>, vector<32x16xf32> -> vector<32x16xf32>
    %c0_248 = arith.constant 0 : index
    %c0_249 = arith.constant 0 : index
    %261 = vector.load %arg13[%c0_248, %c0_249] : memref<32x1xf32, #tpu.memory_space<vmem>>, vector<32x1xf32>
    %262 = vector.broadcast %261 : vector<32x1xf32> to vector<32x16xf32>
    %263 = arith.addf %260, %262 : vector<32x16xf32>
    %cst_250 = arith.constant 0.000000e+00 : f32
    %264 = vector.broadcast %cst_250 : f32 to vector<32x16xf32>
    %265 = arith.maximumf %263, %264 : vector<32x16xf32>
    %c0_251 = arith.constant 0 : index
    %c0_252 = arith.constant 0 : index
    %c0_253 = arith.constant 0 : index
    %266 = vector.load %arg38[%c0_251, %c0_252, %c0_253] : memref<4x16x4xf32, #tpu.memory_space<vmem>>, vector<1x16x4xf32>
    %267 = vector.shape_cast %266 : vector<1x16x4xf32> to vector<16x4xf32>
    %cst_254 = arith.constant dense<0.000000e+00> : vector<32x4xf32>
    %268 = tpu.matmul %265, %267, %cst_254 {dimension_numbers = #tpu.dot_dimension_numbers<[1], [0], [0], [1], [0, 0, 1, 1], [], []>} : vector<32x16xf32>, vector<16x4xf32>, vector<32x4xf32> -> vector<32x4xf32>
    %c1_255 = arith.constant 1 : index
    %c0_256 = arith.constant 0 : index
    %c0_257 = arith.constant 0 : index
    %269 = vector.load %arg38[%c1_255, %c0_256, %c0_257] : memref<4x16x4xf32, #tpu.memory_space<vmem>>, vector<1x16x4xf32>
    %270 = vector.shape_cast %269 : vector<1x16x4xf32> to vector<16x4xf32>
    %cst_258 = arith.constant dense<0.000000e+00> : vector<32x4xf32>
    %271 = tpu.matmul %265, %270, %cst_258 {dimension_numbers = #tpu.dot_dimension_numbers<[1], [0], [0], [1], [0, 0, 1, 1], [], []>} : vector<32x16xf32>, vector<16x4xf32>, vector<32x4xf32> -> vector<32x4xf32>
    %272 = arith.maximumf %268, %271 : vector<32x4xf32>
    %c2_259 = arith.constant 2 : index
    %c0_260 = arith.constant 0 : index
    %c0_261 = arith.constant 0 : index
    %273 = vector.load %arg38[%c2_259, %c0_260, %c0_261] : memref<4x16x4xf32, #tpu.memory_space<vmem>>, vector<1x16x4xf32>
    %274 = vector.shape_cast %273 : vector<1x16x4xf32> to vector<16x4xf32>
    %cst_262 = arith.constant dense<0.000000e+00> : vector<32x4xf32>
    %275 = tpu.matmul %265, %274, %cst_262 {dimension_numbers = #tpu.dot_dimension_numbers<[1], [0], [0], [1], [0, 0, 1, 1], [], []>} : vector<32x16xf32>, vector<16x4xf32>, vector<32x4xf32> -> vector<32x4xf32>
    %276 = arith.maximumf %272, %275 : vector<32x4xf32>
    %c3_263 = arith.constant 3 : index
    %c0_264 = arith.constant 0 : index
    %c0_265 = arith.constant 0 : index
    %277 = vector.load %arg38[%c3_263, %c0_264, %c0_265] : memref<4x16x4xf32, #tpu.memory_space<vmem>>, vector<1x16x4xf32>
    %278 = vector.shape_cast %277 : vector<1x16x4xf32> to vector<16x4xf32>
    %cst_266 = arith.constant dense<0.000000e+00> : vector<32x4xf32>
    %279 = tpu.matmul %265, %278, %cst_266 {dimension_numbers = #tpu.dot_dimension_numbers<[1], [0], [0], [1], [0, 0, 1, 1], [], []>} : vector<32x16xf32>, vector<16x4xf32>, vector<32x4xf32> -> vector<32x4xf32>
    %280 = arith.maximumf %276, %279 : vector<32x4xf32>
    %c0_267 = arith.constant 0 : index
    %c0_268 = arith.constant 0 : index
    %c0_269 = arith.constant 0 : index
    %281 = vector.load %arg35[%c0_267, %c0_268, %c0_269] : memref<9x4x4xf32, #tpu.memory_space<vmem>>, vector<1x4x4xf32>
    %282 = vector.shape_cast %281 : vector<1x4x4xf32> to vector<4x4xf32>
    %cst_270 = arith.constant dense<0.000000e+00> : vector<32x4xf32>
    %283 = tpu.matmul %280, %282, %cst_270 {dimension_numbers = #tpu.dot_dimension_numbers<[1], [0], [0], [1], [0, 0, 1, 1], [], []>} : vector<32x4xf32>, vector<4x4xf32>, vector<32x4xf32> -> vector<32x4xf32>
    %c1_271 = arith.constant 1 : index
    %c0_272 = arith.constant 0 : index
    %c0_273 = arith.constant 0 : index
    %284 = vector.load %arg35[%c1_271, %c0_272, %c0_273] : memref<9x4x4xf32, #tpu.memory_space<vmem>>, vector<1x4x4xf32>
    %285 = vector.shape_cast %284 : vector<1x4x4xf32> to vector<4x4xf32>
    %cst_274 = arith.constant dense<0.000000e+00> : vector<32x4xf32>
    %286 = tpu.matmul %280, %285, %cst_274 {dimension_numbers = #tpu.dot_dimension_numbers<[1], [0], [0], [1], [0, 0, 1, 1], [], []>} : vector<32x4xf32>, vector<4x4xf32>, vector<32x4xf32> -> vector<32x4xf32>
    %c2_275 = arith.constant 2 : index
    %c0_276 = arith.constant 0 : index
    %c0_277 = arith.constant 0 : index
    %287 = vector.load %arg35[%c2_275, %c0_276, %c0_277] : memref<9x4x4xf32, #tpu.memory_space<vmem>>, vector<1x4x4xf32>
    %288 = vector.shape_cast %287 : vector<1x4x4xf32> to vector<4x4xf32>
    %cst_278 = arith.constant dense<0.000000e+00> : vector<32x4xf32>
    %289 = tpu.matmul %280, %288, %cst_278 {dimension_numbers = #tpu.dot_dimension_numbers<[1], [0], [0], [1], [0, 0, 1, 1], [], []>} : vector<32x4xf32>, vector<4x4xf32>, vector<32x4xf32> -> vector<32x4xf32>
    %c3_279 = arith.constant 3 : index
    %c0_280 = arith.constant 0 : index
    %c0_281 = arith.constant 0 : index
    %290 = vector.load %arg35[%c3_279, %c0_280, %c0_281] : memref<9x4x4xf32, #tpu.memory_space<vmem>>, vector<1x4x4xf32>
    %291 = vector.shape_cast %290 : vector<1x4x4xf32> to vector<4x4xf32>
    %cst_282 = arith.constant dense<0.000000e+00> : vector<32x4xf32>
    %292 = tpu.matmul %280, %291, %cst_282 {dimension_numbers = #tpu.dot_dimension_numbers<[1], [0], [0], [1], [0, 0, 1, 1], [], []>} : vector<32x4xf32>, vector<4x4xf32>, vector<32x4xf32> -> vector<32x4xf32>
    %c4_283 = arith.constant 4 : index
    %c0_284 = arith.constant 0 : index
    %c0_285 = arith.constant 0 : index
    %293 = vector.load %arg35[%c4_283, %c0_284, %c0_285] : memref<9x4x4xf32, #tpu.memory_space<vmem>>, vector<1x4x4xf32>
    %294 = vector.shape_cast %293 : vector<1x4x4xf32> to vector<4x4xf32>
    %cst_286 = arith.constant dense<0.000000e+00> : vector<32x4xf32>
    %295 = tpu.matmul %280, %294, %cst_286 {dimension_numbers = #tpu.dot_dimension_numbers<[1], [0], [0], [1], [0, 0, 1, 1], [], []>} : vector<32x4xf32>, vector<4x4xf32>, vector<32x4xf32> -> vector<32x4xf32>
    %c5_287 = arith.constant 5 : index
    %c0_288 = arith.constant 0 : index
    %c0_289 = arith.constant 0 : index
    %296 = vector.load %arg35[%c5_287, %c0_288, %c0_289] : memref<9x4x4xf32, #tpu.memory_space<vmem>>, vector<1x4x4xf32>
    %297 = vector.shape_cast %296 : vector<1x4x4xf32> to vector<4x4xf32>
    %cst_290 = arith.constant dense<0.000000e+00> : vector<32x4xf32>
    %298 = tpu.matmul %280, %297, %cst_290 {dimension_numbers = #tpu.dot_dimension_numbers<[1], [0], [0], [1], [0, 0, 1, 1], [], []>} : vector<32x4xf32>, vector<4x4xf32>, vector<32x4xf32> -> vector<32x4xf32>
    %c6_291 = arith.constant 6 : index
    %c0_292 = arith.constant 0 : index
    %c0_293 = arith.constant 0 : index
    %299 = vector.load %arg35[%c6_291, %c0_292, %c0_293] : memref<9x4x4xf32, #tpu.memory_space<vmem>>, vector<1x4x4xf32>
    %300 = vector.shape_cast %299 : vector<1x4x4xf32> to vector<4x4xf32>
    %cst_294 = arith.constant dense<0.000000e+00> : vector<32x4xf32>
    %301 = tpu.matmul %280, %300, %cst_294 {dimension_numbers = #tpu.dot_dimension_numbers<[1], [0], [0], [1], [0, 0, 1, 1], [], []>} : vector<32x4xf32>, vector<4x4xf32>, vector<32x4xf32> -> vector<32x4xf32>
    %c7_295 = arith.constant 7 : index
    %c0_296 = arith.constant 0 : index
    %c0_297 = arith.constant 0 : index
    %302 = vector.load %arg35[%c7_295, %c0_296, %c0_297] : memref<9x4x4xf32, #tpu.memory_space<vmem>>, vector<1x4x4xf32>
    %303 = vector.shape_cast %302 : vector<1x4x4xf32> to vector<4x4xf32>
    %cst_298 = arith.constant dense<0.000000e+00> : vector<32x4xf32>
    %304 = tpu.matmul %280, %303, %cst_298 {dimension_numbers = #tpu.dot_dimension_numbers<[1], [0], [0], [1], [0, 0, 1, 1], [], []>} : vector<32x4xf32>, vector<4x4xf32>, vector<32x4xf32> -> vector<32x4xf32>
    %c8_299 = arith.constant 8 : index
    %c0_300 = arith.constant 0 : index
    %c0_301 = arith.constant 0 : index
    %305 = vector.load %arg35[%c8_299, %c0_300, %c0_301] : memref<9x4x4xf32, #tpu.memory_space<vmem>>, vector<1x4x4xf32>
    %306 = vector.shape_cast %305 : vector<1x4x4xf32> to vector<4x4xf32>
    %cst_302 = arith.constant dense<0.000000e+00> : vector<32x4xf32>
    %307 = tpu.matmul %280, %306, %cst_302 {dimension_numbers = #tpu.dot_dimension_numbers<[1], [0], [0], [1], [0, 0, 1, 1], [], []>} : vector<32x4xf32>, vector<4x4xf32>, vector<32x4xf32> -> vector<32x4xf32>
    %308 = tpu.concatenate %283, %286, %289, %292, %295, %298, %301, %304, %307 in 0 : vector<32x4xf32>, vector<32x4xf32>, vector<32x4xf32>, vector<32x4xf32>, vector<32x4xf32>, vector<32x4xf32>, vector<32x4xf32>, vector<32x4xf32>, vector<32x4xf32> -> vector<288x4xf32>
    %309 = arith.truncf %308 : vector<288x4xf32> to vector<288x4xbf16>
    %c0_303 = arith.constant 0 : index
    %c0_304 = arith.constant 0 : index
    %310 = vector.load %arg14[%c0_303, %c0_304] : memref<64x288xbf16, #tpu.memory_space<vmem>>, vector<64x288xbf16>
    %cst_305 = arith.constant dense<0.000000e+00> : vector<64x4xf32>
    %311 = tpu.matmul %310, %309, %cst_305 {dimension_numbers = #tpu.dot_dimension_numbers<[1], [0], [0], [1], [0, 0, 1, 1], [], []>} : vector<64x288xbf16>, vector<288x4xbf16>, vector<64x4xf32> -> vector<64x4xf32>
    %c0_306 = arith.constant 0 : index
    %c0_307 = arith.constant 0 : index
    %312 = vector.load %arg15[%c0_306, %c0_307] : memref<64x1xf32, #tpu.memory_space<vmem>>, vector<64x1xf32>
    %313 = vector.broadcast %312 : vector<64x1xf32> to vector<64x4xf32>
    %314 = arith.addf %311, %313 : vector<64x4xf32>
    %cst_308 = arith.constant 0.000000e+00 : f32
    %315 = vector.broadcast %cst_308 : f32 to vector<64x4xf32>
    %316 = arith.maximumf %314, %315 : vector<64x4xf32>
    %c0_309 = arith.constant 0 : index
    %c0_310 = arith.constant 0 : index
    %c0_311 = arith.constant 0 : index
    %317 = vector.load %arg35[%c0_309, %c0_310, %c0_311] : memref<9x4x4xf32, #tpu.memory_space<vmem>>, vector<1x4x4xf32>
    %318 = vector.shape_cast %317 : vector<1x4x4xf32> to vector<4x4xf32>
    %cst_312 = arith.constant dense<0.000000e+00> : vector<64x4xf32>
    %319 = tpu.matmul %316, %318, %cst_312 {dimension_numbers = #tpu.dot_dimension_numbers<[1], [0], [0], [1], [0, 0, 1, 1], [], []>} : vector<64x4xf32>, vector<4x4xf32>, vector<64x4xf32> -> vector<64x4xf32>
    %c1_313 = arith.constant 1 : index
    %c0_314 = arith.constant 0 : index
    %c0_315 = arith.constant 0 : index
    %320 = vector.load %arg35[%c1_313, %c0_314, %c0_315] : memref<9x4x4xf32, #tpu.memory_space<vmem>>, vector<1x4x4xf32>
    %321 = vector.shape_cast %320 : vector<1x4x4xf32> to vector<4x4xf32>
    %cst_316 = arith.constant dense<0.000000e+00> : vector<64x4xf32>
    %322 = tpu.matmul %316, %321, %cst_316 {dimension_numbers = #tpu.dot_dimension_numbers<[1], [0], [0], [1], [0, 0, 1, 1], [], []>} : vector<64x4xf32>, vector<4x4xf32>, vector<64x4xf32> -> vector<64x4xf32>
    %c2_317 = arith.constant 2 : index
    %c0_318 = arith.constant 0 : index
    %c0_319 = arith.constant 0 : index
    %323 = vector.load %arg35[%c2_317, %c0_318, %c0_319] : memref<9x4x4xf32, #tpu.memory_space<vmem>>, vector<1x4x4xf32>
    %324 = vector.shape_cast %323 : vector<1x4x4xf32> to vector<4x4xf32>
    %cst_320 = arith.constant dense<0.000000e+00> : vector<64x4xf32>
    %325 = tpu.matmul %316, %324, %cst_320 {dimension_numbers = #tpu.dot_dimension_numbers<[1], [0], [0], [1], [0, 0, 1, 1], [], []>} : vector<64x4xf32>, vector<4x4xf32>, vector<64x4xf32> -> vector<64x4xf32>
    %c3_321 = arith.constant 3 : index
    %c0_322 = arith.constant 0 : index
    %c0_323 = arith.constant 0 : index
    %326 = vector.load %arg35[%c3_321, %c0_322, %c0_323] : memref<9x4x4xf32, #tpu.memory_space<vmem>>, vector<1x4x4xf32>
    %327 = vector.shape_cast %326 : vector<1x4x4xf32> to vector<4x4xf32>
    %cst_324 = arith.constant dense<0.000000e+00> : vector<64x4xf32>
    %328 = tpu.matmul %316, %327, %cst_324 {dimension_numbers = #tpu.dot_dimension_numbers<[1], [0], [0], [1], [0, 0, 1, 1], [], []>} : vector<64x4xf32>, vector<4x4xf32>, vector<64x4xf32> -> vector<64x4xf32>
    %c4_325 = arith.constant 4 : index
    %c0_326 = arith.constant 0 : index
    %c0_327 = arith.constant 0 : index
    %329 = vector.load %arg35[%c4_325, %c0_326, %c0_327] : memref<9x4x4xf32, #tpu.memory_space<vmem>>, vector<1x4x4xf32>
    %330 = vector.shape_cast %329 : vector<1x4x4xf32> to vector<4x4xf32>
    %cst_328 = arith.constant dense<0.000000e+00> : vector<64x4xf32>
    %331 = tpu.matmul %316, %330, %cst_328 {dimension_numbers = #tpu.dot_dimension_numbers<[1], [0], [0], [1], [0, 0, 1, 1], [], []>} : vector<64x4xf32>, vector<4x4xf32>, vector<64x4xf32> -> vector<64x4xf32>
    %c5_329 = arith.constant 5 : index
    %c0_330 = arith.constant 0 : index
    %c0_331 = arith.constant 0 : index
    %332 = vector.load %arg35[%c5_329, %c0_330, %c0_331] : memref<9x4x4xf32, #tpu.memory_space<vmem>>, vector<1x4x4xf32>
    %333 = vector.shape_cast %332 : vector<1x4x4xf32> to vector<4x4xf32>
    %cst_332 = arith.constant dense<0.000000e+00> : vector<64x4xf32>
    %334 = tpu.matmul %316, %333, %cst_332 {dimension_numbers = #tpu.dot_dimension_numbers<[1], [0], [0], [1], [0, 0, 1, 1], [], []>} : vector<64x4xf32>, vector<4x4xf32>, vector<64x4xf32> -> vector<64x4xf32>
    %c6_333 = arith.constant 6 : index
    %c0_334 = arith.constant 0 : index
    %c0_335 = arith.constant 0 : index
    %335 = vector.load %arg35[%c6_333, %c0_334, %c0_335] : memref<9x4x4xf32, #tpu.memory_space<vmem>>, vector<1x4x4xf32>
    %336 = vector.shape_cast %335 : vector<1x4x4xf32> to vector<4x4xf32>
    %cst_336 = arith.constant dense<0.000000e+00> : vector<64x4xf32>
    %337 = tpu.matmul %316, %336, %cst_336 {dimension_numbers = #tpu.dot_dimension_numbers<[1], [0], [0], [1], [0, 0, 1, 1], [], []>} : vector<64x4xf32>, vector<4x4xf32>, vector<64x4xf32> -> vector<64x4xf32>
    %c7_337 = arith.constant 7 : index
    %c0_338 = arith.constant 0 : index
    %c0_339 = arith.constant 0 : index
    %338 = vector.load %arg35[%c7_337, %c0_338, %c0_339] : memref<9x4x4xf32, #tpu.memory_space<vmem>>, vector<1x4x4xf32>
    %339 = vector.shape_cast %338 : vector<1x4x4xf32> to vector<4x4xf32>
    %cst_340 = arith.constant dense<0.000000e+00> : vector<64x4xf32>
    %340 = tpu.matmul %316, %339, %cst_340 {dimension_numbers = #tpu.dot_dimension_numbers<[1], [0], [0], [1], [0, 0, 1, 1], [], []>} : vector<64x4xf32>, vector<4x4xf32>, vector<64x4xf32> -> vector<64x4xf32>
    %c8_341 = arith.constant 8 : index
    %c0_342 = arith.constant 0 : index
    %c0_343 = arith.constant 0 : index
    %341 = vector.load %arg35[%c8_341, %c0_342, %c0_343] : memref<9x4x4xf32, #tpu.memory_space<vmem>>, vector<1x4x4xf32>
    %342 = vector.shape_cast %341 : vector<1x4x4xf32> to vector<4x4xf32>
    %cst_344 = arith.constant dense<0.000000e+00> : vector<64x4xf32>
    %343 = tpu.matmul %316, %342, %cst_344 {dimension_numbers = #tpu.dot_dimension_numbers<[1], [0], [0], [1], [0, 0, 1, 1], [], []>} : vector<64x4xf32>, vector<4x4xf32>, vector<64x4xf32> -> vector<64x4xf32>
    %344 = tpu.concatenate %319, %322, %325, %328, %331, %334, %337, %340, %343 in 0 : vector<64x4xf32>, vector<64x4xf32>, vector<64x4xf32>, vector<64x4xf32>, vector<64x4xf32>, vector<64x4xf32>, vector<64x4xf32>, vector<64x4xf32>, vector<64x4xf32> -> vector<576x4xf32>
    %345 = arith.truncf %344 : vector<576x4xf32> to vector<576x4xbf16>
    %c0_345 = arith.constant 0 : index
    %c0_346 = arith.constant 0 : index
    %346 = vector.load %arg16[%c0_345, %c0_346] : memref<64x576xbf16, #tpu.memory_space<vmem>>, vector<64x576xbf16>
    %cst_347 = arith.constant dense<0.000000e+00> : vector<64x4xf32>
    %347 = tpu.matmul %346, %345, %cst_347 {dimension_numbers = #tpu.dot_dimension_numbers<[1], [0], [0], [1], [0, 0, 1, 1], [], []>} : vector<64x576xbf16>, vector<576x4xbf16>, vector<64x4xf32> -> vector<64x4xf32>
    %c0_348 = arith.constant 0 : index
    %c0_349 = arith.constant 0 : index
    %348 = vector.load %arg17[%c0_348, %c0_349] : memref<64x1xf32, #tpu.memory_space<vmem>>, vector<64x1xf32>
    %349 = vector.broadcast %348 : vector<64x1xf32> to vector<64x4xf32>
    %350 = arith.addf %347, %349 : vector<64x4xf32>
    %cst_350 = arith.constant 0.000000e+00 : f32
    %351 = vector.broadcast %cst_350 : f32 to vector<64x4xf32>
    %352 = arith.maximumf %350, %351 : vector<64x4xf32>
    %c0_351 = arith.constant 0 : index
    %c0_352 = arith.constant 0 : index
    %353 = vector.load %arg39[%c0_351, %c0_352] : memref<4x16xf32, #tpu.memory_space<vmem>>, vector<4x16xf32>
    %cst_353 = arith.constant dense<0.000000e+00> : vector<64x16xf32>
    %354 = tpu.matmul %352, %353, %cst_353 {dimension_numbers = #tpu.dot_dimension_numbers<[1], [0], [0], [1], [0, 0, 1, 1], [], []>} : vector<64x4xf32>, vector<4x16xf32>, vector<64x16xf32> -> vector<64x16xf32>
    %355 = vector.extract_strided_slice %354 {offsets = [0, 0], sizes = [32, 16], strides = [1, 1]} : vector<64x16xf32> to vector<32x16xf32>
    %356 = arith.addf %355, %265 : vector<32x16xf32>
    %357 = vector.extract_strided_slice %354 {offsets = [32, 0], sizes = [32, 16], strides = [1, 1]} : vector<64x16xf32> to vector<32x16xf32>
    %358 = tpu.concatenate %356, %357 in 0 : vector<32x16xf32>, vector<32x16xf32> -> vector<64x16xf32>
    %c0_354 = arith.constant 0 : index
    %c0_355 = arith.constant 0 : index
    %c0_356 = arith.constant 0 : index
    %359 = vector.load %arg34[%c0_354, %c0_355, %c0_356] : memref<9x16x16xf32, #tpu.memory_space<vmem>>, vector<1x16x16xf32>
    %360 = vector.shape_cast %359 : vector<1x16x16xf32> to vector<16x16xf32>
    %cst_357 = arith.constant dense<0.000000e+00> : vector<64x16xf32>
    %361 = tpu.matmul %358, %360, %cst_357 {dimension_numbers = #tpu.dot_dimension_numbers<[1], [0], [0], [1], [0, 0, 1, 1], [], []>} : vector<64x16xf32>, vector<16x16xf32>, vector<64x16xf32> -> vector<64x16xf32>
    %c1_358 = arith.constant 1 : index
    %c0_359 = arith.constant 0 : index
    %c0_360 = arith.constant 0 : index
    %362 = vector.load %arg34[%c1_358, %c0_359, %c0_360] : memref<9x16x16xf32, #tpu.memory_space<vmem>>, vector<1x16x16xf32>
    %363 = vector.shape_cast %362 : vector<1x16x16xf32> to vector<16x16xf32>
    %cst_361 = arith.constant dense<0.000000e+00> : vector<64x16xf32>
    %364 = tpu.matmul %358, %363, %cst_361 {dimension_numbers = #tpu.dot_dimension_numbers<[1], [0], [0], [1], [0, 0, 1, 1], [], []>} : vector<64x16xf32>, vector<16x16xf32>, vector<64x16xf32> -> vector<64x16xf32>
    %c2_362 = arith.constant 2 : index
    %c0_363 = arith.constant 0 : index
    %c0_364 = arith.constant 0 : index
    %365 = vector.load %arg34[%c2_362, %c0_363, %c0_364] : memref<9x16x16xf32, #tpu.memory_space<vmem>>, vector<1x16x16xf32>
    %366 = vector.shape_cast %365 : vector<1x16x16xf32> to vector<16x16xf32>
    %cst_365 = arith.constant dense<0.000000e+00> : vector<64x16xf32>
    %367 = tpu.matmul %358, %366, %cst_365 {dimension_numbers = #tpu.dot_dimension_numbers<[1], [0], [0], [1], [0, 0, 1, 1], [], []>} : vector<64x16xf32>, vector<16x16xf32>, vector<64x16xf32> -> vector<64x16xf32>
    %c3_366 = arith.constant 3 : index
    %c0_367 = arith.constant 0 : index
    %c0_368 = arith.constant 0 : index
    %368 = vector.load %arg34[%c3_366, %c0_367, %c0_368] : memref<9x16x16xf32, #tpu.memory_space<vmem>>, vector<1x16x16xf32>
    %369 = vector.shape_cast %368 : vector<1x16x16xf32> to vector<16x16xf32>
    %cst_369 = arith.constant dense<0.000000e+00> : vector<64x16xf32>
    %370 = tpu.matmul %358, %369, %cst_369 {dimension_numbers = #tpu.dot_dimension_numbers<[1], [0], [0], [1], [0, 0, 1, 1], [], []>} : vector<64x16xf32>, vector<16x16xf32>, vector<64x16xf32> -> vector<64x16xf32>
    %c4_370 = arith.constant 4 : index
    %c0_371 = arith.constant 0 : index
    %c0_372 = arith.constant 0 : index
    %371 = vector.load %arg34[%c4_370, %c0_371, %c0_372] : memref<9x16x16xf32, #tpu.memory_space<vmem>>, vector<1x16x16xf32>
    %372 = vector.shape_cast %371 : vector<1x16x16xf32> to vector<16x16xf32>
    %cst_373 = arith.constant dense<0.000000e+00> : vector<64x16xf32>
    %373 = tpu.matmul %358, %372, %cst_373 {dimension_numbers = #tpu.dot_dimension_numbers<[1], [0], [0], [1], [0, 0, 1, 1], [], []>} : vector<64x16xf32>, vector<16x16xf32>, vector<64x16xf32> -> vector<64x16xf32>
    %c5_374 = arith.constant 5 : index
    %c0_375 = arith.constant 0 : index
    %c0_376 = arith.constant 0 : index
    %374 = vector.load %arg34[%c5_374, %c0_375, %c0_376] : memref<9x16x16xf32, #tpu.memory_space<vmem>>, vector<1x16x16xf32>
    %375 = vector.shape_cast %374 : vector<1x16x16xf32> to vector<16x16xf32>
    %cst_377 = arith.constant dense<0.000000e+00> : vector<64x16xf32>
    %376 = tpu.matmul %358, %375, %cst_377 {dimension_numbers = #tpu.dot_dimension_numbers<[1], [0], [0], [1], [0, 0, 1, 1], [], []>} : vector<64x16xf32>, vector<16x16xf32>, vector<64x16xf32> -> vector<64x16xf32>
    %c6_378 = arith.constant 6 : index
    %c0_379 = arith.constant 0 : index
    %c0_380 = arith.constant 0 : index
    %377 = vector.load %arg34[%c6_378, %c0_379, %c0_380] : memref<9x16x16xf32, #tpu.memory_space<vmem>>, vector<1x16x16xf32>
    %378 = vector.shape_cast %377 : vector<1x16x16xf32> to vector<16x16xf32>
    %cst_381 = arith.constant dense<0.000000e+00> : vector<64x16xf32>
    %379 = tpu.matmul %358, %378, %cst_381 {dimension_numbers = #tpu.dot_dimension_numbers<[1], [0], [0], [1], [0, 0, 1, 1], [], []>} : vector<64x16xf32>, vector<16x16xf32>, vector<64x16xf32> -> vector<64x16xf32>
    %c7_382 = arith.constant 7 : index
    %c0_383 = arith.constant 0 : index
    %c0_384 = arith.constant 0 : index
    %380 = vector.load %arg34[%c7_382, %c0_383, %c0_384] : memref<9x16x16xf32, #tpu.memory_space<vmem>>, vector<1x16x16xf32>
    %381 = vector.shape_cast %380 : vector<1x16x16xf32> to vector<16x16xf32>
    %cst_385 = arith.constant dense<0.000000e+00> : vector<64x16xf32>
    %382 = tpu.matmul %358, %381, %cst_385 {dimension_numbers = #tpu.dot_dimension_numbers<[1], [0], [0], [1], [0, 0, 1, 1], [], []>} : vector<64x16xf32>, vector<16x16xf32>, vector<64x16xf32> -> vector<64x16xf32>
    %c8_386 = arith.constant 8 : index
    %c0_387 = arith.constant 0 : index
    %c0_388 = arith.constant 0 : index
    %383 = vector.load %arg34[%c8_386, %c0_387, %c0_388] : memref<9x16x16xf32, #tpu.memory_space<vmem>>, vector<1x16x16xf32>
    %384 = vector.shape_cast %383 : vector<1x16x16xf32> to vector<16x16xf32>
    %cst_389 = arith.constant dense<0.000000e+00> : vector<64x16xf32>
    %385 = tpu.matmul %358, %384, %cst_389 {dimension_numbers = #tpu.dot_dimension_numbers<[1], [0], [0], [1], [0, 0, 1, 1], [], []>} : vector<64x16xf32>, vector<16x16xf32>, vector<64x16xf32> -> vector<64x16xf32>
    %386 = tpu.concatenate %361, %364, %367, %370, %373, %376, %379, %382, %385 in 0 : vector<64x16xf32>, vector<64x16xf32>, vector<64x16xf32>, vector<64x16xf32>, vector<64x16xf32>, vector<64x16xf32>, vector<64x16xf32>, vector<64x16xf32>, vector<64x16xf32> -> vector<576x16xf32>
    %387 = arith.truncf %386 : vector<576x16xf32> to vector<576x16xbf16>
    %c0_390 = arith.constant 0 : index
    %c0_391 = arith.constant 0 : index
    %388 = vector.load %arg18[%c0_390, %c0_391] : memref<32x576xbf16, #tpu.memory_space<vmem>>, vector<32x576xbf16>
    %cst_392 = arith.constant dense<0.000000e+00> : vector<32x16xf32>
    %389 = tpu.matmul %388, %387, %cst_392 {dimension_numbers = #tpu.dot_dimension_numbers<[1], [0], [0], [1], [0, 0, 1, 1], [], []>} : vector<32x576xbf16>, vector<576x16xbf16>, vector<32x16xf32> -> vector<32x16xf32>
    %c0_393 = arith.constant 0 : index
    %c0_394 = arith.constant 0 : index
    %390 = vector.load %arg19[%c0_393, %c0_394] : memref<32x1xf32, #tpu.memory_space<vmem>>, vector<32x1xf32>
    %391 = vector.broadcast %390 : vector<32x1xf32> to vector<32x16xf32>
    %392 = arith.addf %389, %391 : vector<32x16xf32>
    %cst_395 = arith.constant 0.000000e+00 : f32
    %393 = vector.broadcast %cst_395 : f32 to vector<32x16xf32>
    %394 = arith.maximumf %392, %393 : vector<32x16xf32>
    %c0_396 = arith.constant 0 : index
    %c0_397 = arith.constant 0 : index
    %c0_398 = arith.constant 0 : index
    %395 = vector.load %arg34[%c0_396, %c0_397, %c0_398] : memref<9x16x16xf32, #tpu.memory_space<vmem>>, vector<1x16x16xf32>
    %396 = vector.shape_cast %395 : vector<1x16x16xf32> to vector<16x16xf32>
    %cst_399 = arith.constant dense<0.000000e+00> : vector<32x16xf32>
    %397 = tpu.matmul %394, %396, %cst_399 {dimension_numbers = #tpu.dot_dimension_numbers<[1], [0], [0], [1], [0, 0, 1, 1], [], []>} : vector<32x16xf32>, vector<16x16xf32>, vector<32x16xf32> -> vector<32x16xf32>
    %c1_400 = arith.constant 1 : index
    %c0_401 = arith.constant 0 : index
    %c0_402 = arith.constant 0 : index
    %398 = vector.load %arg34[%c1_400, %c0_401, %c0_402] : memref<9x16x16xf32, #tpu.memory_space<vmem>>, vector<1x16x16xf32>
    %399 = vector.shape_cast %398 : vector<1x16x16xf32> to vector<16x16xf32>
    %cst_403 = arith.constant dense<0.000000e+00> : vector<32x16xf32>
    %400 = tpu.matmul %394, %399, %cst_403 {dimension_numbers = #tpu.dot_dimension_numbers<[1], [0], [0], [1], [0, 0, 1, 1], [], []>} : vector<32x16xf32>, vector<16x16xf32>, vector<32x16xf32> -> vector<32x16xf32>
    %c2_404 = arith.constant 2 : index
    %c0_405 = arith.constant 0 : index
    %c0_406 = arith.constant 0 : index
    %401 = vector.load %arg34[%c2_404, %c0_405, %c0_406] : memref<9x16x16xf32, #tpu.memory_space<vmem>>, vector<1x16x16xf32>
    %402 = vector.shape_cast %401 : vector<1x16x16xf32> to vector<16x16xf32>
    %cst_407 = arith.constant dense<0.000000e+00> : vector<32x16xf32>
    %403 = tpu.matmul %394, %402, %cst_407 {dimension_numbers = #tpu.dot_dimension_numbers<[1], [0], [0], [1], [0, 0, 1, 1], [], []>} : vector<32x16xf32>, vector<16x16xf32>, vector<32x16xf32> -> vector<32x16xf32>
    %c3_408 = arith.constant 3 : index
    %c0_409 = arith.constant 0 : index
    %c0_410 = arith.constant 0 : index
    %404 = vector.load %arg34[%c3_408, %c0_409, %c0_410] : memref<9x16x16xf32, #tpu.memory_space<vmem>>, vector<1x16x16xf32>
    %405 = vector.shape_cast %404 : vector<1x16x16xf32> to vector<16x16xf32>
    %cst_411 = arith.constant dense<0.000000e+00> : vector<32x16xf32>
    %406 = tpu.matmul %394, %405, %cst_411 {dimension_numbers = #tpu.dot_dimension_numbers<[1], [0], [0], [1], [0, 0, 1, 1], [], []>} : vector<32x16xf32>, vector<16x16xf32>, vector<32x16xf32> -> vector<32x16xf32>
    %c4_412 = arith.constant 4 : index
    %c0_413 = arith.constant 0 : index
    %c0_414 = arith.constant 0 : index
    %407 = vector.load %arg34[%c4_412, %c0_413, %c0_414] : memref<9x16x16xf32, #tpu.memory_space<vmem>>, vector<1x16x16xf32>
    %408 = vector.shape_cast %407 : vector<1x16x16xf32> to vector<16x16xf32>
    %cst_415 = arith.constant dense<0.000000e+00> : vector<32x16xf32>
    %409 = tpu.matmul %394, %408, %cst_415 {dimension_numbers = #tpu.dot_dimension_numbers<[1], [0], [0], [1], [0, 0, 1, 1], [], []>} : vector<32x16xf32>, vector<16x16xf32>, vector<32x16xf32> -> vector<32x16xf32>
    %c5_416 = arith.constant 5 : index
    %c0_417 = arith.constant 0 : index
    %c0_418 = arith.constant 0 : index
    %410 = vector.load %arg34[%c5_416, %c0_417, %c0_418] : memref<9x16x16xf32, #tpu.memory_space<vmem>>, vector<1x16x16xf32>
    %411 = vector.shape_cast %410 : vector<1x16x16xf32> to vector<16x16xf32>
    %cst_419 = arith.constant dense<0.000000e+00> : vector<32x16xf32>
    %412 = tpu.matmul %394, %411, %cst_419 {dimension_numbers = #tpu.dot_dimension_numbers<[1], [0], [0], [1], [0, 0, 1, 1], [], []>} : vector<32x16xf32>, vector<16x16xf32>, vector<32x16xf32> -> vector<32x16xf32>
    %c6_420 = arith.constant 6 : index
    %c0_421 = arith.constant 0 : index
    %c0_422 = arith.constant 0 : index
    %413 = vector.load %arg34[%c6_420, %c0_421, %c0_422] : memref<9x16x16xf32, #tpu.memory_space<vmem>>, vector<1x16x16xf32>
    %414 = vector.shape_cast %413 : vector<1x16x16xf32> to vector<16x16xf32>
    %cst_423 = arith.constant dense<0.000000e+00> : vector<32x16xf32>
    %415 = tpu.matmul %394, %414, %cst_423 {dimension_numbers = #tpu.dot_dimension_numbers<[1], [0], [0], [1], [0, 0, 1, 1], [], []>} : vector<32x16xf32>, vector<16x16xf32>, vector<32x16xf32> -> vector<32x16xf32>
    %c7_424 = arith.constant 7 : index
    %c0_425 = arith.constant 0 : index
    %c0_426 = arith.constant 0 : index
    %416 = vector.load %arg34[%c7_424, %c0_425, %c0_426] : memref<9x16x16xf32, #tpu.memory_space<vmem>>, vector<1x16x16xf32>
    %417 = vector.shape_cast %416 : vector<1x16x16xf32> to vector<16x16xf32>
    %cst_427 = arith.constant dense<0.000000e+00> : vector<32x16xf32>
    %418 = tpu.matmul %394, %417, %cst_427 {dimension_numbers = #tpu.dot_dimension_numbers<[1], [0], [0], [1], [0, 0, 1, 1], [], []>} : vector<32x16xf32>, vector<16x16xf32>, vector<32x16xf32> -> vector<32x16xf32>
    %c8_428 = arith.constant 8 : index
    %c0_429 = arith.constant 0 : index
    %c0_430 = arith.constant 0 : index
    %419 = vector.load %arg34[%c8_428, %c0_429, %c0_430] : memref<9x16x16xf32, #tpu.memory_space<vmem>>, vector<1x16x16xf32>
    %420 = vector.shape_cast %419 : vector<1x16x16xf32> to vector<16x16xf32>
    %cst_431 = arith.constant dense<0.000000e+00> : vector<32x16xf32>
    %421 = tpu.matmul %394, %420, %cst_431 {dimension_numbers = #tpu.dot_dimension_numbers<[1], [0], [0], [1], [0, 0, 1, 1], [], []>} : vector<32x16xf32>, vector<16x16xf32>, vector<32x16xf32> -> vector<32x16xf32>
    %422 = tpu.concatenate %397, %400, %403, %406, %409, %412, %415, %418, %421 in 0 : vector<32x16xf32>, vector<32x16xf32>, vector<32x16xf32>, vector<32x16xf32>, vector<32x16xf32>, vector<32x16xf32>, vector<32x16xf32>, vector<32x16xf32>, vector<32x16xf32> -> vector<288x16xf32>
    %423 = arith.truncf %422 : vector<288x16xf32> to vector<288x16xbf16>
    %c0_432 = arith.constant 0 : index
    %c0_433 = arith.constant 0 : index
    %424 = vector.load %arg20[%c0_432, %c0_433] : memref<32x288xbf16, #tpu.memory_space<vmem>>, vector<32x288xbf16>
    %cst_434 = arith.constant dense<0.000000e+00> : vector<32x16xf32>
    %425 = tpu.matmul %424, %423, %cst_434 {dimension_numbers = #tpu.dot_dimension_numbers<[1], [0], [0], [1], [0, 0, 1, 1], [], []>} : vector<32x288xbf16>, vector<288x16xbf16>, vector<32x16xf32> -> vector<32x16xf32>
    %c0_435 = arith.constant 0 : index
    %c0_436 = arith.constant 0 : index
    %426 = vector.load %arg21[%c0_435, %c0_436] : memref<32x1xf32, #tpu.memory_space<vmem>>, vector<32x1xf32>
    %427 = vector.broadcast %426 : vector<32x1xf32> to vector<32x16xf32>
    %428 = arith.addf %425, %427 : vector<32x16xf32>
    %cst_437 = arith.constant 0.000000e+00 : f32
    %429 = vector.broadcast %cst_437 : f32 to vector<32x16xf32>
    %430 = arith.maximumf %428, %429 : vector<32x16xf32>
    %c0_438 = arith.constant 0 : index
    %c0_439 = arith.constant 0 : index
    %431 = vector.load %arg40[%c0_438, %c0_439] : memref<16x64xf32, #tpu.memory_space<vmem>>, vector<16x64xf32>
    %cst_440 = arith.constant dense<0.000000e+00> : vector<32x64xf32>
    %432 = tpu.matmul %430, %431, %cst_440 {dimension_numbers = #tpu.dot_dimension_numbers<[1], [0], [0], [1], [0, 0, 1, 1], [], []>} : vector<32x16xf32>, vector<16x64xf32>, vector<32x64xf32> -> vector<32x64xf32>
    %433 = vector.extract_strided_slice %432 {offsets = [0, 0], sizes = [16, 64], strides = [1, 1]} : vector<32x64xf32> to vector<16x64xf32>
    %434 = arith.addf %433, %178 : vector<16x64xf32>
    %435 = vector.extract_strided_slice %432 {offsets = [16, 0], sizes = [16, 64], strides = [1, 1]} : vector<32x64xf32> to vector<16x64xf32>
    %436 = tpu.concatenate %434, %435 in 0 : vector<16x64xf32>, vector<16x64xf32> -> vector<32x64xf32>
    %c0_441 = arith.constant 0 : index
    %c0_442 = arith.constant 0 : index
    %c0_443 = arith.constant 0 : index
    %437 = vector.load %arg33[%c0_441, %c0_442, %c0_443] : memref<9x64x64xf32, #tpu.memory_space<vmem>>, vector<1x64x64xf32>
    %438 = vector.shape_cast %437 : vector<1x64x64xf32> to vector<64x64xf32>
    %cst_444 = arith.constant dense<0.000000e+00> : vector<32x64xf32>
    %439 = tpu.matmul %436, %438, %cst_444 {dimension_numbers = #tpu.dot_dimension_numbers<[1], [0], [0], [1], [0, 0, 1, 1], [], []>} : vector<32x64xf32>, vector<64x64xf32>, vector<32x64xf32> -> vector<32x64xf32>
    %c1_445 = arith.constant 1 : index
    %c0_446 = arith.constant 0 : index
    %c0_447 = arith.constant 0 : index
    %440 = vector.load %arg33[%c1_445, %c0_446, %c0_447] : memref<9x64x64xf32, #tpu.memory_space<vmem>>, vector<1x64x64xf32>
    %441 = vector.shape_cast %440 : vector<1x64x64xf32> to vector<64x64xf32>
    %cst_448 = arith.constant dense<0.000000e+00> : vector<32x64xf32>
    %442 = tpu.matmul %436, %441, %cst_448 {dimension_numbers = #tpu.dot_dimension_numbers<[1], [0], [0], [1], [0, 0, 1, 1], [], []>} : vector<32x64xf32>, vector<64x64xf32>, vector<32x64xf32> -> vector<32x64xf32>
    %c2_449 = arith.constant 2 : index
    %c0_450 = arith.constant 0 : index
    %c0_451 = arith.constant 0 : index
    %443 = vector.load %arg33[%c2_449, %c0_450, %c0_451] : memref<9x64x64xf32, #tpu.memory_space<vmem>>, vector<1x64x64xf32>
    %444 = vector.shape_cast %443 : vector<1x64x64xf32> to vector<64x64xf32>
    %cst_452 = arith.constant dense<0.000000e+00> : vector<32x64xf32>
    %445 = tpu.matmul %436, %444, %cst_452 {dimension_numbers = #tpu.dot_dimension_numbers<[1], [0], [0], [1], [0, 0, 1, 1], [], []>} : vector<32x64xf32>, vector<64x64xf32>, vector<32x64xf32> -> vector<32x64xf32>
    %c3_453 = arith.constant 3 : index
    %c0_454 = arith.constant 0 : index
    %c0_455 = arith.constant 0 : index
    %446 = vector.load %arg33[%c3_453, %c0_454, %c0_455] : memref<9x64x64xf32, #tpu.memory_space<vmem>>, vector<1x64x64xf32>
    %447 = vector.shape_cast %446 : vector<1x64x64xf32> to vector<64x64xf32>
    %cst_456 = arith.constant dense<0.000000e+00> : vector<32x64xf32>
    %448 = tpu.matmul %436, %447, %cst_456 {dimension_numbers = #tpu.dot_dimension_numbers<[1], [0], [0], [1], [0, 0, 1, 1], [], []>} : vector<32x64xf32>, vector<64x64xf32>, vector<32x64xf32> -> vector<32x64xf32>
    %c4_457 = arith.constant 4 : index
    %c0_458 = arith.constant 0 : index
    %c0_459 = arith.constant 0 : index
    %449 = vector.load %arg33[%c4_457, %c0_458, %c0_459] : memref<9x64x64xf32, #tpu.memory_space<vmem>>, vector<1x64x64xf32>
    %450 = vector.shape_cast %449 : vector<1x64x64xf32> to vector<64x64xf32>
    %cst_460 = arith.constant dense<0.000000e+00> : vector<32x64xf32>
    %451 = tpu.matmul %436, %450, %cst_460 {dimension_numbers = #tpu.dot_dimension_numbers<[1], [0], [0], [1], [0, 0, 1, 1], [], []>} : vector<32x64xf32>, vector<64x64xf32>, vector<32x64xf32> -> vector<32x64xf32>
    %c5_461 = arith.constant 5 : index
    %c0_462 = arith.constant 0 : index
    %c0_463 = arith.constant 0 : index
    %452 = vector.load %arg33[%c5_461, %c0_462, %c0_463] : memref<9x64x64xf32, #tpu.memory_space<vmem>>, vector<1x64x64xf32>
    %453 = vector.shape_cast %452 : vector<1x64x64xf32> to vector<64x64xf32>
    %cst_464 = arith.constant dense<0.000000e+00> : vector<32x64xf32>
    %454 = tpu.matmul %436, %453, %cst_464 {dimension_numbers = #tpu.dot_dimension_numbers<[1], [0], [0], [1], [0, 0, 1, 1], [], []>} : vector<32x64xf32>, vector<64x64xf32>, vector<32x64xf32> -> vector<32x64xf32>
    %c6_465 = arith.constant 6 : index
    %c0_466 = arith.constant 0 : index
    %c0_467 = arith.constant 0 : index
    %455 = vector.load %arg33[%c6_465, %c0_466, %c0_467] : memref<9x64x64xf32, #tpu.memory_space<vmem>>, vector<1x64x64xf32>
    %456 = vector.shape_cast %455 : vector<1x64x64xf32> to vector<64x64xf32>
    %cst_468 = arith.constant dense<0.000000e+00> : vector<32x64xf32>
    %457 = tpu.matmul %436, %456, %cst_468 {dimension_numbers = #tpu.dot_dimension_numbers<[1], [0], [0], [1], [0, 0, 1, 1], [], []>} : vector<32x64xf32>, vector<64x64xf32>, vector<32x64xf32> -> vector<32x64xf32>
    %c7_469 = arith.constant 7 : index
    %c0_470 = arith.constant 0 : index
    %c0_471 = arith.constant 0 : index
    %458 = vector.load %arg33[%c7_469, %c0_470, %c0_471] : memref<9x64x64xf32, #tpu.memory_space<vmem>>, vector<1x64x64xf32>
    %459 = vector.shape_cast %458 : vector<1x64x64xf32> to vector<64x64xf32>
    %cst_472 = arith.constant dense<0.000000e+00> : vector<32x64xf32>
    %460 = tpu.matmul %436, %459, %cst_472 {dimension_numbers = #tpu.dot_dimension_numbers<[1], [0], [0], [1], [0, 0, 1, 1], [], []>} : vector<32x64xf32>, vector<64x64xf32>, vector<32x64xf32> -> vector<32x64xf32>
    %c8_473 = arith.constant 8 : index
    %c0_474 = arith.constant 0 : index
    %c0_475 = arith.constant 0 : index
    %461 = vector.load %arg33[%c8_473, %c0_474, %c0_475] : memref<9x64x64xf32, #tpu.memory_space<vmem>>, vector<1x64x64xf32>
    %462 = vector.shape_cast %461 : vector<1x64x64xf32> to vector<64x64xf32>
    %cst_476 = arith.constant dense<0.000000e+00> : vector<32x64xf32>
    %463 = tpu.matmul %436, %462, %cst_476 {dimension_numbers = #tpu.dot_dimension_numbers<[1], [0], [0], [1], [0, 0, 1, 1], [], []>} : vector<32x64xf32>, vector<64x64xf32>, vector<32x64xf32> -> vector<32x64xf32>
    %464 = tpu.concatenate %439, %442, %445, %448, %451, %454, %457, %460, %463 in 0 : vector<32x64xf32>, vector<32x64xf32>, vector<32x64xf32>, vector<32x64xf32>, vector<32x64xf32>, vector<32x64xf32>, vector<32x64xf32>, vector<32x64xf32>, vector<32x64xf32> -> vector<288x64xf32>
    %465 = arith.truncf %464 : vector<288x64xf32> to vector<288x64xbf16>
    %c0_477 = arith.constant 0 : index
    %c0_478 = arith.constant 0 : index
    %466 = vector.load %arg22[%c0_477, %c0_478] : memref<16x288xbf16, #tpu.memory_space<vmem>>, vector<16x288xbf16>
    %cst_479 = arith.constant dense<0.000000e+00> : vector<16x64xf32>
    %467 = tpu.matmul %466, %465, %cst_479 {dimension_numbers = #tpu.dot_dimension_numbers<[1], [0], [0], [1], [0, 0, 1, 1], [], []>} : vector<16x288xbf16>, vector<288x64xbf16>, vector<16x64xf32> -> vector<16x64xf32>
    %c0_480 = arith.constant 0 : index
    %c0_481 = arith.constant 0 : index
    %468 = vector.load %arg23[%c0_480, %c0_481] : memref<16x1xf32, #tpu.memory_space<vmem>>, vector<16x1xf32>
    %469 = vector.broadcast %468 : vector<16x1xf32> to vector<16x64xf32>
    %470 = arith.addf %467, %469 : vector<16x64xf32>
    %cst_482 = arith.constant 0.000000e+00 : f32
    %471 = vector.broadcast %cst_482 : f32 to vector<16x64xf32>
    %472 = arith.maximumf %470, %471 : vector<16x64xf32>
    %c0_483 = arith.constant 0 : index
    %c0_484 = arith.constant 0 : index
    %c0_485 = arith.constant 0 : index
    %473 = vector.load %arg33[%c0_483, %c0_484, %c0_485] : memref<9x64x64xf32, #tpu.memory_space<vmem>>, vector<1x64x64xf32>
    %474 = vector.shape_cast %473 : vector<1x64x64xf32> to vector<64x64xf32>
    %cst_486 = arith.constant dense<0.000000e+00> : vector<16x64xf32>
    %475 = tpu.matmul %472, %474, %cst_486 {dimension_numbers = #tpu.dot_dimension_numbers<[1], [0], [0], [1], [0, 0, 1, 1], [], []>} : vector<16x64xf32>, vector<64x64xf32>, vector<16x64xf32> -> vector<16x64xf32>
    %c1_487 = arith.constant 1 : index
    %c0_488 = arith.constant 0 : index
    %c0_489 = arith.constant 0 : index
    %476 = vector.load %arg33[%c1_487, %c0_488, %c0_489] : memref<9x64x64xf32, #tpu.memory_space<vmem>>, vector<1x64x64xf32>
    %477 = vector.shape_cast %476 : vector<1x64x64xf32> to vector<64x64xf32>
    %cst_490 = arith.constant dense<0.000000e+00> : vector<16x64xf32>
    %478 = tpu.matmul %472, %477, %cst_490 {dimension_numbers = #tpu.dot_dimension_numbers<[1], [0], [0], [1], [0, 0, 1, 1], [], []>} : vector<16x64xf32>, vector<64x64xf32>, vector<16x64xf32> -> vector<16x64xf32>
    %c2_491 = arith.constant 2 : index
    %c0_492 = arith.constant 0 : index
    %c0_493 = arith.constant 0 : index
    %479 = vector.load %arg33[%c2_491, %c0_492, %c0_493] : memref<9x64x64xf32, #tpu.memory_space<vmem>>, vector<1x64x64xf32>
    %480 = vector.shape_cast %479 : vector<1x64x64xf32> to vector<64x64xf32>
    %cst_494 = arith.constant dense<0.000000e+00> : vector<16x64xf32>
    %481 = tpu.matmul %472, %480, %cst_494 {dimension_numbers = #tpu.dot_dimension_numbers<[1], [0], [0], [1], [0, 0, 1, 1], [], []>} : vector<16x64xf32>, vector<64x64xf32>, vector<16x64xf32> -> vector<16x64xf32>
    %c3_495 = arith.constant 3 : index
    %c0_496 = arith.constant 0 : index
    %c0_497 = arith.constant 0 : index
    %482 = vector.load %arg33[%c3_495, %c0_496, %c0_497] : memref<9x64x64xf32, #tpu.memory_space<vmem>>, vector<1x64x64xf32>
    %483 = vector.shape_cast %482 : vector<1x64x64xf32> to vector<64x64xf32>
    %cst_498 = arith.constant dense<0.000000e+00> : vector<16x64xf32>
    %484 = tpu.matmul %472, %483, %cst_498 {dimension_numbers = #tpu.dot_dimension_numbers<[1], [0], [0], [1], [0, 0, 1, 1], [], []>} : vector<16x64xf32>, vector<64x64xf32>, vector<16x64xf32> -> vector<16x64xf32>
    %c4_499 = arith.constant 4 : index
    %c0_500 = arith.constant 0 : index
    %c0_501 = arith.constant 0 : index
    %485 = vector.load %arg33[%c4_499, %c0_500, %c0_501] : memref<9x64x64xf32, #tpu.memory_space<vmem>>, vector<1x64x64xf32>
    %486 = vector.shape_cast %485 : vector<1x64x64xf32> to vector<64x64xf32>
    %cst_502 = arith.constant dense<0.000000e+00> : vector<16x64xf32>
    %487 = tpu.matmul %472, %486, %cst_502 {dimension_numbers = #tpu.dot_dimension_numbers<[1], [0], [0], [1], [0, 0, 1, 1], [], []>} : vector<16x64xf32>, vector<64x64xf32>, vector<16x64xf32> -> vector<16x64xf32>
    %c5_503 = arith.constant 5 : index
    %c0_504 = arith.constant 0 : index
    %c0_505 = arith.constant 0 : index
    %488 = vector.load %arg33[%c5_503, %c0_504, %c0_505] : memref<9x64x64xf32, #tpu.memory_space<vmem>>, vector<1x64x64xf32>
    %489 = vector.shape_cast %488 : vector<1x64x64xf32> to vector<64x64xf32>
    %cst_506 = arith.constant dense<0.000000e+00> : vector<16x64xf32>
    %490 = tpu.matmul %472, %489, %cst_506 {dimension_numbers = #tpu.dot_dimension_numbers<[1], [0], [0], [1], [0, 0, 1, 1], [], []>} : vector<16x64xf32>, vector<64x64xf32>, vector<16x64xf32> -> vector<16x64xf32>
    %c6_507 = arith.constant 6 : index
    %c0_508 = arith.constant 0 : index
    %c0_509 = arith.constant 0 : index
    %491 = vector.load %arg33[%c6_507, %c0_508, %c0_509] : memref<9x64x64xf32, #tpu.memory_space<vmem>>, vector<1x64x64xf32>
    %492 = vector.shape_cast %491 : vector<1x64x64xf32> to vector<64x64xf32>
    %cst_510 = arith.constant dense<0.000000e+00> : vector<16x64xf32>
    %493 = tpu.matmul %472, %492, %cst_510 {dimension_numbers = #tpu.dot_dimension_numbers<[1], [0], [0], [1], [0, 0, 1, 1], [], []>} : vector<16x64xf32>, vector<64x64xf32>, vector<16x64xf32> -> vector<16x64xf32>
    %c7_511 = arith.constant 7 : index
    %c0_512 = arith.constant 0 : index
    %c0_513 = arith.constant 0 : index
    %494 = vector.load %arg33[%c7_511, %c0_512, %c0_513] : memref<9x64x64xf32, #tpu.memory_space<vmem>>, vector<1x64x64xf32>
    %495 = vector.shape_cast %494 : vector<1x64x64xf32> to vector<64x64xf32>
    %cst_514 = arith.constant dense<0.000000e+00> : vector<16x64xf32>
    %496 = tpu.matmul %472, %495, %cst_514 {dimension_numbers = #tpu.dot_dimension_numbers<[1], [0], [0], [1], [0, 0, 1, 1], [], []>} : vector<16x64xf32>, vector<64x64xf32>, vector<16x64xf32> -> vector<16x64xf32>
    %c8_515 = arith.constant 8 : index
    %c0_516 = arith.constant 0 : index
    %c0_517 = arith.constant 0 : index
    %497 = vector.load %arg33[%c8_515, %c0_516, %c0_517] : memref<9x64x64xf32, #tpu.memory_space<vmem>>, vector<1x64x64xf32>
    %498 = vector.shape_cast %497 : vector<1x64x64xf32> to vector<64x64xf32>
    %cst_518 = arith.constant dense<0.000000e+00> : vector<16x64xf32>
    %499 = tpu.matmul %472, %498, %cst_518 {dimension_numbers = #tpu.dot_dimension_numbers<[1], [0], [0], [1], [0, 0, 1, 1], [], []>} : vector<16x64xf32>, vector<64x64xf32>, vector<16x64xf32> -> vector<16x64xf32>
    %500 = tpu.concatenate %475, %478, %481, %484, %487, %490, %493, %496, %499 in 0 : vector<16x64xf32>, vector<16x64xf32>, vector<16x64xf32>, vector<16x64xf32>, vector<16x64xf32>, vector<16x64xf32>, vector<16x64xf32>, vector<16x64xf32>, vector<16x64xf32> -> vector<144x64xf32>
    %501 = arith.truncf %500 : vector<144x64xf32> to vector<144x64xbf16>
    %c0_519 = arith.constant 0 : index
    %c0_520 = arith.constant 0 : index
    %502 = vector.load %arg24[%c0_519, %c0_520] : memref<16x144xbf16, #tpu.memory_space<vmem>>, vector<16x144xbf16>
    %cst_521 = arith.constant dense<0.000000e+00> : vector<16x64xf32>
    %503 = tpu.matmul %502, %501, %cst_521 {dimension_numbers = #tpu.dot_dimension_numbers<[1], [0], [0], [1], [0, 0, 1, 1], [], []>} : vector<16x144xbf16>, vector<144x64xbf16>, vector<16x64xf32> -> vector<16x64xf32>
    %c0_522 = arith.constant 0 : index
    %c0_523 = arith.constant 0 : index
    %504 = vector.load %arg25[%c0_522, %c0_523] : memref<16x1xf32, #tpu.memory_space<vmem>>, vector<16x1xf32>
    %505 = vector.broadcast %504 : vector<16x1xf32> to vector<16x64xf32>
    %506 = arith.addf %503, %505 : vector<16x64xf32>
    %cst_524 = arith.constant 0.000000e+00 : f32
    %507 = vector.broadcast %cst_524 : f32 to vector<16x64xf32>
    %508 = arith.maximumf %506, %507 : vector<16x64xf32>
    %c0_525 = arith.constant 0 : index
    %c0_526 = arith.constant 0 : index
    %509 = vector.load %arg41[%c0_525, %c0_526] : memref<64x256xf32, #tpu.memory_space<vmem>>, vector<64x256xf32>
    %cst_527 = arith.constant dense<0.000000e+00> : vector<16x256xf32>
    %510 = tpu.matmul %508, %509, %cst_527 {dimension_numbers = #tpu.dot_dimension_numbers<[1], [0], [0], [1], [0, 0, 1, 1], [], []>} : vector<16x64xf32>, vector<64x256xf32>, vector<16x256xf32> -> vector<16x256xf32>
    %511 = vector.extract_strided_slice %510 {offsets = [0, 0], sizes = [8, 256], strides = [1, 1]} : vector<16x256xf32> to vector<8x256xf32>
    %512 = arith.addf %511, %99 : vector<8x256xf32>
    %513 = vector.extract_strided_slice %510 {offsets = [8, 0], sizes = [8, 256], strides = [1, 1]} : vector<16x256xf32> to vector<8x256xf32>
    %514 = tpu.concatenate %512, %513 in 0 : vector<8x256xf32>, vector<8x256xf32> -> vector<16x256xf32>
    %c17_i32_528 = arith.constant 17 : i32
    %515 = tpu.dynamic_rotate %514 by %c17_i32_528 dim 1 : vector<16x256xf32>, i32 -> vector<16x256xf32>
    %c0_529 = arith.constant 0 : index
    %c0_530 = arith.constant 0 : index
    %c0_531 = arith.constant 0 : index
    %516 = vector.load %arg32[%c0_529, %c0_530, %c0_531] : memref<9x1x256xf32, #tpu.memory_space<vmem>>, vector<1x1x256xf32>
    %517 = vector.shape_cast %516 : vector<1x1x256xf32> to vector<1x256xf32>
    %518 = vector.broadcast %517 : vector<1x256xf32> to vector<16x256xf32>
    %519 = arith.mulf %515, %518 : vector<16x256xf32>
    %c16_i32_532 = arith.constant 16 : i32
    %520 = tpu.dynamic_rotate %514 by %c16_i32_532 dim 1 : vector<16x256xf32>, i32 -> vector<16x256xf32>
    %c1_533 = arith.constant 1 : index
    %c0_534 = arith.constant 0 : index
    %c0_535 = arith.constant 0 : index
    %521 = vector.load %arg32[%c1_533, %c0_534, %c0_535] : memref<9x1x256xf32, #tpu.memory_space<vmem>>, vector<1x1x256xf32>
    %522 = vector.shape_cast %521 : vector<1x1x256xf32> to vector<1x256xf32>
    %523 = vector.broadcast %522 : vector<1x256xf32> to vector<16x256xf32>
    %524 = arith.mulf %520, %523 : vector<16x256xf32>
    %c15_i32_536 = arith.constant 15 : i32
    %525 = tpu.dynamic_rotate %514 by %c15_i32_536 dim 1 : vector<16x256xf32>, i32 -> vector<16x256xf32>
    %c2_537 = arith.constant 2 : index
    %c0_538 = arith.constant 0 : index
    %c0_539 = arith.constant 0 : index
    %526 = vector.load %arg32[%c2_537, %c0_538, %c0_539] : memref<9x1x256xf32, #tpu.memory_space<vmem>>, vector<1x1x256xf32>
    %527 = vector.shape_cast %526 : vector<1x1x256xf32> to vector<1x256xf32>
    %528 = vector.broadcast %527 : vector<1x256xf32> to vector<16x256xf32>
    %529 = arith.mulf %525, %528 : vector<16x256xf32>
    %c1_i32_540 = arith.constant 1 : i32
    %530 = tpu.dynamic_rotate %514 by %c1_i32_540 dim 1 : vector<16x256xf32>, i32 -> vector<16x256xf32>
    %c3_541 = arith.constant 3 : index
    %c0_542 = arith.constant 0 : index
    %c0_543 = arith.constant 0 : index
    %531 = vector.load %arg32[%c3_541, %c0_542, %c0_543] : memref<9x1x256xf32, #tpu.memory_space<vmem>>, vector<1x1x256xf32>
    %532 = vector.shape_cast %531 : vector<1x1x256xf32> to vector<1x256xf32>
    %533 = vector.broadcast %532 : vector<1x256xf32> to vector<16x256xf32>
    %534 = arith.mulf %530, %533 : vector<16x256xf32>
    %c255_i32_544 = arith.constant 255 : i32
    %535 = tpu.dynamic_rotate %514 by %c255_i32_544 dim 1 : vector<16x256xf32>, i32 -> vector<16x256xf32>
    %c5_545 = arith.constant 5 : index
    %c0_546 = arith.constant 0 : index
    %c0_547 = arith.constant 0 : index
    %536 = vector.load %arg32[%c5_545, %c0_546, %c0_547] : memref<9x1x256xf32, #tpu.memory_space<vmem>>, vector<1x1x256xf32>
    %537 = vector.shape_cast %536 : vector<1x1x256xf32> to vector<1x256xf32>
    %538 = vector.broadcast %537 : vector<1x256xf32> to vector<16x256xf32>
    %539 = arith.mulf %535, %538 : vector<16x256xf32>
    %c241_i32_548 = arith.constant 241 : i32
    %540 = tpu.dynamic_rotate %514 by %c241_i32_548 dim 1 : vector<16x256xf32>, i32 -> vector<16x256xf32>
    %c6_549 = arith.constant 6 : index
    %c0_550 = arith.constant 0 : index
    %c0_551 = arith.constant 0 : index
    %541 = vector.load %arg32[%c6_549, %c0_550, %c0_551] : memref<9x1x256xf32, #tpu.memory_space<vmem>>, vector<1x1x256xf32>
    %542 = vector.shape_cast %541 : vector<1x1x256xf32> to vector<1x256xf32>
    %543 = vector.broadcast %542 : vector<1x256xf32> to vector<16x256xf32>
    %544 = arith.mulf %540, %543 : vector<16x256xf32>
    %c240_i32_552 = arith.constant 240 : i32
    %545 = tpu.dynamic_rotate %514 by %c240_i32_552 dim 1 : vector<16x256xf32>, i32 -> vector<16x256xf32>
    %c7_553 = arith.constant 7 : index
    %c0_554 = arith.constant 0 : index
    %c0_555 = arith.constant 0 : index
    %546 = vector.load %arg32[%c7_553, %c0_554, %c0_555] : memref<9x1x256xf32, #tpu.memory_space<vmem>>, vector<1x1x256xf32>
    %547 = vector.shape_cast %546 : vector<1x1x256xf32> to vector<1x256xf32>
    %548 = vector.broadcast %547 : vector<1x256xf32> to vector<16x256xf32>
    %549 = arith.mulf %545, %548 : vector<16x256xf32>
    %c239_i32_556 = arith.constant 239 : i32
    %550 = tpu.dynamic_rotate %514 by %c239_i32_556 dim 1 : vector<16x256xf32>, i32 -> vector<16x256xf32>
    %c8_557 = arith.constant 8 : index
    %c0_558 = arith.constant 0 : index
    %c0_559 = arith.constant 0 : index
    %551 = vector.load %arg32[%c8_557, %c0_558, %c0_559] : memref<9x1x256xf32, #tpu.memory_space<vmem>>, vector<1x1x256xf32>
    %552 = vector.shape_cast %551 : vector<1x1x256xf32> to vector<1x256xf32>
    %553 = vector.broadcast %552 : vector<1x256xf32> to vector<16x256xf32>
    %554 = arith.mulf %550, %553 : vector<16x256xf32>
    %555 = tpu.concatenate %519, %524, %529, %534, %514, %539, %544, %549, %554 in 0 : vector<16x256xf32>, vector<16x256xf32>, vector<16x256xf32>, vector<16x256xf32>, vector<16x256xf32>, vector<16x256xf32>, vector<16x256xf32>, vector<16x256xf32>, vector<16x256xf32> -> vector<144x256xf32>
    %556 = arith.truncf %555 : vector<144x256xf32> to vector<144x256xbf16>
    %c0_560 = arith.constant 0 : index
    %c0_561 = arith.constant 0 : index
    %557 = vector.load %arg26[%c0_560, %c0_561] : memref<8x144xbf16, #tpu.memory_space<vmem>>, vector<8x144xbf16>
    %cst_562 = arith.constant dense<0.000000e+00> : vector<8x256xf32>
    %558 = tpu.matmul %557, %556, %cst_562 {dimension_numbers = #tpu.dot_dimension_numbers<[1], [0], [0], [1], [0, 0, 1, 1], [], []>} : vector<8x144xbf16>, vector<144x256xbf16>, vector<8x256xf32> -> vector<8x256xf32>
    %c0_563 = arith.constant 0 : index
    %c0_564 = arith.constant 0 : index
    %559 = vector.load %arg27[%c0_563, %c0_564] : memref<8x1xf32, #tpu.memory_space<vmem>>, vector<8x1xf32>
    %560 = vector.broadcast %559 : vector<8x1xf32> to vector<8x256xf32>
    %561 = arith.addf %558, %560 : vector<8x256xf32>
    %cst_565 = arith.constant 0.000000e+00 : f32
    %562 = vector.broadcast %cst_565 : f32 to vector<8x256xf32>
    %563 = arith.maximumf %561, %562 : vector<8x256xf32>
    %c17_i32_566 = arith.constant 17 : i32
    %564 = tpu.dynamic_rotate %563 by %c17_i32_566 dim 1 : vector<8x256xf32>, i32 -> vector<8x256xf32>
    %c0_567 = arith.constant 0 : index
    %c0_568 = arith.constant 0 : index
    %c0_569 = arith.constant 0 : index
    %565 = vector.load %arg32[%c0_567, %c0_568, %c0_569] : memref<9x1x256xf32, #tpu.memory_space<vmem>>, vector<1x1x256xf32>
    %566 = vector.shape_cast %565 : vector<1x1x256xf32> to vector<1x256xf32>
    %567 = vector.broadcast %566 : vector<1x256xf32> to vector<8x256xf32>
    %568 = arith.mulf %564, %567 : vector<8x256xf32>
    %c16_i32_570 = arith.constant 16 : i32
    %569 = tpu.dynamic_rotate %563 by %c16_i32_570 dim 1 : vector<8x256xf32>, i32 -> vector<8x256xf32>
    %c1_571 = arith.constant 1 : index
    %c0_572 = arith.constant 0 : index
    %c0_573 = arith.constant 0 : index
    %570 = vector.load %arg32[%c1_571, %c0_572, %c0_573] : memref<9x1x256xf32, #tpu.memory_space<vmem>>, vector<1x1x256xf32>
    %571 = vector.shape_cast %570 : vector<1x1x256xf32> to vector<1x256xf32>
    %572 = vector.broadcast %571 : vector<1x256xf32> to vector<8x256xf32>
    %573 = arith.mulf %569, %572 : vector<8x256xf32>
    %c15_i32_574 = arith.constant 15 : i32
    %574 = tpu.dynamic_rotate %563 by %c15_i32_574 dim 1 : vector<8x256xf32>, i32 -> vector<8x256xf32>
    %c2_575 = arith.constant 2 : index
    %c0_576 = arith.constant 0 : index
    %c0_577 = arith.constant 0 : index
    %575 = vector.load %arg32[%c2_575, %c0_576, %c0_577] : memref<9x1x256xf32, #tpu.memory_space<vmem>>, vector<1x1x256xf32>
    %576 = vector.shape_cast %575 : vector<1x1x256xf32> to vector<1x256xf32>
    %577 = vector.broadcast %576 : vector<1x256xf32> to vector<8x256xf32>
    %578 = arith.mulf %574, %577 : vector<8x256xf32>
    %c1_i32_578 = arith.constant 1 : i32
    %579 = tpu.dynamic_rotate %563 by %c1_i32_578 dim 1 : vector<8x256xf32>, i32 -> vector<8x256xf32>
    %c3_579 = arith.constant 3 : index
    %c0_580 = arith.constant 0 : index
    %c0_581 = arith.constant 0 : index
    %580 = vector.load %arg32[%c3_579, %c0_580, %c0_581] : memref<9x1x256xf32, #tpu.memory_space<vmem>>, vector<1x1x256xf32>
    %581 = vector.shape_cast %580 : vector<1x1x256xf32> to vector<1x256xf32>
    %582 = vector.broadcast %581 : vector<1x256xf32> to vector<8x256xf32>
    %583 = arith.mulf %579, %582 : vector<8x256xf32>
    %c255_i32_582 = arith.constant 255 : i32
    %584 = tpu.dynamic_rotate %563 by %c255_i32_582 dim 1 : vector<8x256xf32>, i32 -> vector<8x256xf32>
    %c5_583 = arith.constant 5 : index
    %c0_584 = arith.constant 0 : index
    %c0_585 = arith.constant 0 : index
    %585 = vector.load %arg32[%c5_583, %c0_584, %c0_585] : memref<9x1x256xf32, #tpu.memory_space<vmem>>, vector<1x1x256xf32>
    %586 = vector.shape_cast %585 : vector<1x1x256xf32> to vector<1x256xf32>
    %587 = vector.broadcast %586 : vector<1x256xf32> to vector<8x256xf32>
    %588 = arith.mulf %584, %587 : vector<8x256xf32>
    %c241_i32_586 = arith.constant 241 : i32
    %589 = tpu.dynamic_rotate %563 by %c241_i32_586 dim 1 : vector<8x256xf32>, i32 -> vector<8x256xf32>
    %c6_587 = arith.constant 6 : index
    %c0_588 = arith.constant 0 : index
    %c0_589 = arith.constant 0 : index
    %590 = vector.load %arg32[%c6_587, %c0_588, %c0_589] : memref<9x1x256xf32, #tpu.memory_space<vmem>>, vector<1x1x256xf32>
    %591 = vector.shape_cast %590 : vector<1x1x256xf32> to vector<1x256xf32>
    %592 = vector.broadcast %591 : vector<1x256xf32> to vector<8x256xf32>
    %593 = arith.mulf %589, %592 : vector<8x256xf32>
    %c240_i32_590 = arith.constant 240 : i32
    %594 = tpu.dynamic_rotate %563 by %c240_i32_590 dim 1 : vector<8x256xf32>, i32 -> vector<8x256xf32>
    %c7_591 = arith.constant 7 : index
    %c0_592 = arith.constant 0 : index
    %c0_593 = arith.constant 0 : index
    %595 = vector.load %arg32[%c7_591, %c0_592, %c0_593] : memref<9x1x256xf32, #tpu.memory_space<vmem>>, vector<1x1x256xf32>
    %596 = vector.shape_cast %595 : vector<1x1x256xf32> to vector<1x256xf32>
    %597 = vector.broadcast %596 : vector<1x256xf32> to vector<8x256xf32>
    %598 = arith.mulf %594, %597 : vector<8x256xf32>
    %c239_i32_594 = arith.constant 239 : i32
    %599 = tpu.dynamic_rotate %563 by %c239_i32_594 dim 1 : vector<8x256xf32>, i32 -> vector<8x256xf32>
    %c8_595 = arith.constant 8 : index
    %c0_596 = arith.constant 0 : index
    %c0_597 = arith.constant 0 : index
    %600 = vector.load %arg32[%c8_595, %c0_596, %c0_597] : memref<9x1x256xf32, #tpu.memory_space<vmem>>, vector<1x1x256xf32>
    %601 = vector.shape_cast %600 : vector<1x1x256xf32> to vector<1x256xf32>
    %602 = vector.broadcast %601 : vector<1x256xf32> to vector<8x256xf32>
    %603 = arith.mulf %599, %602 : vector<8x256xf32>
    %604 = tpu.concatenate %568, %573, %578, %583, %563, %588, %593, %598, %603 in 0 : vector<8x256xf32>, vector<8x256xf32>, vector<8x256xf32>, vector<8x256xf32>, vector<8x256xf32>, vector<8x256xf32>, vector<8x256xf32>, vector<8x256xf32>, vector<8x256xf32> -> vector<72x256xf32>
    %605 = arith.truncf %604 : vector<72x256xf32> to vector<72x256xbf16>
    %c0_598 = arith.constant 0 : index
    %c0_599 = arith.constant 0 : index
    %606 = vector.load %arg28[%c0_598, %c0_599] : memref<8x72xbf16, #tpu.memory_space<vmem>>, vector<8x72xbf16>
    %cst_600 = arith.constant dense<0.000000e+00> : vector<8x256xf32>
    %607 = tpu.matmul %606, %605, %cst_600 {dimension_numbers = #tpu.dot_dimension_numbers<[1], [0], [0], [1], [0, 0, 1, 1], [], []>} : vector<8x72xbf16>, vector<72x256xbf16>, vector<8x256xf32> -> vector<8x256xf32>
    %c0_601 = arith.constant 0 : index
    %c0_602 = arith.constant 0 : index
    %608 = vector.load %arg29[%c0_601, %c0_602] : memref<8x1xf32, #tpu.memory_space<vmem>>, vector<8x1xf32>
    %609 = vector.broadcast %608 : vector<8x1xf32> to vector<8x256xf32>
    %610 = arith.addf %607, %609 : vector<8x256xf32>
    %cst_603 = arith.constant 0.000000e+00 : f32
    %611 = vector.broadcast %cst_603 : f32 to vector<8x256xf32>
    %612 = arith.maximumf %610, %611 : vector<8x256xf32>
    %c0_604 = arith.constant 0 : index
    %c0_605 = arith.constant 0 : index
    %613 = vector.load %arg30[%c0_604, %c0_605] : memref<8x1xf32, #tpu.memory_space<vmem>>, vector<8x1xf32>
    %c0_606 = arith.constant 0 : index
    %c0_607 = arith.constant 0 : index
    %614 = vector.load %arg31[%c0_606, %c0_607] : memref<1x1xf32, #tpu.memory_space<vmem>>, vector<1x1xf32>
    %615 = vector.broadcast %613 : vector<8x1xf32> to vector<8x256xf32>
    %616 = arith.mulf %615, %612 : vector<8x256xf32>
    %cst_608 = arith.constant dense<0.000000e+00> : vector<256xf32>
    %617 = vector.multi_reduction <add>, %616, %cst_608 [0] : vector<8x256xf32> to vector<256xf32>
    %618 = vector.shape_cast %617 : vector<256xf32> to vector<1x256xf32>
    %619 = vector.broadcast %614 : vector<1x1xf32> to vector<1x256xf32>
    %620 = arith.addf %618, %619 : vector<1x256xf32>
    %621 = math.tanh %620 : vector<1x256xf32>
    %c0_609 = arith.constant 0 : index
    %c0_610 = arith.constant 0 : index
    %c0_611 = arith.constant 0 : index
    %622 = vector.load %arg42[%c0_609, %c0_610, %c0_611] : memref<1x1x256xf32, #tpu.memory_space<vmem>>, vector<1x1x256xf32>
    %623 = vector.shape_cast %622 : vector<1x1x256xf32> to vector<1x256xf32>
    %624 = vector.shape_cast %621 : vector<1x256xf32> to vector<1x1x256xf32>
    tpu.vector_store %arg42[%c0_609, %c0_610, %c0_611], %624 {strides = array<i32>} : memref<1x1x256xf32, #tpu.memory_space<vmem>>, vector<1x1x256xf32>,
    return
  }
  func.func @transform_0(%arg0: i32) -> (i32, i32, i32) {
    %c0_i32 = arith.constant 0 : i32
    %c0_i32_0 = arith.constant 0 : i32
    %c0_i32_1 = arith.constant 0 : i32
    return %arg0, %c0_i32, %c0_i32_0 : i32, i32, i32
  }
  func.func @transform_1(%arg0: i32) -> (i32, i32) {
    %c0_i32 = arith.constant 0 : i32
    %c0_i32_0 = arith.constant 0 : i32
    %c0_i32_1 = arith.constant 0 : i32
    return %c0_i32, %c0_i32_0 : i32, i32
  }
  func.func @transform_2(%arg0: i32) -> (i32, i32) {
    %c0_i32 = arith.constant 0 : i32
    %c0_i32_0 = arith.constant 0 : i32
    %c0_i32_1 = arith.constant 0 : i32
    return %c0_i32, %c0_i32_0 : i32, i32
  }
  func.func @transform_3(%arg0: i32) -> (i32, i32) {
    %c0_i32 = arith.constant 0 : i32
    %c0_i32_0 = arith.constant 0 : i32
    %c0_i32_1 = arith.constant 0 : i32
    return %c0_i32, %c0_i32_0 : i32, i32
  }
  func.func @transform_4(%arg0: i32) -> (i32, i32) {
    %c0_i32 = arith.constant 0 : i32
    %c0_i32_0 = arith.constant 0 : i32
    %c0_i32_1 = arith.constant 0 : i32
    return %c0_i32, %c0_i32_0 : i32, i32
  }
  func.func @transform_5(%arg0: i32) -> (i32, i32) {
    %c0_i32 = arith.constant 0 : i32
    %c0_i32_0 = arith.constant 0 : i32
    %c0_i32_1 = arith.constant 0 : i32
    return %c0_i32, %c0_i32_0 : i32, i32
  }
  func.func @transform_6(%arg0: i32) -> (i32, i32) {
    %c0_i32 = arith.constant 0 : i32
    %c0_i32_0 = arith.constant 0 : i32
    %c0_i32_1 = arith.constant 0 : i32
    return %c0_i32, %c0_i32_0 : i32, i32
  }
  func.func @transform_7(%arg0: i32) -> (i32, i32) {
    %c0_i32 = arith.constant 0 : i32
    %c0_i32_0 = arith.constant 0 : i32
    %c0_i32_1 = arith.constant 0 : i32
    return %c0_i32, %c0_i32_0 : i32, i32
  }
  func.func @transform_8(%arg0: i32) -> (i32, i32) {
    %c0_i32 = arith.constant 0 : i32
    %c0_i32_0 = arith.constant 0 : i32
    %c0_i32_1 = arith.constant 0 : i32
    return %c0_i32, %c0_i32_0 : i32, i32
  }
  func.func @transform_9(%arg0: i32) -> (i32, i32) {
    %c0_i32 = arith.constant 0 : i32
    %c0_i32_0 = arith.constant 0 : i32
    %c0_i32_1 = arith.constant 0 : i32
    return %c0_i32, %c0_i32_0 : i32, i32
  }
  func.func @transform_10(%arg0: i32) -> (i32, i32) {
    %c0_i32 = arith.constant 0 : i32
    %c0_i32_0 = arith.constant 0 : i32
    %c0_i32_1 = arith.constant 0 : i32
    return %c0_i32, %c0_i32_0 : i32, i32
  }
  func.func @transform_11(%arg0: i32) -> (i32, i32) {
    %c0_i32 = arith.constant 0 : i32
    %c0_i32_0 = arith.constant 0 : i32
    %c0_i32_1 = arith.constant 0 : i32
    return %c0_i32, %c0_i32_0 : i32, i32
  }
  func.func @transform_12(%arg0: i32) -> (i32, i32) {
    %c0_i32 = arith.constant 0 : i32
    %c0_i32_0 = arith.constant 0 : i32
    %c0_i32_1 = arith.constant 0 : i32
    return %c0_i32, %c0_i32_0 : i32, i32
  }
  func.func @transform_13(%arg0: i32) -> (i32, i32) {
    %c0_i32 = arith.constant 0 : i32
    %c0_i32_0 = arith.constant 0 : i32
    %c0_i32_1 = arith.constant 0 : i32
    return %c0_i32, %c0_i32_0 : i32, i32
  }
  func.func @transform_14(%arg0: i32) -> (i32, i32) {
    %c0_i32 = arith.constant 0 : i32
    %c0_i32_0 = arith.constant 0 : i32
    %c0_i32_1 = arith.constant 0 : i32
    return %c0_i32, %c0_i32_0 : i32, i32
  }
  func.func @transform_15(%arg0: i32) -> (i32, i32) {
    %c0_i32 = arith.constant 0 : i32
    %c0_i32_0 = arith.constant 0 : i32
    %c0_i32_1 = arith.constant 0 : i32
    return %c0_i32, %c0_i32_0 : i32, i32
  }
  func.func @transform_16(%arg0: i32) -> (i32, i32) {
    %c0_i32 = arith.constant 0 : i32
    %c0_i32_0 = arith.constant 0 : i32
    %c0_i32_1 = arith.constant 0 : i32
    return %c0_i32, %c0_i32_0 : i32, i32
  }
  func.func @transform_17(%arg0: i32) -> (i32, i32) {
    %c0_i32 = arith.constant 0 : i32
    %c0_i32_0 = arith.constant 0 : i32
    %c0_i32_1 = arith.constant 0 : i32
    return %c0_i32, %c0_i32_0 : i32, i32
  }
  func.func @transform_18(%arg0: i32) -> (i32, i32) {
    %c0_i32 = arith.constant 0 : i32
    %c0_i32_0 = arith.constant 0 : i32
    %c0_i32_1 = arith.constant 0 : i32
    return %c0_i32, %c0_i32_0 : i32, i32
  }
  func.func @transform_19(%arg0: i32) -> (i32, i32) {
    %c0_i32 = arith.constant 0 : i32
    %c0_i32_0 = arith.constant 0 : i32
    %c0_i32_1 = arith.constant 0 : i32
    return %c0_i32, %c0_i32_0 : i32, i32
  }
  func.func @transform_20(%arg0: i32) -> (i32, i32) {
    %c0_i32 = arith.constant 0 : i32
    %c0_i32_0 = arith.constant 0 : i32
    %c0_i32_1 = arith.constant 0 : i32
    return %c0_i32, %c0_i32_0 : i32, i32
  }
  func.func @transform_21(%arg0: i32) -> (i32, i32) {
    %c0_i32 = arith.constant 0 : i32
    %c0_i32_0 = arith.constant 0 : i32
    %c0_i32_1 = arith.constant 0 : i32
    return %c0_i32, %c0_i32_0 : i32, i32
  }
  func.func @transform_22(%arg0: i32) -> (i32, i32) {
    %c0_i32 = arith.constant 0 : i32
    %c0_i32_0 = arith.constant 0 : i32
    %c0_i32_1 = arith.constant 0 : i32
    return %c0_i32, %c0_i32_0 : i32, i32
  }
  func.func @transform_23(%arg0: i32) -> (i32, i32) {
    %c0_i32 = arith.constant 0 : i32
    %c0_i32_0 = arith.constant 0 : i32
    %c0_i32_1 = arith.constant 0 : i32
    return %c0_i32, %c0_i32_0 : i32, i32
  }
  func.func @transform_24(%arg0: i32) -> (i32, i32) {
    %c0_i32 = arith.constant 0 : i32
    %c0_i32_0 = arith.constant 0 : i32
    %c0_i32_1 = arith.constant 0 : i32
    return %c0_i32, %c0_i32_0 : i32, i32
  }
  func.func @transform_25(%arg0: i32) -> (i32, i32) {
    %c0_i32 = arith.constant 0 : i32
    %c0_i32_0 = arith.constant 0 : i32
    %c0_i32_1 = arith.constant 0 : i32
    return %c0_i32, %c0_i32_0 : i32, i32
  }
  func.func @transform_26(%arg0: i32) -> (i32, i32) {
    %c0_i32 = arith.constant 0 : i32
    %c0_i32_0 = arith.constant 0 : i32
    %c0_i32_1 = arith.constant 0 : i32
    return %c0_i32, %c0_i32_0 : i32, i32
  }
  func.func @transform_27(%arg0: i32) -> (i32, i32) {
    %c0_i32 = arith.constant 0 : i32
    %c0_i32_0 = arith.constant 0 : i32
    %c0_i32_1 = arith.constant 0 : i32
    return %c0_i32, %c0_i32_0 : i32, i32
  }
  func.func @transform_28(%arg0: i32) -> (i32, i32) {
    %c0_i32 = arith.constant 0 : i32
    %c0_i32_0 = arith.constant 0 : i32
    %c0_i32_1 = arith.constant 0 : i32
    return %c0_i32, %c0_i32_0 : i32, i32
  }
  func.func @transform_29(%arg0: i32) -> (i32, i32) {
    %c0_i32 = arith.constant 0 : i32
    %c0_i32_0 = arith.constant 0 : i32
    %c0_i32_1 = arith.constant 0 : i32
    return %c0_i32, %c0_i32_0 : i32, i32
  }
  func.func @transform_30(%arg0: i32) -> (i32, i32) {
    %c0_i32 = arith.constant 0 : i32
    %c0_i32_0 = arith.constant 0 : i32
    %c0_i32_1 = arith.constant 0 : i32
    return %c0_i32, %c0_i32_0 : i32, i32
  }
  func.func @transform_31(%arg0: i32) -> (i32, i32, i32) {
    %c0_i32 = arith.constant 0 : i32
    %c0_i32_0 = arith.constant 0 : i32
    %c0_i32_1 = arith.constant 0 : i32
    %c0_i32_2 = arith.constant 0 : i32
    return %c0_i32, %c0_i32_0, %c0_i32_1 : i32, i32, i32
  }
  func.func @transform_32(%arg0: i32) -> (i32, i32, i32) {
    %c0_i32 = arith.constant 0 : i32
    %c0_i32_0 = arith.constant 0 : i32
    %c0_i32_1 = arith.constant 0 : i32
    %c0_i32_2 = arith.constant 0 : i32
    return %c0_i32, %c0_i32_0, %c0_i32_1 : i32, i32, i32
  }
  func.func @transform_33(%arg0: i32) -> (i32, i32, i32) {
    %c0_i32 = arith.constant 0 : i32
    %c0_i32_0 = arith.constant 0 : i32
    %c0_i32_1 = arith.constant 0 : i32
    %c0_i32_2 = arith.constant 0 : i32
    return %c0_i32, %c0_i32_0, %c0_i32_1 : i32, i32, i32
  }
  func.func @transform_34(%arg0: i32) -> (i32, i32, i32) {
    %c0_i32 = arith.constant 0 : i32
    %c0_i32_0 = arith.constant 0 : i32
    %c0_i32_1 = arith.constant 0 : i32
    %c0_i32_2 = arith.constant 0 : i32
    return %c0_i32, %c0_i32_0, %c0_i32_1 : i32, i32, i32
  }
  func.func @transform_35(%arg0: i32) -> (i32, i32, i32) {
    %c0_i32 = arith.constant 0 : i32
    %c0_i32_0 = arith.constant 0 : i32
    %c0_i32_1 = arith.constant 0 : i32
    %c0_i32_2 = arith.constant 0 : i32
    return %c0_i32, %c0_i32_0, %c0_i32_1 : i32, i32, i32
  }
  func.func @transform_36(%arg0: i32) -> (i32, i32, i32) {
    %c0_i32 = arith.constant 0 : i32
    %c0_i32_0 = arith.constant 0 : i32
    %c0_i32_1 = arith.constant 0 : i32
    %c0_i32_2 = arith.constant 0 : i32
    return %c0_i32, %c0_i32_0, %c0_i32_1 : i32, i32, i32
  }
  func.func @transform_37(%arg0: i32) -> (i32, i32, i32) {
    %c0_i32 = arith.constant 0 : i32
    %c0_i32_0 = arith.constant 0 : i32
    %c0_i32_1 = arith.constant 0 : i32
    %c0_i32_2 = arith.constant 0 : i32
    return %c0_i32, %c0_i32_0, %c0_i32_1 : i32, i32, i32
  }
  func.func @transform_38(%arg0: i32) -> (i32, i32) {
    %c0_i32 = arith.constant 0 : i32
    %c0_i32_0 = arith.constant 0 : i32
    %c0_i32_1 = arith.constant 0 : i32
    return %c0_i32, %c0_i32_0 : i32, i32
  }
  func.func @transform_39(%arg0: i32) -> (i32, i32) {
    %c0_i32 = arith.constant 0 : i32
    %c0_i32_0 = arith.constant 0 : i32
    %c0_i32_1 = arith.constant 0 : i32
    return %c0_i32, %c0_i32_0 : i32, i32
  }
  func.func @transform_40(%arg0: i32) -> (i32, i32) {
    %c0_i32 = arith.constant 0 : i32
    %c0_i32_0 = arith.constant 0 : i32
    %c0_i32_1 = arith.constant 0 : i32
    return %c0_i32, %c0_i32_0 : i32, i32
  }
  func.func @transform_41(%arg0: i32) -> (i32, i32, i32) {
    %c0_i32 = arith.constant 0 : i32
    %c0_i32_0 = arith.constant 0 : i32
    %c0_i32_1 = arith.constant 0 : i32
    return %arg0, %c0_i32, %c0_i32_0 : i32, i32, i32
  }
}

</mosaic_0001>

<llo_original>
// kernel: risk_pred_unet.1
$region0: #{risk_pred_unet.1}
  #allocation0 [shape = 'u32[]', space=smem, size = 0x4, offset = 0x4, fixed_abs, tag = 'smem constant byte address 0x4 - core index']
  #allocation1 [shape = 'u32[72,128]{1,0:T(1,128)}', space=vmem, size = 0x9000, scoped, tag = 'internal scratch']
  #allocation2 [shape = 'f32[1,1]{1,0:T(1,128)S(1)}', space=vmem, size = 0x200, scoped, tag = 'scoped memory for risk_pred_unet.1']
  %s0 = inlined_call_operand.smem [shape: u32[42], index: -1, kind: input, shape index: {}]
  %s1 = sld [smem:[%s0]]
  %s2 = scalar_lea.smem %s0, 1
  %s3 = sld [smem:[%s2]]
  %s4 = scalar_lea.smem %s0, 2
  %s5 = sld [smem:[%s4]]
  %s6 = scalar_lea.smem %s0, 3
  %s7 = sld [smem:[%s6]]
  %s8 = scalar_lea.smem %s0, 4
  %s9 = sld [smem:[%s8]]
  %s10 = scalar_lea.smem %s0, 5
  %s11 = sld [smem:[%s10]]
  %s12 = scalar_lea.smem %s0, 6
  %s13 = sld [smem:[%s12]]
  %s14 = scalar_lea.smem %s0, 7
  %s15 = sld [smem:[%s14]]
  %s16 = scalar_lea.smem %s0, 8
  %s17 = sld [smem:[%s16]]
  %s18 = scalar_lea.smem %s0, 9
  %s19 = sld [smem:[%s18]]
  %s20 = scalar_lea.smem %s0, 10
  %s21 = sld [smem:[%s20]]
  %s22 = scalar_lea.smem %s0, 11
  %s23 = sld [smem:[%s22]]
  %s24 = scalar_lea.smem %s0, 12
  %s25 = sld [smem:[%s24]]
  %s26 = scalar_lea.smem %s0, 13
  %s27 = sld [smem:[%s26]]
  %s28 = scalar_lea.smem %s0, 14
  %s29 = sld [smem:[%s28]]
  %s30 = scalar_lea.smem %s0, 15
  %s31 = sld [smem:[%s30]]
  %s32 = scalar_lea.smem %s0, 16
  %s33 = sld [smem:[%s32]]
  %s34 = scalar_lea.smem %s0, 17
  %s35 = sld [smem:[%s34]]
  %s36 = scalar_lea.smem %s0, 18
  %s37 = sld [smem:[%s36]]
  %s38 = scalar_lea.smem %s0, 19
  %s39 = sld [smem:[%s38]]
  %s40 = scalar_lea.smem %s0, 20
  %s41 = sld [smem:[%s40]]
  %s42 = scalar_lea.smem %s0, 21
  %s43 = sld [smem:[%s42]]
  %s44 = scalar_lea.smem %s0, 22
  %s45 = sld [smem:[%s44]]
  %s46 = scalar_lea.smem %s0, 23
  %s47 = sld [smem:[%s46]]
  %s48 = scalar_lea.smem %s0, 24
  %s49 = sld [smem:[%s48]]
  %s50 = scalar_lea.smem %s0, 25
  %s51 = sld [smem:[%s50]]
  %s52 = scalar_lea.smem %s0, 26
  %s53 = sld [smem:[%s52]]
  %s54 = scalar_lea.smem %s0, 27
  %s55 = sld [smem:[%s54]]
  %s56 = scalar_lea.smem %s0, 28
  %s57 = sld [smem:[%s56]]
  %s58 = scalar_lea.smem %s0, 29
  %s59 = sld [smem:[%s58]]
  %s60 = scalar_lea.smem %s0, 30
  %s61 = sld [smem:[%s60]]
  %s62 = scalar_lea.smem %s0, 31
  %s63 = sld [smem:[%s62]]
  %s64 = scalar_lea.smem %s0, 32
  %s65 = sld [smem:[%s64]]
  %s66 = scalar_lea.smem %s0, 33
  %s67 = sld [smem:[%s66]]
  %s68 = scalar_lea.smem %s0, 34
  %s69 = sld [smem:[%s68]]
  %s70 = scalar_lea.smem %s0, 35
  %s71 = sld [smem:[%s70]]
  %s72 = scalar_lea.smem %s0, 36
  %s73 = sld [smem:[%s72]]
  %s74 = scalar_lea.smem %s0, 37
  %s75 = sld [smem:[%s74]]
  %s76 = scalar_lea.smem %s0, 38
  %s77 = sld [smem:[%s76]]
  %s78 = scalar_lea.smem %s0, 39
  %s79 = sld [smem:[%s78]]
  %s80 = scalar_lea.smem %s0, 40
  %s81 = sld [smem:[%s80]]
  %s82 = scalar_lea.smem %s0, 41
  %s83 = sld [smem:[%s82]]
  %s84 = sld [smem:[#allocation0]]
  $region197: #{risk_pred_unet.1} parent=0
    _
  %s86 = ssub.s32 1, %s84
  %s87 = scalar_select 0, %s86, %s84
  %v88 = vstv %s61
  %89 = vst [vmem:[#allocation2] sm:$0x1] %v88
  loop: start=0, step=1, limit=4
  $region2: #{risk_pred_unet.1} parent=0 // loop_pre_header
    _
  $region3: #{risk_pred_unet.1} parent=0 // loop_header
    %s91 = sphi 0, %s95
    %p92 = scmp.ge.s32.totalorder %s91, 4
    %s101 = sphi 0, %s103
    %s104 = sphi 0, %s101
    %s105 = sphi 0, %s104
    %s121 = sphi 0, %s105
    %s125 = sphi 0, %s125
    %s127 = sphi 0, %s125
    %s128 = sphi 0, %s127
    %s142 = sphi 0, %s128
    %s146 = sphi 0, %s146
    %s148 = sphi 0, %s146
    %s149 = sphi 0, %s148
    %s163 = sphi 0, %s149
    %s167 = sphi 0, %s167
    %s169 = sphi 0, %s167
    %s170 = sphi 0, %s169
    %s184 = sphi 0, %s170
    %s188 = sphi 0, %s188
    %s190 = sphi 0, %s188
    %s191 = sphi 0, %s190
    %s205 = sphi 0, %s191
    %s209 = sphi 0, %s209
    %s211 = sphi 0, %s209
    %s212 = sphi 0, %s211
    %s226 = sphi 0, %s212
    %s230 = sphi 0, %s230
    %s232 = sphi 0, %s230
    %s233 = sphi 0, %s232
    %s247 = sphi 0, %s233
    %s251 = sphi 0, %s251
    %s253 = sphi 0, %s251
    %s254 = sphi 0, %s253
    %s268 = sphi 0, %s254
    %s272 = sphi 0, %s272
    %s274 = sphi 0, %s272
    %s275 = sphi 0, %s274
    %s289 = sphi 0, %s275
    %s293 = sphi 0, %s293
    %s295 = sphi 0, %s293
    %s296 = sphi 0, %s295
    %s310 = sphi 0, %s296
    %s314 = sphi 0, %s314
    %s316 = sphi 0, %s314
    %s317 = sphi 0, %s316
    %s331 = sphi 0, %s317
    %s335 = sphi 0, %s335
    %s337 = sphi 0, %s335
    %s338 = sphi 0, %s337
    %s352 = sphi 0, %s338
    %s356 = sphi 0, %s356
    %s358 = sphi 0, %s356
    %s359 = sphi 0, %s358
    %s373 = sphi 0, %s359
    %s377 = sphi 0, %s377
    %s379 = sphi 0, %s377
    %s380 = sphi 0, %s379
    %s394 = sphi 0, %s380
    %s398 = sphi 0, %s398
    %s400 = sphi 0, %s398
    %s401 = sphi 0, %s400
    %s415 = sphi 0, %s401
    %s419 = sphi 0, %s419
    %s421 = sphi 0, %s419
    %s422 = sphi 0, %s421
    %s436 = sphi 0, %s422
    %s440 = sphi 0, %s440
    %s442 = sphi 0, %s440
    %s443 = sphi 0, %s442
    %s457 = sphi 0, %s443
    %s461 = sphi 0, %s461
    %s463 = sphi 0, %s461
    %s464 = sphi 0, %s463
    %s478 = sphi 0, %s464
    %s482 = sphi 0, %s482
    %s484 = sphi 0, %s482
    %s485 = sphi 0, %s484
    %s499 = sphi 0, %s485
    %s503 = sphi 0, %s503
    %s505 = sphi 0, %s503
    %s506 = sphi 0, %s505
    %s520 = sphi 0, %s506
    %s524 = sphi 0, %s524
    %s526 = sphi 0, %s524
    %s527 = sphi 0, %s526
    %s541 = sphi 0, %s527
    %s545 = sphi 0, %s545
    %s547 = sphi 0, %s545
    %s548 = sphi 0, %s547
    %s562 = sphi 0, %s548
    %s566 = sphi 0, %s566
    %s568 = sphi 0, %s566
    %s569 = sphi 0, %s568
    %s583 = sphi 0, %s569
    %s587 = sphi 0, %s587
    %s589 = sphi 0, %s587
    %s590 = sphi 0, %s589
    %s604 = sphi 0, %s590
    %s608 = sphi 0, %s608
    %s610 = sphi 0, %s608
    %s611 = sphi 0, %s610
    %s625 = sphi 0, %s611
    %s629 = sphi 0, %s629
    %s631 = sphi 0, %s629
    %s632 = sphi 0, %s631
    %s646 = sphi 0, %s632
    %s650 = sphi 0, %s650
    %s652 = sphi 0, %s650
    %s653 = sphi 0, %s652
    %s667 = sphi 0, %s653
    %s671 = sphi 0, %s671
    %s673 = sphi 0, %s671
    %s674 = sphi 0, %s673
    %s688 = sphi 0, %s674
    %s692 = sphi 0, %s692
    %s694 = sphi 0, %s692
    %s695 = sphi 0, %s694
    %s709 = sphi 0, %s695
    %s713 = sphi 0, %s713
    %s715 = sphi 0, %s713
    %s716 = sphi 0, %s715
    %s730 = sphi 0, %s716
    %s734 = sphi 0, %s734
    %s736 = sphi 0, %s734
    %s737 = sphi 0, %s736
    %s751 = sphi 0, %s737
    %s755 = sphi 0, %s755
    %s757 = sphi 0, %s755
    %s758 = sphi 0, %s757
    %s772 = sphi 0, %s758
    %s776 = sphi 0, %s776
    %s778 = sphi 0, %s776
    %s779 = sphi 0, %s778
    %s793 = sphi 0, %s779
    %s797 = sphi 0, %s797
    %s799 = sphi 0, %s797
    %s800 = sphi 0, %s799
    %s814 = sphi 0, %s800
    %s818 = sphi 0, %s818
    %s820 = sphi 0, %s818
    %s821 = sphi 0, %s820
    %s835 = sphi 0, %s821
    %s839 = sphi 0, %s839
    %s841 = sphi 0, %s839
    %s842 = sphi 0, %s841
    %s856 = sphi 0, %s842
    %s860 = sphi 0, %s860
    %s862 = sphi 0, %s860
    %s863 = sphi 0, %s862
    %s877 = sphi 0, %s863
    %s881 = sphi 0, %s881
    %s883 = sphi 0, %s881
    %s884 = sphi 0, %s883
    %s898 = sphi 0, %s884
    %s902 = sphi 0, %s902
    %s904 = sphi 0, %s902
    %s905 = sphi 0, %s904
    %s919 = sphi 0, %s905
    %s923 = sphi 0, %s923
    %s925 = sphi 0, %s923
    %s926 = sphi 0, %s925
    %s940 = sphi 0, %s926
    %s944 = sphi 0, %s944
    %s946 = sphi 0, %s944
    %s947 = sphi 0, %s946
    %s961 = sphi 0, %s947
    %s967 = sphi 0, %s969
    %s970 = sphi 0, %s967
    %s971 = sphi 0, %s970
    %s987 = sphi 0, %s971
  $region4: #{risk_pred_unet.1} parent=0 // loop_header_branch
    %94 = sbr.rel (%p92) target = $region8
  $region5: #{risk_pred_unet.1} parent=0 // loop_body
    %s96 = ssub.s32 %s91, 1
    %s97 = ssub.s32 %s91, 2
    %s98 = sadd.s32 %s91, 1
    %s99 = ssub.s32 %s91, %s98
    %p100 = scmp.eq.s32.totalorder %s99, 0
    %s102 = sadd.s32 %s101, 1
    %s103 = scalar_select %p100, %s101, %s102
    %p106 = pneg %p100
    %p107 = scmp.eq.s32.totalorder %s91, 1
    %p108 = por %p106, %p107
    %p109 = scmp.ne.s32.totalorder %s101, %s104
    %p110 = scmp.eq.s32.totalorder %s91, 0
    %p111 = por %p109, %p110
    %p112 = scmp.ne.s32.totalorder %s101, %s104
    %p113 = scmp.eq.s32.totalorder %s96, 1
    %p114 = por %p112, %p113
    %p115 = scmp.ne.s32.totalorder %s104, %s105
    %p116 = scmp.eq.s32.totalorder %s96, 0
    %p117 = por %p115, %p116
    %p118 = scmp.ne.s32.totalorder %s104, %s105
    %p119 = scmp.eq.s32.totalorder %s97, 1
    %p120 = por %p118, %p119
    %p122 = scmp.ne.s32.totalorder %s105, %s121
    %p123 = scmp.eq.s32.totalorder %s97, 0
    %p124 = por %p122, %p123
    %s126 = sadd.s32 %s125, 1
    %p129 = scmp.eq.s32.totalorder %s91, 1
    %p130 = scmp.ne.s32.totalorder %s125, %s127
    %p131 = scmp.eq.s32.totalorder %s91, 0
    %p132 = por %p130, %p131
    %p133 = scmp.ne.s32.totalorder %s125, %s127
    %p134 = scmp.eq.s32.totalorder %s96, 1
    %p135 = por %p133, %p134
    %p136 = scmp.ne.s32.totalorder %s127, %s128
    %p137 = scmp.eq.s32.totalorder %s96, 0
    %p138 = por %p136, %p137
    %p139 = scmp.ne.s32.totalorder %s127, %s128
    %p140 = scmp.eq.s32.totalorder %s97, 1
    %p141 = por %p139, %p140
    %p143 = scmp.ne.s32.totalorder %s128, %s142
    %p144 = scmp.eq.s32.totalorder %s97, 0
    %p145 = por %p143, %p144
    %s147 = sadd.s32 %s146, 1
    %p150 = scmp.eq.s32.totalorder %s91, 1
    %p151 = scmp.ne.s32.totalorder %s146, %s148
    %p152 = scmp.eq.s32.totalorder %s91, 0
    %p153 = por %p151, %p152
    %p154 = scmp.ne.s32.totalorder %s146, %s148
    %p155 = scmp.eq.s32.totalorder %s96, 1
    %p156 = por %p154, %p155
    %p157 = scmp.ne.s32.totalorder %s148, %s149
    %p158 = scmp.eq.s32.totalorder %s96, 0
    %p159 = por %p157, %p158
    %p160 = scmp.ne.s32.totalorder %s148, %s149
    %p161 = scmp.eq.s32.totalorder %s97, 1
    %p162 = por %p160, %p161
    %p164 = scmp.ne.s32.totalorder %s149, %s163
    %p165 = scmp.eq.s32.totalorder %s97, 0
    %p166 = por %p164, %p165
    %s168 = sadd.s32 %s167, 1
    %p171 = scmp.eq.s32.totalorder %s91, 1
    %p172 = scmp.ne.s32.totalorder %s167, %s169
    %p173 = scmp.eq.s32.totalorder %s91, 0
    %p174 = por %p172, %p173
    %p175 = scmp.ne.s32.totalorder %s167, %s169
    %p176 = scmp.eq.s32.totalorder %s96, 1
    %p177 = por %p175, %p176
    %p178 = scmp.ne.s32.totalorder %s169, %s170
    %p179 = scmp.eq.s32.totalorder %s96, 0
    %p180 = por %p178, %p179
    %p181 = scmp.ne.s32.totalorder %s169, %s170
    %p182 = scmp.eq.s32.totalorder %s97, 1
    %p183 = por %p181, %p182
    %p185 = scmp.ne.s32.totalorder %s170, %s184
    %p186 = scmp.eq.s32.totalorder %s97, 0
    %p187 = por %p185, %p186
    %s189 = sadd.s32 %s188, 1
    %p192 = scmp.eq.s32.totalorder %s91, 1
    %p193 = scmp.ne.s32.totalorder %s188, %s190
    %p194 = scmp.eq.s32.totalorder %s91, 0
    %p195 = por %p193, %p194
    %p196 = scmp.ne.s32.totalorder %s188, %s190
    %p197 = scmp.eq.s32.totalorder %s96, 1
    %p198 = por %p196, %p197
    %p199 = scmp.ne.s32.totalorder %s190, %s191
    %p200 = scmp.eq.s32.totalorder %s96, 0
    %p201 = por %p199, %p200
    %p202 = scmp.ne.s32.totalorder %s190, %s191
    %p203 = scmp.eq.s32.totalorder %s97, 1
    %p204 = por %p202, %p203
    %p206 = scmp.ne.s32.totalorder %s191, %s205
    %p207 = scmp.eq.s32.totalorder %s97, 0
    %p208 = por %p206, %p207
    %s210 = sadd.s32 %s209, 1
    %p213 = scmp.eq.s32.totalorder %s91, 1
    %p214 = scmp.ne.s32.totalorder %s209, %s211
    %p215 = scmp.eq.s32.totalorder %s91, 0
    %p216 = por %p214, %p215
    %p217 = scmp.ne.s32.totalorder %s209, %s211
    %p218 = scmp.eq.s32.totalorder %s96, 1
    %p219 = por %p217, %p218
    %p220 = scmp.ne.s32.totalorder %s211, %s212
    %p221 = scmp.eq.s32.totalorder %s96, 0
    %p222 = por %p220, %p221
    %p223 = scmp.ne.s32.totalorder %s211, %s212
    %p224 = scmp.eq.s32.totalorder %s97, 1
    %p225 = por %p223, %p224
    %p227 = scmp.ne.s32.totalorder %s212, %s226
    %p228 = scmp.eq.s32.totalorder %s97, 0
    %p229 = por %p227, %p228
    %s231 = sadd.s32 %s230, 1
    %p234 = scmp.eq.s32.totalorder %s91, 1
    %p235 = scmp.ne.s32.totalorder %s230, %s232
    %p236 = scmp.eq.s32.totalorder %s91, 0
    %p237 = por %p235, %p236
    %p238 = scmp.ne.s32.totalorder %s230, %s232
    %p239 = scmp.eq.s32.totalorder %s96, 1
    %p240 = por %p238, %p239
    %p241 = scmp.ne.s32.totalorder %s232, %s233
    %p242 = scmp.eq.s32.totalorder %s96, 0
    %p243 = por %p241, %p242
    %p244 = scmp.ne.s32.totalorder %s232, %s233
    %p245 = scmp.eq.s32.totalorder %s97, 1
    %p246 = por %p244, %p245
    %p248 = scmp.ne.s32.totalorder %s233, %s247
    %p249 = scmp.eq.s32.totalorder %s97, 0
    %p250 = por %p248, %p249
    %s252 = sadd.s32 %s251, 1
    %p255 = scmp.eq.s32.totalorder %s91, 1
    %p256 = scmp.ne.s32.totalorder %s251, %s253
    %p257 = scmp.eq.s32.totalorder %s91, 0
    %p258 = por %p256, %p257
    %p259 = scmp.ne.s32.totalorder %s251, %s253
    %p260 = scmp.eq.s32.totalorder %s96, 1
    %p261 = por %p259, %p260
    %p262 = scmp.ne.s32.totalorder %s253, %s254
    %p263 = scmp.eq.s32.totalorder %s96, 0
    %p264 = por %p262, %p263
    %p265 = scmp.ne.s32.totalorder %s253, %s254
    %p266 = scmp.eq.s32.totalorder %s97, 1
    %p267 = por %p265, %p266
    %p269 = scmp.ne.s32.totalorder %s254, %s268
    %p270 = scmp.eq.s32.totalorder %s97, 0
    %p271 = por %p269, %p270
    %s273 = sadd.s32 %s272, 1
    %p276 = scmp.eq.s32.totalorder %s91, 1
    %p277 = scmp.ne.s32.totalorder %s272, %s274
    %p278 = scmp.eq.s32.totalorder %s91, 0
    %p279 = por %p277, %p278
    %p280 = scmp.ne.s32.totalorder %s272, %s274
    %p281 = scmp.eq.s32.totalorder %s96, 1
    %p282 = por %p280, %p281
    %p283 = scmp.ne.s32.totalorder %s274, %s275
    %p284 = scmp.eq.s32.totalorder %s96, 0
    %p285 = por %p283, %p284
    %p286 = scmp.ne.s32.totalorder %s274, %s275
    %p287 = scmp.eq.s32.totalorder %s97, 1
    %p288 = por %p286, %p287
    %p290 = scmp.ne.s32.totalorder %s275, %s289
    %p291 = scmp.eq.s32.totalorder %s97, 0
    %p292 = por %p290, %p291
    %s294 = sadd.s32 %s293, 1
    %p297 = scmp.eq.s32.totalorder %s91, 1
    %p298 = scmp.ne.s32.totalorder %s293, %s295
    %p299 = scmp.eq.s32.totalorder %s91, 0
    %p300 = por %p298, %p299
    %p301 = scmp.ne.s32.totalorder %s293, %s295
    %p302 = scmp.eq.s32.totalorder %s96, 1
    %p303 = por %p301, %p302
    %p304 = scmp.ne.s32.totalorder %s295, %s296
    %p305 = scmp.eq.s32.totalorder %s96, 0
    %p306 = por %p304, %p305
    %p307 = scmp.ne.s32.totalorder %s295, %s296
    %p308 = scmp.eq.s32.totalorder %s97, 1
    %p309 = por %p307, %p308
    %p311 = scmp.ne.s32.totalorder %s296, %s310
    %p312 = scmp.eq.s32.totalorder %s97, 0
    %p313 = por %p311, %p312
    %s315 = sadd.s32 %s314, 1
    %p318 = scmp.eq.s32.totalorder %s91, 1
    %p319 = scmp.ne.s32.totalorder %s314, %s316
    %p320 = scmp.eq.s32.totalorder %s91, 0
    %p321 = por %p319, %p320
    %p322 = scmp.ne.s32.totalorder %s314, %s316
    %p323 = scmp.eq.s32.totalorder %s96, 1
    %p324 = por %p322, %p323
    %p325 = scmp.ne.s32.totalorder %s316, %s317
    %p326 = scmp.eq.s32.totalorder %s96, 0
    %p327 = por %p325, %p326
    %p328 = scmp.ne.s32.totalorder %s316, %s317
    %p329 = scmp.eq.s32.totalorder %s97, 1
    %p330 = por %p328, %p329
    %p332 = scmp.ne.s32.totalorder %s317, %s331
    %p333 = scmp.eq.s32.totalorder %s97, 0
    %p334 = por %p332, %p333
    %s336 = sadd.s32 %s335, 1
    %p339 = scmp.eq.s32.totalorder %s91, 1
    %p340 = scmp.ne.s32.totalorder %s335, %s337
    %p341 = scmp.eq.s32.totalorder %s91, 0
    %p342 = por %p340, %p341
    %p343 = scmp.ne.s32.totalorder %s335, %s337
    %p344 = scmp.eq.s32.totalorder %s96, 1
    %p345 = por %p343, %p344
    %p346 = scmp.ne.s32.totalorder %s337, %s338
    %p347 = scmp.eq.s32.totalorder %s96, 0
    %p348 = por %p346, %p347
    %p349 = scmp.ne.s32.totalorder %s337, %s338
    %p350 = scmp.eq.s32.totalorder %s97, 1
    %p351 = por %p349, %p350
    %p353 = scmp.ne.s32.totalorder %s338, %s352
    %p354 = scmp.eq.s32.totalorder %s97, 0
    %p355 = por %p353, %p354
    %s357 = sadd.s32 %s356, 1
    %p360 = scmp.eq.s32.totalorder %s91, 1
    %p361 = scmp.ne.s32.totalorder %s356, %s358
    %p362 = scmp.eq.s32.totalorder %s91, 0
    %p363 = por %p361, %p362
    %p364 = scmp.ne.s32.totalorder %s356, %s358
    %p365 = scmp.eq.s32.totalorder %s96, 1
    %p366 = por %p364, %p365
    %p367 = scmp.ne.s32.totalorder %s358, %s359
    %p368 = scmp.eq.s32.totalorder %s96, 0
    %p369 = por %p367, %p368
    %p370 = scmp.ne.s32.totalorder %s358, %s359
    %p371 = scmp.eq.s32.totalorder %s97, 1
    %p372 = por %p370, %p371
    %p374 = scmp.ne.s32.totalorder %s359, %s373
    %p375 = scmp.eq.s32.totalorder %s97, 0
    %p376 = por %p374, %p375
    %s378 = sadd.s32 %s377, 1
    %p381 = scmp.eq.s32.totalorder %s91, 1
    %p382 = scmp.ne.s32.totalorder %s377, %s379
    %p383 = scmp.eq.s32.totalorder %s91, 0
    %p384 = por %p382, %p383
    %p385 = scmp.ne.s32.totalorder %s377, %s379
    %p386 = scmp.eq.s32.totalorder %s96, 1
    %p387 = por %p385, %p386
    %p388 = scmp.ne.s32.totalorder %s379, %s380
    %p389 = scmp.eq.s32.totalorder %s96, 0
    %p390 = por %p388, %p389
    %p391 = scmp.ne.s32.totalorder %s379, %s380
    %p392 = scmp.eq.s32.totalorder %s97, 1
    %p393 = por %p391, %p392
    %p395 = scmp.ne.s32.totalorder %s380, %s394
    %p396 = scmp.eq.s32.totalorder %s97, 0
    %p397 = por %p395, %p396
    %s399 = sadd.s32 %s398, 1
    %p402 = scmp.eq.s32.totalorder %s91, 1
    %p403 = scmp.ne.s32.totalorder %s398, %s400
    %p404 = scmp.eq.s32.totalorder %s91, 0
    %p405 = por %p403, %p404
    %p406 = scmp.ne.s32.totalorder %s398, %s400
    %p407 = scmp.eq.s32.totalorder %s96, 1
    %p408 = por %p406, %p407
    %p409 = scmp.ne.s32.totalorder %s400, %s401
    %p410 = scmp.eq.s32.totalorder %s96, 0
    %p411 = por %p409, %p410
    %p412 = scmp.ne.s32.totalorder %s400, %s401
    %p413 = scmp.eq.s32.totalorder %s97, 1
    %p414 = por %p412, %p413
    %p416 = scmp.ne.s32.totalorder %s401, %s415
    %p417 = scmp.eq.s32.totalorder %s97, 0
    %p418 = por %p416, %p417
    %s420 = sadd.s32 %s419, 1
    %p423 = scmp.eq.s32.totalorder %s91, 1
    %p424 = scmp.ne.s32.totalorder %s419, %s421
    %p425 = scmp.eq.s32.totalorder %s91, 0
    %p426 = por %p424, %p425
    %p427 = scmp.ne.s32.totalorder %s419, %s421
    %p428 = scmp.eq.s32.totalorder %s96, 1
    %p429 = por %p427, %p428
    %p430 = scmp.ne.s32.totalorder %s421, %s422
    %p431 = scmp.eq.s32.totalorder %s96, 0
    %p432 = por %p430, %p431
    %p433 = scmp.ne.s32.totalorder %s421, %s422
    %p434 = scmp.eq.s32.totalorder %s97, 1
    %p435 = por %p433, %p434
    %p437 = scmp.ne.s32.totalorder %s422, %s436
    %p438 = scmp.eq.s32.totalorder %s97, 0
    %p439 = por %p437, %p438
    %s441 = sadd.s32 %s440, 1
    %p444 = scmp.eq.s32.totalorder %s91, 1
    %p445 = scmp.ne.s32.totalorder %s440, %s442
    %p446 = scmp.eq.s32.totalorder %s91, 0
    %p447 = por %p445, %p446
    %p448 = scmp.ne.s32.totalorder %s440, %s442
    %p449 = scmp.eq.s32.totalorder %s96, 1
    %p450 = por %p448, %p449
    %p451 = scmp.ne.s32.totalorder %s442, %s443
    %p452 = scmp.eq.s32.totalorder %s96, 0
    %p453 = por %p451, %p452
    %p454 = scmp.ne.s32.totalorder %s442, %s443
    %p455 = scmp.eq.s32.totalorder %s97, 1
    %p456 = por %p454, %p455
    %p458 = scmp.ne.s32.totalorder %s443, %s457
    %p459 = scmp.eq.s32.totalorder %s97, 0
    %p460 = por %p458, %p459
    %s462 = sadd.s32 %s461, 1
    %p465 = scmp.eq.s32.totalorder %s91, 1
    %p466 = scmp.ne.s32.totalorder %s461, %s463
    %p467 = scmp.eq.s32.totalorder %s91, 0
    %p468 = por %p466, %p467
    %p469 = scmp.ne.s32.totalorder %s461, %s463
    %p470 = scmp.eq.s32.totalorder %s96, 1
    %p471 = por %p469, %p470
    %p472 = scmp.ne.s32.totalorder %s463, %s464
    %p473 = scmp.eq.s32.totalorder %s96, 0
    %p474 = por %p472, %p473
    %p475 = scmp.ne.s32.totalorder %s463, %s464
    %p476 = scmp.eq.s32.totalorder %s97, 1
    %p477 = por %p475, %p476
    %p479 = scmp.ne.s32.totalorder %s464, %s478
    %p480 = scmp.eq.s32.totalorder %s97, 0
    %p481 = por %p479, %p480
    %s483 = sadd.s32 %s482, 1
    %p486 = scmp.eq.s32.totalorder %s91, 1
    %p487 = scmp.ne.s32.totalorder %s482, %s484
    %p488 = scmp.eq.s32.totalorder %s91, 0
    %p489 = por %p487, %p488
    %p490 = scmp.ne.s32.totalorder %s482, %s484
    %p491 = scmp.eq.s32.totalorder %s96, 1
    %p492 = por %p490, %p491
    %p493 = scmp.ne.s32.totalorder %s484, %s485
    %p494 = scmp.eq.s32.totalorder %s96, 0
    %p495 = por %p493, %p494
    %p496 = scmp.ne.s32.totalorder %s484, %s485
    %p497 = scmp.eq.s32.totalorder %s97, 1
    %p498 = por %p496, %p497
    %p500 = scmp.ne.s32.totalorder %s485, %s499
    %p501 = scmp.eq.s32.totalorder %s97, 0
    %p502 = por %p500, %p501
    %s504 = sadd.s32 %s503, 1
    %p507 = scmp.eq.s32.totalorder %s91, 1
    %p508 = scmp.ne.s32.totalorder %s503, %s505
    %p509 = scmp.eq.s32.totalorder %s91, 0
    %p510 = por %p508, %p509
    %p511 = scmp.ne.s32.totalorder %s503, %s505
    %p512 = scmp.eq.s32.totalorder %s96, 1
    %p513 = por %p511, %p512
    %p514 = scmp.ne.s32.totalorder %s505, %s506
    %p515 = scmp.eq.s32.totalorder %s96, 0
    %p516 = por %p514, %p515
    %p517 = scmp.ne.s32.totalorder %s505, %s506
    %p518 = scmp.eq.s32.totalorder %s97, 1
    %p519 = por %p517, %p518
    %p521 = scmp.ne.s32.totalorder %s506, %s520
    %p522 = scmp.eq.s32.totalorder %s97, 0
    %p523 = por %p521, %p522
    %s525 = sadd.s32 %s524, 1
    %p528 = scmp.eq.s32.totalorder %s91, 1
    %p529 = scmp.ne.s32.totalorder %s524, %s526
    %p530 = scmp.eq.s32.totalorder %s91, 0
    %p531 = por %p529, %p530
    %p532 = scmp.ne.s32.totalorder %s524, %s526
    %p533 = scmp.eq.s32.totalorder %s96, 1
    %p534 = por %p532, %p533
    %p535 = scmp.ne.s32.totalorder %s526, %s527
    %p536 = scmp.eq.s32.totalorder %s96, 0
    %p537 = por %p535, %p536
    %p538 = scmp.ne.s32.totalorder %s526, %s527
    %p539 = scmp.eq.s32.totalorder %s97, 1
    %p540 = por %p538, %p539
    %p542 = scmp.ne.s32.totalorder %s527, %s541
    %p543 = scmp.eq.s32.totalorder %s97, 0
    %p544 = por %p542, %p543
    %s546 = sadd.s32 %s545, 1
    %p549 = scmp.eq.s32.totalorder %s91, 1
    %p550 = scmp.ne.s32.totalorder %s545, %s547
    %p551 = scmp.eq.s32.totalorder %s91, 0
    %p552 = por %p550, %p551
    %p553 = scmp.ne.s32.totalorder %s545, %s547
    %p554 = scmp.eq.s32.totalorder %s96, 1
    %p555 = por %p553, %p554
    %p556 = scmp.ne.s32.totalorder %s547, %s548
    %p557 = scmp.eq.s32.totalorder %s96, 0
    %p558 = por %p556, %p557
    %p559 = scmp.ne.s32.totalorder %s547, %s548
    %p560 = scmp.eq.s32.totalorder %s97, 1
    %p561 = por %p559, %p560
    %p563 = scmp.ne.s32.totalorder %s548, %s562
    %p564 = scmp.eq.s32.totalorder %s97, 0
    %p565 = por %p563, %p564
    %s567 = sadd.s32 %s566, 1
    %p570 = scmp.eq.s32.totalorder %s91, 1
    %p571 = scmp.ne.s32.totalorder %s566, %s568
    %p572 = scmp.eq.s32.totalorder %s91, 0
    %p573 = por %p571, %p572
    %p574 = scmp.ne.s32.totalorder %s566, %s568
    %p575 = scmp.eq.s32.totalorder %s96, 1
    %p576 = por %p574, %p575
    %p577 = scmp.ne.s32.totalorder %s568, %s569
    %p578 = scmp.eq.s32.totalorder %s96, 0
    %p579 = por %p577, %p578
    %p580 = scmp.ne.s32.totalorder %s568, %s569
    %p581 = scmp.eq.s32.totalorder %s97, 1
    %p582 = por %p580, %p581
    %p584 = scmp.ne.s32.totalorder %s569, %s583
    %p585 = scmp.eq.s32.totalorder %s97, 0
    %p586 = por %p584, %p585
    %s588 = sadd.s32 %s587, 1
    %p591 = scmp.eq.s32.totalorder %s91, 1
    %p592 = scmp.ne.s32.totalorder %s587, %s589
    %p593 = scmp.eq.s32.totalorder %s91, 0
    %p594 = por %p592, %p593
    %p595 = scmp.ne.s32.totalorder %s587, %s589
    %p596 = scmp.eq.s32.totalorder %s96, 1
    %p597 = por %p595, %p596
    %p598 = scmp.ne.s32.totalorder %s589, %s590
    %p599 = scmp.eq.s32.totalorder %s96, 0
    %p600 = por %p598, %p599
    %p601 = scmp.ne.s32.totalorder %s589, %s590
    %p602 = scmp.eq.s32.totalorder %s97, 1
    %p603 = por %p601, %p602
    %p605 = scmp.ne.s32.totalorder %s590, %s604
    %p606 = scmp.eq.s32.totalorder %s97, 0
    %p607 = por %p605, %p606
    %s609 = sadd.s32 %s608, 1
    %p612 = scmp.eq.s32.totalorder %s91, 1
    %p613 = scmp.ne.s32.totalorder %s608, %s610
    %p614 = scmp.eq.s32.totalorder %s91, 0
    %p615 = por %p613, %p614
    %p616 = scmp.ne.s32.totalorder %s608, %s610
    %p617 = scmp.eq.s32.totalorder %s96, 1
    %p618 = por %p616, %p617
    %p619 = scmp.ne.s32.totalorder %s610, %s611
    %p620 = scmp.eq.s32.totalorder %s96, 0
    %p621 = por %p619, %p620
    %p622 = scmp.ne.s32.totalorder %s610, %s611
    %p623 = scmp.eq.s32.totalorder %s97, 1
    %p624 = por %p622, %p623
    %p626 = scmp.ne.s32.totalorder %s611, %s625
    %p627 = scmp.eq.s32.totalorder %s97, 0
    %p628 = por %p626, %p627
    %s630 = sadd.s32 %s629, 1
    %p633 = scmp.eq.s32.totalorder %s91, 1
    %p634 = scmp.ne.s32.totalorder %s629, %s631
    %p635 = scmp.eq.s32.totalorder %s91, 0
    %p636 = por %p634, %p635
    %p637 = scmp.ne.s32.totalorder %s629, %s631
    %p638 = scmp.eq.s32.totalorder %s96, 1
    %p639 = por %p637, %p638
    %p640 = scmp.ne.s32.totalorder %s631, %s632
    %p641 = scmp.eq.s32.totalorder %s96, 0
    %p642 = por %p640, %p641
    %p643 = scmp.ne.s32.totalorder %s631, %s632
    %p644 = scmp.eq.s32.totalorder %s97, 1
    %p645 = por %p643, %p644
    %p647 = scmp.ne.s32.totalorder %s632, %s646
    %p648 = scmp.eq.s32.totalorder %s97, 0
    %p649 = por %p647, %p648
    %s651 = sadd.s32 %s650, 1
    %p654 = scmp.eq.s32.totalorder %s91, 1
    %p655 = scmp.ne.s32.totalorder %s650, %s652
    %p656 = scmp.eq.s32.totalorder %s91, 0
    %p657 = por %p655, %p656
    %p658 = scmp.ne.s32.totalorder %s650, %s652
    %p659 = scmp.eq.s32.totalorder %s96, 1
    %p660 = por %p658, %p659
    %p661 = scmp.ne.s32.totalorder %s652, %s653
    %p662 = scmp.eq.s32.totalorder %s96, 0
    %p663 = por %p661, %p662
    %p664 = scmp.ne.s32.totalorder %s652, %s653
    %p665 = scmp.eq.s32.totalorder %s97, 1
    %p666 = por %p664, %p665
    %p668 = scmp.ne.s32.totalorder %s653, %s667
    %p669 = scmp.eq.s32.totalorder %s97, 0
    %p670 = por %p668, %p669
    %s672 = sadd.s32 %s671, 1
    %p675 = scmp.eq.s32.totalorder %s91, 1
    %p676 = scmp.ne.s32.totalorder %s671, %s673
    %p677 = scmp.eq.s32.totalorder %s91, 0
    %p678 = por %p676, %p677
    %p679 = scmp.ne.s32.totalorder %s671, %s673
    %p680 = scmp.eq.s32.totalorder %s96, 1
    %p681 = por %p679, %p680
    %p682 = scmp.ne.s32.totalorder %s673, %s674
    %p683 = scmp.eq.s32.totalorder %s96, 0
    %p684 = por %p682, %p683
    %p685 = scmp.ne.s32.totalorder %s673, %s674
    %p686 = scmp.eq.s32.totalorder %s97, 1
    %p687 = por %p685, %p686
    %p689 = scmp.ne.s32.totalorder %s674, %s688
    %p690 = scmp.eq.s32.totalorder %s97, 0
    %p691 = por %p689, %p690
    %s693 = sadd.s32 %s692, 1
    %p696 = scmp.eq.s32.totalorder %s91, 1
    %p697 = scmp.ne.s32.totalorder %s692, %s694
    %p698 = scmp.eq.s32.totalorder %s91, 0
    %p699 = por %p697, %p698
    %p700 = scmp.ne.s32.totalorder %s692, %s694
    %p701 = scmp.eq.s32.totalorder %s96, 1
    %p702 = por %p700, %p701
    %p703 = scmp.ne.s32.totalorder %s694, %s695
    %p704 = scmp.eq.s32.totalorder %s96, 0
    %p705 = por %p703, %p704
    %p706 = scmp.ne.s32.totalorder %s694, %s695
    %p707 = scmp.eq.s32.totalorder %s97, 1
    %p708 = por %p706, %p707
    %p710 = scmp.ne.s32.totalorder %s695, %s709
    %p711 = scmp.eq.s32.totalorder %s97, 0
    %p712 = por %p710, %p711
    %s714 = sadd.s32 %s713, 1
    %p717 = scmp.eq.s32.totalorder %s91, 1
    %p718 = scmp.ne.s32.totalorder %s713, %s715
    %p719 = scmp.eq.s32.totalorder %s91, 0
    %p720 = por %p718, %p719
    %p721 = scmp.ne.s32.totalorder %s713, %s715
    %p722 = scmp.eq.s32.totalorder %s96, 1
    %p723 = por %p721, %p722
    %p724 = scmp.ne.s32.totalorder %s715, %s716
    %p725 = scmp.eq.s32.totalorder %s96, 0
    %p726 = por %p724, %p725
    %p727 = scmp.ne.s32.totalorder %s715, %s716
    %p728 = scmp.eq.s32.totalorder %s97, 1
    %p729 = por %p727, %p728
    %p731 = scmp.ne.s32.totalorder %s716, %s730
    %p732 = scmp.eq.s32.totalorder %s97, 0
    %p733 = por %p731, %p732
    %s735 = sadd.s32 %s734, 1
    %p738 = scmp.eq.s32.totalorder %s91, 1
    %p739 = scmp.ne.s32.totalorder %s734, %s736
    %p740 = scmp.eq.s32.totalorder %s91, 0
    %p741 = por %p739, %p740
    %p742 = scmp.ne.s32.totalorder %s734, %s736
    %p743 = scmp.eq.s32.totalorder %s96, 1
    %p744 = por %p742, %p743
    %p745 = scmp.ne.s32.totalorder %s736, %s737
    %p746 = scmp.eq.s32.totalorder %s96, 0
    %p747 = por %p745, %p746
    %p748 = scmp.ne.s32.totalorder %s736, %s737
    %p749 = scmp.eq.s32.totalorder %s97, 1
    %p750 = por %p748, %p749
    %p752 = scmp.ne.s32.totalorder %s737, %s751
    %p753 = scmp.eq.s32.totalorder %s97, 0
    %p754 = por %p752, %p753
    %s756 = sadd.s32 %s755, 1
    %p759 = scmp.eq.s32.totalorder %s91, 1
    %p760 = scmp.ne.s32.totalorder %s755, %s757
    %p761 = scmp.eq.s32.totalorder %s91, 0
    %p762 = por %p760, %p761
    %p763 = scmp.ne.s32.totalorder %s755, %s757
    %p764 = scmp.eq.s32.totalorder %s96, 1
    %p765 = por %p763, %p764
    %p766 = scmp.ne.s32.totalorder %s757, %s758
    %p767 = scmp.eq.s32.totalorder %s96, 0
    %p768 = por %p766, %p767
    %p769 = scmp.ne.s32.totalorder %s757, %s758
    %p770 = scmp.eq.s32.totalorder %s97, 1
    %p771 = por %p769, %p770
    %p773 = scmp.ne.s32.totalorder %s758, %s772
    %p774 = scmp.eq.s32.totalorder %s97, 0
    %p775 = por %p773, %p774
    %s777 = sadd.s32 %s776, 1
    %p780 = scmp.eq.s32.totalorder %s91, 1
    %p781 = scmp.ne.s32.totalorder %s776, %s778
    %p782 = scmp.eq.s32.totalorder %s91, 0
    %p783 = por %p781, %p782
    %p784 = scmp.ne.s32.totalorder %s776, %s778
    %p785 = scmp.eq.s32.totalorder %s96, 1
    %p786 = por %p784, %p785
    %p787 = scmp.ne.s32.totalorder %s778, %s779
    %p788 = scmp.eq.s32.totalorder %s96, 0
    %p789 = por %p787, %p788
    %p790 = scmp.ne.s32.totalorder %s778, %s779
    %p791 = scmp.eq.s32.totalorder %s97, 1
    %p792 = por %p790, %p791
    %p794 = scmp.ne.s32.totalorder %s779, %s793
    %p795 = scmp.eq.s32.totalorder %s97, 0
    %p796 = por %p794, %p795
    %s798 = sadd.s32 %s797, 1
    %p801 = scmp.eq.s32.totalorder %s91, 1
    %p802 = scmp.ne.s32.totalorder %s797, %s799
    %p803 = scmp.eq.s32.totalorder %s91, 0
    %p804 = por %p802, %p803
    %p805 = scmp.ne.s32.totalorder %s797, %s799
    %p806 = scmp.eq.s32.totalorder %s96, 1
    %p807 = por %p805, %p806
    %p808 = scmp.ne.s32.totalorder %s799, %s800
    %p809 = scmp.eq.s32.totalorder %s96, 0
    %p810 = por %p808, %p809
    %p811 = scmp.ne.s32.totalorder %s799, %s800
    %p812 = scmp.eq.s32.totalorder %s97, 1
    %p813 = por %p811, %p812
    %p815 = scmp.ne.s32.totalorder %s800, %s814
    %p816 = scmp.eq.s32.totalorder %s97, 0
    %p817 = por %p815, %p816
    %s819 = sadd.s32 %s818, 1
    %p822 = scmp.eq.s32.totalorder %s91, 1
    %p823 = scmp.ne.s32.totalorder %s818, %s820
    %p824 = scmp.eq.s32.totalorder %s91, 0
    %p825 = por %p823, %p824
    %p826 = scmp.ne.s32.totalorder %s818, %s820
    %p827 = scmp.eq.s32.totalorder %s96, 1
    %p828 = por %p826, %p827
    %p829 = scmp.ne.s32.totalorder %s820, %s821
    %p830 = scmp.eq.s32.totalorder %s96, 0
    %p831 = por %p829, %p830
    %p832 = scmp.ne.s32.totalorder %s820, %s821
    %p833 = scmp.eq.s32.totalorder %s97, 1
    %p834 = por %p832, %p833
    %p836 = scmp.ne.s32.totalorder %s821, %s835
    %p837 = scmp.eq.s32.totalorder %s97, 0
    %p838 = por %p836, %p837
    %s840 = sadd.s32 %s839, 1
    %p843 = scmp.eq.s32.totalorder %s91, 1
    %p844 = scmp.ne.s32.totalorder %s839, %s841
    %p845 = scmp.eq.s32.totalorder %s91, 0
    %p846 = por %p844, %p845
    %p847 = scmp.ne.s32.totalorder %s839, %s841
    %p848 = scmp.eq.s32.totalorder %s96, 1
    %p849 = por %p847, %p848
    %p850 = scmp.ne.s32.totalorder %s841, %s842
    %p851 = scmp.eq.s32.totalorder %s96, 0
    %p852 = por %p850, %p851
    %p853 = scmp.ne.s32.totalorder %s841, %s842
    %p854 = scmp.eq.s32.totalorder %s97, 1
    %p855 = por %p853, %p854
    %p857 = scmp.ne.s32.totalorder %s842, %s856
    %p858 = scmp.eq.s32.totalorder %s97, 0
    %p859 = por %p857, %p858
    %s861 = sadd.s32 %s860, 1
    %p864 = scmp.eq.s32.totalorder %s91, 1
    %p865 = scmp.ne.s32.totalorder %s860, %s862
    %p866 = scmp.eq.s32.totalorder %s91, 0
    %p867 = por %p865, %p866
    %p868 = scmp.ne.s32.totalorder %s860, %s862
    %p869 = scmp.eq.s32.totalorder %s96, 1
    %p870 = por %p868, %p869
    %p871 = scmp.ne.s32.totalorder %s862, %s863
    %p872 = scmp.eq.s32.totalorder %s96, 0
    %p873 = por %p871, %p872
    %p874 = scmp.ne.s32.totalorder %s862, %s863
    %p875 = scmp.eq.s32.totalorder %s97, 1
    %p876 = por %p874, %p875
    %p878 = scmp.ne.s32.totalorder %s863, %s877
    %p879 = scmp.eq.s32.totalorder %s97, 0
    %p880 = por %p878, %p879
    %s882 = sadd.s32 %s881, 1
    %p885 = scmp.eq.s32.totalorder %s91, 1
    %p886 = scmp.ne.s32.totalorder %s881, %s883
    %p887 = scmp.eq.s32.totalorder %s91, 0
    %p888 = por %p886, %p887
    %p889 = scmp.ne.s32.totalorder %s881, %s883
    %p890 = scmp.eq.s32.totalorder %s96, 1
    %p891 = por %p889, %p890
    %p892 = scmp.ne.s32.totalorder %s883, %s884
    %p893 = scmp.eq.s32.totalorder %s96, 0
    %p894 = por %p892, %p893
    %p895 = scmp.ne.s32.totalorder %s883, %s884
    %p896 = scmp.eq.s32.totalorder %s97, 1
    %p897 = por %p895, %p896
    %p899 = scmp.ne.s32.totalorder %s884, %s898
    %p900 = scmp.eq.s32.totalorder %s97, 0
    %p901 = por %p899, %p900
    %s903 = sadd.s32 %s902, 1
    %p906 = scmp.eq.s32.totalorder %s91, 1
    %p907 = scmp.ne.s32.totalorder %s902, %s904
    %p908 = scmp.eq.s32.totalorder %s91, 0
    %p909 = por %p907, %p908
    %p910 = scmp.ne.s32.totalorder %s902, %s904
    %p911 = scmp.eq.s32.totalorder %s96, 1
    %p912 = por %p910, %p911
    %p913 = scmp.ne.s32.totalorder %s904, %s905
    %p914 = scmp.eq.s32.totalorder %s96, 0
    %p915 = por %p913, %p914
    %p916 = scmp.ne.s32.totalorder %s904, %s905
    %p917 = scmp.eq.s32.totalorder %s97, 1
    %p918 = por %p916, %p917
    %p920 = scmp.ne.s32.totalorder %s905, %s919
    %p921 = scmp.eq.s32.totalorder %s97, 0
    %p922 = por %p920, %p921
    %s924 = sadd.s32 %s923, 1
    %p927 = scmp.eq.s32.totalorder %s91, 1
    %p928 = scmp.ne.s32.totalorder %s923, %s925
    %p929 = scmp.eq.s32.totalorder %s91, 0
    %p930 = por %p928, %p929
    %p931 = scmp.ne.s32.totalorder %s923, %s925
    %p932 = scmp.eq.s32.totalorder %s96, 1
    %p933 = por %p931, %p932
    %p934 = scmp.ne.s32.totalorder %s925, %s926
    %p935 = scmp.eq.s32.totalorder %s96, 0
    %p936 = por %p934, %p935
    %p937 = scmp.ne.s32.totalorder %s925, %s926
    %p938 = scmp.eq.s32.totalorder %s97, 1
    %p939 = por %p937, %p938
    %p941 = scmp.ne.s32.totalorder %s926, %s940
    %p942 = scmp.eq.s32.totalorder %s97, 0
    %p943 = por %p941, %p942
    %s945 = sadd.s32 %s944, 1
    %p948 = scmp.eq.s32.totalorder %s91, 1
    %p949 = scmp.ne.s32.totalorder %s944, %s946
    %p950 = scmp.eq.s32.totalorder %s91, 0
    %p951 = por %p949, %p950
    %p952 = scmp.ne.s32.totalorder %s944, %s946
    %p953 = scmp.eq.s32.totalorder %s96, 1
    %p954 = por %p952, %p953
    %p955 = scmp.ne.s32.totalorder %s946, %s947
    %p956 = scmp.eq.s32.totalorder %s96, 0
    %p957 = por %p955, %p956
    %p958 = scmp.ne.s32.totalorder %s946, %s947
    %p959 = scmp.eq.s32.totalorder %s97, 1
    %p960 = por %p958, %p959
    %p962 = scmp.ne.s32.totalorder %s947, %s961
    %p963 = scmp.eq.s32.totalorder %s97, 0
    %p964 = por %p962, %p963
    %s965 = ssub.s32 %s91, %s98
    %p966 = scmp.eq.s32.totalorder %s965, 0
    %s968 = sadd.s32 %s967, 1
    %s969 = scalar_select %p966, %s967, %s968
    %p972 = pneg %p966
    %p973 = scmp.eq.s32.totalorder %s91, 1
    %p974 = por %p972, %p973
    %p975 = scmp.ne.s32.totalorder %s967, %s970
    %p976 = scmp.eq.s32.totalorder %s91, 0
    %p977 = por %p975, %p976
    %p978 = scmp.ne.s32.totalorder %s967, %s970
    %p979 = scmp.eq.s32.totalorder %s96, 1
    %p980 = por %p978, %p979
    %p981 = scmp.ne.s32.totalorder %s970, %s971
    %p982 = scmp.eq.s32.totalorder %s96, 0
    %p983 = por %p981, %p982
    %p984 = scmp.ne.s32.totalorder %s970, %s971
    %p985 = scmp.eq.s32.totalorder %s97, 1
    %p986 = por %p984, %p985
    %p988 = scmp.ne.s32.totalorder %s971, %s987
    %p989 = scmp.eq.s32.totalorder %s97, 0
    %p990 = por %p988, %p989
    %p991 = scmp.le.s32.totalorder 1, %s91
    %p992 = scmp.lt.s32.totalorder %s91, 3
    %p993 = pnand %p991, %p992
    %p994 = pneg %p993
    // Predicated region
    $region9: #{risk_pred_unet.1} parent=5 // pred_check
      _
    $region10: #{risk_pred_unet.1} parent=5 // pred_check_branch
      %996 = sbr.rel (%p993) target = $region12
    $region11: #{risk_pred_unet.1} parent=5 // pred_region
      %s997 = ssub.s32 %s91, 1
      // Predicated region
      $region13: #{risk_pred_unet.1} parent=11 // pred_check
        %p998 = pneg %p138
      $region14: #{risk_pred_unet.1} parent=11 // pred_check_branch
        %1000 = sbr.rel (%p998) target = $region16
      $region15: #{risk_pred_unet.1} parent=11 // pred_region
        _
      $region16: #{risk_pred_unet.1} parent=11 // pred_fallthru
        _
      // Predicated region
      $region17: #{risk_pred_unet.1} parent=11 // pred_check
        %p1001 = pneg %p159
      $region18: #{risk_pred_unet.1} parent=11 // pred_check_branch
        %1003 = sbr.rel (%p1001) target = $region20
      $region19: #{risk_pred_unet.1} parent=11 // pred_region
        _
      $region20: #{risk_pred_unet.1} parent=11 // pred_fallthru
        _
      // Predicated region
      $region21: #{risk_pred_unet.1} parent=11 // pred_check
        %p1004 = pneg %p180
      $region22: #{risk_pred_unet.1} parent=11 // pred_check_branch
        %1006 = sbr.rel (%p1004) target = $region24
      $region23: #{risk_pred_unet.1} parent=11 // pred_region
        _
      $region24: #{risk_pred_unet.1} parent=11 // pred_fallthru
        _
      // Predicated region
      $region25: #{risk_pred_unet.1} parent=11 // pred_check
        %p1007 = pneg %p201
      $region26: #{risk_pred_unet.1} parent=11 // pred_check_branch
        %1009 = sbr.rel (%p1007) target = $region28
      $region27: #{risk_pred_unet.1} parent=11 // pred_region
        _
      $region28: #{risk_pred_unet.1} parent=11 // pred_fallthru
        _
      // Predicated region
      $region29: #{risk_pred_unet.1} parent=11 // pred_check
        %p1010 = pneg %p222
      $region30: #{risk_pred_unet.1} parent=11 // pred_check_branch
        %1012 = sbr.rel (%p1010) target = $region32
      $region31: #{risk_pred_unet.1} parent=11 // pred_region
        _
      $region32: #{risk_pred_unet.1} parent=11 // pred_fallthru
        _
      // Predicated region
      $region33: #{risk_pred_unet.1} parent=11 // pred_check
        %p1013 = pneg %p243
      $region34: #{risk_pred_unet.1} parent=11 // pred_check_branch
        %1015 = sbr.rel (%p1013) target = $region36
      $region35: #{risk_pred_unet.1} parent=11 // pred_region
        _
      $region36: #{risk_pred_unet.1} parent=11 // pred_fallthru
        _
      // Predicated region
      $region37: #{risk_pred_unet.1} parent=11 // pred_check
        %p1016 = pneg %p264
      $region38: #{risk_pred_unet.1} parent=11 // pred_check_branch
        %1018 = sbr.rel (%p1016) target = $region40
      $region39: #{risk_pred_unet.1} parent=11 // pred_region
        _
      $region40: #{risk_pred_unet.1} parent=11 // pred_fallthru
        _
      // Predicated region
      $region41: #{risk_pred_unet.1} parent=11 // pred_check
        %p1019 = pneg %p285
      $region42: #{risk_pred_unet.1} parent=11 // pred_check_branch
        %1021 = sbr.rel (%p1019) target = $region44
      $region43: #{risk_pred_unet.1} parent=11 // pred_region
        _
      $region44: #{risk_pred_unet.1} parent=11 // pred_fallthru
        _
      // Predicated region
      $region45: #{risk_pred_unet.1} parent=11 // pred_check
        %p1022 = pneg %p306
      $region46: #{risk_pred_unet.1} parent=11 // pred_check_branch
        %1024 = sbr.rel (%p1022) target = $region48
      $region47: #{risk_pred_unet.1} parent=11 // pred_region
        _
      $region48: #{risk_pred_unet.1} parent=11 // pred_fallthru
        _
      // Predicated region
      $region49: #{risk_pred_unet.1} parent=11 // pred_check
        %p1025 = pneg %p327
      $region50: #{risk_pred_unet.1} parent=11 // pred_check_branch
        %1027 = sbr.rel (%p1025) target = $region52
      $region51: #{risk_pred_unet.1} parent=11 // pred_region
        _
      $region52: #{risk_pred_unet.1} parent=11 // pred_fallthru
        _
      // Predicated region
      $region53: #{risk_pred_unet.1} parent=11 // pred_check
        %p1028 = pneg %p348
      $region54: #{risk_pred_unet.1} parent=11 // pred_check_branch
        %1030 = sbr.rel (%p1028) target = $region56
      $region55: #{risk_pred_unet.1} parent=11 // pred_region
        _
      $region56: #{risk_pred_unet.1} parent=11 // pred_fallthru
        _
      // Predicated region
      $region57: #{risk_pred_unet.1} parent=11 // pred_check
        %p1031 = pneg %p369
      $region58: #{risk_pred_unet.1} parent=11 // pred_check_branch
        %1033 = sbr.rel (%p1031) target = $region60
      $region59: #{risk_pred_unet.1} parent=11 // pred_region
        _
      $region60: #{risk_pred_unet.1} parent=11 // pred_fallthru
        _
      // Predicated region
      $region61: #{risk_pred_unet.1} parent=11 // pred_check
        %p1034 = pneg %p390
      $region62: #{risk_pred_unet.1} parent=11 // pred_check_branch
        %1036 = sbr.rel (%p1034) target = $region64
      $region63: #{risk_pred_unet.1} parent=11 // pred_region
        _
      $region64: #{risk_pred_unet.1} parent=11 // pred_fallthru
        _
      // Predicated region
      $region65: #{risk_pred_unet.1} parent=11 // pred_check
        %p1037 = pneg %p411
      $region66: #{risk_pred_unet.1} parent=11 // pred_check_branch
        %1039 = sbr.rel (%p1037) target = $region68
      $region67: #{risk_pred_unet.1} parent=11 // pred_region
        _
      $region68: #{risk_pred_unet.1} parent=11 // pred_fallthru
        _
      // Predicated region
      $region69: #{risk_pred_unet.1} parent=11 // pred_check
        %p1040 = pneg %p432
      $region70: #{risk_pred_unet.1} parent=11 // pred_check_branch
        %1042 = sbr.rel (%p1040) target = $region72
      $region71: #{risk_pred_unet.1} parent=11 // pred_region
        _
      $region72: #{risk_pred_unet.1} parent=11 // pred_fallthru
        _
      // Predicated region
      $region73: #{risk_pred_unet.1} parent=11 // pred_check
        %p1043 = pneg %p453
      $region74: #{risk_pred_unet.1} parent=11 // pred_check_branch
        %1045 = sbr.rel (%p1043) target = $region76
      $region75: #{risk_pred_unet.1} parent=11 // pred_region
        _
      $region76: #{risk_pred_unet.1} parent=11 // pred_fallthru
        _
      // Predicated region
      $region77: #{risk_pred_unet.1} parent=11 // pred_check
        %p1046 = pneg %p474
      $region78: #{risk_pred_unet.1} parent=11 // pred_check_branch
        %1048 = sbr.rel (%p1046) target = $region80
      $region79: #{risk_pred_unet.1} parent=11 // pred_region
        _
      $region80: #{risk_pred_unet.1} parent=11 // pred_fallthru
        _
      // Predicated region
      $region81: #{risk_pred_unet.1} parent=11 // pred_check
        %p1049 = pneg %p495
      $region82: #{risk_pred_unet.1} parent=11 // pred_check_branch
        %1051 = sbr.rel (%p1049) target = $region84
      $region83: #{risk_pred_unet.1} parent=11 // pred_region
        _
      $region84: #{risk_pred_unet.1} parent=11 // pred_fallthru
        _
      // Predicated region
      $region85: #{risk_pred_unet.1} parent=11 // pred_check
        %p1052 = pneg %p516
      $region86: #{risk_pred_unet.1} parent=11 // pred_check_branch
        %1054 = sbr.rel (%p1052) target = $region88
      $region87: #{risk_pred_unet.1} parent=11 // pred_region
        _
      $region88: #{risk_pred_unet.1} parent=11 // pred_fallthru
        _
      // Predicated region
      $region89: #{risk_pred_unet.1} parent=11 // pred_check
        %p1055 = pneg %p537
      $region90: #{risk_pred_unet.1} parent=11 // pred_check_branch
        %1057 = sbr.rel (%p1055) target = $region92
      $region91: #{risk_pred_unet.1} parent=11 // pred_region
        _
      $region92: #{risk_pred_unet.1} parent=11 // pred_fallthru
        _
      // Predicated region
      $region93: #{risk_pred_unet.1} parent=11 // pred_check
        %p1058 = pneg %p558
      $region94: #{risk_pred_unet.1} parent=11 // pred_check_branch
        %1060 = sbr.rel (%p1058) target = $region96
      $region95: #{risk_pred_unet.1} parent=11 // pred_region
        _
      $region96: #{risk_pred_unet.1} parent=11 // pred_fallthru
        _
      // Predicated region
      $region97: #{risk_pred_unet.1} parent=11 // pred_check
        %p1061 = pneg %p579
      $region98: #{risk_pred_unet.1} parent=11 // pred_check_branch
        %1063 = sbr.rel (%p1061) target = $region100
      $region99: #{risk_pred_unet.1} parent=11 // pred_region
        _
      $region100: #{risk_pred_unet.1} parent=11 // pred_fallthru
        _
      // Predicated region
      $region101: #{risk_pred_unet.1} parent=11 // pred_check
        %p1064 = pneg %p600
      $region102: #{risk_pred_unet.1} parent=11 // pred_check_branch
        %1066 = sbr.rel (%p1064) target = $region104
      $region103: #{risk_pred_unet.1} parent=11 // pred_region
        _
      $region104: #{risk_pred_unet.1} parent=11 // pred_fallthru
        _
      // Predicated region
      $region105: #{risk_pred_unet.1} parent=11 // pred_check
        %p1067 = pneg %p621
      $region106: #{risk_pred_unet.1} parent=11 // pred_check_branch
        %1069 = sbr.rel (%p1067) target = $region108
      $region107: #{risk_pred_unet.1} parent=11 // pred_region
        _
      $region108: #{risk_pred_unet.1} parent=11 // pred_fallthru
        _
      // Predicated region
      $region109: #{risk_pred_unet.1} parent=11 // pred_check
        %p1070 = pneg %p642
      $region110: #{risk_pred_unet.1} parent=11 // pred_check_branch
        %1072 = sbr.rel (%p1070) target = $region112
      $region111: #{risk_pred_unet.1} parent=11 // pred_region
        _
      $region112: #{risk_pred_unet.1} parent=11 // pred_fallthru
        _
      // Predicated region
      $region113: #{risk_pred_unet.1} parent=11 // pred_check
        %p1073 = pneg %p663
      $region114: #{risk_pred_unet.1} parent=11 // pred_check_branch
        %1075 = sbr.rel (%p1073) target = $region116
      $region115: #{risk_pred_unet.1} parent=11 // pred_region
        _
      $region116: #{risk_pred_unet.1} parent=11 // pred_fallthru
        _
      // Predicated region
      $region117: #{risk_pred_unet.1} parent=11 // pred_check
        %p1076 = pneg %p684
      $region118: #{risk_pred_unet.1} parent=11 // pred_check_branch
        %1078 = sbr.rel (%p1076) target = $region120
      $region119: #{risk_pred_unet.1} parent=11 // pred_region
        _
      $region120: #{risk_pred_unet.1} parent=11 // pred_fallthru
        _
      // Predicated region
      $region121: #{risk_pred_unet.1} parent=11 // pred_check
        %p1079 = pneg %p705
      $region122: #{risk_pred_unet.1} parent=11 // pred_check_branch
        %1081 = sbr.rel (%p1079) target = $region124
      $region123: #{risk_pred_unet.1} parent=11 // pred_region
        _
      $region124: #{risk_pred_unet.1} parent=11 // pred_fallthru
        _
      // Predicated region
      $region125: #{risk_pred_unet.1} parent=11 // pred_check
        %p1082 = pneg %p726
      $region126: #{risk_pred_unet.1} parent=11 // pred_check_branch
        %1084 = sbr.rel (%p1082) target = $region128
      $region127: #{risk_pred_unet.1} parent=11 // pred_region
        _
      $region128: #{risk_pred_unet.1} parent=11 // pred_fallthru
        _
      // Predicated region
      $region129: #{risk_pred_unet.1} parent=11 // pred_check
        %p1085 = pneg %p747
      $region130: #{risk_pred_unet.1} parent=11 // pred_check_branch
        %1087 = sbr.rel (%p1085) target = $region132
      $region131: #{risk_pred_unet.1} parent=11 // pred_region
        _
      $region132: #{risk_pred_unet.1} parent=11 // pred_fallthru
        _
      // Predicated region
      $region133: #{risk_pred_unet.1} parent=11 // pred_check
        %p1088 = pneg %p768
      $region134: #{risk_pred_unet.1} parent=11 // pred_check_branch
        %1090 = sbr.rel (%p1088) target = $region136
      $region135: #{risk_pred_unet.1} parent=11 // pred_region
        _
      $region136: #{risk_pred_unet.1} parent=11 // pred_fallthru
        _
      // Predicated region
      $region137: #{risk_pred_unet.1} parent=11 // pred_check
        %p1091 = pneg %p789
      $region138: #{risk_pred_unet.1} parent=11 // pred_check_branch
        %1093 = sbr.rel (%p1091) target = $region140
      $region139: #{risk_pred_unet.1} parent=11 // pred_region
        _
      $region140: #{risk_pred_unet.1} parent=11 // pred_fallthru
        _
      // Predicated region
      $region141: #{risk_pred_unet.1} parent=11 // pred_check
        %p1094 = pneg %p810
      $region142: #{risk_pred_unet.1} parent=11 // pred_check_branch
        %1096 = sbr.rel (%p1094) target = $region144
      $region143: #{risk_pred_unet.1} parent=11 // pred_region
        _
      $region144: #{risk_pred_unet.1} parent=11 // pred_fallthru
        _
      // Predicated region
      $region145: #{risk_pred_unet.1} parent=11 // pred_check
        %p1097 = pneg %p831
      $region146: #{risk_pred_unet.1} parent=11 // pred_check_branch
        %1099 = sbr.rel (%p1097) target = $region148
      $region147: #{risk_pred_unet.1} parent=11 // pred_region
        _
      $region148: #{risk_pred_unet.1} parent=11 // pred_fallthru
        _
      // Predicated region
      $region149: #{risk_pred_unet.1} parent=11 // pred_check
        %p1100 = pneg %p852
      $region150: #{risk_pred_unet.1} parent=11 // pred_check_branch
        %1102 = sbr.rel (%p1100) target = $region152
      $region151: #{risk_pred_unet.1} parent=11 // pred_region
        _
      $region152: #{risk_pred_unet.1} parent=11 // pred_fallthru
        _
      // Predicated region
      $region153: #{risk_pred_unet.1} parent=11 // pred_check
        %p1103 = pneg %p873
      $region154: #{risk_pred_unet.1} parent=11 // pred_check_branch
        %1105 = sbr.rel (%p1103) target = $region156
      $region155: #{risk_pred_unet.1} parent=11 // pred_region
        _
      $region156: #{risk_pred_unet.1} parent=11 // pred_fallthru
        _
      // Predicated region
      $region157: #{risk_pred_unet.1} parent=11 // pred_check
        %p1106 = pneg %p894
      $region158: #{risk_pred_unet.1} parent=11 // pred_check_branch
        %1108 = sbr.rel (%p1106) target = $region160
      $region159: #{risk_pred_unet.1} parent=11 // pred_region
        _
      $region160: #{risk_pred_unet.1} parent=11 // pred_fallthru
        _
      // Predicated region
      $region161: #{risk_pred_unet.1} parent=11 // pred_check
        %p1109 = pneg %p915
      $region162: #{risk_pred_unet.1} parent=11 // pred_check_branch
        %1111 = sbr.rel (%p1109) target = $region164
      $region163: #{risk_pred_unet.1} parent=11 // pred_region
        _
      $region164: #{risk_pred_unet.1} parent=11 // pred_fallthru
        _
      // Predicated region
      $region165: #{risk_pred_unet.1} parent=11 // pred_check
        %p1112 = pneg %p936
      $region166: #{risk_pred_unet.1} parent=11 // pred_check_branch
        %1114 = sbr.rel (%p1112) target = $region168
      $region167: #{risk_pred_unet.1} parent=11 // pred_region
        _
      $region168: #{risk_pred_unet.1} parent=11 // pred_fallthru
        _
      // Predicated region
      $region169: #{risk_pred_unet.1} parent=11 // pred_check
        %p1115 = pneg %p957
      $region170: #{risk_pred_unet.1} parent=11 // pred_check_branch
        %1117 = sbr.rel (%p1115) target = $region172
      $region171: #{risk_pred_unet.1} parent=11 // pred_region
        _
      $region172: #{risk_pred_unet.1} parent=11 // pred_fallthru
        _
    $region12: #{risk_pred_unet.1} parent=5 // pred_fallthru
      _
    %p1118 = scmp.lt.s32.totalorder %s91, 2
    // Predicated region
    $region173: #{risk_pred_unet.1} parent=5 // pred_check
      %p1119 = pneg %p1118
    $region174: #{risk_pred_unet.1} parent=5 // pred_check_branch
      %1121 = sbr.rel (%p1119) target = $region176
    $region175: #{risk_pred_unet.1} parent=5 // pred_region
      // Predicated region
      $region177: #{risk_pred_unet.1} parent=175 // pred_check
        %p1122 = pneg %p111
      $region178: #{risk_pred_unet.1} parent=175 // pred_check_branch
        %1124 = sbr.rel (%p1122) target = $region180
      $region179: #{risk_pred_unet.1} parent=175 // pred_region
        %p1125 = scmp.lt.s32.totalorder %s91, 1
        %s1126 = scalar_select %p1125, %s91, 1
        %s1127 = smul.addr %s1126, 2
        %s1128 = smul.addr %s1127, 8
        %s1129 = scalar_lea.vmem %s1, %s1128
      $region180: #{risk_pred_unet.1} parent=175 // pred_fallthru
        _
    $region176: #{risk_pred_unet.1} parent=5 // pred_fallthru
      _
    %p1130 = scmp.le.s32.totalorder 1, %s91
    %p1131 = scmp.lt.s32.totalorder %s91, 3
    %p1132 = pnand %p1130, %p1131
    %p1133 = pneg %p1132
    // Predicated region
    $region181: #{risk_pred_unet.1} parent=5 // pred_check
      _
    $region182: #{risk_pred_unet.1} parent=5 // pred_check_branch
      %1135 = sbr.rel (%p1132) target = $region184
    $region183: #{risk_pred_unet.1} parent=5 // pred_region
      %s1136 = ssub.s32 %s91, 1
      %p1137 = scmp.lt.s32.totalorder %s96, 1
      %s1138 = scalar_select %p1137, %s96, 1
      %s1139 = smul.addr %s1138, 2
      %s1140 = smul.addr %s1139, 8
      %s1141 = scalar_lea.vmem %s1, %s1140
      %p1142 = pneg %p117
      %p1143 = pneg %p114
      %p1144 = pneg %p138
      %p1145 = pneg %p135
      %p1146 = pneg %p159
      %p1147 = pneg %p156
      %p1148 = pneg %p180
      %p1149 = pneg %p177
      %p1150 = pneg %p201
      %p1151 = pneg %p198
      %p1152 = pneg %p222
      %p1153 = pneg %p219
      %p1154 = pneg %p243
      %p1155 = pneg %p240
      %p1156 = pneg %p264
      %p1157 = pneg %p261
      %p1158 = pneg %p285
      %p1159 = pneg %p282
      %p1160 = pneg %p306
      %p1161 = pneg %p303
      %p1162 = pneg %p327
      %p1163 = pneg %p324
      %p1164 = pneg %p348
      %p1165 = pneg %p345
      %p1166 = pneg %p369
      %p1167 = pneg %p366
      %p1168 = pneg %p390
      %p1169 = pneg %p387
      %p1170 = pneg %p411
      %p1171 = pneg %p408
      %p1172 = pneg %p432
      %p1173 = pneg %p429
      %p1174 = pneg %p453
      %p1175 = pneg %p450
      %p1176 = pneg %p474
      %p1177 = pneg %p471
      %p1178 = pneg %p495
      %p1179 = pneg %p492
      %p1180 = pneg %p516
      %p1181 = pneg %p513
      %p1182 = pneg %p537
      %p1183 = pneg %p534
      %p1184 = pneg %p558
      %p1185 = pneg %p555
      %p1186 = pneg %p579
      %p1187 = pneg %p576
      %p1188 = pneg %p600
      %p1189 = pneg %p597
      %p1190 = pneg %p621
      %p1191 = pneg %p618
      %p1192 = pneg %p642
      %p1193 = pneg %p639
      %p1194 = pneg %p663
      %p1195 = pneg %p660
      %p1196 = pneg %p684
      %p1197 = pneg %p681
      %p1198 = pneg %p705
      %p1199 = pneg %p702
      %p1200 = pneg %p726
      %p1201 = pneg %p723
      %p1202 = pneg %p747
      %p1203 = pneg %p744
      %p1204 = pneg %p768
      %p1205 = pneg %p765
      %p1206 = pneg %p789
      %p1207 = pneg %p786
      %p1208 = pneg %p810
      %p1209 = pneg %p807
      %p1210 = pneg %p831
      %p1211 = pneg %p828
      %p1212 = pneg %p852
      %p1213 = pneg %p849
      %p1214 = pneg %p873
      %p1215 = pneg %p870
      %p1216 = pneg %p894
      %p1217 = pneg %p891
      %p1218 = pneg %p915
      %p1219 = pneg %p912
      %p1220 = pneg %p936
      %p1221 = pneg %p933
      %p1222 = pneg %p957
      %p1223 = pneg %p954
      %p1224 = pneg %p983
      %p1225 = pneg %p980
      %p1226 = scmp.lt.s32.totalorder %s96, 1
      %s1227 = scalar_select %p1226, %s96, 1
      %s1228 = smul.addr %s1227, 2
      %s1229 = scalar_lea.vmem %s83, %s1228
      %p1230 = scmp.lt.s32.totalorder %s96, 1
      %s1231 = scalar_select %p1230, %s96, 1
      %s1232 = smul.addr %s1231, 2
      %s1233 = smul.addr %s1232, 8
      %s1234 = scalar_lea.vmem %s1, %s1233
      %p1235 = scmp.lt.s32.totalorder %s96, 1
      %s1236 = scalar_select %p1235, %s96, 1
      %s1237 = smul.addr %s1236, 2
      %s1238 = scalar_lea.vmem %s83, %s1237
      %v1240 = vld [vmem:[%s1234] sm:$0xff]
      %v1241 = vld [vmem:[%s1234 + $0x8] sm:$0xff]
      %1242 = vrot.lane.b32.xlu0 %v1240, 17
      %v1243 = vpop.permute.xlu0 %1242
      %1244 = vrot.lane.b32.xlu0 %v1241, 17
      %v1245 = vpop.permute.xlu0 %1244
      %v1246 = vlaneseq
      %v1247 = vand.u32 %v1246, 127
      %vm1248 = vcmp.lt.s32.totalorder %v1247, 17
      %v1249 = vsel %vm1248, %v1243, %v1245
      %v1250 = vsel %vm1248, %v1245, %v1243
      %v1251 = vld [vmem:[%s63] sm:$0x3]
      %v1253 = vperm.slane %v1251, 0
      %v1254 = vperm.slane %v1251, 1
      %v1257 = vmul.f32 %v1250, %v1253
      %v1258 = vmul.f32 %v1249, %v1254
      %1259 = vrot.lane.b32.xlu0 %v1240, 16
      %v1260 = vpop.permute.xlu0 %1259
      %1261 = vrot.lane.b32.xlu0 %v1241, 16
      %v1262 = vpop.permute.xlu0 %1261
      %vm1263 = vcmp.lt.s32.totalorder %v1247, 16
      %v1264 = vsel %vm1263, %v1260, %v1262
      %v1265 = vsel %vm1263, %v1262, %v1260
      %s1266 = scalar_lea.vmem %s63, 2
      %v1267 = vld [vmem:[%s1266] sm:$0x3]
      %v1269 = vperm.slane %v1267, 0
      %v1270 = vperm.slane %v1267, 1
      %v1273 = vmul.f32 %v1265, %v1269
      %v1274 = vmul.f32 %v1264, %v1270
      %1275 = vrot.lane.b32.xlu0 %v1240, 15
      %v1276 = vpop.permute.xlu0 %1275
      %1277 = vrot.lane.b32.xlu0 %v1241, 15
      %v1278 = vpop.permute.xlu0 %1277
      %vm1279 = vcmp.lt.s32.totalorder %v1247, 15
      %v1280 = vsel %vm1279, %v1276, %v1278
      %v1281 = vsel %vm1279, %v1278, %v1276
      %s1282 = scalar_lea.vmem %s63, 4
      %v1283 = vld [vmem:[%s1282] sm:$0x3]
      %v1285 = vperm.slane %v1283, 0
      %v1286 = vperm.slane %v1283, 1
      %v1289 = vmul.f32 %v1281, %v1285
      %v1290 = vmul.f32 %v1280, %v1286
      %1291 = vrot.lane.b32.xlu0 %v1240, 1
      %v1292 = vpop.permute.xlu0 %1291
      %1293 = vrot.lane.b32.xlu0 %v1241, 1
      %v1294 = vpop.permute.xlu0 %1293
      %vm1295 = vcmp.lt.s32.totalorder %v1247, 1
      %v1296 = vsel %vm1295, %v1292, %v1294
      %v1297 = vsel %vm1295, %v1294, %v1292
      %s1298 = scalar_lea.vmem %s63, 6
      %v1299 = vld [vmem:[%s1298] sm:$0x3]
      %v1301 = vperm.slane %v1299, 0
      %v1302 = vperm.slane %v1299, 1
      %v1305 = vmul.f32 %v1297, %v1301
      %v1306 = vmul.f32 %v1296, %v1302
      %1307 = vrot.lane.b32.xlu0 %v1240, 127
      %v1308 = vpop.permute.xlu0 %1307
      %1309 = vrot.lane.b32.xlu0 %v1241, 127
      %v1310 = vpop.permute.xlu0 %1309
      %vm1311 = vcmp.lt.s32.totalorder %v1247, 127
      %v1312 = vsel %vm1311, %v1308, %v1310
      %v1313 = vsel %vm1311, %v1310, %v1308
      %s1314 = scalar_lea.vmem %s63, 10
      %v1315 = vld [vmem:[%s1314] sm:$0x3]
      %v1317 = vperm.slane %v1315, 0
      %v1318 = vperm.slane %v1315, 1
      %v1321 = vmul.f32 %v1312, %v1317
      %v1322 = vmul.f32 %v1313, %v1318
      %1323 = vrot.lane.b32.xlu0 %v1240, 113
      %v1324 = vpop.permute.xlu0 %1323
      %1325 = vrot.lane.b32.xlu0 %v1241, 113
      %v1326 = vpop.permute.xlu0 %1325
      %vm1327 = vcmp.lt.s32.totalorder %v1247, 113
      %v1328 = vsel %vm1327, %v1324, %v1326
      %v1329 = vsel %vm1327, %v1326, %v1324
      %s1330 = scalar_lea.vmem %s63, 12
      %v1331 = vld [vmem:[%s1330] sm:$0x3]
      %v1333 = vperm.slane %v1331, 0
      %v1334 = vperm.slane %v1331, 1
      %v1337 = vmul.f32 %v1328, %v1333
      %v1338 = vmul.f32 %v1329, %v1334
      %1339 = vrot.lane.b32.xlu0 %v1240, 112
      %v1340 = vpop.permute.xlu0 %1339
      %1341 = vrot.lane.b32.xlu0 %v1241, 112
      %v1342 = vpop.permute.xlu0 %1341
      %vm1343 = vcmp.lt.s32.totalorder %v1247, 112
      %v1344 = vsel %vm1343, %v1340, %v1342
      %v1345 = vsel %vm1343, %v1342, %v1340
      %s1346 = scalar_lea.vmem %s63, 14
      %v1347 = vld [vmem:[%s1346] sm:$0x3]
      %v1349 = vperm.slane %v1347, 0
      %v1350 = vperm.slane %v1347, 1
      %v1353 = vmul.f32 %v1344, %v1349
      %v1354 = vmul.f32 %v1345, %v1350
      %1355 = vrot.lane.b32.xlu0 %v1240, 111
      %v1356 = vpop.permute.xlu0 %1355
      %1357 = vrot.lane.b32.xlu0 %v1241, 111
      %v1358 = vpop.permute.xlu0 %1357
      %vm1359 = vcmp.lt.s32.totalorder %v1247, 111
      %v1360 = vsel %vm1359, %v1356, %v1358
      %v1361 = vsel %vm1359, %v1358, %v1356
      %s1362 = scalar_lea.vmem %s63, 16
      %v1363 = vld [vmem:[%s1362] sm:$0x3]
      %v1365 = vperm.slane %v1363, 0
      %v1366 = vperm.slane %v1363, 1
      %v1369 = vmul.f32 %v1360, %v1365
      %v1370 = vmul.f32 %v1361, %v1366
      %v1371 = vpack.c.bf16 %v1273, %v1257
      %v1372 = vpack.c.bf16 %v1274, %v1258
      %v1373 = vpack.c.bf16 %v1305, %v1289
      %v1374 = vpack.c.bf16 %v1306, %v1290
      %v1375 = vpack.c.bf16 %v1321, %v1240
      %v1376 = vpack.c.bf16 %v1322, %v1241
      %v1377 = vpack.c.bf16 %v1353, %v1337
      %v1378 = vpack.c.bf16 %v1354, %v1338
      %v1379 = vpack.c.bf16 %v1369, %v1369
      %v1380 = vpack.c.bf16 %v1370, %v1370
      %v1381 = vld [vmem:[%s3] sm:$0xf]
      %v1382 = vld [vmem:[%s5] sm:$0xff]
      %1384 = vset.pattern.permute.xlu0 0
      %1385 = vperm.xlu0 %1384, %v1382
      %v1386 = vpop.permute.xlu0 %1385
      %vm1388 = vcmask 588800
      %v1390 = vsel %vm1388, %v1381, 0
      %vm1392 = vcmask 1043456
      %v1394 = vsel %vm1392, %v1379, 0
      %v1397 = vsel %vm1392, %v1380, 0
      %1399 = vmatpush.bf16.msra.mxu0 0
      %1400 = vmatpush.bf16.msra.mxu0 0
      %1401 = vmatpush.bf16.msra.mxu0 0
      %1402 = vmatpush.bf16.msra.mxu0 %v1394
      %1403 = vmatpush.bf16.msra.mxu0 %v1377
      %1404 = vmatpush.bf16.msra.mxu0 %v1375
      %1405 = vmatpush.bf16.msra.mxu0 %v1373
      %1406 = vmatpush.bf16.msra.mxu0 %v1371
      %1407 = vmatmul.bf16.gmra.mxu0 %v1390
      %v1408 = vpop.f32.mrf.mxu0
      %v1409 = vadd.f32 %v1386, %v1408
      %v1410 = vpop.f32.mrf.mxu0
      %1411 = vdwg.mxu0
      %1412 = vmatpush.bf16.msra.mxu0 0
      %1413 = vmatpush.bf16.msra.mxu0 0
      %1414 = vmatpush.bf16.msra.mxu0 0
      %1415 = vmatpush.bf16.msra.mxu0 %v1397
      %1416 = vmatpush.bf16.msra.mxu0 %v1378
      %1417 = vmatpush.bf16.msra.mxu0 %v1376
      %1418 = vmatpush.bf16.msra.mxu0 %v1374
      %1419 = vmatpush.bf16.msra.mxu0 %v1372
      %1420 = vmatmul.bf16.gmra.mxu0 %v1390
      %v1421 = vpop.f32.mrf.mxu0
      %v1422 = vadd.f32 %v1386, %v1421
      %v1423 = vpop.f32.mrf.mxu0
      %1424 = vdwg.mxu0
      %v1425 = vmax.f32 %v1409, 0.0
      %v1426 = vmax.f32 %v1422, 0.0
      %1427 = vrot.lane.b32.xlu0 %v1425, 17
      %v1428 = vpop.permute.xlu0 %1427
      %1429 = vrot.lane.b32.xlu0 %v1426, 17
      %v1430 = vpop.permute.xlu0 %1429
      %v1431 = vsel %vm1248, %v1428, %v1430
      %v1432 = vsel %vm1248, %v1430, %v1428
      %v1433 = vmul.f32 %v1432, %v1253
      %v1434 = vmul.f32 %v1431, %v1254
      %1435 = vrot.lane.b32.xlu0 %v1425, 16
      %v1436 = vpop.permute.xlu0 %1435
      %1437 = vrot.lane.b32.xlu0 %v1426, 16
      %v1438 = vpop.permute.xlu0 %1437
      %v1439 = vsel %vm1263, %v1436, %v1438
      %v1440 = vsel %vm1263, %v1438, %v1436
      %v1441 = vmul.f32 %v1440, %v1269
      %v1442 = vmul.f32 %v1439, %v1270
      %1443 = vrot.lane.b32.xlu0 %v1425, 15
      %v1444 = vpop.permute.xlu0 %1443
      %1445 = vrot.lane.b32.xlu0 %v1426, 15
      %v1446 = vpop.permute.xlu0 %1445
      %v1447 = vsel %vm1279, %v1444, %v1446
      %v1448 = vsel %vm1279, %v1446, %v1444
      %v1449 = vmul.f32 %v1448, %v1285
      %v1450 = vmul.f32 %v1447, %v1286
      %1451 = vrot.lane.b32.xlu0 %v1425, 1
      %v1452 = vpop.permute.xlu0 %1451
      %1453 = vrot.lane.b32.xlu0 %v1426, 1
      %v1454 = vpop.permute.xlu0 %1453
      %v1455 = vsel %vm1295, %v1452, %v1454
      %v1456 = vsel %vm1295, %v1454, %v1452
      %v1457 = vmul.f32 %v1456, %v1301
      %v1458 = vmul.f32 %v1455, %v1302
      %1459 = vrot.lane.b32.xlu0 %v1425, 127
      %v1460 = vpop.permute.xlu0 %1459
      %1461 = vrot.lane.b32.xlu0 %v1426, 127
      %v1462 = vpop.permute.xlu0 %1461
      %v1463 = vsel %vm1311, %v1460, %v1462
      %v1464 = vsel %vm1311, %v1462, %v1460
      %v1465 = vmul.f32 %v1463, %v1317
      %v1466 = vmul.f32 %v1464, %v1318
      %1467 = vrot.lane.b32.xlu0 %v1425, 113
      %v1468 = vpop.permute.xlu0 %1467
      %1469 = vrot.lane.b32.xlu0 %v1426, 113
      %v1470 = vpop.permute.xlu0 %1469
      %v1471 = vsel %vm1327, %v1468, %v1470
      %v1472 = vsel %vm1327, %v1470, %v1468
      %v1473 = vmul.f32 %v1471, %v1333
      %v1474 = vmul.f32 %v1472, %v1334
      %1475 = vrot.lane.b32.xlu0 %v1425, 112
      %v1476 = vpop.permute.xlu0 %1475
      %1477 = vrot.lane.b32.xlu0 %v1426, 112
      %v1478 = vpop.permute.xlu0 %1477
      %v1479 = vsel %vm1343, %v1476, %v1478
      %v1480 = vsel %vm1343, %v1478, %v1476
      %v1481 = vmul.f32 %v1479, %v1349
      %v1482 = vmul.f32 %v1480, %v1350
      %1483 = vrot.lane.b32.xlu0 %v1425, 111
      %v1484 = vpop.permute.xlu0 %1483
      %1485 = vrot.lane.b32.xlu0 %v1426, 111
      %v1486 = vpop.permute.xlu0 %1485
      %v1487 = vsel %vm1359, %v1484, %v1486
      %v1488 = vsel %vm1359, %v1486, %v1484
      %v1489 = vmul.f32 %v1487, %v1365
      %v1490 = vmul.f32 %v1488, %v1366
      %v1491 = vpack.c.bf16 %v1441, %v1433
      %v1492 = vpack.c.bf16 %v1442, %v1434
      %v1493 = vpack.c.bf16 %v1457, %v1449
      %v1494 = vpack.c.bf16 %v1458, %v1450
      %v1495 = vpack.c.bf16 %v1465, %v1425
      %v1496 = vpack.c.bf16 %v1466, %v1426
      %v1497 = vpack.c.bf16 %v1481, %v1473
      %v1498 = vpack.c.bf16 %v1482, %v1474
      %v1499 = vpack.c.bf16 %v1489, %v1489
      %v1500 = vpack.c.bf16 %v1490, %v1490
      %v1501 = vld [vmem:[%s7] sm:$0xf]
      %v1502 = vld [vmem:[%s9] sm:$0xff]
      %1504 = vset.pattern.permute.xlu0 0
      %1505 = vperm.xlu0 %1504, %v1502
      %v1506 = vpop.permute.xlu0 %1505
      %v1509 = vsel %vm1388, %v1501, 0
      %v1512 = vsel %vm1392, %v1499, 0
      %v1515 = vsel %vm1392, %v1500, 0
      %1517 = vmatpush.bf16.msra.mxu0 0
      %1518 = vmatpush.bf16.msra.mxu0 0
      %1519 = vmatpush.bf16.msra.mxu0 0
      %1520 = vmatpush.bf16.msra.mxu0 %v1512
      %1521 = vmatpush.bf16.msra.mxu0 %v1497
      %1522 = vmatpush.bf16.msra.mxu0 %v1495
      %1523 = vmatpush.bf16.msra.mxu0 %v1493
      %1524 = vmatpush.bf16.msra.mxu0 %v1491
      %1525 = vmatmul.bf16.gmra.mxu0 %v1509
      %v1526 = vpop.f32.mrf.mxu0
      %v1527 = vadd.f32 %v1506, %v1526
      %v1528 = vpop.f32.mrf.mxu0
      %1529 = vdwg.mxu0
      %1530 = vmatpush.bf16.msra.mxu0 0
      %1531 = vmatpush.bf16.msra.mxu0 0
      %1532 = vmatpush.bf16.msra.mxu0 0
      %1533 = vmatpush.bf16.msra.mxu0 %v1515
      %1534 = vmatpush.bf16.msra.mxu0 %v1498
      %1535 = vmatpush.bf16.msra.mxu0 %v1496
      %1536 = vmatpush.bf16.msra.mxu0 %v1494
      %1537 = vmatpush.bf16.msra.mxu0 %v1492
      %1538 = vmatmul.bf16.gmra.mxu0 %v1509
      %v1539 = vpop.f32.mrf.mxu0
      %v1540 = vadd.f32 %v1506, %v1539
      %v1541 = vpop.f32.mrf.mxu0
      %1542 = vdwg.mxu0
      %v1543 = vmax.f32 %v1527, 0.0
      %v1544 = vmax.f32 %v1540, 0.0
      %1545 = vrot.lane.b32.xlu0 %v1543, 127
      %v1546 = vpop.permute.xlu0 %1545
      %1547 = vrot.lane.b32.xlu0 %v1544, 127
      %v1548 = vpop.permute.xlu0 %1547
      %v1549 = vsel %vm1311, %v1546, %v1548
      %v1550 = vsel %vm1311, %v1548, %v1546
      %v1551 = vmax.f32 %v1543, %v1549
      %v1552 = vmax.f32 %v1544, %v1550
      %1553 = vrot.lane.b32.xlu0 %v1551, 112
      %v1554 = vpop.permute.xlu0 %1553
      %1555 = vrot.lane.b32.xlu0 %v1552, 112
      %v1556 = vpop.permute.xlu0 %1555
      %v1557 = vsel %vm1343, %v1554, %v1556
      %v1558 = vsel %vm1343, %v1556, %v1554
      %v1559 = vmax.f32 %v1551, %v1557
      %v1560 = vmax.f32 %v1552, %v1558
      %v1561 = vld [vmem:[%s71] sm:$0xff]
      %v1562 = vld [vmem:[%s71 + $0x8] sm:$0xff]
      %v1563 = vld [vmem:[%s71 + $0x10] sm:$0xff]
      %v1564 = vld [vmem:[%s71 + $0x18] sm:$0xff]
      %v1565 = vld [vmem:[%s71 + $0x20] sm:$0xff]
      %v1566 = vld [vmem:[%s71 + $0x28] sm:$0xff]
      %v1567 = vld [vmem:[%s71 + $0x30] sm:$0xff]
      %v1568 = vld [vmem:[%s71 + $0x38] sm:$0xff]
      %v1569 = vld [vmem:[%s71 + $0x40] sm:$0xff]
      %v1570 = vld [vmem:[%s71 + $0x48] sm:$0xff]
      %v1571 = vld [vmem:[%s71 + $0x50] sm:$0xff]
      %v1572 = vld [vmem:[%s71 + $0x58] sm:$0xff]
      %v1573 = vld [vmem:[%s71 + $0x60] sm:$0xff]
      %v1574 = vld [vmem:[%s71 + $0x68] sm:$0xff]
      %v1575 = vld [vmem:[%s71 + $0x70] sm:$0xff]
      %v1576 = vld [vmem:[%s71 + $0x78] sm:$0xff]
      %v1577 = vld [vmem:[%s71 + $0x80] sm:$0xff]
      %v1578 = vld [vmem:[%s71 + $0x88] sm:$0xff]
      %v1579 = vld [vmem:[%s71 + $0x90] sm:$0xff]
      %v1580 = vld [vmem:[%s71 + $0x98] sm:$0xff]
      %v1581 = vld [vmem:[%s71 + $0xa0] sm:$0xff]
      %v1582 = vld [vmem:[%s71 + $0xa8] sm:$0xff]
      %v1583 = vld [vmem:[%s71 + $0xb0] sm:$0xff]
      %v1584 = vld [vmem:[%s71 + $0xb8] sm:$0xff]
      %v1585 = vld [vmem:[%s71 + $0xc0] sm:$0xff]
      %v1586 = vld [vmem:[%s71 + $0xc8] sm:$0xff]
      %v1587 = vld [vmem:[%s71 + $0xd0] sm:$0xff]
      %v1588 = vld [vmem:[%s71 + $0xd8] sm:$0xff]
      %v1589 = vld [vmem:[%s71 + $0xe0] sm:$0xff]
      %v1590 = vld [vmem:[%s71 + $0xe8] sm:$0xff]
      %v1591 = vld [vmem:[%s71 + $0xf0] sm:$0xff]
      %v1592 = vld [vmem:[%s71 + $0xf8] sm:$0xff]
      %1593 = vmatpush.msra.mxu0 %v1576
      %1594 = vmatpush.msra.mxu0 %v1575
      %1595 = vmatpush.msra.mxu0 %v1574
      %1596 = vmatpush.msra.mxu0 %v1573
      %1597 = vmatpush.msra.mxu0 %v1572
      %1598 = vmatpush.msra.mxu0 %v1571
      %1599 = vmatpush.msra.mxu0 %v1570
      %1600 = vmatpush.msra.mxu0 %v1569
      %1601 = vmatpush.msra.mxu0 %v1568
      %1602 = vmatpush.msra.mxu0 %v1567
      %1603 = vmatpush.msra.mxu0 %v1566
      %1604 = vmatpush.msra.mxu0 %v1565
      %1605 = vmatpush.msra.mxu0 %v1564
      %1606 = vmatpush.msra.mxu0 %v1563
      %1607 = vmatpush.msra.mxu0 %v1562
      %1608 = vmatpush.msra.mxu0 %v1561
      %1609 = vmatmul.f32.gmra.mxu0 %v1559
      %v1610 = vpop.f32.mrf.mxu0
      %v1611 = vadd.f32 0.0, %v1610
      %1612 = vdwg.mxu0
      %1613 = vmatpush.msra.mxu0 %v1592
      %1614 = vmatpush.msra.mxu0 %v1591
      %1615 = vmatpush.msra.mxu0 %v1590
      %1616 = vmatpush.msra.mxu0 %v1589
      %1617 = vmatpush.msra.mxu0 %v1588
      %1618 = vmatpush.msra.mxu0 %v1587
      %1619 = vmatpush.msra.mxu0 %v1586
      %1620 = vmatpush.msra.mxu0 %v1585
      %1621 = vmatpush.msra.mxu0 %v1584
      %1622 = vmatpush.msra.mxu0 %v1583
      %1623 = vmatpush.msra.mxu0 %v1582
      %1624 = vmatpush.msra.mxu0 %v1581
      %1625 = vmatpush.msra.mxu0 %v1580
      %1626 = vmatpush.msra.mxu0 %v1579
      %1627 = vmatpush.msra.mxu0 %v1578
      %1628 = vmatpush.msra.mxu0 %v1577
      %1629 = vmatmul.f32.gmra.mxu0 %v1560
      %v1630 = vpop.f32.mrf.mxu0
      %v1631 = vadd.f32 %v1611, %v1630
      %1632 = vdwg.mxu0
      %v1633 = vld [vmem:[%s65] sm:$0xff]
      %v1634 = vld [vmem:[%s65 + $0x8] sm:$0xff]
      %v1635 = vld [vmem:[%s65 + $0x10] sm:$0xff]
      %v1636 = vld [vmem:[%s65 + $0x18] sm:$0xff]
      %v1637 = vld [vmem:[%s65 + $0x20] sm:$0xff]
      %v1638 = vld [vmem:[%s65 + $0x28] sm:$0xff]
      %v1639 = vld [vmem:[%s65 + $0x30] sm:$0xff]
      %v1640 = vld [vmem:[%s65 + $0x38] sm:$0xff]
      %vm1641 = vcmask 523264
      %v1643 = vsel %vm1641, %v1631, 0
      %1645 = vmatpush.msra.mxu0 0.0
      %1646 = vmatpush.msra.mxu0 0.0
      %1647 = vmatpush.msra.mxu0 0.0
      %1648 = vmatpush.msra.mxu0 0.0
      %1649 = vmatpush.msra.mxu0 0.0
      %1650 = vmatpush.msra.mxu0 0.0
      %1651 = vmatpush.msra.mxu0 0.0
      %1652 = vmatpush.msra.mxu0 0.0
      %1653 = vmatpush.msra.mxu0 %v1640
      %1654 = vmatpush.msra.mxu0 %v1639
      %1655 = vmatpush.msra.mxu0 %v1638
      %1656 = vmatpush.msra.mxu0 %v1637
      %1657 = vmatpush.msra.mxu0 %v1636
      %1658 = vmatpush.msra.mxu0 %v1635
      %1659 = vmatpush.msra.mxu0 %v1634
      %1660 = vmatpush.msra.mxu0 %v1633
      %1661 = vmatmul.f32.gmra.mxu0 %v1643
      %v1662 = vpop.f32.mrf.mxu0
      %v1663 = vadd.f32 0.0, %v1662
      %1664 = vdwg.mxu0
      %s1665 = scalar_lea.vmem %s65, 64
      %v1666 = vld [vmem:[%s1665] sm:$0xff]
      %v1667 = vld [vmem:[%s1665 + $0x8] sm:$0xff]
      %v1668 = vld [vmem:[%s1665 + $0x10] sm:$0xff]
      %v1669 = vld [vmem:[%s1665 + $0x18] sm:$0xff]
      %v1670 = vld [vmem:[%s1665 + $0x20] sm:$0xff]
      %v1671 = vld [vmem:[%s1665 + $0x28] sm:$0xff]
      %v1672 = vld [vmem:[%s1665 + $0x30] sm:$0xff]
      %v1673 = vld [vmem:[%s1665 + $0x38] sm:$0xff]
      %1674 = vmatpush.msra.mxu0 0.0
      %1675 = vmatpush.msra.mxu0 0.0
      %1676 = vmatpush.msra.mxu0 0.0
      %1677 = vmatpush.msra.mxu0 0.0
      %1678 = vmatpush.msra.mxu0 0.0
      %1679 = vmatpush.msra.mxu0 0.0
      %1680 = vmatpush.msra.mxu0 0.0
      %1681 = vmatpush.msra.mxu0 0.0
      %1682 = vmatpush.msra.mxu0 %v1673
      %1683 = vmatpush.msra.mxu0 %v1672
      %1684 = vmatpush.msra.mxu0 %v1671
      %1685 = vmatpush.msra.mxu0 %v1670
      %1686 = vmatpush.msra.mxu0 %v1669
      %1687 = vmatpush.msra.mxu0 %v1668
      %1688 = vmatpush.msra.mxu0 %v1667
      %1689 = vmatpush.msra.mxu0 %v1666
      %1690 = vmatmul.f32.gmra.mxu0 %v1643
      %v1691 = vpop.f32.mrf.mxu0
      %v1692 = vadd.f32 0.0, %v1691
      %1693 = vdwg.mxu0
      %s1694 = scalar_lea.vmem %s65, 128
      %v1695 = vld [vmem:[%s1694] sm:$0xff]
      %v1696 = vld [vmem:[%s1694 + $0x8] sm:$0xff]
      %v1697 = vld [vmem:[%s1694 + $0x10] sm:$0xff]
      %v1698 = vld [vmem:[%s1694 + $0x18] sm:$0xff]
      %v1699 = vld [vmem:[%s1694 + $0x20] sm:$0xff]
      %v1700 = vld [vmem:[%s1694 + $0x28] sm:$0xff]
      %v1701 = vld [vmem:[%s1694 + $0x30] sm:$0xff]
      %v1702 = vld [vmem:[%s1694 + $0x38] sm:$0xff]
      %1703 = vmatpush.msra.mxu0 0.0
      %1704 = vmatpush.msra.mxu0 0.0
      %1705 = vmatpush.msra.mxu0 0.0
      %1706 = vmatpush.msra.mxu0 0.0
      %1707 = vmatpush.msra.mxu0 0.0
      %1708 = vmatpush.msra.mxu0 0.0
      %1709 = vmatpush.msra.mxu0 0.0
      %1710 = vmatpush.msra.mxu0 0.0
      %1711 = vmatpush.msra.mxu0 %v1702
      %1712 = vmatpush.msra.mxu0 %v1701
      %1713 = vmatpush.msra.mxu0 %v1700
      %1714 = vmatpush.msra.mxu0 %v1699
      %1715 = vmatpush.msra.mxu0 %v1698
      %1716 = vmatpush.msra.mxu0 %v1697
      %1717 = vmatpush.msra.mxu0 %v1696
      %1718 = vmatpush.msra.mxu0 %v1695
      %1719 = vmatmul.f32.gmra.mxu0 %v1643
      %v1720 = vpop.f32.mrf.mxu0
      %v1721 = vadd.f32 0.0, %v1720
      %1722 = vdwg.mxu0
      %s1723 = scalar_lea.vmem %s65, 192
      %v1724 = vld [vmem:[%s1723] sm:$0xff]
      %v1725 = vld [vmem:[%s1723 + $0x8] sm:$0xff]
      %v1726 = vld [vmem:[%s1723 + $0x10] sm:$0xff]
      %v1727 = vld [vmem:[%s1723 + $0x18] sm:$0xff]
      %v1728 = vld [vmem:[%s1723 + $0x20] sm:$0xff]
      %v1729 = vld [vmem:[%s1723 + $0x28] sm:$0xff]
      %v1730 = vld [vmem:[%s1723 + $0x30] sm:$0xff]
      %v1731 = vld [vmem:[%s1723 + $0x38] sm:$0xff]
      %1732 = vmatpush.msra.mxu0 0.0
      %1733 = vmatpush.msra.mxu0 0.0
      %1734 = vmatpush.msra.mxu0 0.0
      %1735 = vmatpush.msra.mxu0 0.0
      %1736 = vmatpush.msra.mxu0 0.0
      %1737 = vmatpush.msra.mxu0 0.0
      %1738 = vmatpush.msra.mxu0 0.0
      %1739 = vmatpush.msra.mxu0 0.0
      %1740 = vmatpush.msra.mxu0 %v1731
      %1741 = vmatpush.msra.mxu0 %v1730
      %1742 = vmatpush.msra.mxu0 %v1729
      %1743 = vmatpush.msra.mxu0 %v1728
      %1744 = vmatpush.msra.mxu0 %v1727
      %1745 = vmatpush.msra.mxu0 %v1726
      %1746 = vmatpush.msra.mxu0 %v1725
      %1747 = vmatpush.msra.mxu0 %v1724
      %1748 = vmatmul.f32.gmra.mxu0 %v1643
      %v1749 = vpop.f32.mrf.mxu0
      %v1750 = vadd.f32 0.0, %v1749
      %1751 = vdwg.mxu0
      %s1752 = scalar_lea.vmem %s65, 256
      %v1753 = vld [vmem:[%s1752] sm:$0xff]
      %v1754 = vld [vmem:[%s1752 + $0x8] sm:$0xff]
      %v1755 = vld [vmem:[%s1752 + $0x10] sm:$0xff]
      %v1756 = vld [vmem:[%s1752 + $0x18] sm:$0xff]
      %v1757 = vld [vmem:[%s1752 + $0x20] sm:$0xff]
      %v1758 = vld [vmem:[%s1752 + $0x28] sm:$0xff]
      %v1759 = vld [vmem:[%s1752 + $0x30] sm:$0xff]
      %v1760 = vld [vmem:[%s1752 + $0x38] sm:$0xff]
      %1761 = vmatpush.msra.mxu0 0.0
      %1762 = vmatpush.msra.mxu0 0.0
      %1763 = vmatpush.msra.mxu0 0.0
      %1764 = vmatpush.msra.mxu0 0.0
      %1765 = vmatpush.msra.mxu0 0.0
      %1766 = vmatpush.msra.mxu0 0.0
      %1767 = vmatpush.msra.mxu0 0.0
      %1768 = vmatpush.msra.mxu0 0.0
      %1769 = vmatpush.msra.mxu0 %v1760
      %1770 = vmatpush.msra.mxu0 %v1759
      %1771 = vmatpush.msra.mxu0 %v1758
      %1772 = vmatpush.msra.mxu0 %v1757
      %1773 = vmatpush.msra.mxu0 %v1756
      %1774 = vmatpush.msra.mxu0 %v1755
      %1775 = vmatpush.msra.mxu0 %v1754
      %1776 = vmatpush.msra.mxu0 %v1753
      %1777 = vmatmul.f32.gmra.mxu0 %v1643
      %v1778 = vpop.f32.mrf.mxu0
      %v1779 = vadd.f32 0.0, %v1778
      %1780 = vdwg.mxu0
      %s1781 = scalar_lea.vmem %s65, 320
      %v1782 = vld [vmem:[%s1781] sm:$0xff]
      %v1783 = vld [vmem:[%s1781 + $0x8] sm:$0xff]
      %v1784 = vld [vmem:[%s1781 + $0x10] sm:$0xff]
      %v1785 = vld [vmem:[%s1781 + $0x18] sm:$0xff]
      %v1786 = vld [vmem:[%s1781 + $0x20] sm:$0xff]
      %v1787 = vld [vmem:[%s1781 + $0x28] sm:$0xff]
      %v1788 = vld [vmem:[%s1781 + $0x30] sm:$0xff]
      %v1789 = vld [vmem:[%s1781 + $0x38] sm:$0xff]
      %1790 = vmatpush.msra.mxu0 0.0
      %1791 = vmatpush.msra.mxu0 0.0
      %1792 = vmatpush.msra.mxu0 0.0
      %1793 = vmatpush.msra.mxu0 0.0
      %1794 = vmatpush.msra.mxu0 0.0
      %1795 = vmatpush.msra.mxu0 0.0
      %1796 = vmatpush.msra.mxu0 0.0
      %1797 = vmatpush.msra.mxu0 0.0
      %1798 = vmatpush.msra.mxu0 %v1789
      %1799 = vmatpush.msra.mxu0 %v1788
      %1800 = vmatpush.msra.mxu0 %v1787
      %1801 = vmatpush.msra.mxu0 %v1786
      %1802 = vmatpush.msra.mxu0 %v1785
      %1803 = vmatpush.msra.mxu0 %v1784
      %1804 = vmatpush.msra.mxu0 %v1783
      %1805 = vmatpush.msra.mxu0 %v1782
      %1806 = vmatmul.f32.gmra.mxu0 %v1643
      %v1807 = vpop.f32.mrf.mxu0
      %v1808 = vadd.f32 0.0, %v1807
      %1809 = vdwg.mxu0
      %s1810 = scalar_lea.vmem %s65, 384
      %v1811 = vld [vmem:[%s1810] sm:$0xff]
      %v1812 = vld [vmem:[%s1810 + $0x8] sm:$0xff]
      %v1813 = vld [vmem:[%s1810 + $0x10] sm:$0xff]
      %v1814 = vld [vmem:[%s1810 + $0x18] sm:$0xff]
      %v1815 = vld [vmem:[%s1810 + $0x20] sm:$0xff]
      %v1816 = vld [vmem:[%s1810 + $0x28] sm:$0xff]
      %v1817 = vld [vmem:[%s1810 + $0x30] sm:$0xff]
      %v1818 = vld [vmem:[%s1810 + $0x38] sm:$0xff]
      %1819 = vmatpush.msra.mxu0 0.0
      %1820 = vmatpush.msra.mxu0 0.0
      %1821 = vmatpush.msra.mxu0 0.0
      %1822 = vmatpush.msra.mxu0 0.0
      %1823 = vmatpush.msra.mxu0 0.0
      %1824 = vmatpush.msra.mxu0 0.0
      %1825 = vmatpush.msra.mxu0 0.0
      %1826 = vmatpush.msra.mxu0 0.0
      %1827 = vmatpush.msra.mxu0 %v1818
      %1828 = vmatpush.msra.mxu0 %v1817
      %1829 = vmatpush.msra.mxu0 %v1816
      %1830 = vmatpush.msra.mxu0 %v1815
      %1831 = vmatpush.msra.mxu0 %v1814
      %1832 = vmatpush.msra.mxu0 %v1813
      %1833 = vmatpush.msra.mxu0 %v1812
      %1834 = vmatpush.msra.mxu0 %v1811
      %1835 = vmatmul.f32.gmra.mxu0 %v1643
      %v1836 = vpop.f32.mrf.mxu0
      %v1837 = vadd.f32 0.0, %v1836
      %1838 = vdwg.mxu0
      %s1839 = scalar_lea.vmem %s65, 448
      %v1840 = vld [vmem:[%s1839] sm:$0xff]
      %v1841 = vld [vmem:[%s1839 + $0x8] sm:$0xff]
      %v1842 = vld [vmem:[%s1839 + $0x10] sm:$0xff]
      %v1843 = vld [vmem:[%s1839 + $0x18] sm:$0xff]
      %v1844 = vld [vmem:[%s1839 + $0x20] sm:$0xff]
      %v1845 = vld [vmem:[%s1839 + $0x28] sm:$0xff]
      %v1846 = vld [vmem:[%s1839 + $0x30] sm:$0xff]
      %v1847 = vld [vmem:[%s1839 + $0x38] sm:$0xff]
      %1848 = vmatpush.msra.mxu0 0.0
      %1849 = vmatpush.msra.mxu0 0.0
      %1850 = vmatpush.msra.mxu0 0.0
      %1851 = vmatpush.msra.mxu0 0.0
      %1852 = vmatpush.msra.mxu0 0.0
      %1853 = vmatpush.msra.mxu0 0.0
      %1854 = vmatpush.msra.mxu0 0.0
      %1855 = vmatpush.msra.mxu0 0.0
      %1856 = vmatpush.msra.mxu0 %v1847
      %1857 = vmatpush.msra.mxu0 %v1846
      %1858 = vmatpush.msra.mxu0 %v1845
      %1859 = vmatpush.msra.mxu0 %v1844
      %1860 = vmatpush.msra.mxu0 %v1843
      %1861 = vmatpush.msra.mxu0 %v1842
      %1862 = vmatpush.msra.mxu0 %v1841
      %1863 = vmatpush.msra.mxu0 %v1840
      %1864 = vmatmul.f32.gmra.mxu0 %v1643
      %v1865 = vpop.f32.mrf.mxu0
      %v1866 = vadd.f32 0.0, %v1865
      %1867 = vdwg.mxu0
      %s1868 = scalar_lea.vmem %s65, 512
      %v1869 = vld [vmem:[%s1868] sm:$0xff]
      %v1870 = vld [vmem:[%s1868 + $0x8] sm:$0xff]
      %v1871 = vld [vmem:[%s1868 + $0x10] sm:$0xff]
      %v1872 = vld [vmem:[%s1868 + $0x18] sm:$0xff]
      %v1873 = vld [vmem:[%s1868 + $0x20] sm:$0xff]
      %v1874 = vld [vmem:[%s1868 + $0x28] sm:$0xff]
      %v1875 = vld [vmem:[%s1868 + $0x30] sm:$0xff]
      %v1876 = vld [vmem:[%s1868 + $0x38] sm:$0xff]
      %1877 = vmatpush.msra.mxu0 0.0
      %1878 = vmatpush.msra.mxu0 0.0
      %1879 = vmatpush.msra.mxu0 0.0
      %1880 = vmatpush.msra.mxu0 0.0
      %1881 = vmatpush.msra.mxu0 0.0
      %1882 = vmatpush.msra.mxu0 0.0
      %1883 = vmatpush.msra.mxu0 0.0
      %1884 = vmatpush.msra.mxu0 0.0
      %1885 = vmatpush.msra.mxu0 %v1876
      %1886 = vmatpush.msra.mxu0 %v1875
      %1887 = vmatpush.msra.mxu0 %v1874
      %1888 = vmatpush.msra.mxu0 %v1873
      %1889 = vmatpush.msra.mxu0 %v1872
      %1890 = vmatpush.msra.mxu0 %v1871
      %1891 = vmatpush.msra.mxu0 %v1870
      %1892 = vmatpush.msra.mxu0 %v1869
      %1893 = vmatmul.f32.gmra.mxu0 %v1643
      %v1894 = vpop.f32.mrf.mxu0
      %v1895 = vadd.f32 0.0, %v1894
      %1896 = vdwg.mxu0
      %v1897 = vpack.c.bf16 %v1692, %v1663
      %v1898 = vpack.c.bf16 %v1750, %v1721
      %v1899 = vpack.c.bf16 %v1808, %v1779
      %v1900 = vpack.c.bf16 %v1866, %v1837
      %v1901 = vpack.c.bf16 %v1895, %v1895
      %v1902 = vld [vmem:[%s11] sm:$0xf]
      %v1903 = vld [vmem:[%s11 + $0x4] sm:$0xf]
      %v1904 = vld [vmem:[%s13] sm:$0xff]
      %v1905 = vld [vmem:[%s13 + $0x8] sm:$0xff]
      %1907 = vset.pattern.permute.xlu0 0
      %1908 = vperm.xlu0 %1907, %v1904
      %v1909 = vpop.permute.xlu0 %1908
      %1912 = vset.pattern.permute.xlu0 0
      %1913 = vperm.xlu0 %1912, %v1905
      %v1914 = vpop.permute.xlu0 %1913
      %v1918 = vunpack.c.l.b16 %v1902
      %v1919 = vunpack.c.l.b16 %v1903
      %v1920 = vpack.c.b16 %v1919, %v1918
      %v1922 = vsel %vm1388, %v1920, 0
      %v1925 = vsel %vm1392, %v1901, 0
      %1927 = vmatpush.bf16.msra.mxu0 0
      %1928 = vmatpush.bf16.msra.mxu0 0
      %1929 = vmatpush.bf16.msra.mxu0 0
      %1930 = vmatpush.bf16.msra.mxu0 %v1925
      %1931 = vmatpush.bf16.msra.mxu0 %v1900
      %1932 = vmatpush.bf16.msra.mxu0 %v1899
      %1933 = vmatpush.bf16.msra.mxu0 %v1898
      %1934 = vmatpush.bf16.msra.mxu0 %v1897
      %1935 = vmatmul.bf16.gmra.mxu0 %v1922
      %v1936 = vpop.f32.mrf.mxu0
      %v1937 = vadd.f32 %v1909, %v1936
      %v1938 = vpop.f32.mrf.mxu0
      %v1939 = vadd.f32 %v1914, %v1938
      %1940 = vdwg.mxu0
      %v1941 = vmax.f32 %v1937, 0.0
      %v1942 = vmax.f32 %v1939, 0.0
      %v1944 = vsel %vm1641, %v1941, 0
      %v1947 = vsel %vm1641, %v1942, 0
      %1949 = vmatpush.msra.mxu0 0.0
      %1950 = vmatpush.msra.mxu0 0.0
      %1951 = vmatpush.msra.mxu0 0.0
      %1952 = vmatpush.msra.mxu0 0.0
      %1953 = vmatpush.msra.mxu0 0.0
      %1954 = vmatpush.msra.mxu0 0.0
      %1955 = vmatpush.msra.mxu0 0.0
      %1956 = vmatpush.msra.mxu0 0.0
      %1957 = vmatpush.msra.mxu0 %v1640
      %1958 = vmatpush.msra.mxu0 %v1639
      %1959 = vmatpush.msra.mxu0 %v1638
      %1960 = vmatpush.msra.mxu0 %v1637
      %1961 = vmatpush.msra.mxu0 %v1636
      %1962 = vmatpush.msra.mxu0 %v1635
      %1963 = vmatpush.msra.mxu0 %v1634
      %1964 = vmatpush.msra.mxu0 %v1633
      %1965 = vmatmul.f32.gmra.mxu0 %v1944
      %v1966 = vpop.f32.mrf.mxu0
      %v1967 = vadd.f32 0.0, %v1966
      %1968 = vmatmul.f32.gmra.mxu0 %v1947
      %v1969 = vpop.f32.mrf.mxu0
      %v1970 = vadd.f32 0.0, %v1969
      %1971 = vdwg.mxu0
      %1972 = vmatpush.msra.mxu0 0.0
      %1973 = vmatpush.msra.mxu0 0.0
      %1974 = vmatpush.msra.mxu0 0.0
      %1975 = vmatpush.msra.mxu0 0.0
      %1976 = vmatpush.msra.mxu0 0.0
      %1977 = vmatpush.msra.mxu0 0.0
      %1978 = vmatpush.msra.mxu0 0.0
      %1979 = vmatpush.msra.mxu0 0.0
      %1980 = vmatpush.msra.mxu0 %v1673
      %1981 = vmatpush.msra.mxu0 %v1672
      %1982 = vmatpush.msra.mxu0 %v1671
      %1983 = vmatpush.msra.mxu0 %v1670
      %1984 = vmatpush.msra.mxu0 %v1669
      %1985 = vmatpush.msra.mxu0 %v1668
      %1986 = vmatpush.msra.mxu0 %v1667
      %1987 = vmatpush.msra.mxu0 %v1666
      %1988 = vmatmul.f32.gmra.mxu0 %v1944
      %v1989 = vpop.f32.mrf.mxu0
      %v1990 = vadd.f32 0.0, %v1989
      %1991 = vmatmul.f32.gmra.mxu0 %v1947
      %v1992 = vpop.f32.mrf.mxu0
      %v1993 = vadd.f32 0.0, %v1992
      %1994 = vdwg.mxu0
      %1995 = vmatpush.msra.mxu0 0.0
      %1996 = vmatpush.msra.mxu0 0.0
      %1997 = vmatpush.msra.mxu0 0.0
      %1998 = vmatpush.msra.mxu0 0.0
      %1999 = vmatpush.msra.mxu0 0.0
      %2000 = vmatpush.msra.mxu0 0.0
      %2001 = vmatpush.msra.mxu0 0.0
      %2002 = vmatpush.msra.mxu0 0.0
      %2003 = vmatpush.msra.mxu0 %v1702
      %2004 = vmatpush.msra.mxu0 %v1701
      %2005 = vmatpush.msra.mxu0 %v1700
      %2006 = vmatpush.msra.mxu0 %v1699
      %2007 = vmatpush.msra.mxu0 %v1698
      %2008 = vmatpush.msra.mxu0 %v1697
      %2009 = vmatpush.msra.mxu0 %v1696
      %2010 = vmatpush.msra.mxu0 %v1695
      %2011 = vmatmul.f32.gmra.mxu0 %v1944
      %v2012 = vpop.f32.mrf.mxu0
      %v2013 = vadd.f32 0.0, %v2012
      %2014 = vmatmul.f32.gmra.mxu0 %v1947
      %v2015 = vpop.f32.mrf.mxu0
      %v2016 = vadd.f32 0.0, %v2015
      %2017 = vdwg.mxu0
      %2018 = vmatpush.msra.mxu0 0.0
      %2019 = vmatpush.msra.mxu0 0.0
      %2020 = vmatpush.msra.mxu0 0.0
      %2021 = vmatpush.msra.mxu0 0.0
      %2022 = vmatpush.msra.mxu0 0.0
      %2023 = vmatpush.msra.mxu0 0.0
      %2024 = vmatpush.msra.mxu0 0.0
      %2025 = vmatpush.msra.mxu0 0.0
      %2026 = vmatpush.msra.mxu0 %v1731
      %2027 = vmatpush.msra.mxu0 %v1730
      %2028 = vmatpush.msra.mxu0 %v1729
      %2029 = vmatpush.msra.mxu0 %v1728
      %2030 = vmatpush.msra.mxu0 %v1727
      %2031 = vmatpush.msra.mxu0 %v1726
      %2032 = vmatpush.msra.mxu0 %v1725
      %2033 = vmatpush.msra.mxu0 %v1724
      %2034 = vmatmul.f32.gmra.mxu0 %v1944
      %v2035 = vpop.f32.mrf.mxu0
      %v2036 = vadd.f32 0.0, %v2035
      %2037 = vmatmul.f32.gmra.mxu0 %v1947
      %v2038 = vpop.f32.mrf.mxu0
      %v2039 = vadd.f32 0.0, %v2038
      %2040 = vdwg.mxu0
      %2041 = vmatpush.msra.mxu0 0.0
      %2042 = vmatpush.msra.mxu0 0.0
      %2043 = vmatpush.msra.mxu0 0.0
      %2044 = vmatpush.msra.mxu0 0.0
      %2045 = vmatpush.msra.mxu0 0.0
      %2046 = vmatpush.msra.mxu0 0.0
      %2047 = vmatpush.msra.mxu0 0.0
      %2048 = vmatpush.msra.mxu0 0.0
      %2049 = vmatpush.msra.mxu0 %v1760
      %2050 = vmatpush.msra.mxu0 %v1759
      %2051 = vmatpush.msra.mxu0 %v1758
      %2052 = vmatpush.msra.mxu0 %v1757
      %2053 = vmatpush.msra.mxu0 %v1756
      %2054 = vmatpush.msra.mxu0 %v1755
      %2055 = vmatpush.msra.mxu0 %v1754
      %2056 = vmatpush.msra.mxu0 %v1753
      %2057 = vmatmul.f32.gmra.mxu0 %v1944
      %v2058 = vpop.f32.mrf.mxu0
      %v2059 = vadd.f32 0.0, %v2058
      %2060 = vmatmul.f32.gmra.mxu0 %v1947
      %v2061 = vpop.f32.mrf.mxu0
      %v2062 = vadd.f32 0.0, %v2061
      %2063 = vdwg.mxu0
      %2064 = vmatpush.msra.mxu0 0.0
      %2065 = vmatpush.msra.mxu0 0.0
      %2066 = vmatpush.msra.mxu0 0.0
      %2067 = vmatpush.msra.mxu0 0.0
      %2068 = vmatpush.msra.mxu0 0.0
      %2069 = vmatpush.msra.mxu0 0.0
      %2070 = vmatpush.msra.mxu0 0.0
      %2071 = vmatpush.msra.mxu0 0.0
      %2072 = vmatpush.msra.mxu0 %v1789
      %2073 = vmatpush.msra.mxu0 %v1788
      %2074 = vmatpush.msra.mxu0 %v1787
      %2075 = vmatpush.msra.mxu0 %v1786
      %2076 = vmatpush.msra.mxu0 %v1785
      %2077 = vmatpush.msra.mxu0 %v1784
      %2078 = vmatpush.msra.mxu0 %v1783
      %2079 = vmatpush.msra.mxu0 %v1782
      %2080 = vmatmul.f32.gmra.mxu0 %v1944
      %v2081 = vpop.f32.mrf.mxu0
      %v2082 = vadd.f32 0.0, %v2081
      %2083 = vmatmul.f32.gmra.mxu0 %v1947
      %v2084 = vpop.f32.mrf.mxu0
      %v2085 = vadd.f32 0.0, %v2084
      %2086 = vdwg.mxu0
      %2087 = vmatpush.msra.mxu0 0.0
      %2088 = vmatpush.msra.mxu0 0.0
      %2089 = vmatpush.msra.mxu0 0.0
      %2090 = vmatpush.msra.mxu0 0.0
      %2091 = vmatpush.msra.mxu0 0.0
      %2092 = vmatpush.msra.mxu0 0.0
      %2093 = vmatpush.msra.mxu0 0.0
      %2094 = vmatpush.msra.mxu0 0.0
      %2095 = vmatpush.msra.mxu0 %v1818
      %2096 = vmatpush.msra.mxu0 %v1817
      %2097 = vmatpush.msra.mxu0 %v1816
      %2098 = vmatpush.msra.mxu0 %v1815
      %2099 = vmatpush.msra.mxu0 %v1814
      %2100 = vmatpush.msra.mxu0 %v1813
      %2101 = vmatpush.msra.mxu0 %v1812
      %2102 = vmatpush.msra.mxu0 %v1811
      %2103 = vmatmul.f32.gmra.mxu0 %v1944
      %v2104 = vpop.f32.mrf.mxu0
      %v2105 = vadd.f32 0.0, %v2104
      %2106 = vmatmul.f32.gmra.mxu0 %v1947
      %v2107 = vpop.f32.mrf.mxu0
      %v2108 = vadd.f32 0.0, %v2107
      %2109 = vdwg.mxu0
      %2110 = vmatpush.msra.mxu0 0.0
      %2111 = vmatpush.msra.mxu0 0.0
      %2112 = vmatpush.msra.mxu0 0.0
      %2113 = vmatpush.msra.mxu0 0.0
      %2114 = vmatpush.msra.mxu0 0.0
      %2115 = vmatpush.msra.mxu0 0.0
      %2116 = vmatpush.msra.mxu0 0.0
      %2117 = vmatpush.msra.mxu0 0.0
      %2118 = vmatpush.msra.mxu0 %v1847
      %2119 = vmatpush.msra.mxu0 %v1846
      %2120 = vmatpush.msra.mxu0 %v1845
      %2121 = vmatpush.msra.mxu0 %v1844
      %2122 = vmatpush.msra.mxu0 %v1843
      %2123 = vmatpush.msra.mxu0 %v1842
      %2124 = vmatpush.msra.mxu0 %v1841
      %2125 = vmatpush.msra.mxu0 %v1840
      %2126 = vmatmul.f32.gmra.mxu0 %v1944
      %v2127 = vpop.f32.mrf.mxu0
      %v2128 = vadd.f32 0.0, %v2127
      %2129 = vmatmul.f32.gmra.mxu0 %v1947
      %v2130 = vpop.f32.mrf.mxu0
      %v2131 = vadd.f32 0.0, %v2130
      %2132 = vdwg.mxu0
      %2133 = vmatpush.msra.mxu0 0.0
      %2134 = vmatpush.msra.mxu0 0.0
      %2135 = vmatpush.msra.mxu0 0.0
      %2136 = vmatpush.msra.mxu0 0.0
      %2137 = vmatpush.msra.mxu0 0.0
      %2138 = vmatpush.msra.mxu0 0.0
      %2139 = vmatpush.msra.mxu0 0.0
      %2140 = vmatpush.msra.mxu0 0.0
      %2141 = vmatpush.msra.mxu0 %v1876
      %2142 = vmatpush.msra.mxu0 %v1875
      %2143 = vmatpush.msra.mxu0 %v1874
      %2144 = vmatpush.msra.mxu0 %v1873
      %2145 = vmatpush.msra.mxu0 %v1872
      %2146 = vmatpush.msra.mxu0 %v1871
      %2147 = vmatpush.msra.mxu0 %v1870
      %2148 = vmatpush.msra.mxu0 %v1869
      %2149 = vmatmul.f32.gmra.mxu0 %v1944
      %v2150 = vpop.f32.mrf.mxu0
      %v2151 = vadd.f32 0.0, %v2150
      %2152 = vmatmul.f32.gmra.mxu0 %v1947
      %v2153 = vpop.f32.mrf.mxu0
      %v2154 = vadd.f32 0.0, %v2153
      %2155 = vdwg.mxu0
      %v2156 = vpack.c.bf16 %v1970, %v1967
      %v2157 = vpack.c.bf16 %v1993, %v1990
      %v2158 = vpack.c.bf16 %v2016, %v2013
      %v2159 = vpack.c.bf16 %v2039, %v2036
      %v2160 = vpack.c.bf16 %v2062, %v2059
      %v2161 = vpack.c.bf16 %v2085, %v2082
      %v2162 = vpack.c.bf16 %v2108, %v2105
      %v2163 = vpack.c.bf16 %v2131, %v2128
      %v2164 = vpack.c.bf16 %v2154, %v2151
      %v2165 = vld [vmem:[%s15] sm:$0xff]
      %v2166 = vld [vmem:[%s15 + $0x8] sm:$0xff]
      %v2167 = vld [vmem:[%s17] sm:$0xff]
      %v2168 = vld [vmem:[%s17 + $0x8] sm:$0xff]
      %2170 = vset.pattern.permute.xlu0 0
      %2171 = vperm.xlu0 %2170, %v2167
      %v2172 = vpop.permute.xlu0 %2171
      %2175 = vset.pattern.permute.xlu0 0
      %2176 = vperm.xlu0 %2175, %v2168
      %v2177 = vpop.permute.xlu0 %2176
      %v2181 = vunpack.c.l.b16 %v2165
      %v2182 = vunpack.c.h.b16 %v2165
      %v2183 = vunpack.c.l.b16 %v2166
      %v2184 = vunpack.c.h.b16 %v2166
      %v2185 = vpack.c.b16 %v2183, %v2181
      %v2186 = vpack.c.b16 %v2184, %v2182
      %vm2188 = vcmask 130048
      %v2190 = vsel %vm2188, %v2186, 0
      %2192 = vmatpush.bf16.msra.mxu0 %v2163
      %2193 = vmatpush.bf16.msra.mxu0 %v2162
      %2194 = vmatpush.bf16.msra.mxu0 %v2161
      %2195 = vmatpush.bf16.msra.mxu0 %v2160
      %2196 = vmatpush.bf16.msra.mxu0 %v2159
      %2197 = vmatpush.bf16.msra.mxu0 %v2158
      %2198 = vmatpush.bf16.msra.mxu0 %v2157
      %2199 = vmatpush.bf16.msra.mxu0 %v2156
      %2200 = vmatmul.bf16.gmra.mxu0 %v2185
      %v2201 = vpop.f32.mrf.mxu0
      %v2202 = vadd.f32 %v2172, %v2201
      %v2203 = vpop.f32.mrf.mxu0
      %v2204 = vadd.f32 %v2177, %v2203
      %2205 = vdwg.mxu0
      %2206 = vmatpush.bf16.msra.mxu0 0
      %2207 = vmatpush.bf16.msra.mxu0 0
      %2208 = vmatpush.bf16.msra.mxu0 0
      %2209 = vmatpush.bf16.msra.mxu0 0
      %2210 = vmatpush.bf16.msra.mxu0 0
      %2211 = vmatpush.bf16.msra.mxu0 0
      %2212 = vmatpush.bf16.msra.mxu0 0
      %2213 = vmatpush.bf16.msra.mxu0 %v2164
      %2214 = vmatmul.bf16.gmra.mxu0 %v2190
      %v2215 = vpop.f32.mrf.mxu0
      %v2216 = vadd.f32 %v2202, %v2215
      %v2217 = vpop.f32.mrf.mxu0
      %v2218 = vadd.f32 %v2204, %v2217
      %2219 = vdwg.mxu0
      %v2220 = vmax.f32 %v2216, 0.0
      %v2221 = vmax.f32 %v2218, 0.0
      %v2222 = vld [vmem:[%s73] sm:$0xff]
      %v2223 = vld [vmem:[%s73 + $0x8] sm:$0xff]
      %v2224 = vld [vmem:[%s73 + $0x10] sm:$0xff]
      %v2225 = vld [vmem:[%s73 + $0x18] sm:$0xff]
      %v2226 = vld [vmem:[%s73 + $0x20] sm:$0xff]
      %v2227 = vld [vmem:[%s73 + $0x28] sm:$0xff]
      %v2228 = vld [vmem:[%s73 + $0x30] sm:$0xff]
      %v2229 = vld [vmem:[%s73 + $0x38] sm:$0xff]
      %v2231 = vsel %vm1641, %v2220, 0
      %v2234 = vsel %vm1641, %v2221, 0
      %2236 = vmatpush.msra.mxu0 0.0
      %2237 = vmatpush.msra.mxu0 0.0
      %2238 = vmatpush.msra.mxu0 0.0
      %2239 = vmatpush.msra.mxu0 0.0
      %2240 = vmatpush.msra.mxu0 0.0
      %2241 = vmatpush.msra.mxu0 0.0
      %2242 = vmatpush.msra.mxu0 0.0
      %2243 = vmatpush.msra.mxu0 0.0
      %2244 = vmatpush.msra.mxu0 %v2229
      %2245 = vmatpush.msra.mxu0 %v2228
      %2246 = vmatpush.msra.mxu0 %v2227
      %2247 = vmatpush.msra.mxu0 %v2226
      %2248 = vmatpush.msra.mxu0 %v2225
      %2249 = vmatpush.msra.mxu0 %v2224
      %2250 = vmatpush.msra.mxu0 %v2223
      %2251 = vmatpush.msra.mxu0 %v2222
      %2252 = vmatmul.f32.gmra.mxu0 %v2231
      %v2253 = vpop.f32.mrf.mxu0
      %v2254 = vadd.f32 0.0, %v2253
      %2255 = vmatmul.f32.gmra.mxu0 %v2234
      %v2256 = vpop.f32.mrf.mxu0
      %v2257 = vadd.f32 0.0, %v2256
      %2258 = vdwg.mxu0
      %s2259 = scalar_lea.vmem %s73, 64
      %v2260 = vld [vmem:[%s2259] sm:$0xff]
      %v2261 = vld [vmem:[%s2259 + $0x8] sm:$0xff]
      %v2262 = vld [vmem:[%s2259 + $0x10] sm:$0xff]
      %v2263 = vld [vmem:[%s2259 + $0x18] sm:$0xff]
      %v2264 = vld [vmem:[%s2259 + $0x20] sm:$0xff]
      %v2265 = vld [vmem:[%s2259 + $0x28] sm:$0xff]
      %v2266 = vld [vmem:[%s2259 + $0x30] sm:$0xff]
      %v2267 = vld [vmem:[%s2259 + $0x38] sm:$0xff]
      %2268 = vmatpush.msra.mxu0 0.0
      %2269 = vmatpush.msra.mxu0 0.0
      %2270 = vmatpush.msra.mxu0 0.0
      %2271 = vmatpush.msra.mxu0 0.0
      %2272 = vmatpush.msra.mxu0 0.0
      %2273 = vmatpush.msra.mxu0 0.0
      %2274 = vmatpush.msra.mxu0 0.0
      %2275 = vmatpush.msra.mxu0 0.0
      %2276 = vmatpush.msra.mxu0 %v2267
      %2277 = vmatpush.msra.mxu0 %v2266
      %2278 = vmatpush.msra.mxu0 %v2265
      %2279 = vmatpush.msra.mxu0 %v2264
      %2280 = vmatpush.msra.mxu0 %v2263
      %2281 = vmatpush.msra.mxu0 %v2262
      %2282 = vmatpush.msra.mxu0 %v2261
      %2283 = vmatpush.msra.mxu0 %v2260
      %2284 = vmatmul.f32.gmra.mxu0 %v2231
      %v2285 = vpop.f32.mrf.mxu0
      %v2286 = vadd.f32 0.0, %v2285
      %2287 = vmatmul.f32.gmra.mxu0 %v2234
      %v2288 = vpop.f32.mrf.mxu0
      %v2289 = vadd.f32 0.0, %v2288
      %2290 = vdwg.mxu0
      %v2291 = vmax.f32 %v2254, %v2286
      %v2292 = vmax.f32 %v2257, %v2289
      %s2293 = scalar_lea.vmem %s73, 128
      %v2294 = vld [vmem:[%s2293] sm:$0xff]
      %v2295 = vld [vmem:[%s2293 + $0x8] sm:$0xff]
      %v2296 = vld [vmem:[%s2293 + $0x10] sm:$0xff]
      %v2297 = vld [vmem:[%s2293 + $0x18] sm:$0xff]
      %v2298 = vld [vmem:[%s2293 + $0x20] sm:$0xff]
      %v2299 = vld [vmem:[%s2293 + $0x28] sm:$0xff]
      %v2300 = vld [vmem:[%s2293 + $0x30] sm:$0xff]
      %v2301 = vld [vmem:[%s2293 + $0x38] sm:$0xff]
      %2302 = vmatpush.msra.mxu0 0.0
      %2303 = vmatpush.msra.mxu0 0.0
      %2304 = vmatpush.msra.mxu0 0.0
      %2305 = vmatpush.msra.mxu0 0.0
      %2306 = vmatpush.msra.mxu0 0.0
      %2307 = vmatpush.msra.mxu0 0.0
      %2308 = vmatpush.msra.mxu0 0.0
      %2309 = vmatpush.msra.mxu0 0.0
      %2310 = vmatpush.msra.mxu0 %v2301
      %2311 = vmatpush.msra.mxu0 %v2300
      %2312 = vmatpush.msra.mxu0 %v2299
      %2313 = vmatpush.msra.mxu0 %v2298
      %2314 = vmatpush.msra.mxu0 %v2297
      %2315 = vmatpush.msra.mxu0 %v2296
      %2316 = vmatpush.msra.mxu0 %v2295
      %2317 = vmatpush.msra.mxu0 %v2294
      %2318 = vmatmul.f32.gmra.mxu0 %v2231
      %v2319 = vpop.f32.mrf.mxu0
      %v2320 = vadd.f32 0.0, %v2319
      %2321 = vmatmul.f32.gmra.mxu0 %v2234
      %v2322 = vpop.f32.mrf.mxu0
      %v2323 = vadd.f32 0.0, %v2322
      %2324 = vdwg.mxu0
      %v2325 = vmax.f32 %v2291, %v2320
      %v2326 = vmax.f32 %v2292, %v2323
      %s2327 = scalar_lea.vmem %s73, 192
      %v2328 = vld [vmem:[%s2327] sm:$0xff]
      %v2329 = vld [vmem:[%s2327 + $0x8] sm:$0xff]
      %v2330 = vld [vmem:[%s2327 + $0x10] sm:$0xff]
      %v2331 = vld [vmem:[%s2327 + $0x18] sm:$0xff]
      %v2332 = vld [vmem:[%s2327 + $0x20] sm:$0xff]
      %v2333 = vld [vmem:[%s2327 + $0x28] sm:$0xff]
      %v2334 = vld [vmem:[%s2327 + $0x30] sm:$0xff]
      %v2335 = vld [vmem:[%s2327 + $0x38] sm:$0xff]
      %2336 = vmatpush.msra.mxu0 0.0
      %2337 = vmatpush.msra.mxu0 0.0
      %2338 = vmatpush.msra.mxu0 0.0
      %2339 = vmatpush.msra.mxu0 0.0
      %2340 = vmatpush.msra.mxu0 0.0
      %2341 = vmatpush.msra.mxu0 0.0
      %2342 = vmatpush.msra.mxu0 0.0
      %2343 = vmatpush.msra.mxu0 0.0
      %2344 = vmatpush.msra.mxu0 %v2335
      %2345 = vmatpush.msra.mxu0 %v2334
      %2346 = vmatpush.msra.mxu0 %v2333
      %2347 = vmatpush.msra.mxu0 %v2332
      %2348 = vmatpush.msra.mxu0 %v2331
      %2349 = vmatpush.msra.mxu0 %v2330
      %2350 = vmatpush.msra.mxu0 %v2329
      %2351 = vmatpush.msra.mxu0 %v2328
      %2352 = vmatmul.f32.gmra.mxu0 %v2231
      %v2353 = vpop.f32.mrf.mxu0
      %v2354 = vadd.f32 0.0, %v2353
      %2355 = vmatmul.f32.gmra.mxu0 %v2234
      %v2356 = vpop.f32.mrf.mxu0
      %v2357 = vadd.f32 0.0, %v2356
      %2358 = vdwg.mxu0
      %v2359 = vmax.f32 %v2325, %v2354
      %v2360 = vmax.f32 %v2326, %v2357
      %v2361 = vld [vmem:[%s67] sm:$0xff]
      %v2362 = vld [vmem:[%s67 + $0x8] sm:$0xff]
      %v2364 = vsel %vm2188, %v2359, 0
      %v2367 = vsel %vm2188, %v2360, 0
      %2369 = vmatpush.msra.mxu0 0.0
      %2370 = vmatpush.msra.mxu0 0.0
      %2371 = vmatpush.msra.mxu0 0.0
      %2372 = vmatpush.msra.mxu0 0.0
      %2373 = vmatpush.msra.mxu0 0.0
      %2374 = vmatpush.msra.mxu0 0.0
      %2375 = vmatpush.msra.mxu0 0.0
      %2376 = vmatpush.msra.mxu0 0.0
      %2377 = vmatpush.msra.mxu0 0.0
      %2378 = vmatpush.msra.mxu0 0.0
      %2379 = vmatpush.msra.mxu0 0.0
      %2380 = vmatpush.msra.mxu0 0.0
      %2381 = vmatpush.msra.mxu0 0.0
      %2382 = vmatpush.msra.mxu0 0.0
      %2383 = vmatpush.msra.mxu0 %v2362
      %2384 = vmatpush.msra.mxu0 %v2361
      %2385 = vmatmul.f32.gmra.mxu0 %v2364
      %v2386 = vpop.f32.mrf.mxu0
      %v2387 = vadd.f32 0.0, %v2386
      %2388 = vmatmul.f32.gmra.mxu0 %v2367
      %v2389 = vpop.f32.mrf.mxu0
      %v2390 = vadd.f32 0.0, %v2389
      %2391 = vdwg.mxu0
      %s2392 = scalar_lea.vmem %s67, 16
      %v2393 = vld [vmem:[%s2392] sm:$0xff]
      %v2394 = vld [vmem:[%s2392 + $0x8] sm:$0xff]
      %2395 = vmatpush.msra.mxu0 0.0
      %2396 = vmatpush.msra.mxu0 0.0
      %2397 = vmatpush.msra.mxu0 0.0
      %2398 = vmatpush.msra.mxu0 0.0
      %2399 = vmatpush.msra.mxu0 0.0
      %2400 = vmatpush.msra.mxu0 0.0
      %2401 = vmatpush.msra.mxu0 0.0
      %2402 = vmatpush.msra.mxu0 0.0
      %2403 = vmatpush.msra.mxu0 0.0
      %2404 = vmatpush.msra.mxu0 0.0
      %2405 = vmatpush.msra.mxu0 0.0
      %2406 = vmatpush.msra.mxu0 0.0
      %2407 = vmatpush.msra.mxu0 0.0
      %2408 = vmatpush.msra.mxu0 0.0
      %2409 = vmatpush.msra.mxu0 %v2394
      %2410 = vmatpush.msra.mxu0 %v2393
      %2411 = vmatmul.f32.gmra.mxu0 %v2364
      %v2412 = vpop.f32.mrf.mxu0
      %v2413 = vadd.f32 0.0, %v2412
      %2414 = vmatmul.f32.gmra.mxu0 %v2367
      %v2415 = vpop.f32.mrf.mxu0
      %v2416 = vadd.f32 0.0, %v2415
      %2417 = vdwg.mxu0
      %s2418 = scalar_lea.vmem %s67, 32
      %v2419 = vld [vmem:[%s2418] sm:$0xff]
      %v2420 = vld [vmem:[%s2418 + $0x8] sm:$0xff]
      %2421 = vmatpush.msra.mxu0 0.0
      %2422 = vmatpush.msra.mxu0 0.0
      %2423 = vmatpush.msra.mxu0 0.0
      %2424 = vmatpush.msra.mxu0 0.0
      %2425 = vmatpush.msra.mxu0 0.0
      %2426 = vmatpush.msra.mxu0 0.0
      %2427 = vmatpush.msra.mxu0 0.0
      %2428 = vmatpush.msra.mxu0 0.0
      %2429 = vmatpush.msra.mxu0 0.0
      %2430 = vmatpush.msra.mxu0 0.0
      %2431 = vmatpush.msra.mxu0 0.0
      %2432 = vmatpush.msra.mxu0 0.0
      %2433 = vmatpush.msra.mxu0 0.0
      %2434 = vmatpush.msra.mxu0 0.0
      %2435 = vmatpush.msra.mxu0 %v2420
      %2436 = vmatpush.msra.mxu0 %v2419
      %2437 = vmatmul.f32.gmra.mxu0 %v2364
      %v2438 = vpop.f32.mrf.mxu0
      %v2439 = vadd.f32 0.0, %v2438
      %2440 = vmatmul.f32.gmra.mxu0 %v2367
      %v2441 = vpop.f32.mrf.mxu0
      %v2442 = vadd.f32 0.0, %v2441
      %2443 = vdwg.mxu0
      %s2444 = scalar_lea.vmem %s67, 48
      %v2445 = vld [vmem:[%s2444] sm:$0xff]
      %v2446 = vld [vmem:[%s2444 + $0x8] sm:$0xff]
      %2447 = vmatpush.msra.mxu0 0.0
      %2448 = vmatpush.msra.mxu0 0.0
      %2449 = vmatpush.msra.mxu0 0.0
      %2450 = vmatpush.msra.mxu0 0.0
      %2451 = vmatpush.msra.mxu0 0.0
      %2452 = vmatpush.msra.mxu0 0.0
      %2453 = vmatpush.msra.mxu0 0.0
      %2454 = vmatpush.msra.mxu0 0.0
      %2455 = vmatpush.msra.mxu0 0.0
      %2456 = vmatpush.msra.mxu0 0.0
      %2457 = vmatpush.msra.mxu0 0.0
      %2458 = vmatpush.msra.mxu0 0.0
      %2459 = vmatpush.msra.mxu0 0.0
      %2460 = vmatpush.msra.mxu0 0.0
      %2461 = vmatpush.msra.mxu0 %v2446
      %2462 = vmatpush.msra.mxu0 %v2445
      %2463 = vmatmul.f32.gmra.mxu0 %v2364
      %v2464 = vpop.f32.mrf.mxu0
      %v2465 = vadd.f32 0.0, %v2464
      %2466 = vmatmul.f32.gmra.mxu0 %v2367
      %v2467 = vpop.f32.mrf.mxu0
      %v2468 = vadd.f32 0.0, %v2467
      %2469 = vdwg.mxu0
      %s2470 = scalar_lea.vmem %s67, 64
      %v2471 = vld [vmem:[%s2470] sm:$0xff]
      %v2472 = vld [vmem:[%s2470 + $0x8] sm:$0xff]
      %2473 = vmatpush.msra.mxu0 0.0
      %2474 = vmatpush.msra.mxu0 0.0
      %2475 = vmatpush.msra.mxu0 0.0
      %2476 = vmatpush.msra.mxu0 0.0
      %2477 = vmatpush.msra.mxu0 0.0
      %2478 = vmatpush.msra.mxu0 0.0
      %2479 = vmatpush.msra.mxu0 0.0
      %2480 = vmatpush.msra.mxu0 0.0
      %2481 = vmatpush.msra.mxu0 0.0
      %2482 = vmatpush.msra.mxu0 0.0
      %2483 = vmatpush.msra.mxu0 0.0
      %2484 = vmatpush.msra.mxu0 0.0
      %2485 = vmatpush.msra.mxu0 0.0
      %2486 = vmatpush.msra.mxu0 0.0
      %2487 = vmatpush.msra.mxu0 %v2472
      %2488 = vmatpush.msra.mxu0 %v2471
      %2489 = vmatmul.f32.gmra.mxu0 %v2364
      %v2490 = vpop.f32.mrf.mxu0
      %v2491 = vadd.f32 0.0, %v2490
      %2492 = vmatmul.f32.gmra.mxu0 %v2367
      %v2493 = vpop.f32.mrf.mxu0
      %v2494 = vadd.f32 0.0, %v2493
      %2495 = vdwg.mxu0
      %s2496 = scalar_lea.vmem %s67, 80
      %v2497 = vld [vmem:[%s2496] sm:$0xff]
      %v2498 = vld [vmem:[%s2496 + $0x8] sm:$0xff]
      %2499 = vmatpush.msra.mxu0 0.0
      %2500 = vmatpush.msra.mxu0 0.0
      %2501 = vmatpush.msra.mxu0 0.0
      %2502 = vmatpush.msra.mxu0 0.0
      %2503 = vmatpush.msra.mxu0 0.0
      %2504 = vmatpush.msra.mxu0 0.0
      %2505 = vmatpush.msra.mxu0 0.0
      %2506 = vmatpush.msra.mxu0 0.0
      %2507 = vmatpush.msra.mxu0 0.0
      %2508 = vmatpush.msra.mxu0 0.0
      %2509 = vmatpush.msra.mxu0 0.0
      %2510 = vmatpush.msra.mxu0 0.0
      %2511 = vmatpush.msra.mxu0 0.0
      %2512 = vmatpush.msra.mxu0 0.0
      %2513 = vmatpush.msra.mxu0 %v2498
      %2514 = vmatpush.msra.mxu0 %v2497
      %2515 = vmatmul.f32.gmra.mxu0 %v2364
      %v2516 = vpop.f32.mrf.mxu0
      %v2517 = vadd.f32 0.0, %v2516
      %2518 = vmatmul.f32.gmra.mxu0 %v2367
      %v2519 = vpop.f32.mrf.mxu0
      %v2520 = vadd.f32 0.0, %v2519
      %2521 = vdwg.mxu0
      %s2522 = scalar_lea.vmem %s67, 96
      %v2523 = vld [vmem:[%s2522] sm:$0xff]
      %v2524 = vld [vmem:[%s2522 + $0x8] sm:$0xff]
      %2525 = vmatpush.msra.mxu0 0.0
      %2526 = vmatpush.msra.mxu0 0.0
      %2527 = vmatpush.msra.mxu0 0.0
      %2528 = vmatpush.msra.mxu0 0.0
      %2529 = vmatpush.msra.mxu0 0.0
      %2530 = vmatpush.msra.mxu0 0.0
      %2531 = vmatpush.msra.mxu0 0.0
      %2532 = vmatpush.msra.mxu0 0.0
      %2533 = vmatpush.msra.mxu0 0.0
      %2534 = vmatpush.msra.mxu0 0.0
      %2535 = vmatpush.msra.mxu0 0.0
      %2536 = vmatpush.msra.mxu0 0.0
      %2537 = vmatpush.msra.mxu0 0.0
      %2538 = vmatpush.msra.mxu0 0.0
      %2539 = vmatpush.msra.mxu0 %v2524
      %2540 = vmatpush.msra.mxu0 %v2523
      %2541 = vmatmul.f32.gmra.mxu0 %v2364
      %v2542 = vpop.f32.mrf.mxu0
      %v2543 = vadd.f32 0.0, %v2542
      %2544 = vmatmul.f32.gmra.mxu0 %v2367
      %v2545 = vpop.f32.mrf.mxu0
      %v2546 = vadd.f32 0.0, %v2545
      %2547 = vdwg.mxu0
      %s2548 = scalar_lea.vmem %s67, 112
      %v2549 = vld [vmem:[%s2548] sm:$0xff]
      %v2550 = vld [vmem:[%s2548 + $0x8] sm:$0xff]
      %2551 = vmatpush.msra.mxu0 0.0
      %2552 = vmatpush.msra.mxu0 0.0
      %2553 = vmatpush.msra.mxu0 0.0
      %2554 = vmatpush.msra.mxu0 0.0
      %2555 = vmatpush.msra.mxu0 0.0
      %2556 = vmatpush.msra.mxu0 0.0
      %2557 = vmatpush.msra.mxu0 0.0
      %2558 = vmatpush.msra.mxu0 0.0
      %2559 = vmatpush.msra.mxu0 0.0
      %2560 = vmatpush.msra.mxu0 0.0
      %2561 = vmatpush.msra.mxu0 0.0
      %2562 = vmatpush.msra.mxu0 0.0
      %2563 = vmatpush.msra.mxu0 0.0
      %2564 = vmatpush.msra.mxu0 0.0
      %2565 = vmatpush.msra.mxu0 %v2550
      %2566 = vmatpush.msra.mxu0 %v2549
      %2567 = vmatmul.f32.gmra.mxu0 %v2364
      %v2568 = vpop.f32.mrf.mxu0
      %v2569 = vadd.f32 0.0, %v2568
      %2570 = vmatmul.f32.gmra.mxu0 %v2367
      %v2571 = vpop.f32.mrf.mxu0
      %v2572 = vadd.f32 0.0, %v2571
      %2573 = vdwg.mxu0
      %s2574 = scalar_lea.vmem %s67, 128
      %v2575 = vld [vmem:[%s2574] sm:$0xff]
      %v2576 = vld [vmem:[%s2574 + $0x8] sm:$0xff]
      %2577 = vmatpush.msra.mxu0 0.0
      %2578 = vmatpush.msra.mxu0 0.0
      %2579 = vmatpush.msra.mxu0 0.0
      %2580 = vmatpush.msra.mxu0 0.0
      %2581 = vmatpush.msra.mxu0 0.0
      %2582 = vmatpush.msra.mxu0 0.0
      %2583 = vmatpush.msra.mxu0 0.0
      %2584 = vmatpush.msra.mxu0 0.0
      %2585 = vmatpush.msra.mxu0 0.0
      %2586 = vmatpush.msra.mxu0 0.0
      %2587 = vmatpush.msra.mxu0 0.0
      %2588 = vmatpush.msra.mxu0 0.0
      %2589 = vmatpush.msra.mxu0 0.0
      %2590 = vmatpush.msra.mxu0 0.0
      %2591 = vmatpush.msra.mxu0 %v2576
      %2592 = vmatpush.msra.mxu0 %v2575
      %2593 = vmatmul.f32.gmra.mxu0 %v2364
      %v2594 = vpop.f32.mrf.mxu0
      %v2595 = vadd.f32 0.0, %v2594
      %2596 = vmatmul.f32.gmra.mxu0 %v2367
      %v2597 = vpop.f32.mrf.mxu0
      %v2598 = vadd.f32 0.0, %v2597
      %2599 = vdwg.mxu0
      %v2600 = vpack.c.bf16 %v2390, %v2387
      %v2601 = vpack.c.bf16 %v2416, %v2413
      %v2602 = vpack.c.bf16 %v2442, %v2439
      %v2603 = vpack.c.bf16 %v2468, %v2465
      %v2604 = vpack.c.bf16 %v2494, %v2491
      %v2605 = vpack.c.bf16 %v2520, %v2517
      %v2606 = vpack.c.bf16 %v2546, %v2543
      %v2607 = vpack.c.bf16 %v2572, %v2569
      %v2608 = vpack.c.bf16 %v2598, %v2595
      %v2609 = vld [vmem:[%s19] sm:$0xff]
      %v2610 = vld [vmem:[%s19 + $0x8] sm:$0xff]
      %v2611 = vld [vmem:[%s19 + $0x10] sm:$0xff]
      %v2612 = vld [vmem:[%s19 + $0x18] sm:$0xff]
      %v2613 = vld [vmem:[%s21] sm:$0xff]
      %v2614 = vld [vmem:[%s21 + $0x8] sm:$0xff]
      %v2615 = vld [vmem:[%s21 + $0x10] sm:$0xff]
      %v2616 = vld [vmem:[%s21 + $0x18] sm:$0xff]
      %2618 = vset.pattern.permute.xlu0 0
      %2619 = vperm.xlu0 %2618, %v2613
      %v2620 = vpop.permute.xlu0 %2619
      %2623 = vset.pattern.permute.xlu0 0
      %2624 = vperm.xlu0 %2623, %v2614
      %v2625 = vpop.permute.xlu0 %2624
      %2628 = vset.pattern.permute.xlu0 0
      %2629 = vperm.xlu0 %2628, %v2615
      %v2630 = vpop.permute.xlu0 %2629
      %2633 = vset.pattern.permute.xlu0 0
      %2634 = vperm.xlu0 %2633, %v2616
      %v2635 = vpop.permute.xlu0 %2634
      %v2641 = vunpack.c.l.b16 %v2609
      %v2642 = vunpack.c.h.b16 %v2609
      %v2643 = vunpack.c.l.b16 %v2610
      %v2644 = vunpack.c.h.b16 %v2610
      %v2645 = vunpack.c.l.b16 %v2611
      %v2646 = vunpack.c.h.b16 %v2611
      %v2647 = vunpack.c.l.b16 %v2612
      %v2648 = vunpack.c.h.b16 %v2612
      %v2649 = vpack.c.b16 %v2643, %v2641
      %v2650 = vpack.c.b16 %v2644, %v2642
      %v2651 = vpack.c.b16 %v2647, %v2645
      %v2652 = vpack.c.b16 %v2648, %v2646
      %v2656 = vsel %vm2188, %v2650, 0
      %v2659 = vsel %vm2188, %v2652, 0
      %2661 = vmatpush.bf16.msra.mxu0 %v2607
      %2662 = vmatpush.bf16.msra.mxu0 %v2606
      %2663 = vmatpush.bf16.msra.mxu0 %v2605
      %2664 = vmatpush.bf16.msra.mxu0 %v2604
      %2665 = vmatpush.bf16.msra.mxu0 %v2603
      %2666 = vmatpush.bf16.msra.mxu0 %v2602
      %2667 = vmatpush.bf16.msra.mxu0 %v2601
      %2668 = vmatpush.bf16.msra.mxu0 %v2600
      %2669 = vmatmul.bf16.gmra.mxu0 %v2649
      %v2670 = vpop.f32.mrf.mxu0
      %v2671 = vadd.f32 %v2620, %v2670
      %v2672 = vpop.f32.mrf.mxu0
      %v2673 = vadd.f32 %v2625, %v2672
      %2674 = vmatmul.bf16.gmra.mxu0 %v2651
      %v2675 = vpop.f32.mrf.mxu0
      %v2676 = vadd.f32 %v2630, %v2675
      %v2677 = vpop.f32.mrf.mxu0
      %v2678 = vadd.f32 %v2635, %v2677
      %2679 = vdwg.mxu0
      %2680 = vmatpush.bf16.msra.mxu0 0
      %2681 = vmatpush.bf16.msra.mxu0 0
      %2682 = vmatpush.bf16.msra.mxu0 0
      %2683 = vmatpush.bf16.msra.mxu0 0
      %2684 = vmatpush.bf16.msra.mxu0 0
      %2685 = vmatpush.bf16.msra.mxu0 0
      %2686 = vmatpush.bf16.msra.mxu0 0
      %2687 = vmatpush.bf16.msra.mxu0 %v2608
      %2688 = vmatmul.bf16.gmra.mxu0 %v2656
      %v2689 = vpop.f32.mrf.mxu0
      %v2690 = vadd.f32 %v2671, %v2689
      %v2691 = vpop.f32.mrf.mxu0
      %v2692 = vadd.f32 %v2673, %v2691
      %2693 = vmatmul.bf16.gmra.mxu0 %v2659
      %v2694 = vpop.f32.mrf.mxu0
      %v2695 = vadd.f32 %v2676, %v2694
      %v2696 = vpop.f32.mrf.mxu0
      %v2697 = vadd.f32 %v2678, %v2696
      %2698 = vdwg.mxu0
      %v2699 = vmax.f32 %v2690, 0.0
      %v2700 = vmax.f32 %v2692, 0.0
      %v2701 = vmax.f32 %v2695, 0.0
      %v2702 = vmax.f32 %v2697, 0.0
      %v2704 = vsel %vm2188, %v2699, 0
      %v2707 = vsel %vm2188, %v2700, 0
      %v2710 = vsel %vm2188, %v2701, 0
      %v2713 = vsel %vm2188, %v2702, 0
      %2715 = vmatpush.msra.mxu0 0.0
      %2716 = vmatpush.msra.mxu0 0.0
      %2717 = vmatpush.msra.mxu0 0.0
      %2718 = vmatpush.msra.mxu0 0.0
      %2719 = vmatpush.msra.mxu0 0.0
      %2720 = vmatpush.msra.mxu0 0.0
      %2721 = vmatpush.msra.mxu0 0.0
      %2722 = vmatpush.msra.mxu0 0.0
      %2723 = vmatpush.msra.mxu0 0.0
      %2724 = vmatpush.msra.mxu0 0.0
      %2725 = vmatpush.msra.mxu0 0.0
      %2726 = vmatpush.msra.mxu0 0.0
      %2727 = vmatpush.msra.mxu0 0.0
      %2728 = vmatpush.msra.mxu0 0.0
      %2729 = vmatpush.msra.mxu0 %v2362
      %2730 = vmatpush.msra.mxu0 %v2361
      %2731 = vmatmul.f32.gmra.mxu0 %v2704
      %v2732 = vpop.f32.mrf.mxu0
      %v2733 = vadd.f32 0.0, %v2732
      %2734 = vmatmul.f32.gmra.mxu0 %v2707
      %v2735 = vpop.f32.mrf.mxu0
      %v2736 = vadd.f32 0.0, %v2735
      %2737 = vmatmul.f32.gmra.mxu0 %v2710
      %v2738 = vpop.f32.mrf.mxu0
      %v2739 = vadd.f32 0.0, %v2738
      %2740 = vmatmul.f32.gmra.mxu0 %v2713
      %v2741 = vpop.f32.mrf.mxu0
      %v2742 = vadd.f32 0.0, %v2741
      %2743 = vdwg.mxu0
      %2744 = vmatpush.msra.mxu0 0.0
      %2745 = vmatpush.msra.mxu0 0.0
      %2746 = vmatpush.msra.mxu0 0.0
      %2747 = vmatpush.msra.mxu0 0.0
      %2748 = vmatpush.msra.mxu0 0.0
      %2749 = vmatpush.msra.mxu0 0.0
      %2750 = vmatpush.msra.mxu0 0.0
      %2751 = vmatpush.msra.mxu0 0.0
      %2752 = vmatpush.msra.mxu0 0.0
      %2753 = vmatpush.msra.mxu0 0.0
      %2754 = vmatpush.msra.mxu0 0.0
      %2755 = vmatpush.msra.mxu0 0.0
      %2756 = vmatpush.msra.mxu0 0.0
      %2757 = vmatpush.msra.mxu0 0.0
      %2758 = vmatpush.msra.mxu0 %v2394
      %2759 = vmatpush.msra.mxu0 %v2393
      %2760 = vmatmul.f32.gmra.mxu0 %v2704
      %v2761 = vpop.f32.mrf.mxu0
      %v2762 = vadd.f32 0.0, %v2761
      %2763 = vmatmul.f32.gmra.mxu0 %v2707
      %v2764 = vpop.f32.mrf.mxu0
      %v2765 = vadd.f32 0.0, %v2764
      %2766 = vmatmul.f32.gmra.mxu0 %v2710
      %v2767 = vpop.f32.mrf.mxu0
      %v2768 = vadd.f32 0.0, %v2767
      %2769 = vmatmul.f32.gmra.mxu0 %v2713
      %v2770 = vpop.f32.mrf.mxu0
      %v2771 = vadd.f32 0.0, %v2770
      %2772 = vdwg.mxu0
      %2773 = vmatpush.msra.mxu0 0.0
      %2774 = vmatpush.msra.mxu0 0.0
      %2775 = vmatpush.msra.mxu0 0.0
      %2776 = vmatpush.msra.mxu0 0.0
      %2777 = vmatpush.msra.mxu0 0.0
      %2778 = vmatpush.msra.mxu0 0.0
      %2779 = vmatpush.msra.mxu0 0.0
      %2780 = vmatpush.msra.mxu0 0.0
      %2781 = vmatpush.msra.mxu0 0.0
      %2782 = vmatpush.msra.mxu0 0.0
      %2783 = vmatpush.msra.mxu0 0.0
      %2784 = vmatpush.msra.mxu0 0.0
      %2785 = vmatpush.msra.mxu0 0.0
      %2786 = vmatpush.msra.mxu0 0.0
      %2787 = vmatpush.msra.mxu0 %v2420
      %2788 = vmatpush.msra.mxu0 %v2419
      %2789 = vmatmul.f32.gmra.mxu0 %v2704
      %v2790 = vpop.f32.mrf.mxu0
      %v2791 = vadd.f32 0.0, %v2790
      %2792 = vmatmul.f32.gmra.mxu0 %v2707
      %v2793 = vpop.f32.mrf.mxu0
      %v2794 = vadd.f32 0.0, %v2793
      %2795 = vmatmul.f32.gmra.mxu0 %v2710
      %v2796 = vpop.f32.mrf.mxu0
      %v2797 = vadd.f32 0.0, %v2796
      %2798 = vmatmul.f32.gmra.mxu0 %v2713
      %v2799 = vpop.f32.mrf.mxu0
      %v2800 = vadd.f32 0.0, %v2799
      %2801 = vdwg.mxu0
      %2802 = vmatpush.msra.mxu0 0.0
      %2803 = vmatpush.msra.mxu0 0.0
      %2804 = vmatpush.msra.mxu0 0.0
      %2805 = vmatpush.msra.mxu0 0.0
      %2806 = vmatpush.msra.mxu0 0.0
      %2807 = vmatpush.msra.mxu0 0.0
      %2808 = vmatpush.msra.mxu0 0.0
      %2809 = vmatpush.msra.mxu0 0.0
      %2810 = vmatpush.msra.mxu0 0.0
      %2811 = vmatpush.msra.mxu0 0.0
      %2812 = vmatpush.msra.mxu0 0.0
      %2813 = vmatpush.msra.mxu0 0.0
      %2814 = vmatpush.msra.mxu0 0.0
      %2815 = vmatpush.msra.mxu0 0.0
      %2816 = vmatpush.msra.mxu0 %v2446
      %2817 = vmatpush.msra.mxu0 %v2445
      %2818 = vmatmul.f32.gmra.mxu0 %v2704
      %v2819 = vpop.f32.mrf.mxu0
      %v2820 = vadd.f32 0.0, %v2819
      %2821 = vmatmul.f32.gmra.mxu0 %v2707
      %v2822 = vpop.f32.mrf.mxu0
      %v2823 = vadd.f32 0.0, %v2822
      %2824 = vmatmul.f32.gmra.mxu0 %v2710
      %v2825 = vpop.f32.mrf.mxu0
      %v2826 = vadd.f32 0.0, %v2825
      %2827 = vmatmul.f32.gmra.mxu0 %v2713
      %v2828 = vpop.f32.mrf.mxu0
      %v2829 = vadd.f32 0.0, %v2828
      %2830 = vdwg.mxu0
      %2831 = vmatpush.msra.mxu0 0.0
      %2832 = vmatpush.msra.mxu0 0.0
      %2833 = vmatpush.msra.mxu0 0.0
      %2834 = vmatpush.msra.mxu0 0.0
      %2835 = vmatpush.msra.mxu0 0.0
      %2836 = vmatpush.msra.mxu0 0.0
      %2837 = vmatpush.msra.mxu0 0.0
      %2838 = vmatpush.msra.mxu0 0.0
      %2839 = vmatpush.msra.mxu0 0.0
      %2840 = vmatpush.msra.mxu0 0.0
      %2841 = vmatpush.msra.mxu0 0.0
      %2842 = vmatpush.msra.mxu0 0.0
      %2843 = vmatpush.msra.mxu0 0.0
      %2844 = vmatpush.msra.mxu0 0.0
      %2845 = vmatpush.msra.mxu0 %v2472
      %2846 = vmatpush.msra.mxu0 %v2471
      %2847 = vmatmul.f32.gmra.mxu0 %v2704
      %v2848 = vpop.f32.mrf.mxu0
      %v2849 = vadd.f32 0.0, %v2848
      %2850 = vmatmul.f32.gmra.mxu0 %v2707
      %v2851 = vpop.f32.mrf.mxu0
      %v2852 = vadd.f32 0.0, %v2851
      %2853 = vmatmul.f32.gmra.mxu0 %v2710
      %v2854 = vpop.f32.mrf.mxu0
      %v2855 = vadd.f32 0.0, %v2854
      %2856 = vmatmul.f32.gmra.mxu0 %v2713
      %v2857 = vpop.f32.mrf.mxu0
      %v2858 = vadd.f32 0.0, %v2857
      %2859 = vdwg.mxu0
      %2860 = vmatpush.msra.mxu0 0.0
      %2861 = vmatpush.msra.mxu0 0.0
      %2862 = vmatpush.msra.mxu0 0.0
      %2863 = vmatpush.msra.mxu0 0.0
      %2864 = vmatpush.msra.mxu0 0.0
      %2865 = vmatpush.msra.mxu0 0.0
      %2866 = vmatpush.msra.mxu0 0.0
      %2867 = vmatpush.msra.mxu0 0.0
      %2868 = vmatpush.msra.mxu0 0.0
      %2869 = vmatpush.msra.mxu0 0.0
      %2870 = vmatpush.msra.mxu0 0.0
      %2871 = vmatpush.msra.mxu0 0.0
      %2872 = vmatpush.msra.mxu0 0.0
      %2873 = vmatpush.msra.mxu0 0.0
      %2874 = vmatpush.msra.mxu0 %v2498
      %2875 = vmatpush.msra.mxu0 %v2497
      %2876 = vmatmul.f32.gmra.mxu0 %v2704
      %v2877 = vpop.f32.mrf.mxu0
      %v2878 = vadd.f32 0.0, %v2877
      %2879 = vmatmul.f32.gmra.mxu0 %v2707
      %v2880 = vpop.f32.mrf.mxu0
      %v2881 = vadd.f32 0.0, %v2880
      %2882 = vmatmul.f32.gmra.mxu0 %v2710
      %v2883 = vpop.f32.mrf.mxu0
      %v2884 = vadd.f32 0.0, %v2883
      %2885 = vmatmul.f32.gmra.mxu0 %v2713
      %v2886 = vpop.f32.mrf.mxu0
      %v2887 = vadd.f32 0.0, %v2886
      %2888 = vdwg.mxu0
      %2889 = vmatpush.msra.mxu0 0.0
      %2890 = vmatpush.msra.mxu0 0.0
      %2891 = vmatpush.msra.mxu0 0.0
      %2892 = vmatpush.msra.mxu0 0.0
      %2893 = vmatpush.msra.mxu0 0.0
      %2894 = vmatpush.msra.mxu0 0.0
      %2895 = vmatpush.msra.mxu0 0.0
      %2896 = vmatpush.msra.mxu0 0.0
      %2897 = vmatpush.msra.mxu0 0.0
      %2898 = vmatpush.msra.mxu0 0.0
      %2899 = vmatpush.msra.mxu0 0.0
      %2900 = vmatpush.msra.mxu0 0.0
      %2901 = vmatpush.msra.mxu0 0.0
      %2902 = vmatpush.msra.mxu0 0.0
      %2903 = vmatpush.msra.mxu0 %v2524
      %2904 = vmatpush.msra.mxu0 %v2523
      %2905 = vmatmul.f32.gmra.mxu0 %v2704
      %v2906 = vpop.f32.mrf.mxu0
      %v2907 = vadd.f32 0.0, %v2906
      %2908 = vmatmul.f32.gmra.mxu0 %v2707
      %v2909 = vpop.f32.mrf.mxu0
      %v2910 = vadd.f32 0.0, %v2909
      %2911 = vmatmul.f32.gmra.mxu0 %v2710
      %v2912 = vpop.f32.mrf.mxu0
      %v2913 = vadd.f32 0.0, %v2912
      %2914 = vmatmul.f32.gmra.mxu0 %v2713
      %v2915 = vpop.f32.mrf.mxu0
      %v2916 = vadd.f32 0.0, %v2915
      %2917 = vdwg.mxu0
      %2918 = vmatpush.msra.mxu0 0.0
      %2919 = vmatpush.msra.mxu0 0.0
      %2920 = vmatpush.msra.mxu0 0.0
      %2921 = vmatpush.msra.mxu0 0.0
      %2922 = vmatpush.msra.mxu0 0.0
      %2923 = vmatpush.msra.mxu0 0.0
      %2924 = vmatpush.msra.mxu0 0.0
      %2925 = vmatpush.msra.mxu0 0.0
      %2926 = vmatpush.msra.mxu0 0.0
      %2927 = vmatpush.msra.mxu0 0.0
      %2928 = vmatpush.msra.mxu0 0.0
      %2929 = vmatpush.msra.mxu0 0.0
      %2930 = vmatpush.msra.mxu0 0.0
      %2931 = vmatpush.msra.mxu0 0.0
      %2932 = vmatpush.msra.mxu0 %v2550
      %2933 = vmatpush.msra.mxu0 %v2549
      %2934 = vmatmul.f32.gmra.mxu0 %v2704
      %v2935 = vpop.f32.mrf.mxu0
      %v2936 = vadd.f32 0.0, %v2935
      %2937 = vmatmul.f32.gmra.mxu0 %v2707
      %v2938 = vpop.f32.mrf.mxu0
      %v2939 = vadd.f32 0.0, %v2938
      %2940 = vmatmul.f32.gmra.mxu0 %v2710
      %v2941 = vpop.f32.mrf.mxu0
      %v2942 = vadd.f32 0.0, %v2941
      %2943 = vmatmul.f32.gmra.mxu0 %v2713
      %v2944 = vpop.f32.mrf.mxu0
      %v2945 = vadd.f32 0.0, %v2944
      %2946 = vdwg.mxu0
      %2947 = vmatpush.msra.mxu0 0.0
      %2948 = vmatpush.msra.mxu0 0.0
      %2949 = vmatpush.msra.mxu0 0.0
      %2950 = vmatpush.msra.mxu0 0.0
      %2951 = vmatpush.msra.mxu0 0.0
      %2952 = vmatpush.msra.mxu0 0.0
      %2953 = vmatpush.msra.mxu0 0.0
      %2954 = vmatpush.msra.mxu0 0.0
      %2955 = vmatpush.msra.mxu0 0.0
      %2956 = vmatpush.msra.mxu0 0.0
      %2957 = vmatpush.msra.mxu0 0.0
      %2958 = vmatpush.msra.mxu0 0.0
      %2959 = vmatpush.msra.mxu0 0.0
      %2960 = vmatpush.msra.mxu0 0.0
      %2961 = vmatpush.msra.mxu0 %v2576
      %2962 = vmatpush.msra.mxu0 %v2575
      %2963 = vmatmul.f32.gmra.mxu0 %v2704
      %v2964 = vpop.f32.mrf.mxu0
      %v2965 = vadd.f32 0.0, %v2964
      %2966 = vmatmul.f32.gmra.mxu0 %v2707
      %v2967 = vpop.f32.mrf.mxu0
      %v2968 = vadd.f32 0.0, %v2967
      %2969 = vmatmul.f32.gmra.mxu0 %v2710
      %v2970 = vpop.f32.mrf.mxu0
      %v2971 = vadd.f32 0.0, %v2970
      %2972 = vmatmul.f32.gmra.mxu0 %v2713
      %v2973 = vpop.f32.mrf.mxu0
      %v2974 = vadd.f32 0.0, %v2973
      %2975 = vdwg.mxu0
      %v2976 = vpack.c.bf16 %v2736, %v2733
      %v2977 = vpack.c.bf16 %v2742, %v2739
      %v2978 = vpack.c.bf16 %v2765, %v2762
      %v2979 = vpack.c.bf16 %v2771, %v2768
      %v2980 = vpack.c.bf16 %v2794, %v2791
      %v2981 = vpack.c.bf16 %v2800, %v2797
      %v2982 = vpack.c.bf16 %v2823, %v2820
      %v2983 = vpack.c.bf16 %v2829, %v2826
      %v2984 = vpack.c.bf16 %v2852, %v2849
      %v2985 = vpack.c.bf16 %v2858, %v2855
      %v2986 = vpack.c.bf16 %v2881, %v2878
      %v2987 = vpack.c.bf16 %v2887, %v2884
      %v2988 = vpack.c.bf16 %v2910, %v2907
      %v2989 = vpack.c.bf16 %v2916, %v2913
      %v2990 = vpack.c.bf16 %v2939, %v2936
      %v2991 = vpack.c.bf16 %v2945, %v2942
      %v2992 = vpack.c.bf16 %v2968, %v2965
      %v2993 = vpack.c.bf16 %v2974, %v2971
      %v2994 = vld [vmem:[%s23] sm:$0xff]
      %v2995 = vld [vmem:[%s23 + $0x8] sm:$0xf]
      %v2996 = vld [vmem:[%s23 + $0xc] sm:$0xff]
      %v2997 = vld [vmem:[%s23 + $0x14] sm:$0xf]
      %v2998 = vld [vmem:[%s23 + $0x18] sm:$0xff]
      %v2999 = vld [vmem:[%s23 + $0x20] sm:$0xf]
      %v3000 = vld [vmem:[%s23 + $0x24] sm:$0xff]
      %v3001 = vld [vmem:[%s23 + $0x2c] sm:$0xf]
      %v3002 = vld [vmem:[%s25] sm:$0xff]
      %v3003 = vld [vmem:[%s25 + $0x8] sm:$0xff]
      %v3004 = vld [vmem:[%s25 + $0x10] sm:$0xff]
      %v3005 = vld [vmem:[%s25 + $0x18] sm:$0xff]
      %3007 = vset.pattern.permute.xlu0 0
      %3008 = vperm.xlu0 %3007, %v3002
      %v3009 = vpop.permute.xlu0 %3008
      %3012 = vset.pattern.permute.xlu0 0
      %3013 = vperm.xlu0 %3012, %v3003
      %v3014 = vpop.permute.xlu0 %3013
      %3017 = vset.pattern.permute.xlu0 0
      %3018 = vperm.xlu0 %3017, %v3004
      %v3019 = vpop.permute.xlu0 %3018
      %3022 = vset.pattern.permute.xlu0 0
      %3023 = vperm.xlu0 %3022, %v3005
      %v3024 = vpop.permute.xlu0 %3023
      %v3034 = vunpack.c.l.b16 %v2994
      %v3035 = vunpack.c.h.b16 %v2994
      %v3036 = vunpack.c.l.b16 %v2995
      %v3037 = vunpack.c.l.b16 %v2996
      %v3038 = vunpack.c.h.b16 %v2996
      %v3039 = vunpack.c.l.b16 %v2997
      %v3040 = vunpack.c.l.b16 %v2998
      %v3041 = vunpack.c.h.b16 %v2998
      %v3042 = vunpack.c.l.b16 %v2999
      %v3043 = vunpack.c.l.b16 %v3000
      %v3044 = vunpack.c.h.b16 %v3000
      %v3045 = vunpack.c.l.b16 %v3001
      %v3046 = vpack.c.b16 %v3037, %v3034
      %v3047 = vpack.c.b16 %v3038, %v3035
      %v3048 = vpack.c.b16 %v3039, %v3036
      %v3049 = vpack.c.b16 %v3043, %v3040
      %v3050 = vpack.c.b16 %v3044, %v3041
      %v3051 = vpack.c.b16 %v3045, %v3042
      %vm3056 = vcmask 261120
      %v3058 = vsel %vm3056, %v3048, 0
      %v3061 = vsel %vm3056, %v3051, 0
      %3063 = vmatpush.bf16.msra.mxu0 %v2983
      %3064 = vmatpush.bf16.msra.mxu0 %v2982
      %3065 = vmatpush.bf16.msra.mxu0 %v2981
      %3066 = vmatpush.bf16.msra.mxu0 %v2980
      %3067 = vmatpush.bf16.msra.mxu0 %v2979
      %3068 = vmatpush.bf16.msra.mxu0 %v2978
      %3069 = vmatpush.bf16.msra.mxu0 %v2977
      %3070 = vmatpush.bf16.msra.mxu0 %v2976
      %3071 = vmatmul.bf16.gmra.mxu0 %v3046
      %v3072 = vpop.f32.mrf.mxu0
      %v3073 = vadd.f32 %v3009, %v3072
      %v3074 = vpop.f32.mrf.mxu0
      %v3075 = vadd.f32 %v3014, %v3074
      %3076 = vmatmul.bf16.gmra.mxu0 %v3049
      %v3077 = vpop.f32.mrf.mxu0
      %v3078 = vadd.f32 %v3019, %v3077
      %v3079 = vpop.f32.mrf.mxu0
      %v3080 = vadd.f32 %v3024, %v3079
      %3081 = vdwg.mxu0
      %3082 = vmatpush.bf16.msra.mxu0 %v2991
      %3083 = vmatpush.bf16.msra.mxu0 %v2990
      %3084 = vmatpush.bf16.msra.mxu0 %v2989
      %3085 = vmatpush.bf16.msra.mxu0 %v2988
      %3086 = vmatpush.bf16.msra.mxu0 %v2987
      %3087 = vmatpush.bf16.msra.mxu0 %v2986
      %3088 = vmatpush.bf16.msra.mxu0 %v2985
      %3089 = vmatpush.bf16.msra.mxu0 %v2984
      %3090 = vmatmul.bf16.gmra.mxu0 %v3047
      %v3091 = vpop.f32.mrf.mxu0
      %v3092 = vadd.f32 %v3073, %v3091
      %v3093 = vpop.f32.mrf.mxu0
      %v3094 = vadd.f32 %v3075, %v3093
      %3095 = vmatmul.bf16.gmra.mxu0 %v3050
      %v3096 = vpop.f32.mrf.mxu0
      %v3097 = vadd.f32 %v3078, %v3096
      %v3098 = vpop.f32.mrf.mxu0
      %v3099 = vadd.f32 %v3080, %v3098
      %3100 = vdwg.mxu0
      %3101 = vmatpush.bf16.msra.mxu0 0
      %3102 = vmatpush.bf16.msra.mxu0 0
      %3103 = vmatpush.bf16.msra.mxu0 0
      %3104 = vmatpush.bf16.msra.mxu0 0
      %3105 = vmatpush.bf16.msra.mxu0 0
      %3106 = vmatpush.bf16.msra.mxu0 0
      %3107 = vmatpush.bf16.msra.mxu0 %v2993
      %3108 = vmatpush.bf16.msra.mxu0 %v2992
      %3109 = vmatmul.bf16.gmra.mxu0 %v3058
      %v3110 = vpop.f32.mrf.mxu0
      %v3111 = vadd.f32 %v3092, %v3110
      %v3112 = vpop.f32.mrf.mxu0
      %v3113 = vadd.f32 %v3094, %v3112
      %3114 = vmatmul.bf16.gmra.mxu0 %v3061
      %v3115 = vpop.f32.mrf.mxu0
      %v3116 = vadd.f32 %v3097, %v3115
      %v3117 = vpop.f32.mrf.mxu0
      %v3118 = vadd.f32 %v3099, %v3117
      %3119 = vdwg.mxu0
      %v3120 = vmax.f32 %v3111, 0.0
      %v3121 = vmax.f32 %v3113, 0.0
      %v3122 = vmax.f32 %v3116, 0.0
      %v3123 = vmax.f32 %v3118, 0.0
      %v3124 = vld [vmem:[%s75] sm:$0xff]
      %v3125 = vld [vmem:[%s75 + $0x8] sm:$0xff]
      %v3127 = vsel %vm2188, %v3120, 0
      %v3130 = vsel %vm2188, %v3121, 0
      %v3133 = vsel %vm2188, %v3122, 0
      %v3136 = vsel %vm2188, %v3123, 0
      %3138 = vmatpush.msra.mxu0 0.0
      %3139 = vmatpush.msra.mxu0 0.0
      %3140 = vmatpush.msra.mxu0 0.0
      %3141 = vmatpush.msra.mxu0 0.0
      %3142 = vmatpush.msra.mxu0 0.0
      %3143 = vmatpush.msra.mxu0 0.0
      %3144 = vmatpush.msra.mxu0 0.0
      %3145 = vmatpush.msra.mxu0 0.0
      %3146 = vmatpush.msra.mxu0 0.0
      %3147 = vmatpush.msra.mxu0 0.0
      %3148 = vmatpush.msra.mxu0 0.0
      %3149 = vmatpush.msra.mxu0 0.0
      %3150 = vmatpush.msra.mxu0 0.0
      %3151 = vmatpush.msra.mxu0 0.0
      %3152 = vmatpush.msra.mxu0 %v3125
      %3153 = vmatpush.msra.mxu0 %v3124
      %3154 = vmatmul.f32.gmra.mxu0 %v3127
      %v3155 = vpop.f32.mrf.mxu0
      %v3156 = vadd.f32 0.0, %v3155
      %3157 = vmatmul.f32.gmra.mxu0 %v3130
      %v3158 = vpop.f32.mrf.mxu0
      %v3159 = vadd.f32 0.0, %v3158
      %3160 = vmatmul.f32.gmra.mxu0 %v3133
      %v3161 = vpop.f32.mrf.mxu0
      %v3162 = vadd.f32 0.0, %v3161
      %3163 = vmatmul.f32.gmra.mxu0 %v3136
      %v3164 = vpop.f32.mrf.mxu0
      %v3165 = vadd.f32 0.0, %v3164
      %3166 = vdwg.mxu0
      %s3167 = scalar_lea.vmem %s75, 16
      %v3168 = vld [vmem:[%s3167] sm:$0xff]
      %v3169 = vld [vmem:[%s3167 + $0x8] sm:$0xff]
      %3170 = vmatpush.msra.mxu0 0.0
      %3171 = vmatpush.msra.mxu0 0.0
      %3172 = vmatpush.msra.mxu0 0.0
      %3173 = vmatpush.msra.mxu0 0.0
      %3174 = vmatpush.msra.mxu0 0.0
      %3175 = vmatpush.msra.mxu0 0.0
      %3176 = vmatpush.msra.mxu0 0.0
      %3177 = vmatpush.msra.mxu0 0.0
      %3178 = vmatpush.msra.mxu0 0.0
      %3179 = vmatpush.msra.mxu0 0.0
      %3180 = vmatpush.msra.mxu0 0.0
      %3181 = vmatpush.msra.mxu0 0.0
      %3182 = vmatpush.msra.mxu0 0.0
      %3183 = vmatpush.msra.mxu0 0.0
      %3184 = vmatpush.msra.mxu0 %v3169
      %3185 = vmatpush.msra.mxu0 %v3168
      %3186 = vmatmul.f32.gmra.mxu0 %v3127
      %v3187 = vpop.f32.mrf.mxu0
      %v3188 = vadd.f32 0.0, %v3187
      %3189 = vmatmul.f32.gmra.mxu0 %v3130
      %v3190 = vpop.f32.mrf.mxu0
      %v3191 = vadd.f32 0.0, %v3190
      %3192 = vmatmul.f32.gmra.mxu0 %v3133
      %v3193 = vpop.f32.mrf.mxu0
      %v3194 = vadd.f32 0.0, %v3193
      %3195 = vmatmul.f32.gmra.mxu0 %v3136
      %v3196 = vpop.f32.mrf.mxu0
      %v3197 = vadd.f32 0.0, %v3196
      %3198 = vdwg.mxu0
      %v3199 = vmax.f32 %v3156, %v3188
      %v3200 = vmax.f32 %v3159, %v3191
      %v3201 = vmax.f32 %v3162, %v3194
      %v3202 = vmax.f32 %v3165, %v3197
      %s3203 = scalar_lea.vmem %s75, 32
      %v3204 = vld [vmem:[%s3203] sm:$0xff]
      %v3205 = vld [vmem:[%s3203 + $0x8] sm:$0xff]
      %3206 = vmatpush.msra.mxu0 0.0
      %3207 = vmatpush.msra.mxu0 0.0
      %3208 = vmatpush.msra.mxu0 0.0
      %3209 = vmatpush.msra.mxu0 0.0
      %3210 = vmatpush.msra.mxu0 0.0
      %3211 = vmatpush.msra.mxu0 0.0
      %3212 = vmatpush.msra.mxu0 0.0
      %3213 = vmatpush.msra.mxu0 0.0
      %3214 = vmatpush.msra.mxu0 0.0
      %3215 = vmatpush.msra.mxu0 0.0
      %3216 = vmatpush.msra.mxu0 0.0
      %3217 = vmatpush.msra.mxu0 0.0
      %3218 = vmatpush.msra.mxu0 0.0
      %3219 = vmatpush.msra.mxu0 0.0
      %3220 = vmatpush.msra.mxu0 %v3205
      %3221 = vmatpush.msra.mxu0 %v3204
      %3222 = vmatmul.f32.gmra.mxu0 %v3127
      %v3223 = vpop.f32.mrf.mxu0
      %v3224 = vadd.f32 0.0, %v3223
      %3225 = vmatmul.f32.gmra.mxu0 %v3130
      %v3226 = vpop.f32.mrf.mxu0
      %v3227 = vadd.f32 0.0, %v3226
      %3228 = vmatmul.f32.gmra.mxu0 %v3133
      %v3229 = vpop.f32.mrf.mxu0
      %v3230 = vadd.f32 0.0, %v3229
      %3231 = vmatmul.f32.gmra.mxu0 %v3136
      %v3232 = vpop.f32.mrf.mxu0
      %v3233 = vadd.f32 0.0, %v3232
      %3234 = vdwg.mxu0
      %v3235 = vmax.f32 %v3199, %v3224
      %v3236 = vmax.f32 %v3200, %v3227
      %v3237 = vmax.f32 %v3201, %v3230
      %v3238 = vmax.f32 %v3202, %v3233
      %s3239 = scalar_lea.vmem %s75, 48
      %v3240 = vld [vmem:[%s3239] sm:$0xff]
      %v3241 = vld [vmem:[%s3239 + $0x8] sm:$0xff]
      %3242 = vmatpush.msra.mxu0 0.0
      %3243 = vmatpush.msra.mxu0 0.0
      %3244 = vmatpush.msra.mxu0 0.0
      %3245 = vmatpush.msra.mxu0 0.0
      %3246 = vmatpush.msra.mxu0 0.0
      %3247 = vmatpush.msra.mxu0 0.0
      %3248 = vmatpush.msra.mxu0 0.0
      %3249 = vmatpush.msra.mxu0 0.0
      %3250 = vmatpush.msra.mxu0 0.0
      %3251 = vmatpush.msra.mxu0 0.0
      %3252 = vmatpush.msra.mxu0 0.0
      %3253 = vmatpush.msra.mxu0 0.0
      %3254 = vmatpush.msra.mxu0 0.0
      %3255 = vmatpush.msra.mxu0 0.0
      %3256 = vmatpush.msra.mxu0 %v3241
      %3257 = vmatpush.msra.mxu0 %v3240
      %3258 = vmatmul.f32.gmra.mxu0 %v3127
      %v3259 = vpop.f32.mrf.mxu0
      %v3260 = vadd.f32 0.0, %v3259
      %3261 = vmatmul.f32.gmra.mxu0 %v3130
      %v3262 = vpop.f32.mrf.mxu0
      %v3263 = vadd.f32 0.0, %v3262
      %3264 = vmatmul.f32.gmra.mxu0 %v3133
      %v3265 = vpop.f32.mrf.mxu0
      %v3266 = vadd.f32 0.0, %v3265
      %3267 = vmatmul.f32.gmra.mxu0 %v3136
      %v3268 = vpop.f32.mrf.mxu0
      %v3269 = vadd.f32 0.0, %v3268
      %3270 = vdwg.mxu0
      %v3271 = vmax.f32 %v3235, %v3260
      %v3272 = vmax.f32 %v3236, %v3263
      %v3273 = vmax.f32 %v3237, %v3266
      %v3274 = vmax.f32 %v3238, %v3269
      %v3275 = vld [vmem:[%s69] sm:$0xf]
      %vm3276 = vcmask 31744
      %v3278 = vsel %vm3276, %v3271, 0
      %v3281 = vsel %vm3276, %v3272, 0
      %v3284 = vsel %vm3276, %v3273, 0
      %v3287 = vsel %vm3276, %v3274, 0
      %v3290 = vsel %vm1392, %v3275, 0
      %3292 = vmatpush.msra.mxu0 0.0
      %3293 = vmatpush.msra.mxu0 0.0
      %3294 = vmatpush.msra.mxu0 0.0
      %3295 = vmatpush.msra.mxu0 0.0
      %3296 = vmatpush.msra.mxu0 0.0
      %3297 = vmatpush.msra.mxu0 0.0
      %3298 = vmatpush.msra.mxu0 0.0
      %3299 = vmatpush.msra.mxu0 0.0
      %3300 = vmatpush.msra.mxu0 0.0
      %3301 = vmatpush.msra.mxu0 0.0
      %3302 = vmatpush.msra.mxu0 0.0
      %3303 = vmatpush.msra.mxu0 0.0
      %3304 = vmatpush.msra.mxu0 0.0
      %3305 = vmatpush.msra.mxu0 0.0
      %3306 = vmatpush.msra.mxu0 0.0
      %3307 = vmatpush.msra.mxu0 %v3290
      %3308 = vmatmul.f32.gmra.mxu0 %v3278
      %v3309 = vpop.f32.mrf.mxu0
      %v3310 = vadd.f32 0.0, %v3309
      %3311 = vmatmul.f32.gmra.mxu0 %v3281
      %v3312 = vpop.f32.mrf.mxu0
      %v3313 = vadd.f32 0.0, %v3312
      %3314 = vmatmul.f32.gmra.mxu0 %v3284
      %v3315 = vpop.f32.mrf.mxu0
      %v3316 = vadd.f32 0.0, %v3315
      %3317 = vmatmul.f32.gmra.mxu0 %v3287
      %v3318 = vpop.f32.mrf.mxu0
      %v3319 = vadd.f32 0.0, %v3318
      %3320 = vdwg.mxu0
      %s3321 = scalar_lea.vmem %s69, 4
      %v3322 = vld [vmem:[%s3321] sm:$0xf]
      %v3324 = vsel %vm1392, %v3322, 0
      %3326 = vmatpush.msra.mxu0 0.0
      %3327 = vmatpush.msra.mxu0 0.0
      %3328 = vmatpush.msra.mxu0 0.0
      %3329 = vmatpush.msra.mxu0 0.0
      %3330 = vmatpush.msra.mxu0 0.0
      %3331 = vmatpush.msra.mxu0 0.0
      %3332 = vmatpush.msra.mxu0 0.0
      %3333 = vmatpush.msra.mxu0 0.0
      %3334 = vmatpush.msra.mxu0 0.0
      %3335 = vmatpush.msra.mxu0 0.0
      %3336 = vmatpush.msra.mxu0 0.0
      %3337 = vmatpush.msra.mxu0 0.0
      %3338 = vmatpush.msra.mxu0 0.0
      %3339 = vmatpush.msra.mxu0 0.0
      %3340 = vmatpush.msra.mxu0 0.0
      %3341 = vmatpush.msra.mxu0 %v3324
      %3342 = vmatmul.f32.gmra.mxu0 %v3278
      %v3343 = vpop.f32.mrf.mxu0
      %v3344 = vadd.f32 0.0, %v3343
      %3345 = vmatmul.f32.gmra.mxu0 %v3281
      %v3346 = vpop.f32.mrf.mxu0
      %v3347 = vadd.f32 0.0, %v3346
      %3348 = vmatmul.f32.gmra.mxu0 %v3284
      %v3349 = vpop.f32.mrf.mxu0
      %v3350 = vadd.f32 0.0, %v3349
      %3351 = vmatmul.f32.gmra.mxu0 %v3287
      %v3352 = vpop.f32.mrf.mxu0
      %v3353 = vadd.f32 0.0, %v3352
      %3354 = vdwg.mxu0
      %s3355 = scalar_lea.vmem %s69, 8
      %v3356 = vld [vmem:[%s3355] sm:$0xf]
      %v3358 = vsel %vm1392, %v3356, 0
      %3360 = vmatpush.msra.mxu0 0.0
      %3361 = vmatpush.msra.mxu0 0.0
      %3362 = vmatpush.msra.mxu0 0.0
      %3363 = vmatpush.msra.mxu0 0.0
      %3364 = vmatpush.msra.mxu0 0.0
      %3365 = vmatpush.msra.mxu0 0.0
      %3366 = vmatpush.msra.mxu0 0.0
      %3367 = vmatpush.msra.mxu0 0.0
      %3368 = vmatpush.msra.mxu0 0.0
      %3369 = vmatpush.msra.mxu0 0.0
      %3370 = vmatpush.msra.mxu0 0.0
      %3371 = vmatpush.msra.mxu0 0.0
      %3372 = vmatpush.msra.mxu0 0.0
      %3373 = vmatpush.msra.mxu0 0.0
      %3374 = vmatpush.msra.mxu0 0.0
      %3375 = vmatpush.msra.mxu0 %v3358
      %3376 = vmatmul.f32.gmra.mxu0 %v3278
      %v3377 = vpop.f32.mrf.mxu0
      %v3378 = vadd.f32 0.0, %v3377
      %3379 = vmatmul.f32.gmra.mxu0 %v3281
      %v3380 = vpop.f32.mrf.mxu0
      %v3381 = vadd.f32 0.0, %v3380
      %3382 = vmatmul.f32.gmra.mxu0 %v3284
      %v3383 = vpop.f32.mrf.mxu0
      %v3384 = vadd.f32 0.0, %v3383
      %3385 = vmatmul.f32.gmra.mxu0 %v3287
      %v3386 = vpop.f32.mrf.mxu0
      %v3387 = vadd.f32 0.0, %v3386
      %3388 = vdwg.mxu0
      %s3389 = scalar_lea.vmem %s69, 12
      %v3390 = vld [vmem:[%s3389] sm:$0xf]
      %v3392 = vsel %vm1392, %v3390, 0
      %3394 = vmatpush.msra.mxu0 0.0
      %3395 = vmatpush.msra.mxu0 0.0
      %3396 = vmatpush.msra.mxu0 0.0
      %3397 = vmatpush.msra.mxu0 0.0
      %3398 = vmatpush.msra.mxu0 0.0
      %3399 = vmatpush.msra.mxu0 0.0
      %3400 = vmatpush.msra.mxu0 0.0
      %3401 = vmatpush.msra.mxu0 0.0
      %3402 = vmatpush.msra.mxu0 0.0
      %3403 = vmatpush.msra.mxu0 0.0
      %3404 = vmatpush.msra.mxu0 0.0
      %3405 = vmatpush.msra.mxu0 0.0
      %3406 = vmatpush.msra.mxu0 0.0
      %3407 = vmatpush.msra.mxu0 0.0
      %3408 = vmatpush.msra.mxu0 0.0
      %3409 = vmatpush.msra.mxu0 %v3392
      %3410 = vmatmul.f32.gmra.mxu0 %v3278
      %v3411 = vpop.f32.mrf.mxu0
      %v3412 = vadd.f32 0.0, %v3411
      %3413 = vmatmul.f32.gmra.mxu0 %v3281
      %v3414 = vpop.f32.mrf.mxu0
      %v3415 = vadd.f32 0.0, %v3414
      %3416 = vmatmul.f32.gmra.mxu0 %v3284
      %v3417 = vpop.f32.mrf.mxu0
      %v3418 = vadd.f32 0.0, %v3417
      %3419 = vmatmul.f32.gmra.mxu0 %v3287
      %v3420 = vpop.f32.mrf.mxu0
      %v3421 = vadd.f32 0.0, %v3420
      %3422 = vdwg.mxu0
      %s3423 = scalar_lea.vmem %s69, 16
      %v3424 = vld [vmem:[%s3423] sm:$0xf]
      %v3426 = vsel %vm1392, %v3424, 0
      %3428 = vmatpush.msra.mxu0 0.0
      %3429 = vmatpush.msra.mxu0 0.0
      %3430 = vmatpush.msra.mxu0 0.0
      %3431 = vmatpush.msra.mxu0 0.0
      %3432 = vmatpush.msra.mxu0 0.0
      %3433 = vmatpush.msra.mxu0 0.0
      %3434 = vmatpush.msra.mxu0 0.0
      %3435 = vmatpush.msra.mxu0 0.0
      %3436 = vmatpush.msra.mxu0 0.0
      %3437 = vmatpush.msra.mxu0 0.0
      %3438 = vmatpush.msra.mxu0 0.0
      %3439 = vmatpush.msra.mxu0 0.0
      %3440 = vmatpush.msra.mxu0 0.0
      %3441 = vmatpush.msra.mxu0 0.0
      %3442 = vmatpush.msra.mxu0 0.0
      %3443 = vmatpush.msra.mxu0 %v3426
      %3444 = vmatmul.f32.gmra.mxu0 %v3278
      %v3445 = vpop.f32.mrf.mxu0
      %v3446 = vadd.f32 0.0, %v3445
      %3447 = vmatmul.f32.gmra.mxu0 %v3281
      %v3448 = vpop.f32.mrf.mxu0
      %v3449 = vadd.f32 0.0, %v3448
      %3450 = vmatmul.f32.gmra.mxu0 %v3284
      %v3451 = vpop.f32.mrf.mxu0
      %v3452 = vadd.f32 0.0, %v3451
      %3453 = vmatmul.f32.gmra.mxu0 %v3287
      %v3454 = vpop.f32.mrf.mxu0
      %v3455 = vadd.f32 0.0, %v3454
      %3456 = vdwg.mxu0
      %s3457 = scalar_lea.vmem %s69, 20
      %v3458 = vld [vmem:[%s3457] sm:$0xf]
      %v3460 = vsel %vm1392, %v3458, 0
      %3462 = vmatpush.msra.mxu0 0.0
      %3463 = vmatpush.msra.mxu0 0.0
      %3464 = vmatpush.msra.mxu0 0.0
      %3465 = vmatpush.msra.mxu0 0.0
      %3466 = vmatpush.msra.mxu0 0.0
      %3467 = vmatpush.msra.mxu0 0.0
      %3468 = vmatpush.msra.mxu0 0.0
      %3469 = vmatpush.msra.mxu0 0.0
      %3470 = vmatpush.msra.mxu0 0.0
      %3471 = vmatpush.msra.mxu0 0.0
      %3472 = vmatpush.msra.mxu0 0.0
      %3473 = vmatpush.msra.mxu0 0.0
      %3474 = vmatpush.msra.mxu0 0.0
      %3475 = vmatpush.msra.mxu0 0.0
      %3476 = vmatpush.msra.mxu0 0.0
      %3477 = vmatpush.msra.mxu0 %v3460
      %3478 = vmatmul.f32.gmra.mxu0 %v3278
      %v3479 = vpop.f32.mrf.mxu0
      %v3480 = vadd.f32 0.0, %v3479
      %3481 = vmatmul.f32.gmra.mxu0 %v3281
      %v3482 = vpop.f32.mrf.mxu0
      %v3483 = vadd.f32 0.0, %v3482
      %3484 = vmatmul.f32.gmra.mxu0 %v3284
      %v3485 = vpop.f32.mrf.mxu0
      %v3486 = vadd.f32 0.0, %v3485
      %3487 = vmatmul.f32.gmra.mxu0 %v3287
      %v3488 = vpop.f32.mrf.mxu0
      %v3489 = vadd.f32 0.0, %v3488
      %3490 = vdwg.mxu0
      %s3491 = scalar_lea.vmem %s69, 24
      %v3492 = vld [vmem:[%s3491] sm:$0xf]
      %v3494 = vsel %vm1392, %v3492, 0
      %3496 = vmatpush.msra.mxu0 0.0
      %3497 = vmatpush.msra.mxu0 0.0
      %3498 = vmatpush.msra.mxu0 0.0
      %3499 = vmatpush.msra.mxu0 0.0
      %3500 = vmatpush.msra.mxu0 0.0
      %3501 = vmatpush.msra.mxu0 0.0
      %3502 = vmatpush.msra.mxu0 0.0
      %3503 = vmatpush.msra.mxu0 0.0
      %3504 = vmatpush.msra.mxu0 0.0
      %3505 = vmatpush.msra.mxu0 0.0
      %3506 = vmatpush.msra.mxu0 0.0
      %3507 = vmatpush.msra.mxu0 0.0
      %3508 = vmatpush.msra.mxu0 0.0
      %3509 = vmatpush.msra.mxu0 0.0
      %3510 = vmatpush.msra.mxu0 0.0
      %3511 = vmatpush.msra.mxu0 %v3494
      %3512 = vmatmul.f32.gmra.mxu0 %v3278
      %v3513 = vpop.f32.mrf.mxu0
      %v3514 = vadd.f32 0.0, %v3513
      %3515 = vmatmul.f32.gmra.mxu0 %v3281
      %v3516 = vpop.f32.mrf.mxu0
      %v3517 = vadd.f32 0.0, %v3516
      %3518 = vmatmul.f32.gmra.mxu0 %v3284
      %v3519 = vpop.f32.mrf.mxu0
      %v3520 = vadd.f32 0.0, %v3519
      %3521 = vmatmul.f32.gmra.mxu0 %v3287
      %v3522 = vpop.f32.mrf.mxu0
      %v3523 = vadd.f32 0.0, %v3522
      %3524 = vdwg.mxu0
      %s3525 = scalar_lea.vmem %s69, 28
      %v3526 = vld [vmem:[%s3525] sm:$0xf]
      %v3528 = vsel %vm1392, %v3526, 0
      %3530 = vmatpush.msra.mxu0 0.0
      %3531 = vmatpush.msra.mxu0 0.0
      %3532 = vmatpush.msra.mxu0 0.0
      %3533 = vmatpush.msra.mxu0 0.0
      %3534 = vmatpush.msra.mxu0 0.0
      %3535 = vmatpush.msra.mxu0 0.0
      %3536 = vmatpush.msra.mxu0 0.0
      %3537 = vmatpush.msra.mxu0 0.0
      %3538 = vmatpush.msra.mxu0 0.0
      %3539 = vmatpush.msra.mxu0 0.0
      %3540 = vmatpush.msra.mxu0 0.0
      %3541 = vmatpush.msra.mxu0 0.0
      %3542 = vmatpush.msra.mxu0 0.0
      %3543 = vmatpush.msra.mxu0 0.0
      %3544 = vmatpush.msra.mxu0 0.0
      %3545 = vmatpush.msra.mxu0 %v3528
      %3546 = vmatmul.f32.gmra.mxu0 %v3278
      %v3547 = vpop.f32.mrf.mxu0
      %v3548 = vadd.f32 0.0, %v3547
      %3549 = vmatmul.f32.gmra.mxu0 %v3281
      %v3550 = vpop.f32.mrf.mxu0
      %v3551 = vadd.f32 0.0, %v3550
      %3552 = vmatmul.f32.gmra.mxu0 %v3284
      %v3553 = vpop.f32.mrf.mxu0
      %v3554 = vadd.f32 0.0, %v3553
      %3555 = vmatmul.f32.gmra.mxu0 %v3287
      %v3556 = vpop.f32.mrf.mxu0
      %v3557 = vadd.f32 0.0, %v3556
      %3558 = vdwg.mxu0
      %s3559 = scalar_lea.vmem %s69, 32
      %v3560 = vld [vmem:[%s3559] sm:$0xf]
      %v3562 = vsel %vm1392, %v3560, 0
      %3564 = vmatpush.msra.mxu0 0.0
      %3565 = vmatpush.msra.mxu0 0.0
      %3566 = vmatpush.msra.mxu0 0.0
      %3567 = vmatpush.msra.mxu0 0.0
      %3568 = vmatpush.msra.mxu0 0.0
      %3569 = vmatpush.msra.mxu0 0.0
      %3570 = vmatpush.msra.mxu0 0.0
      %3571 = vmatpush.msra.mxu0 0.0
      %3572 = vmatpush.msra.mxu0 0.0
      %3573 = vmatpush.msra.mxu0 0.0
      %3574 = vmatpush.msra.mxu0 0.0
      %3575 = vmatpush.msra.mxu0 0.0
      %3576 = vmatpush.msra.mxu0 0.0
      %3577 = vmatpush.msra.mxu0 0.0
      %3578 = vmatpush.msra.mxu0 0.0
      %3579 = vmatpush.msra.mxu0 %v3562
      %3580 = vmatmul.f32.gmra.mxu0 %v3278
      %v3581 = vpop.f32.mrf.mxu0
      %v3582 = vadd.f32 0.0, %v3581
      %3583 = vmatmul.f32.gmra.mxu0 %v3281
      %v3584 = vpop.f32.mrf.mxu0
      %v3585 = vadd.f32 0.0, %v3584
      %3586 = vmatmul.f32.gmra.mxu0 %v3284
      %v3587 = vpop.f32.mrf.mxu0
      %v3588 = vadd.f32 0.0, %v3587
      %3589 = vmatmul.f32.gmra.mxu0 %v3287
      %v3590 = vpop.f32.mrf.mxu0
      %v3591 = vadd.f32 0.0, %v3590
      %3592 = vdwg.mxu0
      %v3593 = vpack.c.bf16 %v3313, %v3310
      %v3594 = vpack.c.bf16 %v3319, %v3316
      %v3595 = vpack.c.bf16 %v3347, %v3344
      %v3596 = vpack.c.bf16 %v3353, %v3350
      %v3597 = vpack.c.bf16 %v3381, %v3378
      %v3598 = vpack.c.bf16 %v3387, %v3384
      %v3599 = vpack.c.bf16 %v3415, %v3412
      %v3600 = vpack.c.bf16 %v3421, %v3418
      %v3601 = vpack.c.bf16 %v3449, %v3446
      %v3602 = vpack.c.bf16 %v3455, %v3452
      %v3603 = vpack.c.bf16 %v3483, %v3480
      %v3604 = vpack.c.bf16 %v3489, %v3486
      %v3605 = vpack.c.bf16 %v3517, %v3514
      %v3606 = vpack.c.bf16 %v3523, %v3520
      %v3607 = vpack.c.bf16 %v3551, %v3548
      %v3608 = vpack.c.bf16 %v3557, %v3554
      %v3609 = vpack.c.bf16 %v3585, %v3582
      %v3610 = vpack.c.bf16 %v3591, %v3588
      %v3611 = vld [vmem:[%s27] sm:$0xff]
      %v3612 = vld [vmem:[%s27 + $0x8] sm:$0xf]
      %v3613 = vld [vmem:[%s27 + $0xc] sm:$0xff]
      %v3614 = vld [vmem:[%s27 + $0x14] sm:$0xf]
      %v3615 = vld [vmem:[%s27 + $0x18] sm:$0xff]
      %v3616 = vld [vmem:[%s27 + $0x20] sm:$0xf]
      %v3617 = vld [vmem:[%s27 + $0x24] sm:$0xff]
      %v3618 = vld [vmem:[%s27 + $0x2c] sm:$0xf]
      %v3619 = vld [vmem:[%s27 + $0x30] sm:$0xff]
      %v3620 = vld [vmem:[%s27 + $0x38] sm:$0xf]
      %v3621 = vld [vmem:[%s27 + $0x3c] sm:$0xff]
      %v3622 = vld [vmem:[%s27 + $0x44] sm:$0xf]
      %v3623 = vld [vmem:[%s27 + $0x48] sm:$0xff]
      %v3624 = vld [vmem:[%s27 + $0x50] sm:$0xf]
      %v3625 = vld [vmem:[%s27 + $0x54] sm:$0xff]
      %v3626 = vld [vmem:[%s27 + $0x5c] sm:$0xf]
      %v3627 = vld [vmem:[%s29] sm:$0xff]
      %v3628 = vld [vmem:[%s29 + $0x8] sm:$0xff]
      %v3629 = vld [vmem:[%s29 + $0x10] sm:$0xff]
      %v3630 = vld [vmem:[%s29 + $0x18] sm:$0xff]
      %v3631 = vld [vmem:[%s29 + $0x20] sm:$0xff]
      %v3632 = vld [vmem:[%s29 + $0x28] sm:$0xff]
      %v3633 = vld [vmem:[%s29 + $0x30] sm:$0xff]
      %v3634 = vld [vmem:[%s29 + $0x38] sm:$0xff]
      %3636 = vset.pattern.permute.xlu0 0
      %3637 = vperm.xlu0 %3636, %v3627
      %v3638 = vpop.permute.xlu0 %3637
      %3641 = vset.pattern.permute.xlu0 0
      %3642 = vperm.xlu0 %3641, %v3628
      %v3643 = vpop.permute.xlu0 %3642
      %3646 = vset.pattern.permute.xlu0 0
      %3647 = vperm.xlu0 %3646, %v3629
      %v3648 = vpop.permute.xlu0 %3647
      %3651 = vset.pattern.permute.xlu0 0
      %3652 = vperm.xlu0 %3651, %v3630
      %v3653 = vpop.permute.xlu0 %3652
      %3656 = vset.pattern.permute.xlu0 0
      %3657 = vperm.xlu0 %3656, %v3631
      %v3658 = vpop.permute.xlu0 %3657
      %3661 = vset.pattern.permute.xlu0 0
      %3662 = vperm.xlu0 %3661, %v3632
      %v3663 = vpop.permute.xlu0 %3662
      %3666 = vset.pattern.permute.xlu0 0
      %3667 = vperm.xlu0 %3666, %v3633
      %v3668 = vpop.permute.xlu0 %3667
      %3671 = vset.pattern.permute.xlu0 0
      %3672 = vperm.xlu0 %3671, %v3634
      %v3673 = vpop.permute.xlu0 %3672
      %v3691 = vunpack.c.l.b16 %v3611
      %v3692 = vunpack.c.h.b16 %v3611
      %v3693 = vunpack.c.l.b16 %v3612
      %v3694 = vunpack.c.l.b16 %v3613
      %v3695 = vunpack.c.h.b16 %v3613
      %v3696 = vunpack.c.l.b16 %v3614
      %v3697 = vunpack.c.l.b16 %v3615
      %v3698 = vunpack.c.h.b16 %v3615
      %v3699 = vunpack.c.l.b16 %v3616
      %v3700 = vunpack.c.l.b16 %v3617
      %v3701 = vunpack.c.h.b16 %v3617
      %v3702 = vunpack.c.l.b16 %v3618
      %v3703 = vunpack.c.l.b16 %v3619
      %v3704 = vunpack.c.h.b16 %v3619
      %v3705 = vunpack.c.l.b16 %v3620
      %v3706 = vunpack.c.l.b16 %v3621
      %v3707 = vunpack.c.h.b16 %v3621
      %v3708 = vunpack.c.l.b16 %v3622
      %v3709 = vunpack.c.l.b16 %v3623
      %v3710 = vunpack.c.h.b16 %v3623
      %v3711 = vunpack.c.l.b16 %v3624
      %v3712 = vunpack.c.l.b16 %v3625
      %v3713 = vunpack.c.h.b16 %v3625
      %v3714 = vunpack.c.l.b16 %v3626
      %v3715 = vpack.c.b16 %v3694, %v3691
      %v3716 = vpack.c.b16 %v3695, %v3692
      %v3717 = vpack.c.b16 %v3696, %v3693
      %v3718 = vpack.c.b16 %v3700, %v3697
      %v3719 = vpack.c.b16 %v3701, %v3698
      %v3720 = vpack.c.b16 %v3702, %v3699
      %v3721 = vpack.c.b16 %v3706, %v3703
      %v3722 = vpack.c.b16 %v3707, %v3704
      %v3723 = vpack.c.b16 %v3708, %v3705
      %v3724 = vpack.c.b16 %v3712, %v3709
      %v3725 = vpack.c.b16 %v3713, %v3710
      %v3726 = vpack.c.b16 %v3714, %v3711
      %v3736 = vsel %vm3056, %v3717, 0
      %v3739 = vsel %vm3056, %v3720, 0
      %v3742 = vsel %vm3056, %v3723, 0
      %v3745 = vsel %vm3056, %v3726, 0
      %3747 = vmatpush.bf16.msra.mxu0 %v3600
      %3748 = vmatpush.bf16.msra.mxu0 %v3599
      %3749 = vmatpush.bf16.msra.mxu0 %v3598
      %3750 = vmatpush.bf16.msra.mxu0 %v3597
      %3751 = vmatpush.bf16.msra.mxu0 %v3596
      %3752 = vmatpush.bf16.msra.mxu0 %v3595
      %3753 = vmatpush.bf16.msra.mxu0 %v3594
      %3754 = vmatpush.bf16.msra.mxu0 %v3593
      %3755 = vmatmul.bf16.gmra.mxu0 %v3715
      %v3756 = vpop.f32.mrf.mxu0
      %v3757 = vadd.f32 %v3638, %v3756
      %v3758 = vpop.f32.mrf.mxu0
      %v3759 = vadd.f32 %v3643, %v3758
      %3760 = vmatmul.bf16.gmra.mxu0 %v3718
      %v3761 = vpop.f32.mrf.mxu0
      %v3762 = vadd.f32 %v3648, %v3761
      %v3763 = vpop.f32.mrf.mxu0
      %v3764 = vadd.f32 %v3653, %v3763
      %3765 = vmatmul.bf16.gmra.mxu0 %v3721
      %v3766 = vpop.f32.mrf.mxu0
      %v3767 = vadd.f32 %v3658, %v3766
      %v3768 = vpop.f32.mrf.mxu0
      %v3769 = vadd.f32 %v3663, %v3768
      %3770 = vmatmul.bf16.gmra.mxu0 %v3724
      %v3771 = vpop.f32.mrf.mxu0
      %v3772 = vadd.f32 %v3668, %v3771
      %v3773 = vpop.f32.mrf.mxu0
      %v3774 = vadd.f32 %v3673, %v3773
      %3775 = vdwg.mxu0
      %3776 = vmatpush.bf16.msra.mxu0 %v3608
      %3777 = vmatpush.bf16.msra.mxu0 %v3607
      %3778 = vmatpush.bf16.msra.mxu0 %v3606
      %3779 = vmatpush.bf16.msra.mxu0 %v3605
      %3780 = vmatpush.bf16.msra.mxu0 %v3604
      %3781 = vmatpush.bf16.msra.mxu0 %v3603
      %3782 = vmatpush.bf16.msra.mxu0 %v3602
      %3783 = vmatpush.bf16.msra.mxu0 %v3601
      %3784 = vmatmul.bf16.gmra.mxu0 %v3716
      %v3785 = vpop.f32.mrf.mxu0
      %v3786 = vadd.f32 %v3757, %v3785
      %v3787 = vpop.f32.mrf.mxu0
      %v3788 = vadd.f32 %v3759, %v3787
      %3789 = vmatmul.bf16.gmra.mxu0 %v3719
      %v3790 = vpop.f32.mrf.mxu0
      %v3791 = vadd.f32 %v3762, %v3790
      %v3792 = vpop.f32.mrf.mxu0
      %v3793 = vadd.f32 %v3764, %v3792
      %3794 = vmatmul.bf16.gmra.mxu0 %v3722
      %v3795 = vpop.f32.mrf.mxu0
      %v3796 = vadd.f32 %v3767, %v3795
      %v3797 = vpop.f32.mrf.mxu0
      %v3798 = vadd.f32 %v3769, %v3797
      %3799 = vmatmul.bf16.gmra.mxu0 %v3725
      %v3800 = vpop.f32.mrf.mxu0
      %v3801 = vadd.f32 %v3772, %v3800
      %v3802 = vpop.f32.mrf.mxu0
      %v3803 = vadd.f32 %v3774, %v3802
      %3804 = vdwg.mxu0
      %3805 = vmatpush.bf16.msra.mxu0 0
      %3806 = vmatpush.bf16.msra.mxu0 0
      %3807 = vmatpush.bf16.msra.mxu0 0
      %3808 = vmatpush.bf16.msra.mxu0 0
      %3809 = vmatpush.bf16.msra.mxu0 0
      %3810 = vmatpush.bf16.msra.mxu0 0
      %3811 = vmatpush.bf16.msra.mxu0 %v3610
      %3812 = vmatpush.bf16.msra.mxu0 %v3609
      %3813 = vmatmul.bf16.gmra.mxu0 %v3736
      %v3814 = vpop.f32.mrf.mxu0
      %v3815 = vadd.f32 %v3786, %v3814
      %v3816 = vpop.f32.mrf.mxu0
      %v3817 = vadd.f32 %v3788, %v3816
      %3818 = vmatmul.bf16.gmra.mxu0 %v3739
      %v3819 = vpop.f32.mrf.mxu0
      %v3820 = vadd.f32 %v3791, %v3819
      %v3821 = vpop.f32.mrf.mxu0
      %v3822 = vadd.f32 %v3793, %v3821
      %3823 = vmatmul.bf16.gmra.mxu0 %v3742
      %v3824 = vpop.f32.mrf.mxu0
      %v3825 = vadd.f32 %v3796, %v3824
      %v3826 = vpop.f32.mrf.mxu0
      %v3827 = vadd.f32 %v3798, %v3826
      %3828 = vmatmul.bf16.gmra.mxu0 %v3745
      %v3829 = vpop.f32.mrf.mxu0
      %v3830 = vadd.f32 %v3801, %v3829
      %v3831 = vpop.f32.mrf.mxu0
      %v3832 = vadd.f32 %v3803, %v3831
      %3833 = vdwg.mxu0
      %v3834 = vmax.f32 %v3815, 0.0
      %v3835 = vmax.f32 %v3817, 0.0
      %v3836 = vmax.f32 %v3820, 0.0
      %v3837 = vmax.f32 %v3822, 0.0
      %v3838 = vmax.f32 %v3825, 0.0
      %v3839 = vmax.f32 %v3827, 0.0
      %v3840 = vmax.f32 %v3830, 0.0
      %v3841 = vmax.f32 %v3832, 0.0
      %v3843 = vsel %vm3276, %v3834, 0
      %v3846 = vsel %vm3276, %v3835, 0
      %v3849 = vsel %vm3276, %v3836, 0
      %v3852 = vsel %vm3276, %v3837, 0
      %v3855 = vsel %vm3276, %v3838, 0
      %v3858 = vsel %vm3276, %v3839, 0
      %v3861 = vsel %vm3276, %v3840, 0
      %v3864 = vsel %vm3276, %v3841, 0
      %3866 = vmatpush.msra.mxu0 0.0
      %3867 = vmatpush.msra.mxu0 0.0
      %3868 = vmatpush.msra.mxu0 0.0
      %3869 = vmatpush.msra.mxu0 0.0
      %3870 = vmatpush.msra.mxu0 0.0
      %3871 = vmatpush.msra.mxu0 0.0
      %3872 = vmatpush.msra.mxu0 0.0
      %3873 = vmatpush.msra.mxu0 0.0
      %3874 = vmatpush.msra.mxu0 0.0
      %3875 = vmatpush.msra.mxu0 0.0
      %3876 = vmatpush.msra.mxu0 0.0
      %3877 = vmatpush.msra.mxu0 0.0
      %3878 = vmatpush.msra.mxu0 0.0
      %3879 = vmatpush.msra.mxu0 0.0
      %3880 = vmatpush.msra.mxu0 0.0
      %3881 = vmatpush.msra.mxu0 %v3290
      %3882 = vmatmul.f32.gmra.mxu0 %v3843
      %v3883 = vpop.f32.mrf.mxu0
      %v3884 = vadd.f32 0.0, %v3883
      %3885 = vmatmul.f32.gmra.mxu0 %v3846
      %v3886 = vpop.f32.mrf.mxu0
      %v3887 = vadd.f32 0.0, %v3886
      %3888 = vmatmul.f32.gmra.mxu0 %v3849
      %v3889 = vpop.f32.mrf.mxu0
      %v3890 = vadd.f32 0.0, %v3889
      %3891 = vmatmul.f32.gmra.mxu0 %v3852
      %v3892 = vpop.f32.mrf.mxu0
      %v3893 = vadd.f32 0.0, %v3892
      %3894 = vmatmul.f32.gmra.mxu0 %v3855
      %v3895 = vpop.f32.mrf.mxu0
      %v3896 = vadd.f32 0.0, %v3895
      %3897 = vmatmul.f32.gmra.mxu0 %v3858
      %v3898 = vpop.f32.mrf.mxu0
      %v3899 = vadd.f32 0.0, %v3898
      %3900 = vmatmul.f32.gmra.mxu0 %v3861
      %v3901 = vpop.f32.mrf.mxu0
      %v3902 = vadd.f32 0.0, %v3901
      %3903 = vmatmul.f32.gmra.mxu0 %v3864
      %v3904 = vpop.f32.mrf.mxu0
      %v3905 = vadd.f32 0.0, %v3904
      %3906 = vdwg.mxu0
      %3907 = vmatpush.msra.mxu0 0.0
      %3908 = vmatpush.msra.mxu0 0.0
      %3909 = vmatpush.msra.mxu0 0.0
      %3910 = vmatpush.msra.mxu0 0.0
      %3911 = vmatpush.msra.mxu0 0.0
      %3912 = vmatpush.msra.mxu0 0.0
      %3913 = vmatpush.msra.mxu0 0.0
      %3914 = vmatpush.msra.mxu0 0.0
      %3915 = vmatpush.msra.mxu0 0.0
      %3916 = vmatpush.msra.mxu0 0.0
      %3917 = vmatpush.msra.mxu0 0.0
      %3918 = vmatpush.msra.mxu0 0.0
      %3919 = vmatpush.msra.mxu0 0.0
      %3920 = vmatpush.msra.mxu0 0.0
      %3921 = vmatpush.msra.mxu0 0.0
      %3922 = vmatpush.msra.mxu0 %v3324
      %3923 = vmatmul.f32.gmra.mxu0 %v3843
      %v3924 = vpop.f32.mrf.mxu0
      %v3925 = vadd.f32 0.0, %v3924
      %3926 = vmatmul.f32.gmra.mxu0 %v3846
      %v3927 = vpop.f32.mrf.mxu0
      %v3928 = vadd.f32 0.0, %v3927
      %3929 = vmatmul.f32.gmra.mxu0 %v3849
      %v3930 = vpop.f32.mrf.mxu0
      %v3931 = vadd.f32 0.0, %v3930
      %3932 = vmatmul.f32.gmra.mxu0 %v3852
      %v3933 = vpop.f32.mrf.mxu0
      %v3934 = vadd.f32 0.0, %v3933
      %3935 = vmatmul.f32.gmra.mxu0 %v3855
      %v3936 = vpop.f32.mrf.mxu0
      %v3937 = vadd.f32 0.0, %v3936
      %3938 = vmatmul.f32.gmra.mxu0 %v3858
      %v3939 = vpop.f32.mrf.mxu0
      %v3940 = vadd.f32 0.0, %v3939
      %3941 = vmatmul.f32.gmra.mxu0 %v3861
      %v3942 = vpop.f32.mrf.mxu0
      %v3943 = vadd.f32 0.0, %v3942
      %3944 = vmatmul.f32.gmra.mxu0 %v3864
      %v3945 = vpop.f32.mrf.mxu0
      %v3946 = vadd.f32 0.0, %v3945
      %3947 = vdwg.mxu0
      %3948 = vmatpush.msra.mxu0 0.0
      %3949 = vmatpush.msra.mxu0 0.0
      %3950 = vmatpush.msra.mxu0 0.0
      %3951 = vmatpush.msra.mxu0 0.0
      %3952 = vmatpush.msra.mxu0 0.0
      %3953 = vmatpush.msra.mxu0 0.0
      %3954 = vmatpush.msra.mxu0 0.0
      %3955 = vmatpush.msra.mxu0 0.0
      %3956 = vmatpush.msra.mxu0 0.0
      %3957 = vmatpush.msra.mxu0 0.0
      %3958 = vmatpush.msra.mxu0 0.0
      %3959 = vmatpush.msra.mxu0 0.0
      %3960 = vmatpush.msra.mxu0 0.0
      %3961 = vmatpush.msra.mxu0 0.0
      %3962 = vmatpush.msra.mxu0 0.0
      %3963 = vmatpush.msra.mxu0 %v3358
      %3964 = vmatmul.f32.gmra.mxu0 %v3843
      %v3965 = vpop.f32.mrf.mxu0
      %v3966 = vadd.f32 0.0, %v3965
      %3967 = vmatmul.f32.gmra.mxu0 %v3846
      %v3968 = vpop.f32.mrf.mxu0
      %v3969 = vadd.f32 0.0, %v3968
      %3970 = vmatmul.f32.gmra.mxu0 %v3849
      %v3971 = vpop.f32.mrf.mxu0
      %v3972 = vadd.f32 0.0, %v3971
      %3973 = vmatmul.f32.gmra.mxu0 %v3852
      %v3974 = vpop.f32.mrf.mxu0
      %v3975 = vadd.f32 0.0, %v3974
      %3976 = vmatmul.f32.gmra.mxu0 %v3855
      %v3977 = vpop.f32.mrf.mxu0
      %v3978 = vadd.f32 0.0, %v3977
      %3979 = vmatmul.f32.gmra.mxu0 %v3858
      %v3980 = vpop.f32.mrf.mxu0
      %v3981 = vadd.f32 0.0, %v3980
      %3982 = vmatmul.f32.gmra.mxu0 %v3861
      %v3983 = vpop.f32.mrf.mxu0
      %v3984 = vadd.f32 0.0, %v3983
      %3985 = vmatmul.f32.gmra.mxu0 %v3864
      %v3986 = vpop.f32.mrf.mxu0
      %v3987 = vadd.f32 0.0, %v3986
      %3988 = vdwg.mxu0
      %3989 = vmatpush.msra.mxu0 0.0
      %3990 = vmatpush.msra.mxu0 0.0
      %3991 = vmatpush.msra.mxu0 0.0
      %3992 = vmatpush.msra.mxu0 0.0
      %3993 = vmatpush.msra.mxu0 0.0
      %3994 = vmatpush.msra.mxu0 0.0
      %3995 = vmatpush.msra.mxu0 0.0
      %3996 = vmatpush.msra.mxu0 0.0
      %3997 = vmatpush.msra.mxu0 0.0
      %3998 = vmatpush.msra.mxu0 0.0
      %3999 = vmatpush.msra.mxu0 0.0
      %4000 = vmatpush.msra.mxu0 0.0
      %4001 = vmatpush.msra.mxu0 0.0
      %4002 = vmatpush.msra.mxu0 0.0
      %4003 = vmatpush.msra.mxu0 0.0
      %4004 = vmatpush.msra.mxu0 %v3392
      %4005 = vmatmul.f32.gmra.mxu0 %v3843
      %v4006 = vpop.f32.mrf.mxu0
      %v4007 = vadd.f32 0.0, %v4006
      %4008 = vmatmul.f32.gmra.mxu0 %v3846
      %v4009 = vpop.f32.mrf.mxu0
      %v4010 = vadd.f32 0.0, %v4009
      %4011 = vmatmul.f32.gmra.mxu0 %v3849
      %v4012 = vpop.f32.mrf.mxu0
      %v4013 = vadd.f32 0.0, %v4012
      %4014 = vmatmul.f32.gmra.mxu0 %v3852
      %v4015 = vpop.f32.mrf.mxu0
      %v4016 = vadd.f32 0.0, %v4015
      %4017 = vmatmul.f32.gmra.mxu0 %v3855
      %v4018 = vpop.f32.mrf.mxu0
      %v4019 = vadd.f32 0.0, %v4018
      %4020 = vmatmul.f32.gmra.mxu0 %v3858
      %v4021 = vpop.f32.mrf.mxu0
      %v4022 = vadd.f32 0.0, %v4021
      %4023 = vmatmul.f32.gmra.mxu0 %v3861
      %v4024 = vpop.f32.mrf.mxu0
      %v4025 = vadd.f32 0.0, %v4024
      %4026 = vmatmul.f32.gmra.mxu0 %v3864
      %v4027 = vpop.f32.mrf.mxu0
      %v4028 = vadd.f32 0.0, %v4027
      %4029 = vdwg.mxu0
      %4030 = vmatpush.msra.mxu0 0.0
      %4031 = vmatpush.msra.mxu0 0.0
      %4032 = vmatpush.msra.mxu0 0.0
      %4033 = vmatpush.msra.mxu0 0.0
      %4034 = vmatpush.msra.mxu0 0.0
      %4035 = vmatpush.msra.mxu0 0.0
      %4036 = vmatpush.msra.mxu0 0.0
      %4037 = vmatpush.msra.mxu0 0.0
      %4038 = vmatpush.msra.mxu0 0.0
      %4039 = vmatpush.msra.mxu0 0.0
      %4040 = vmatpush.msra.mxu0 0.0
      %4041 = vmatpush.msra.mxu0 0.0
      %4042 = vmatpush.msra.mxu0 0.0
      %4043 = vmatpush.msra.mxu0 0.0
      %4044 = vmatpush.msra.mxu0 0.0
      %4045 = vmatpush.msra.mxu0 %v3426
      %4046 = vmatmul.f32.gmra.mxu0 %v3843
      %v4047 = vpop.f32.mrf.mxu0
      %v4048 = vadd.f32 0.0, %v4047
      %4049 = vmatmul.f32.gmra.mxu0 %v3846
      %v4050 = vpop.f32.mrf.mxu0
      %v4051 = vadd.f32 0.0, %v4050
      %4052 = vmatmul.f32.gmra.mxu0 %v3849
      %v4053 = vpop.f32.mrf.mxu0
      %v4054 = vadd.f32 0.0, %v4053
      %4055 = vmatmul.f32.gmra.mxu0 %v3852
      %v4056 = vpop.f32.mrf.mxu0
      %v4057 = vadd.f32 0.0, %v4056
      %4058 = vmatmul.f32.gmra.mxu0 %v3855
      %v4059 = vpop.f32.mrf.mxu0
      %v4060 = vadd.f32 0.0, %v4059
      %4061 = vmatmul.f32.gmra.mxu0 %v3858
      %v4062 = vpop.f32.mrf.mxu0
      %v4063 = vadd.f32 0.0, %v4062
      %4064 = vmatmul.f32.gmra.mxu0 %v3861
      %v4065 = vpop.f32.mrf.mxu0
      %v4066 = vadd.f32 0.0, %v4065
      %4067 = vmatmul.f32.gmra.mxu0 %v3864
      %v4068 = vpop.f32.mrf.mxu0
      %v4069 = vadd.f32 0.0, %v4068
      %4070 = vdwg.mxu0
      %4071 = vmatpush.msra.mxu0 0.0
      %4072 = vmatpush.msra.mxu0 0.0
      %4073 = vmatpush.msra.mxu0 0.0
      %4074 = vmatpush.msra.mxu0 0.0
      %4075 = vmatpush.msra.mxu0 0.0
      %4076 = vmatpush.msra.mxu0 0.0
      %4077 = vmatpush.msra.mxu0 0.0
      %4078 = vmatpush.msra.mxu0 0.0
      %4079 = vmatpush.msra.mxu0 0.0
      %4080 = vmatpush.msra.mxu0 0.0
      %4081 = vmatpush.msra.mxu0 0.0
      %4082 = vmatpush.msra.mxu0 0.0
      %4083 = vmatpush.msra.mxu0 0.0
      %4084 = vmatpush.msra.mxu0 0.0
      %4085 = vmatpush.msra.mxu0 0.0
      %4086 = vmatpush.msra.mxu0 %v3460
      %4087 = vmatmul.f32.gmra.mxu0 %v3843
      %v4088 = vpop.f32.mrf.mxu0
      %v4089 = vadd.f32 0.0, %v4088
      %4090 = vmatmul.f32.gmra.mxu0 %v3846
      %v4091 = vpop.f32.mrf.mxu0
      %v4092 = vadd.f32 0.0, %v4091
      %4093 = vmatmul.f32.gmra.mxu0 %v3849
      %v4094 = vpop.f32.mrf.mxu0
      %v4095 = vadd.f32 0.0, %v4094
      %4096 = vmatmul.f32.gmra.mxu0 %v3852
      %v4097 = vpop.f32.mrf.mxu0
      %v4098 = vadd.f32 0.0, %v4097
      %4099 = vmatmul.f32.gmra.mxu0 %v3855
      %v4100 = vpop.f32.mrf.mxu0
      %v4101 = vadd.f32 0.0, %v4100
      %4102 = vmatmul.f32.gmra.mxu0 %v3858
      %v4103 = vpop.f32.mrf.mxu0
      %v4104 = vadd.f32 0.0, %v4103
      %4105 = vmatmul.f32.gmra.mxu0 %v3861
      %v4106 = vpop.f32.mrf.mxu0
      %v4107 = vadd.f32 0.0, %v4106
      %4108 = vmatmul.f32.gmra.mxu0 %v3864
      %v4109 = vpop.f32.mrf.mxu0
      %v4110 = vadd.f32 0.0, %v4109
      %4111 = vdwg.mxu0
      %4112 = vmatpush.msra.mxu0 0.0
      %4113 = vmatpush.msra.mxu0 0.0
      %4114 = vmatpush.msra.mxu0 0.0
      %4115 = vmatpush.msra.mxu0 0.0
      %4116 = vmatpush.msra.mxu0 0.0
      %4117 = vmatpush.msra.mxu0 0.0
      %4118 = vmatpush.msra.mxu0 0.0
      %4119 = vmatpush.msra.mxu0 0.0
      %4120 = vmatpush.msra.mxu0 0.0
      %4121 = vmatpush.msra.mxu0 0.0
      %4122 = vmatpush.msra.mxu0 0.0
      %4123 = vmatpush.msra.mxu0 0.0
      %4124 = vmatpush.msra.mxu0 0.0
      %4125 = vmatpush.msra.mxu0 0.0
      %4126 = vmatpush.msra.mxu0 0.0
      %4127 = vmatpush.msra.mxu0 %v3494
      %4128 = vmatmul.f32.gmra.mxu0 %v3843
      %v4129 = vpop.f32.mrf.mxu0
      %v4130 = vadd.f32 0.0, %v4129
      %4131 = vmatmul.f32.gmra.mxu0 %v3846
      %v4132 = vpop.f32.mrf.mxu0
      %v4133 = vadd.f32 0.0, %v4132
      %4134 = vmatmul.f32.gmra.mxu0 %v3849
      %v4135 = vpop.f32.mrf.mxu0
      %v4136 = vadd.f32 0.0, %v4135
      %4137 = vmatmul.f32.gmra.mxu0 %v3852
      %v4138 = vpop.f32.mrf.mxu0
      %v4139 = vadd.f32 0.0, %v4138
      %4140 = vmatmul.f32.gmra.mxu0 %v3855
      %v4141 = vpop.f32.mrf.mxu0
      %v4142 = vadd.f32 0.0, %v4141
      %4143 = vmatmul.f32.gmra.mxu0 %v3858
      %v4144 = vpop.f32.mrf.mxu0
      %v4145 = vadd.f32 0.0, %v4144
      %4146 = vmatmul.f32.gmra.mxu0 %v3861
      %v4147 = vpop.f32.mrf.mxu0
      %v4148 = vadd.f32 0.0, %v4147
      %4149 = vmatmul.f32.gmra.mxu0 %v3864
      %v4150 = vpop.f32.mrf.mxu0
      %v4151 = vadd.f32 0.0, %v4150
      %4152 = vdwg.mxu0
      %4153 = vmatpush.msra.mxu0 0.0
      %4154 = vmatpush.msra.mxu0 0.0
      %4155 = vmatpush.msra.mxu0 0.0
      %4156 = vmatpush.msra.mxu0 0.0
      %4157 = vmatpush.msra.mxu0 0.0
      %4158 = vmatpush.msra.mxu0 0.0
      %4159 = vmatpush.msra.mxu0 0.0
      %4160 = vmatpush.msra.mxu0 0.0
      %4161 = vmatpush.msra.mxu0 0.0
      %4162 = vmatpush.msra.mxu0 0.0
      %4163 = vmatpush.msra.mxu0 0.0
      %4164 = vmatpush.msra.mxu0 0.0
      %4165 = vmatpush.msra.mxu0 0.0
      %4166 = vmatpush.msra.mxu0 0.0
      %4167 = vmatpush.msra.mxu0 0.0
      %4168 = vmatpush.msra.mxu0 %v3528
      %4169 = vmatmul.f32.gmra.mxu0 %v3843
      %v4170 = vpop.f32.mrf.mxu0
      %v4171 = vadd.f32 0.0, %v4170
      %4172 = vmatmul.f32.gmra.mxu0 %v3846
      %v4173 = vpop.f32.mrf.mxu0
      %v4174 = vadd.f32 0.0, %v4173
      %4175 = vmatmul.f32.gmra.mxu0 %v3849
      %v4176 = vpop.f32.mrf.mxu0
      %v4177 = vadd.f32 0.0, %v4176
      %4178 = vmatmul.f32.gmra.mxu0 %v3852
      %v4179 = vpop.f32.mrf.mxu0
      %v4180 = vadd.f32 0.0, %v4179
      %4181 = vmatmul.f32.gmra.mxu0 %v3855
      %v4182 = vpop.f32.mrf.mxu0
      %v4183 = vadd.f32 0.0, %v4182
      %4184 = vmatmul.f32.gmra.mxu0 %v3858
      %v4185 = vpop.f32.mrf.mxu0
      %v4186 = vadd.f32 0.0, %v4185
      %4187 = vmatmul.f32.gmra.mxu0 %v3861
      %v4188 = vpop.f32.mrf.mxu0
      %v4189 = vadd.f32 0.0, %v4188
      %4190 = vmatmul.f32.gmra.mxu0 %v3864
      %v4191 = vpop.f32.mrf.mxu0
      %v4192 = vadd.f32 0.0, %v4191
      %4193 = vdwg.mxu0
      %4194 = vmatpush.msra.mxu0 0.0
      %4195 = vmatpush.msra.mxu0 0.0
      %4196 = vmatpush.msra.mxu0 0.0
      %4197 = vmatpush.msra.mxu0 0.0
      %4198 = vmatpush.msra.mxu0 0.0
      %4199 = vmatpush.msra.mxu0 0.0
      %4200 = vmatpush.msra.mxu0 0.0
      %4201 = vmatpush.msra.mxu0 0.0
      %4202 = vmatpush.msra.mxu0 0.0
      %4203 = vmatpush.msra.mxu0 0.0
      %4204 = vmatpush.msra.mxu0 0.0
      %4205 = vmatpush.msra.mxu0 0.0
      %4206 = vmatpush.msra.mxu0 0.0
      %4207 = vmatpush.msra.mxu0 0.0
      %4208 = vmatpush.msra.mxu0 0.0
      %4209 = vmatpush.msra.mxu0 %v3562
      %4210 = vmatmul.f32.gmra.mxu0 %v3843
      %v4211 = vpop.f32.mrf.mxu0
      %v4212 = vadd.f32 0.0, %v4211
      %4213 = vmatmul.f32.gmra.mxu0 %v3846
      %v4214 = vpop.f32.mrf.mxu0
      %v4215 = vadd.f32 0.0, %v4214
      %4216 = vmatmul.f32.gmra.mxu0 %v3849
      %v4217 = vpop.f32.mrf.mxu0
      %v4218 = vadd.f32 0.0, %v4217
      %4219 = vmatmul.f32.gmra.mxu0 %v3852
      %v4220 = vpop.f32.mrf.mxu0
      %v4221 = vadd.f32 0.0, %v4220
      %4222 = vmatmul.f32.gmra.mxu0 %v3855
      %v4223 = vpop.f32.mrf.mxu0
      %v4224 = vadd.f32 0.0, %v4223
      %4225 = vmatmul.f32.gmra.mxu0 %v3858
      %v4226 = vpop.f32.mrf.mxu0
      %v4227 = vadd.f32 0.0, %v4226
      %4228 = vmatmul.f32.gmra.mxu0 %v3861
      %v4229 = vpop.f32.mrf.mxu0
      %v4230 = vadd.f32 0.0, %v4229
      %4231 = vmatmul.f32.gmra.mxu0 %v3864
      %v4232 = vpop.f32.mrf.mxu0
      %v4233 = vadd.f32 0.0, %v4232
      %4234 = vdwg.mxu0
      %v4235 = vpack.c.bf16 %v3887, %v3884
      %v4236 = vpack.c.bf16 %v3893, %v3890
      %v4237 = vpack.c.bf16 %v3899, %v3896
      %v4238 = vpack.c.bf16 %v3905, %v3902
      %v4239 = vpack.c.bf16 %v3928, %v3925
      %v4240 = vpack.c.bf16 %v3934, %v3931
      %v4241 = vpack.c.bf16 %v3940, %v3937
      %v4242 = vpack.c.bf16 %v3946, %v3943
      %v4243 = vpack.c.bf16 %v3969, %v3966
      %v4244 = vpack.c.bf16 %v3975, %v3972
      %v4245 = vpack.c.bf16 %v3981, %v3978
      %v4246 = vpack.c.bf16 %v3987, %v3984
      %v4247 = vpack.c.bf16 %v4010, %v4007
      %v4248 = vpack.c.bf16 %v4016, %v4013
      %v4249 = vpack.c.bf16 %v4022, %v4019
      %v4250 = vpack.c.bf16 %v4028, %v4025
      %v4251 = vpack.c.bf16 %v4051, %v4048
      %v4252 = vpack.c.bf16 %v4057, %v4054
      %v4253 = vpack.c.bf16 %v4063, %v4060
      %v4254 = vpack.c.bf16 %v4069, %v4066
      %v4255 = vpack.c.bf16 %v4092, %v4089
      %v4256 = vpack.c.bf16 %v4098, %v4095
      %v4257 = vpack.c.bf16 %v4104, %v4101
      %v4258 = vpack.c.bf16 %v4110, %v4107
      %v4259 = vpack.c.bf16 %v4133, %v4130
      %v4260 = vpack.c.bf16 %v4139, %v4136
      %v4261 = vpack.c.bf16 %v4145, %v4142
      %v4262 = vpack.c.bf16 %v4151, %v4148
      %v4263 = vpack.c.bf16 %v4174, %v4171
      %v4264 = vpack.c.bf16 %v4180, %v4177
      %v4265 = vpack.c.bf16 %v4186, %v4183
      %v4266 = vpack.c.bf16 %v4192, %v4189
      %v4267 = vpack.c.bf16 %v4215, %v4212
      %v4268 = vpack.c.bf16 %v4221, %v4218
      %v4269 = vpack.c.bf16 %v4227, %v4224
      %v4270 = vpack.c.bf16 %v4233, %v4230
      %v4271 = vld [vmem:[%s31] sm:$0xff]
      %v4272 = vld [vmem:[%s31 + $0x8] sm:$0xff]
      %v4273 = vld [vmem:[%s31 + $0x10] sm:$0xf]
      %v4274 = vld [vmem:[%s31 + $0x14] sm:$0xff]
      %v4275 = vld [vmem:[%s31 + $0x1c] sm:$0xff]
      %v4276 = vld [vmem:[%s31 + $0x24] sm:$0xf]
      %v4277 = vld [vmem:[%s31 + $0x28] sm:$0xff]
      %v4278 = vld [vmem:[%s31 + $0x30] sm:$0xff]
      %v4279 = vld [vmem:[%s31 + $0x38] sm:$0xf]
      %v4280 = vld [vmem:[%s31 + $0x3c] sm:$0xff]
      %v4281 = vld [vmem:[%s31 + $0x44] sm:$0xff]
      %v4282 = vld [vmem:[%s31 + $0x4c] sm:$0xf]
      %v4283 = vld [vmem:[%s31 + $0x50] sm:$0xff]
      %v4284 = vld [vmem:[%s31 + $0x58] sm:$0xff]
      %v4285 = vld [vmem:[%s31 + $0x60] sm:$0xf]
      %v4286 = vld [vmem:[%s31 + $0x64] sm:$0xff]
      %v4287 = vld [vmem:[%s31 + $0x6c] sm:$0xff]
      %v4288 = vld [vmem:[%s31 + $0x74] sm:$0xf]
      %v4289 = vld [vmem:[%s31 + $0x78] sm:$0xff]
      %v4290 = vld [vmem:[%s31 + $0x80] sm:$0xff]
      %v4291 = vld [vmem:[%s31 + $0x88] sm:$0xf]
      %v4292 = vld [vmem:[%s31 + $0x8c] sm:$0xff]
      %v4293 = vld [vmem:[%s31 + $0x94] sm:$0xff]
      %v4294 = vld [vmem:[%s31 + $0x9c] sm:$0xf]
      %v4295 = vld [vmem:[%s33] sm:$0xff]
      %v4296 = vld [vmem:[%s33 + $0x8] sm:$0xff]
      %v4297 = vld [vmem:[%s33 + $0x10] sm:$0xff]
      %v4298 = vld [vmem:[%s33 + $0x18] sm:$0xff]
      %v4299 = vld [vmem:[%s33 + $0x20] sm:$0xff]
      %v4300 = vld [vmem:[%s33 + $0x28] sm:$0xff]
      %v4301 = vld [vmem:[%s33 + $0x30] sm:$0xff]
      %v4302 = vld [vmem:[%s33 + $0x38] sm:$0xff]
      %4304 = vset.pattern.permute.xlu0 0
      %4305 = vperm.xlu0 %4304, %v4295
      %v4306 = vpop.permute.xlu0 %4305
      %4309 = vset.pattern.permute.xlu0 0
      %4310 = vperm.xlu0 %4309, %v4296
      %v4311 = vpop.permute.xlu0 %4310
      %4314 = vset.pattern.permute.xlu0 0
      %4315 = vperm.xlu0 %4314, %v4297
      %v4316 = vpop.permute.xlu0 %4315
      %4319 = vset.pattern.permute.xlu0 0
      %4320 = vperm.xlu0 %4319, %v4298
      %v4321 = vpop.permute.xlu0 %4320
      %4324 = vset.pattern.permute.xlu0 0
      %4325 = vperm.xlu0 %4324, %v4299
      %v4326 = vpop.permute.xlu0 %4325
      %4329 = vset.pattern.permute.xlu0 0
      %4330 = vperm.xlu0 %4329, %v4300
      %v4331 = vpop.permute.xlu0 %4330
      %4334 = vset.pattern.permute.xlu0 0
      %4335 = vperm.xlu0 %4334, %v4301
      %v4336 = vpop.permute.xlu0 %4335
      %4339 = vset.pattern.permute.xlu0 0
      %4340 = vperm.xlu0 %4339, %v4302
      %v4341 = vpop.permute.xlu0 %4340
      %v4367 = vunpack.c.l.b16 %v4271
      %v4368 = vunpack.c.h.b16 %v4271
      %v4369 = vunpack.c.l.b16 %v4272
      %v4370 = vunpack.c.h.b16 %v4272
      %v4371 = vunpack.c.l.b16 %v4273
      %v4372 = vunpack.c.l.b16 %v4274
      %v4373 = vunpack.c.h.b16 %v4274
      %v4374 = vunpack.c.l.b16 %v4275
      %v4375 = vunpack.c.h.b16 %v4275
      %v4376 = vunpack.c.l.b16 %v4276
      %v4377 = vunpack.c.l.b16 %v4277
      %v4378 = vunpack.c.h.b16 %v4277
      %v4379 = vunpack.c.l.b16 %v4278
      %v4380 = vunpack.c.h.b16 %v4278
      %v4381 = vunpack.c.l.b16 %v4279
      %v4382 = vunpack.c.l.b16 %v4280
      %v4383 = vunpack.c.h.b16 %v4280
      %v4384 = vunpack.c.l.b16 %v4281
      %v4385 = vunpack.c.h.b16 %v4281
      %v4386 = vunpack.c.l.b16 %v4282
      %v4387 = vunpack.c.l.b16 %v4283
      %v4388 = vunpack.c.h.b16 %v4283
      %v4389 = vunpack.c.l.b16 %v4284
      %v4390 = vunpack.c.h.b16 %v4284
      %v4391 = vunpack.c.l.b16 %v4285
      %v4392 = vunpack.c.l.b16 %v4286
      %v4393 = vunpack.c.h.b16 %v4286
      %v4394 = vunpack.c.l.b16 %v4287
      %v4395 = vunpack.c.h.b16 %v4287
      %v4396 = vunpack.c.l.b16 %v4288
      %v4397 = vunpack.c.l.b16 %v4289
      %v4398 = vunpack.c.h.b16 %v4289
      %v4399 = vunpack.c.l.b16 %v4290
      %v4400 = vunpack.c.h.b16 %v4290
      %v4401 = vunpack.c.l.b16 %v4291
      %v4402 = vunpack.c.l.b16 %v4292
      %v4403 = vunpack.c.h.b16 %v4292
      %v4404 = vunpack.c.l.b16 %v4293
      %v4405 = vunpack.c.h.b16 %v4293
      %v4406 = vunpack.c.l.b16 %v4294
      %v4407 = vpack.c.b16 %v4372, %v4367
      %v4408 = vpack.c.b16 %v4373, %v4368
      %v4409 = vpack.c.b16 %v4374, %v4369
      %v4410 = vpack.c.b16 %v4375, %v4370
      %v4411 = vpack.c.b16 %v4376, %v4371
      %v4412 = vpack.c.b16 %v4382, %v4377
      %v4413 = vpack.c.b16 %v4383, %v4378
      %v4414 = vpack.c.b16 %v4384, %v4379
      %v4415 = vpack.c.b16 %v4385, %v4380
      %v4416 = vpack.c.b16 %v4386, %v4381
      %v4417 = vpack.c.b16 %v4392, %v4387
      %v4418 = vpack.c.b16 %v4393, %v4388
      %v4419 = vpack.c.b16 %v4394, %v4389
      %v4420 = vpack.c.b16 %v4395, %v4390
      %v4421 = vpack.c.b16 %v4396, %v4391
      %v4422 = vpack.c.b16 %v4402, %v4397
      %v4423 = vpack.c.b16 %v4403, %v4398
      %v4424 = vpack.c.b16 %v4404, %v4399
      %v4425 = vpack.c.b16 %v4405, %v4400
      %v4426 = vpack.c.b16 %v4406, %v4401
      %v4444 = vsel %vm1641, %v4411, 0
      %v4447 = vsel %vm1641, %v4416, 0
      %v4450 = vsel %vm1641, %v4421, 0
      %v4453 = vsel %vm1641, %v4426, 0
      %4455 = vmatpush.bf16.msra.mxu0 %v4242
      %4456 = vmatpush.bf16.msra.mxu0 %v4241
      %4457 = vmatpush.bf16.msra.mxu0 %v4240
      %4458 = vmatpush.bf16.msra.mxu0 %v4239
      %4459 = vmatpush.bf16.msra.mxu0 %v4238
      %4460 = vmatpush.bf16.msra.mxu0 %v4237
      %4461 = vmatpush.bf16.msra.mxu0 %v4236
      %4462 = vmatpush.bf16.msra.mxu0 %v4235
      %4463 = vmatmul.bf16.gmra.mxu0 %v4407
      %v4464 = vpop.f32.mrf.mxu0
      %v4465 = vadd.f32 %v4306, %v4464
      %v4466 = vpop.f32.mrf.mxu0
      %v4467 = vadd.f32 %v4311, %v4466
      %4468 = vmatmul.bf16.gmra.mxu0 %v4412
      %v4469 = vpop.f32.mrf.mxu0
      %v4470 = vadd.f32 %v4316, %v4469
      %v4471 = vpop.f32.mrf.mxu0
      %v4472 = vadd.f32 %v4321, %v4471
      %4473 = vmatmul.bf16.gmra.mxu0 %v4417
      %v4474 = vpop.f32.mrf.mxu0
      %v4475 = vadd.f32 %v4326, %v4474
      %v4476 = vpop.f32.mrf.mxu0
      %v4477 = vadd.f32 %v4331, %v4476
      %4478 = vmatmul.bf16.gmra.mxu0 %v4422
      %v4479 = vpop.f32.mrf.mxu0
      %v4480 = vadd.f32 %v4336, %v4479
      %v4481 = vpop.f32.mrf.mxu0
      %v4482 = vadd.f32 %v4341, %v4481
      %4483 = vdwg.mxu0
      %4484 = vmatpush.bf16.msra.mxu0 %v4250
      %4485 = vmatpush.bf16.msra.mxu0 %v4249
      %4486 = vmatpush.bf16.msra.mxu0 %v4248
      %4487 = vmatpush.bf16.msra.mxu0 %v4247
      %4488 = vmatpush.bf16.msra.mxu0 %v4246
      %4489 = vmatpush.bf16.msra.mxu0 %v4245
      %4490 = vmatpush.bf16.msra.mxu0 %v4244
      %4491 = vmatpush.bf16.msra.mxu0 %v4243
      %4492 = vmatmul.bf16.gmra.mxu0 %v4408
      %v4493 = vpop.f32.mrf.mxu0
      %v4494 = vadd.f32 %v4465, %v4493
      %v4495 = vpop.f32.mrf.mxu0
      %v4496 = vadd.f32 %v4467, %v4495
      %4497 = vmatmul.bf16.gmra.mxu0 %v4413
      %v4498 = vpop.f32.mrf.mxu0
      %v4499 = vadd.f32 %v4470, %v4498
      %v4500 = vpop.f32.mrf.mxu0
      %v4501 = vadd.f32 %v4472, %v4500
      %4502 = vmatmul.bf16.gmra.mxu0 %v4418
      %v4503 = vpop.f32.mrf.mxu0
      %v4504 = vadd.f32 %v4475, %v4503
      %v4505 = vpop.f32.mrf.mxu0
      %v4506 = vadd.f32 %v4477, %v4505
      %4507 = vmatmul.bf16.gmra.mxu0 %v4423
      %v4508 = vpop.f32.mrf.mxu0
      %v4509 = vadd.f32 %v4480, %v4508
      %v4510 = vpop.f32.mrf.mxu0
      %v4511 = vadd.f32 %v4482, %v4510
      %4512 = vdwg.mxu0
      %4513 = vmatpush.bf16.msra.mxu0 %v4258
      %4514 = vmatpush.bf16.msra.mxu0 %v4257
      %4515 = vmatpush.bf16.msra.mxu0 %v4256
      %4516 = vmatpush.bf16.msra.mxu0 %v4255
      %4517 = vmatpush.bf16.msra.mxu0 %v4254
      %4518 = vmatpush.bf16.msra.mxu0 %v4253
      %4519 = vmatpush.bf16.msra.mxu0 %v4252
      %4520 = vmatpush.bf16.msra.mxu0 %v4251
      %4521 = vmatmul.bf16.gmra.mxu0 %v4409
      %v4522 = vpop.f32.mrf.mxu0
      %v4523 = vadd.f32 %v4494, %v4522
      %v4524 = vpop.f32.mrf.mxu0
      %v4525 = vadd.f32 %v4496, %v4524
      %4526 = vmatmul.bf16.gmra.mxu0 %v4414
      %v4527 = vpop.f32.mrf.mxu0
      %v4528 = vadd.f32 %v4499, %v4527
      %v4529 = vpop.f32.mrf.mxu0
      %v4530 = vadd.f32 %v4501, %v4529
      %4531 = vmatmul.bf16.gmra.mxu0 %v4419
      %v4532 = vpop.f32.mrf.mxu0
      %v4533 = vadd.f32 %v4504, %v4532
      %v4534 = vpop.f32.mrf.mxu0
      %v4535 = vadd.f32 %v4506, %v4534
      %4536 = vmatmul.bf16.gmra.mxu0 %v4424
      %v4537 = vpop.f32.mrf.mxu0
      %v4538 = vadd.f32 %v4509, %v4537
      %v4539 = vpop.f32.mrf.mxu0
      %v4540 = vadd.f32 %v4511, %v4539
      %4541 = vdwg.mxu0
      %4542 = vmatpush.bf16.msra.mxu0 %v4266
      %4543 = vmatpush.bf16.msra.mxu0 %v4265
      %4544 = vmatpush.bf16.msra.mxu0 %v4264
      %4545 = vmatpush.bf16.msra.mxu0 %v4263
      %4546 = vmatpush.bf16.msra.mxu0 %v4262
      %4547 = vmatpush.bf16.msra.mxu0 %v4261
      %4548 = vmatpush.bf16.msra.mxu0 %v4260
      %4549 = vmatpush.bf16.msra.mxu0 %v4259
      %4550 = vmatmul.bf16.gmra.mxu0 %v4410
      %v4551 = vpop.f32.mrf.mxu0
      %v4552 = vadd.f32 %v4523, %v4551
      %v4553 = vpop.f32.mrf.mxu0
      %v4554 = vadd.f32 %v4525, %v4553
      %4555 = vmatmul.bf16.gmra.mxu0 %v4415
      %v4556 = vpop.f32.mrf.mxu0
      %v4557 = vadd.f32 %v4528, %v4556
      %v4558 = vpop.f32.mrf.mxu0
      %v4559 = vadd.f32 %v4530, %v4558
      %4560 = vmatmul.bf16.gmra.mxu0 %v4420
      %v4561 = vpop.f32.mrf.mxu0
      %v4562 = vadd.f32 %v4533, %v4561
      %v4563 = vpop.f32.mrf.mxu0
      %v4564 = vadd.f32 %v4535, %v4563
      %4565 = vmatmul.bf16.gmra.mxu0 %v4425
      %v4566 = vpop.f32.mrf.mxu0
      %v4567 = vadd.f32 %v4538, %v4566
      %v4568 = vpop.f32.mrf.mxu0
      %v4569 = vadd.f32 %v4540, %v4568
      %4570 = vdwg.mxu0
      %4571 = vmatpush.bf16.msra.mxu0 0
      %4572 = vmatpush.bf16.msra.mxu0 0
      %4573 = vmatpush.bf16.msra.mxu0 0
      %4574 = vmatpush.bf16.msra.mxu0 0
      %4575 = vmatpush.bf16.msra.mxu0 %v4270
      %4576 = vmatpush.bf16.msra.mxu0 %v4269
      %4577 = vmatpush.bf16.msra.mxu0 %v4268
      %4578 = vmatpush.bf16.msra.mxu0 %v4267
      %4579 = vmatmul.bf16.gmra.mxu0 %v4444
      %v4580 = vpop.f32.mrf.mxu0
      %v4581 = vadd.f32 %v4552, %v4580
      %v4582 = vpop.f32.mrf.mxu0
      %v4583 = vadd.f32 %v4554, %v4582
      %4584 = vmatmul.bf16.gmra.mxu0 %v4447
      %v4585 = vpop.f32.mrf.mxu0
      %v4586 = vadd.f32 %v4557, %v4585
      %v4587 = vpop.f32.mrf.mxu0
      %v4588 = vadd.f32 %v4559, %v4587
      %4589 = vmatmul.bf16.gmra.mxu0 %v4450
      %v4590 = vpop.f32.mrf.mxu0
      %v4591 = vadd.f32 %v4562, %v4590
      %v4592 = vpop.f32.mrf.mxu0
      %v4593 = vadd.f32 %v4564, %v4592
      %4594 = vmatmul.bf16.gmra.mxu0 %v4453
      %v4595 = vpop.f32.mrf.mxu0
      %v4596 = vadd.f32 %v4567, %v4595
      %v4597 = vpop.f32.mrf.mxu0
      %v4598 = vadd.f32 %v4569, %v4597
      %4599 = vdwg.mxu0
      %v4600 = vmax.f32 %v4581, 0.0
      %v4601 = vmax.f32 %v4583, 0.0
      %v4602 = vmax.f32 %v4586, 0.0
      %v4603 = vmax.f32 %v4588, 0.0
      %v4604 = vmax.f32 %v4591, 0.0
      %v4605 = vmax.f32 %v4593, 0.0
      %v4606 = vmax.f32 %v4596, 0.0
      %v4607 = vmax.f32 %v4598, 0.0
      %v4608 = vld [vmem:[%s77] sm:$0xf]
      %v4610 = vsel %vm3276, %v4600, 0
      %v4613 = vsel %vm3276, %v4601, 0
      %v4616 = vsel %vm3276, %v4602, 0
      %v4619 = vsel %vm3276, %v4603, 0
      %v4622 = vsel %vm3276, %v4604, 0
      %v4625 = vsel %vm3276, %v4605, 0
      %v4628 = vsel %vm3276, %v4606, 0
      %v4631 = vsel %vm3276, %v4607, 0
      %v4634 = vsel %vm1392, %v4608, 0
      %4636 = vmatpush.msra.mxu0 0.0
      %4637 = vmatpush.msra.mxu0 0.0
      %4638 = vmatpush.msra.mxu0 0.0
      %4639 = vmatpush.msra.mxu0 0.0
      %4640 = vmatpush.msra.mxu0 0.0
      %4641 = vmatpush.msra.mxu0 0.0
      %4642 = vmatpush.msra.mxu0 0.0
      %4643 = vmatpush.msra.mxu0 0.0
      %4644 = vmatpush.msra.mxu0 0.0
      %4645 = vmatpush.msra.mxu0 0.0
      %4646 = vmatpush.msra.mxu0 0.0
      %4647 = vmatpush.msra.mxu0 0.0
      %4648 = vmatpush.msra.mxu0 0.0
      %4649 = vmatpush.msra.mxu0 0.0
      %4650 = vmatpush.msra.mxu0 0.0
      %4651 = vmatpush.msra.mxu0 %v4634
      %4652 = vmatmul.f32.gmra.mxu0 %v4610
      %v4653 = vpop.f32.mrf.mxu0
      %v4654 = vadd.f32 0.0, %v4653
      %4655 = vmatmul.f32.gmra.mxu0 %v4613
      %v4656 = vpop.f32.mrf.mxu0
      %v4657 = vadd.f32 0.0, %v4656
      %4658 = vmatmul.f32.gmra.mxu0 %v4616
      %v4659 = vpop.f32.mrf.mxu0
      %v4660 = vadd.f32 0.0, %v4659
      %4661 = vmatmul.f32.gmra.mxu0 %v4619
      %v4662 = vpop.f32.mrf.mxu0
      %v4663 = vadd.f32 0.0, %v4662
      %4664 = vmatmul.f32.gmra.mxu0 %v4622
      %v4665 = vpop.f32.mrf.mxu0
      %v4666 = vadd.f32 0.0, %v4665
      %4667 = vmatmul.f32.gmra.mxu0 %v4625
      %v4668 = vpop.f32.mrf.mxu0
      %v4669 = vadd.f32 0.0, %v4668
      %4670 = vmatmul.f32.gmra.mxu0 %v4628
      %v4671 = vpop.f32.mrf.mxu0
      %v4672 = vadd.f32 0.0, %v4671
      %4673 = vmatmul.f32.gmra.mxu0 %v4631
      %v4674 = vpop.f32.mrf.mxu0
      %v4675 = vadd.f32 0.0, %v4674
      %4676 = vdwg.mxu0
      %v4677 = vadd.f32 %v4654, %v3120
      %v4678 = vadd.f32 %v4657, %v3121
      %v4679 = vadd.f32 %v4660, %v3122
      %v4680 = vadd.f32 %v4663, %v3123
      %v4682 = vsel %vm2188, %v4677, 0
      %v4685 = vsel %vm2188, %v4678, 0
      %v4688 = vsel %vm2188, %v4679, 0
      %v4691 = vsel %vm2188, %v4680, 0
      %v4694 = vsel %vm2188, %v4666, 0
      %v4697 = vsel %vm2188, %v4669, 0
      %v4700 = vsel %vm2188, %v4672, 0
      %v4703 = vsel %vm2188, %v4675, 0
      %4705 = vmatpush.msra.mxu0 0.0
      %4706 = vmatpush.msra.mxu0 0.0
      %4707 = vmatpush.msra.mxu0 0.0
      %4708 = vmatpush.msra.mxu0 0.0
      %4709 = vmatpush.msra.mxu0 0.0
      %4710 = vmatpush.msra.mxu0 0.0
      %4711 = vmatpush.msra.mxu0 0.0
      %4712 = vmatpush.msra.mxu0 0.0
      %4713 = vmatpush.msra.mxu0 0.0
      %4714 = vmatpush.msra.mxu0 0.0
      %4715 = vmatpush.msra.mxu0 0.0
      %4716 = vmatpush.msra.mxu0 0.0
      %4717 = vmatpush.msra.mxu0 0.0
      %4718 = vmatpush.msra.mxu0 0.0
      %4719 = vmatpush.msra.mxu0 %v2362
      %4720 = vmatpush.msra.mxu0 %v2361
      %4721 = vmatmul.f32.gmra.mxu0 %v4682
      %v4722 = vpop.f32.mrf.mxu0
      %v4723 = vadd.f32 0.0, %v4722
      %4724 = vmatmul.f32.gmra.mxu0 %v4685
      %v4725 = vpop.f32.mrf.mxu0
      %v4726 = vadd.f32 0.0, %v4725
      %4727 = vmatmul.f32.gmra.mxu0 %v4688
      %v4728 = vpop.f32.mrf.mxu0
      %v4729 = vadd.f32 0.0, %v4728
      %4730 = vmatmul.f32.gmra.mxu0 %v4691
      %v4731 = vpop.f32.mrf.mxu0
      %v4732 = vadd.f32 0.0, %v4731
      %4733 = vmatmul.f32.gmra.mxu0 %v4694
      %v4734 = vpop.f32.mrf.mxu0
      %v4735 = vadd.f32 0.0, %v4734
      %4736 = vmatmul.f32.gmra.mxu0 %v4697
      %v4737 = vpop.f32.mrf.mxu0
      %v4738 = vadd.f32 0.0, %v4737
      %4739 = vmatmul.f32.gmra.mxu0 %v4700
      %v4740 = vpop.f32.mrf.mxu0
      %v4741 = vadd.f32 0.0, %v4740
      %4742 = vmatmul.f32.gmra.mxu0 %v4703
      %v4743 = vpop.f32.mrf.mxu0
      %v4744 = vadd.f32 0.0, %v4743
      %4745 = vdwg.mxu0
      %4746 = vmatpush.msra.mxu0 0.0
      %4747 = vmatpush.msra.mxu0 0.0
      %4748 = vmatpush.msra.mxu0 0.0
      %4749 = vmatpush.msra.mxu0 0.0
      %4750 = vmatpush.msra.mxu0 0.0
      %4751 = vmatpush.msra.mxu0 0.0
      %4752 = vmatpush.msra.mxu0 0.0
      %4753 = vmatpush.msra.mxu0 0.0
      %4754 = vmatpush.msra.mxu0 0.0
      %4755 = vmatpush.msra.mxu0 0.0
      %4756 = vmatpush.msra.mxu0 0.0
      %4757 = vmatpush.msra.mxu0 0.0
      %4758 = vmatpush.msra.mxu0 0.0
      %4759 = vmatpush.msra.mxu0 0.0
      %4760 = vmatpush.msra.mxu0 %v2394
      %4761 = vmatpush.msra.mxu0 %v2393
      %4762 = vmatmul.f32.gmra.mxu0 %v4682
      %v4763 = vpop.f32.mrf.mxu0
      %v4764 = vadd.f32 0.0, %v4763
      %4765 = vmatmul.f32.gmra.mxu0 %v4685
      %v4766 = vpop.f32.mrf.mxu0
      %v4767 = vadd.f32 0.0, %v4766
      %4768 = vmatmul.f32.gmra.mxu0 %v4688
      %v4769 = vpop.f32.mrf.mxu0
      %v4770 = vadd.f32 0.0, %v4769
      %4771 = vmatmul.f32.gmra.mxu0 %v4691
      %v4772 = vpop.f32.mrf.mxu0
      %v4773 = vadd.f32 0.0, %v4772
      %4774 = vmatmul.f32.gmra.mxu0 %v4694
      %v4775 = vpop.f32.mrf.mxu0
      %v4776 = vadd.f32 0.0, %v4775
      %4777 = vmatmul.f32.gmra.mxu0 %v4697
      %v4778 = vpop.f32.mrf.mxu0
      %v4779 = vadd.f32 0.0, %v4778
      %4780 = vmatmul.f32.gmra.mxu0 %v4700
      %v4781 = vpop.f32.mrf.mxu0
      %v4782 = vadd.f32 0.0, %v4781
      %4783 = vmatmul.f32.gmra.mxu0 %v4703
      %v4784 = vpop.f32.mrf.mxu0
      %v4785 = vadd.f32 0.0, %v4784
      %4786 = vdwg.mxu0
      %4787 = vmatpush.msra.mxu0 0.0
      %4788 = vmatpush.msra.mxu0 0.0
      %4789 = vmatpush.msra.mxu0 0.0
      %4790 = vmatpush.msra.mxu0 0.0
      %4791 = vmatpush.msra.mxu0 0.0
      %4792 = vmatpush.msra.mxu0 0.0
      %4793 = vmatpush.msra.mxu0 0.0
      %4794 = vmatpush.msra.mxu0 0.0
      %4795 = vmatpush.msra.mxu0 0.0
      %4796 = vmatpush.msra.mxu0 0.0
      %4797 = vmatpush.msra.mxu0 0.0
      %4798 = vmatpush.msra.mxu0 0.0
      %4799 = vmatpush.msra.mxu0 0.0
      %4800 = vmatpush.msra.mxu0 0.0
      %4801 = vmatpush.msra.mxu0 %v2420
      %4802 = vmatpush.msra.mxu0 %v2419
      %4803 = vmatmul.f32.gmra.mxu0 %v4682
      %v4804 = vpop.f32.mrf.mxu0
      %v4805 = vadd.f32 0.0, %v4804
      %4806 = vmatmul.f32.gmra.mxu0 %v4685
      %v4807 = vpop.f32.mrf.mxu0
      %v4808 = vadd.f32 0.0, %v4807
      %4809 = vmatmul.f32.gmra.mxu0 %v4688
      %v4810 = vpop.f32.mrf.mxu0
      %v4811 = vadd.f32 0.0, %v4810
      %4812 = vmatmul.f32.gmra.mxu0 %v4691
      %v4813 = vpop.f32.mrf.mxu0
      %v4814 = vadd.f32 0.0, %v4813
      %4815 = vmatmul.f32.gmra.mxu0 %v4694
      %v4816 = vpop.f32.mrf.mxu0
      %v4817 = vadd.f32 0.0, %v4816
      %4818 = vmatmul.f32.gmra.mxu0 %v4697
      %v4819 = vpop.f32.mrf.mxu0
      %v4820 = vadd.f32 0.0, %v4819
      %4821 = vmatmul.f32.gmra.mxu0 %v4700
      %v4822 = vpop.f32.mrf.mxu0
      %v4823 = vadd.f32 0.0, %v4822
      %4824 = vmatmul.f32.gmra.mxu0 %v4703
      %v4825 = vpop.f32.mrf.mxu0
      %v4826 = vadd.f32 0.0, %v4825
      %4827 = vdwg.mxu0
      %4828 = vmatpush.msra.mxu0 0.0
      %4829 = vmatpush.msra.mxu0 0.0
      %4830 = vmatpush.msra.mxu0 0.0
      %4831 = vmatpush.msra.mxu0 0.0
      %4832 = vmatpush.msra.mxu0 0.0
      %4833 = vmatpush.msra.mxu0 0.0
      %4834 = vmatpush.msra.mxu0 0.0
      %4835 = vmatpush.msra.mxu0 0.0
      %4836 = vmatpush.msra.mxu0 0.0
      %4837 = vmatpush.msra.mxu0 0.0
      %4838 = vmatpush.msra.mxu0 0.0
      %4839 = vmatpush.msra.mxu0 0.0
      %4840 = vmatpush.msra.mxu0 0.0
      %4841 = vmatpush.msra.mxu0 0.0
      %4842 = vmatpush.msra.mxu0 %v2446
      %4843 = vmatpush.msra.mxu0 %v2445
      %4844 = vmatmul.f32.gmra.mxu0 %v4682
      %v4845 = vpop.f32.mrf.mxu0
      %v4846 = vadd.f32 0.0, %v4845
      %4847 = vmatmul.f32.gmra.mxu0 %v4685
      %v4848 = vpop.f32.mrf.mxu0
      %v4849 = vadd.f32 0.0, %v4848
      %4850 = vmatmul.f32.gmra.mxu0 %v4688
      %v4851 = vpop.f32.mrf.mxu0
      %v4852 = vadd.f32 0.0, %v4851
      %4853 = vmatmul.f32.gmra.mxu0 %v4691
      %v4854 = vpop.f32.mrf.mxu0
      %v4855 = vadd.f32 0.0, %v4854
      %4856 = vmatmul.f32.gmra.mxu0 %v4694
      %v4857 = vpop.f32.mrf.mxu0
      %v4858 = vadd.f32 0.0, %v4857
      %4859 = vmatmul.f32.gmra.mxu0 %v4697
      %v4860 = vpop.f32.mrf.mxu0
      %v4861 = vadd.f32 0.0, %v4860
      %4862 = vmatmul.f32.gmra.mxu0 %v4700
      %v4863 = vpop.f32.mrf.mxu0
      %v4864 = vadd.f32 0.0, %v4863
      %4865 = vmatmul.f32.gmra.mxu0 %v4703
      %v4866 = vpop.f32.mrf.mxu0
      %v4867 = vadd.f32 0.0, %v4866
      %4868 = vdwg.mxu0
      %4869 = vmatpush.msra.mxu0 0.0
      %4870 = vmatpush.msra.mxu0 0.0
      %4871 = vmatpush.msra.mxu0 0.0
      %4872 = vmatpush.msra.mxu0 0.0
      %4873 = vmatpush.msra.mxu0 0.0
      %4874 = vmatpush.msra.mxu0 0.0
      %4875 = vmatpush.msra.mxu0 0.0
      %4876 = vmatpush.msra.mxu0 0.0
      %4877 = vmatpush.msra.mxu0 0.0
      %4878 = vmatpush.msra.mxu0 0.0
      %4879 = vmatpush.msra.mxu0 0.0
      %4880 = vmatpush.msra.mxu0 0.0
      %4881 = vmatpush.msra.mxu0 0.0
      %4882 = vmatpush.msra.mxu0 0.0
      %4883 = vmatpush.msra.mxu0 %v2472
      %4884 = vmatpush.msra.mxu0 %v2471
      %4885 = vmatmul.f32.gmra.mxu0 %v4682
      %v4886 = vpop.f32.mrf.mxu0
      %v4887 = vadd.f32 0.0, %v4886
      %4888 = vmatmul.f32.gmra.mxu0 %v4685
      %v4889 = vpop.f32.mrf.mxu0
      %v4890 = vadd.f32 0.0, %v4889
      %4891 = vmatmul.f32.gmra.mxu0 %v4688
      %v4892 = vpop.f32.mrf.mxu0
      %v4893 = vadd.f32 0.0, %v4892
      %4894 = vmatmul.f32.gmra.mxu0 %v4691
      %v4895 = vpop.f32.mrf.mxu0
      %v4896 = vadd.f32 0.0, %v4895
      %4897 = vmatmul.f32.gmra.mxu0 %v4694
      %v4898 = vpop.f32.mrf.mxu0
      %v4899 = vadd.f32 0.0, %v4898
      %4900 = vmatmul.f32.gmra.mxu0 %v4697
      %v4901 = vpop.f32.mrf.mxu0
      %v4902 = vadd.f32 0.0, %v4901
      %4903 = vmatmul.f32.gmra.mxu0 %v4700
      %v4904 = vpop.f32.mrf.mxu0
      %v4905 = vadd.f32 0.0, %v4904
      %4906 = vmatmul.f32.gmra.mxu0 %v4703
      %v4907 = vpop.f32.mrf.mxu0
      %v4908 = vadd.f32 0.0, %v4907
      %4909 = vdwg.mxu0
      %4910 = vmatpush.msra.mxu0 0.0
      %4911 = vmatpush.msra.mxu0 0.0
      %4912 = vmatpush.msra.mxu0 0.0
      %4913 = vmatpush.msra.mxu0 0.0
      %4914 = vmatpush.msra.mxu0 0.0
      %4915 = vmatpush.msra.mxu0 0.0
      %4916 = vmatpush.msra.mxu0 0.0
      %4917 = vmatpush.msra.mxu0 0.0
      %4918 = vmatpush.msra.mxu0 0.0
      %4919 = vmatpush.msra.mxu0 0.0
      %4920 = vmatpush.msra.mxu0 0.0
      %4921 = vmatpush.msra.mxu0 0.0
      %4922 = vmatpush.msra.mxu0 0.0
      %4923 = vmatpush.msra.mxu0 0.0
      %4924 = vmatpush.msra.mxu0 %v2498
      %4925 = vmatpush.msra.mxu0 %v2497
      %4926 = vmatmul.f32.gmra.mxu0 %v4682
      %v4927 = vpop.f32.mrf.mxu0
      %v4928 = vadd.f32 0.0, %v4927
      %4929 = vmatmul.f32.gmra.mxu0 %v4685
      %v4930 = vpop.f32.mrf.mxu0
      %v4931 = vadd.f32 0.0, %v4930
      %4932 = vmatmul.f32.gmra.mxu0 %v4688
      %v4933 = vpop.f32.mrf.mxu0
      %v4934 = vadd.f32 0.0, %v4933
      %4935 = vmatmul.f32.gmra.mxu0 %v4691
      %v4936 = vpop.f32.mrf.mxu0
      %v4937 = vadd.f32 0.0, %v4936
      %4938 = vmatmul.f32.gmra.mxu0 %v4694
      %v4939 = vpop.f32.mrf.mxu0
      %v4940 = vadd.f32 0.0, %v4939
      %4941 = vmatmul.f32.gmra.mxu0 %v4697
      %v4942 = vpop.f32.mrf.mxu0
      %v4943 = vadd.f32 0.0, %v4942
      %4944 = vmatmul.f32.gmra.mxu0 %v4700
      %v4945 = vpop.f32.mrf.mxu0
      %v4946 = vadd.f32 0.0, %v4945
      %4947 = vmatmul.f32.gmra.mxu0 %v4703
      %v4948 = vpop.f32.mrf.mxu0
      %v4949 = vadd.f32 0.0, %v4948
      %4950 = vdwg.mxu0
      %4951 = vmatpush.msra.mxu0 0.0
      %4952 = vmatpush.msra.mxu0 0.0
      %4953 = vmatpush.msra.mxu0 0.0
      %4954 = vmatpush.msra.mxu0 0.0
      %4955 = vmatpush.msra.mxu0 0.0
      %4956 = vmatpush.msra.mxu0 0.0
      %4957 = vmatpush.msra.mxu0 0.0
      %4958 = vmatpush.msra.mxu0 0.0
      %4959 = vmatpush.msra.mxu0 0.0
      %4960 = vmatpush.msra.mxu0 0.0
      %4961 = vmatpush.msra.mxu0 0.0
      %4962 = vmatpush.msra.mxu0 0.0
      %4963 = vmatpush.msra.mxu0 0.0
      %4964 = vmatpush.msra.mxu0 0.0
      %4965 = vmatpush.msra.mxu0 %v2524
      %4966 = vmatpush.msra.mxu0 %v2523
      %4967 = vmatmul.f32.gmra.mxu0 %v4682
      %v4968 = vpop.f32.mrf.mxu0
      %v4969 = vadd.f32 0.0, %v4968
      %4970 = vmatmul.f32.gmra.mxu0 %v4685
      %v4971 = vpop.f32.mrf.mxu0
      %v4972 = vadd.f32 0.0, %v4971
      %4973 = vmatmul.f32.gmra.mxu0 %v4688
      %v4974 = vpop.f32.mrf.mxu0
      %v4975 = vadd.f32 0.0, %v4974
      %4976 = vmatmul.f32.gmra.mxu0 %v4691
      %v4977 = vpop.f32.mrf.mxu0
      %v4978 = vadd.f32 0.0, %v4977
      %4979 = vmatmul.f32.gmra.mxu0 %v4694
      %v4980 = vpop.f32.mrf.mxu0
      %v4981 = vadd.f32 0.0, %v4980
      %4982 = vmatmul.f32.gmra.mxu0 %v4697
      %v4983 = vpop.f32.mrf.mxu0
      %v4984 = vadd.f32 0.0, %v4983
      %4985 = vmatmul.f32.gmra.mxu0 %v4700
      %v4986 = vpop.f32.mrf.mxu0
      %v4987 = vadd.f32 0.0, %v4986
      %4988 = vmatmul.f32.gmra.mxu0 %v4703
      %v4989 = vpop.f32.mrf.mxu0
      %v4990 = vadd.f32 0.0, %v4989
      %4991 = vdwg.mxu0
      %4992 = vmatpush.msra.mxu0 0.0
      %4993 = vmatpush.msra.mxu0 0.0
      %4994 = vmatpush.msra.mxu0 0.0
      %4995 = vmatpush.msra.mxu0 0.0
      %4996 = vmatpush.msra.mxu0 0.0
      %4997 = vmatpush.msra.mxu0 0.0
      %4998 = vmatpush.msra.mxu0 0.0
      %4999 = vmatpush.msra.mxu0 0.0
      %5000 = vmatpush.msra.mxu0 0.0
      %5001 = vmatpush.msra.mxu0 0.0
      %5002 = vmatpush.msra.mxu0 0.0
      %5003 = vmatpush.msra.mxu0 0.0
      %5004 = vmatpush.msra.mxu0 0.0
      %5005 = vmatpush.msra.mxu0 0.0
      %5006 = vmatpush.msra.mxu0 %v2550
      %5007 = vmatpush.msra.mxu0 %v2549
      %5008 = vmatmul.f32.gmra.mxu0 %v4682
      %v5009 = vpop.f32.mrf.mxu0
      %v5010 = vadd.f32 0.0, %v5009
      %5011 = vmatmul.f32.gmra.mxu0 %v4685
      %v5012 = vpop.f32.mrf.mxu0
      %v5013 = vadd.f32 0.0, %v5012
      %5014 = vmatmul.f32.gmra.mxu0 %v4688
      %v5015 = vpop.f32.mrf.mxu0
      %v5016 = vadd.f32 0.0, %v5015
      %5017 = vmatmul.f32.gmra.mxu0 %v4691
      %v5018 = vpop.f32.mrf.mxu0
      %v5019 = vadd.f32 0.0, %v5018
      %5020 = vmatmul.f32.gmra.mxu0 %v4694
      %v5021 = vpop.f32.mrf.mxu0
      %v5022 = vadd.f32 0.0, %v5021
      %5023 = vmatmul.f32.gmra.mxu0 %v4697
      %v5024 = vpop.f32.mrf.mxu0
      %v5025 = vadd.f32 0.0, %v5024
      %5026 = vmatmul.f32.gmra.mxu0 %v4700
      %v5027 = vpop.f32.mrf.mxu0
      %v5028 = vadd.f32 0.0, %v5027
      %5029 = vmatmul.f32.gmra.mxu0 %v4703
      %v5030 = vpop.f32.mrf.mxu0
      %v5031 = vadd.f32 0.0, %v5030
      %5032 = vdwg.mxu0
      %5033 = vmatpush.msra.mxu0 0.0
      %5034 = vmatpush.msra.mxu0 0.0
      %5035 = vmatpush.msra.mxu0 0.0
      %5036 = vmatpush.msra.mxu0 0.0
      %5037 = vmatpush.msra.mxu0 0.0
      %5038 = vmatpush.msra.mxu0 0.0
      %5039 = vmatpush.msra.mxu0 0.0
      %5040 = vmatpush.msra.mxu0 0.0
      %5041 = vmatpush.msra.mxu0 0.0
      %5042 = vmatpush.msra.mxu0 0.0
      %5043 = vmatpush.msra.mxu0 0.0
      %5044 = vmatpush.msra.mxu0 0.0
      %5045 = vmatpush.msra.mxu0 0.0
      %5046 = vmatpush.msra.mxu0 0.0
      %5047 = vmatpush.msra.mxu0 %v2576
      %5048 = vmatpush.msra.mxu0 %v2575
      %5049 = vmatmul.f32.gmra.mxu0 %v4682
      %v5050 = vpop.f32.mrf.mxu0
      %v5051 = vadd.f32 0.0, %v5050
      %5052 = vmatmul.f32.gmra.mxu0 %v4685
      %v5053 = vpop.f32.mrf.mxu0
      %v5054 = vadd.f32 0.0, %v5053
      %5055 = vmatmul.f32.gmra.mxu0 %v4688
      %v5056 = vpop.f32.mrf.mxu0
      %v5057 = vadd.f32 0.0, %v5056
      %5058 = vmatmul.f32.gmra.mxu0 %v4691
      %v5059 = vpop.f32.mrf.mxu0
      %v5060 = vadd.f32 0.0, %v5059
      %5061 = vmatmul.f32.gmra.mxu0 %v4694
      %v5062 = vpop.f32.mrf.mxu0
      %v5063 = vadd.f32 0.0, %v5062
      %5064 = vmatmul.f32.gmra.mxu0 %v4697
      %v5065 = vpop.f32.mrf.mxu0
      %v5066 = vadd.f32 0.0, %v5065
      %5067 = vmatmul.f32.gmra.mxu0 %v4700
      %v5068 = vpop.f32.mrf.mxu0
      %v5069 = vadd.f32 0.0, %v5068
      %5070 = vmatmul.f32.gmra.mxu0 %v4703
      %v5071 = vpop.f32.mrf.mxu0
      %v5072 = vadd.f32 0.0, %v5071
      %5073 = vdwg.mxu0
      %v5074 = vpack.c.bf16 %v4726, %v4723
      %v5075 = vpack.c.bf16 %v4732, %v4729
      %v5076 = vpack.c.bf16 %v4738, %v4735
      %v5077 = vpack.c.bf16 %v4744, %v4741
      %v5078 = vpack.c.bf16 %v4767, %v4764
      %v5079 = vpack.c.bf16 %v4773, %v4770
      %v5080 = vpack.c.bf16 %v4779, %v4776
      %v5081 = vpack.c.bf16 %v4785, %v4782
      %v5082 = vpack.c.bf16 %v4808, %v4805
      %v5083 = vpack.c.bf16 %v4814, %v4811
      %v5084 = vpack.c.bf16 %v4820, %v4817
      %v5085 = vpack.c.bf16 %v4826, %v4823
      %v5086 = vpack.c.bf16 %v4849, %v4846
      %v5087 = vpack.c.bf16 %v4855, %v4852
      %v5088 = vpack.c.bf16 %v4861, %v4858
      %v5089 = vpack.c.bf16 %v4867, %v4864
      %v5090 = vpack.c.bf16 %v4890, %v4887
      %v5091 = vpack.c.bf16 %v4896, %v4893
      %v5092 = vpack.c.bf16 %v4902, %v4899
      %v5093 = vpack.c.bf16 %v4908, %v4905
      %v5094 = vpack.c.bf16 %v4931, %v4928
      %v5095 = vpack.c.bf16 %v4937, %v4934
      %v5096 = vpack.c.bf16 %v4943, %v4940
      %v5097 = vpack.c.bf16 %v4949, %v4946
      %v5098 = vpack.c.bf16 %v4972, %v4969
      %v5099 = vpack.c.bf16 %v4978, %v4975
      %v5100 = vpack.c.bf16 %v4984, %v4981
      %v5101 = vpack.c.bf16 %v4990, %v4987
      %v5102 = vpack.c.bf16 %v5013, %v5010
      %v5103 = vpack.c.bf16 %v5019, %v5016
      %v5104 = vpack.c.bf16 %v5025, %v5022
      %v5105 = vpack.c.bf16 %v5031, %v5028
      %v5106 = vpack.c.bf16 %v5054, %v5051
      %v5107 = vpack.c.bf16 %v5060, %v5057
      %v5108 = vpack.c.bf16 %v5066, %v5063
      %v5109 = vpack.c.bf16 %v5072, %v5069
      %v5110 = vld [vmem:[%s35] sm:$0xff]
      %v5111 = vld [vmem:[%s35 + $0x8] sm:$0xff]
      %v5112 = vld [vmem:[%s35 + $0x10] sm:$0xf]
      %v5113 = vld [vmem:[%s35 + $0x14] sm:$0xff]
      %v5114 = vld [vmem:[%s35 + $0x1c] sm:$0xff]
      %v5115 = vld [vmem:[%s35 + $0x24] sm:$0xf]
      %v5116 = vld [vmem:[%s35 + $0x28] sm:$0xff]
      %v5117 = vld [vmem:[%s35 + $0x30] sm:$0xff]
      %v5118 = vld [vmem:[%s35 + $0x38] sm:$0xf]
      %v5119 = vld [vmem:[%s35 + $0x3c] sm:$0xff]
      %v5120 = vld [vmem:[%s35 + $0x44] sm:$0xff]
      %v5121 = vld [vmem:[%s35 + $0x4c] sm:$0xf]
      %v5122 = vld [vmem:[%s37] sm:$0xff]
      %v5123 = vld [vmem:[%s37 + $0x8] sm:$0xff]
      %v5124 = vld [vmem:[%s37 + $0x10] sm:$0xff]
      %v5125 = vld [vmem:[%s37 + $0x18] sm:$0xff]
      %5127 = vset.pattern.permute.xlu0 0
      %5128 = vperm.xlu0 %5127, %v5122
      %v5129 = vpop.permute.xlu0 %5128
      %5132 = vset.pattern.permute.xlu0 0
      %5133 = vperm.xlu0 %5132, %v5123
      %v5134 = vpop.permute.xlu0 %5133
      %5137 = vset.pattern.permute.xlu0 0
      %5138 = vperm.xlu0 %5137, %v5124
      %v5139 = vpop.permute.xlu0 %5138
      %5142 = vset.pattern.permute.xlu0 0
      %5143 = vperm.xlu0 %5142, %v5125
      %v5144 = vpop.permute.xlu0 %5143
      %v5158 = vunpack.c.l.b16 %v5110
      %v5159 = vunpack.c.h.b16 %v5110
      %v5160 = vunpack.c.l.b16 %v5111
      %v5161 = vunpack.c.h.b16 %v5111
      %v5162 = vunpack.c.l.b16 %v5112
      %v5163 = vunpack.c.l.b16 %v5113
      %v5164 = vunpack.c.h.b16 %v5113
      %v5165 = vunpack.c.l.b16 %v5114
      %v5166 = vunpack.c.h.b16 %v5114
      %v5167 = vunpack.c.l.b16 %v5115
      %v5168 = vunpack.c.l.b16 %v5116
      %v5169 = vunpack.c.h.b16 %v5116
      %v5170 = vunpack.c.l.b16 %v5117
      %v5171 = vunpack.c.h.b16 %v5117
      %v5172 = vunpack.c.l.b16 %v5118
      %v5173 = vunpack.c.l.b16 %v5119
      %v5174 = vunpack.c.h.b16 %v5119
      %v5175 = vunpack.c.l.b16 %v5120
      %v5176 = vunpack.c.h.b16 %v5120
      %v5177 = vunpack.c.l.b16 %v5121
      %v5178 = vpack.c.b16 %v5163, %v5158
      %v5179 = vpack.c.b16 %v5164, %v5159
      %v5180 = vpack.c.b16 %v5165, %v5160
      %v5181 = vpack.c.b16 %v5166, %v5161
      %v5182 = vpack.c.b16 %v5167, %v5162
      %v5183 = vpack.c.b16 %v5173, %v5168
      %v5184 = vpack.c.b16 %v5174, %v5169
      %v5185 = vpack.c.b16 %v5175, %v5170
      %v5186 = vpack.c.b16 %v5176, %v5171
      %v5187 = vpack.c.b16 %v5177, %v5172
      %v5197 = vsel %vm1641, %v5182, 0
      %v5200 = vsel %vm1641, %v5187, 0
      %5202 = vmatpush.bf16.msra.mxu0 %v5081
      %5203 = vmatpush.bf16.msra.mxu0 %v5080
      %5204 = vmatpush.bf16.msra.mxu0 %v5079
      %5205 = vmatpush.bf16.msra.mxu0 %v5078
      %5206 = vmatpush.bf16.msra.mxu0 %v5077
      %5207 = vmatpush.bf16.msra.mxu0 %v5076
      %5208 = vmatpush.bf16.msra.mxu0 %v5075
      %5209 = vmatpush.bf16.msra.mxu0 %v5074
      %5210 = vmatmul.bf16.gmra.mxu0 %v5178
      %v5211 = vpop.f32.mrf.mxu0
      %v5212 = vadd.f32 %v5129, %v5211
      %v5213 = vpop.f32.mrf.mxu0
      %v5214 = vadd.f32 %v5134, %v5213
      %5215 = vmatmul.bf16.gmra.mxu0 %v5183
      %v5216 = vpop.f32.mrf.mxu0
      %v5217 = vadd.f32 %v5139, %v5216
      %v5218 = vpop.f32.mrf.mxu0
      %v5219 = vadd.f32 %v5144, %v5218
      %5220 = vdwg.mxu0
      %5221 = vmatpush.bf16.msra.mxu0 %v5089
      %5222 = vmatpush.bf16.msra.mxu0 %v5088
      %5223 = vmatpush.bf16.msra.mxu0 %v5087
      %5224 = vmatpush.bf16.msra.mxu0 %v5086
      %5225 = vmatpush.bf16.msra.mxu0 %v5085
      %5226 = vmatpush.bf16.msra.mxu0 %v5084
      %5227 = vmatpush.bf16.msra.mxu0 %v5083
      %5228 = vmatpush.bf16.msra.mxu0 %v5082
      %5229 = vmatmul.bf16.gmra.mxu0 %v5179
      %v5230 = vpop.f32.mrf.mxu0
      %v5231 = vadd.f32 %v5212, %v5230
      %v5232 = vpop.f32.mrf.mxu0
      %v5233 = vadd.f32 %v5214, %v5232
      %5234 = vmatmul.bf16.gmra.mxu0 %v5184
      %v5235 = vpop.f32.mrf.mxu0
      %v5236 = vadd.f32 %v5217, %v5235
      %v5237 = vpop.f32.mrf.mxu0
      %v5238 = vadd.f32 %v5219, %v5237
      %5239 = vdwg.mxu0
      %5240 = vmatpush.bf16.msra.mxu0 %v5097
      %5241 = vmatpush.bf16.msra.mxu0 %v5096
      %5242 = vmatpush.bf16.msra.mxu0 %v5095
      %5243 = vmatpush.bf16.msra.mxu0 %v5094
      %5244 = vmatpush.bf16.msra.mxu0 %v5093
      %5245 = vmatpush.bf16.msra.mxu0 %v5092
      %5246 = vmatpush.bf16.msra.mxu0 %v5091
      %5247 = vmatpush.bf16.msra.mxu0 %v5090
      %5248 = vmatmul.bf16.gmra.mxu0 %v5180
      %v5249 = vpop.f32.mrf.mxu0
      %v5250 = vadd.f32 %v5231, %v5249
      %v5251 = vpop.f32.mrf.mxu0
      %v5252 = vadd.f32 %v5233, %v5251
      %5253 = vmatmul.bf16.gmra.mxu0 %v5185
      %v5254 = vpop.f32.mrf.mxu0
      %v5255 = vadd.f32 %v5236, %v5254
      %v5256 = vpop.f32.mrf.mxu0
      %v5257 = vadd.f32 %v5238, %v5256
      %5258 = vdwg.mxu0
      %5259 = vmatpush.bf16.msra.mxu0 %v5105
      %5260 = vmatpush.bf16.msra.mxu0 %v5104
      %5261 = vmatpush.bf16.msra.mxu0 %v5103
      %5262 = vmatpush.bf16.msra.mxu0 %v5102
      %5263 = vmatpush.bf16.msra.mxu0 %v5101
      %5264 = vmatpush.bf16.msra.mxu0 %v5100
      %5265 = vmatpush.bf16.msra.mxu0 %v5099
      %5266 = vmatpush.bf16.msra.mxu0 %v5098
      %5267 = vmatmul.bf16.gmra.mxu0 %v5181
      %v5268 = vpop.f32.mrf.mxu0
      %v5269 = vadd.f32 %v5250, %v5268
      %v5270 = vpop.f32.mrf.mxu0
      %v5271 = vadd.f32 %v5252, %v5270
      %5272 = vmatmul.bf16.gmra.mxu0 %v5186
      %v5273 = vpop.f32.mrf.mxu0
      %v5274 = vadd.f32 %v5255, %v5273
      %v5275 = vpop.f32.mrf.mxu0
      %v5276 = vadd.f32 %v5257, %v5275
      %5277 = vdwg.mxu0
      %5278 = vmatpush.bf16.msra.mxu0 0
      %5279 = vmatpush.bf16.msra.mxu0 0
      %5280 = vmatpush.bf16.msra.mxu0 0
      %5281 = vmatpush.bf16.msra.mxu0 0
      %5282 = vmatpush.bf16.msra.mxu0 %v5109
      %5283 = vmatpush.bf16.msra.mxu0 %v5108
      %5284 = vmatpush.bf16.msra.mxu0 %v5107
      %5285 = vmatpush.bf16.msra.mxu0 %v5106
      %5286 = vmatmul.bf16.gmra.mxu0 %v5197
      %v5287 = vpop.f32.mrf.mxu0
      %v5288 = vadd.f32 %v5269, %v5287
      %v5289 = vpop.f32.mrf.mxu0
      %v5290 = vadd.f32 %v5271, %v5289
      %5291 = vmatmul.bf16.gmra.mxu0 %v5200
      %v5292 = vpop.f32.mrf.mxu0
      %v5293 = vadd.f32 %v5274, %v5292
      %v5294 = vpop.f32.mrf.mxu0
      %v5295 = vadd.f32 %v5276, %v5294
      %5296 = vdwg.mxu0
      %v5297 = vmax.f32 %v5288, 0.0
      %v5298 = vmax.f32 %v5290, 0.0
      %v5299 = vmax.f32 %v5293, 0.0
      %v5300 = vmax.f32 %v5295, 0.0
      %v5302 = vsel %vm2188, %v5297, 0
      %v5305 = vsel %vm2188, %v5298, 0
      %v5308 = vsel %vm2188, %v5299, 0
      %v5311 = vsel %vm2188, %v5300, 0
      %5313 = vmatpush.msra.mxu0 0.0
      %5314 = vmatpush.msra.mxu0 0.0
      %5315 = vmatpush.msra.mxu0 0.0
      %5316 = vmatpush.msra.mxu0 0.0
      %5317 = vmatpush.msra.mxu0 0.0
      %5318 = vmatpush.msra.mxu0 0.0
      %5319 = vmatpush.msra.mxu0 0.0
      %5320 = vmatpush.msra.mxu0 0.0
      %5321 = vmatpush.msra.mxu0 0.0
      %5322 = vmatpush.msra.mxu0 0.0
      %5323 = vmatpush.msra.mxu0 0.0
      %5324 = vmatpush.msra.mxu0 0.0
      %5325 = vmatpush.msra.mxu0 0.0
      %5326 = vmatpush.msra.mxu0 0.0
      %5327 = vmatpush.msra.mxu0 %v2362
      %5328 = vmatpush.msra.mxu0 %v2361
      %5329 = vmatmul.f32.gmra.mxu0 %v5302
      %v5330 = vpop.f32.mrf.mxu0
      %v5331 = vadd.f32 0.0, %v5330
      %5332 = vmatmul.f32.gmra.mxu0 %v5305
      %v5333 = vpop.f32.mrf.mxu0
      %v5334 = vadd.f32 0.0, %v5333
      %5335 = vmatmul.f32.gmra.mxu0 %v5308
      %v5336 = vpop.f32.mrf.mxu0
      %v5337 = vadd.f32 0.0, %v5336
      %5338 = vmatmul.f32.gmra.mxu0 %v5311
      %v5339 = vpop.f32.mrf.mxu0
      %v5340 = vadd.f32 0.0, %v5339
      %5341 = vdwg.mxu0
      %5342 = vmatpush.msra.mxu0 0.0
      %5343 = vmatpush.msra.mxu0 0.0
      %5344 = vmatpush.msra.mxu0 0.0
      %5345 = vmatpush.msra.mxu0 0.0
      %5346 = vmatpush.msra.mxu0 0.0
      %5347 = vmatpush.msra.mxu0 0.0
      %5348 = vmatpush.msra.mxu0 0.0
      %5349 = vmatpush.msra.mxu0 0.0
      %5350 = vmatpush.msra.mxu0 0.0
      %5351 = vmatpush.msra.mxu0 0.0
      %5352 = vmatpush.msra.mxu0 0.0
      %5353 = vmatpush.msra.mxu0 0.0
      %5354 = vmatpush.msra.mxu0 0.0
      %5355 = vmatpush.msra.mxu0 0.0
      %5356 = vmatpush.msra.mxu0 %v2394
      %5357 = vmatpush.msra.mxu0 %v2393
      %5358 = vmatmul.f32.gmra.mxu0 %v5302
      %v5359 = vpop.f32.mrf.mxu0
      %v5360 = vadd.f32 0.0, %v5359
      %5361 = vmatmul.f32.gmra.mxu0 %v5305
      %v5362 = vpop.f32.mrf.mxu0
      %v5363 = vadd.f32 0.0, %v5362
      %5364 = vmatmul.f32.gmra.mxu0 %v5308
      %v5365 = vpop.f32.mrf.mxu0
      %v5366 = vadd.f32 0.0, %v5365
      %5367 = vmatmul.f32.gmra.mxu0 %v5311
      %v5368 = vpop.f32.mrf.mxu0
      %v5369 = vadd.f32 0.0, %v5368
      %5370 = vdwg.mxu0
      %5371 = vmatpush.msra.mxu0 0.0
      %5372 = vmatpush.msra.mxu0 0.0
      %5373 = vmatpush.msra.mxu0 0.0
      %5374 = vmatpush.msra.mxu0 0.0
      %5375 = vmatpush.msra.mxu0 0.0
      %5376 = vmatpush.msra.mxu0 0.0
      %5377 = vmatpush.msra.mxu0 0.0
      %5378 = vmatpush.msra.mxu0 0.0
      %5379 = vmatpush.msra.mxu0 0.0
      %5380 = vmatpush.msra.mxu0 0.0
      %5381 = vmatpush.msra.mxu0 0.0
      %5382 = vmatpush.msra.mxu0 0.0
      %5383 = vmatpush.msra.mxu0 0.0
      %5384 = vmatpush.msra.mxu0 0.0
      %5385 = vmatpush.msra.mxu0 %v2420
      %5386 = vmatpush.msra.mxu0 %v2419
      %5387 = vmatmul.f32.gmra.mxu0 %v5302
      %v5388 = vpop.f32.mrf.mxu0
      %v5389 = vadd.f32 0.0, %v5388
      %5390 = vmatmul.f32.gmra.mxu0 %v5305
      %v5391 = vpop.f32.mrf.mxu0
      %v5392 = vadd.f32 0.0, %v5391
      %5393 = vmatmul.f32.gmra.mxu0 %v5308
      %v5394 = vpop.f32.mrf.mxu0
      %v5395 = vadd.f32 0.0, %v5394
      %5396 = vmatmul.f32.gmra.mxu0 %v5311
      %v5397 = vpop.f32.mrf.mxu0
      %v5398 = vadd.f32 0.0, %v5397
      %5399 = vdwg.mxu0
      %5400 = vmatpush.msra.mxu0 0.0
      %5401 = vmatpush.msra.mxu0 0.0
      %5402 = vmatpush.msra.mxu0 0.0
      %5403 = vmatpush.msra.mxu0 0.0
      %5404 = vmatpush.msra.mxu0 0.0
      %5405 = vmatpush.msra.mxu0 0.0
      %5406 = vmatpush.msra.mxu0 0.0
      %5407 = vmatpush.msra.mxu0 0.0
      %5408 = vmatpush.msra.mxu0 0.0
      %5409 = vmatpush.msra.mxu0 0.0
      %5410 = vmatpush.msra.mxu0 0.0
      %5411 = vmatpush.msra.mxu0 0.0
      %5412 = vmatpush.msra.mxu0 0.0
      %5413 = vmatpush.msra.mxu0 0.0
      %5414 = vmatpush.msra.mxu0 %v2446
      %5415 = vmatpush.msra.mxu0 %v2445
      %5416 = vmatmul.f32.gmra.mxu0 %v5302
      %v5417 = vpop.f32.mrf.mxu0
      %v5418 = vadd.f32 0.0, %v5417
      %5419 = vmatmul.f32.gmra.mxu0 %v5305
      %v5420 = vpop.f32.mrf.mxu0
      %v5421 = vadd.f32 0.0, %v5420
      %5422 = vmatmul.f32.gmra.mxu0 %v5308
      %v5423 = vpop.f32.mrf.mxu0
      %v5424 = vadd.f32 0.0, %v5423
      %5425 = vmatmul.f32.gmra.mxu0 %v5311
      %v5426 = vpop.f32.mrf.mxu0
      %v5427 = vadd.f32 0.0, %v5426
      %5428 = vdwg.mxu0
      %5429 = vmatpush.msra.mxu0 0.0
      %5430 = vmatpush.msra.mxu0 0.0
      %5431 = vmatpush.msra.mxu0 0.0
      %5432 = vmatpush.msra.mxu0 0.0
      %5433 = vmatpush.msra.mxu0 0.0
      %5434 = vmatpush.msra.mxu0 0.0
      %5435 = vmatpush.msra.mxu0 0.0
      %5436 = vmatpush.msra.mxu0 0.0
      %5437 = vmatpush.msra.mxu0 0.0
      %5438 = vmatpush.msra.mxu0 0.0
      %5439 = vmatpush.msra.mxu0 0.0
      %5440 = vmatpush.msra.mxu0 0.0
      %5441 = vmatpush.msra.mxu0 0.0
      %5442 = vmatpush.msra.mxu0 0.0
      %5443 = vmatpush.msra.mxu0 %v2472
      %5444 = vmatpush.msra.mxu0 %v2471
      %5445 = vmatmul.f32.gmra.mxu0 %v5302
      %v5446 = vpop.f32.mrf.mxu0
      %v5447 = vadd.f32 0.0, %v5446
      %5448 = vmatmul.f32.gmra.mxu0 %v5305
      %v5449 = vpop.f32.mrf.mxu0
      %v5450 = vadd.f32 0.0, %v5449
      %5451 = vmatmul.f32.gmra.mxu0 %v5308
      %v5452 = vpop.f32.mrf.mxu0
      %v5453 = vadd.f32 0.0, %v5452
      %5454 = vmatmul.f32.gmra.mxu0 %v5311
      %v5455 = vpop.f32.mrf.mxu0
      %v5456 = vadd.f32 0.0, %v5455
      %5457 = vdwg.mxu0
      %5458 = vmatpush.msra.mxu0 0.0
      %5459 = vmatpush.msra.mxu0 0.0
      %5460 = vmatpush.msra.mxu0 0.0
      %5461 = vmatpush.msra.mxu0 0.0
      %5462 = vmatpush.msra.mxu0 0.0
      %5463 = vmatpush.msra.mxu0 0.0
      %5464 = vmatpush.msra.mxu0 0.0
      %5465 = vmatpush.msra.mxu0 0.0
      %5466 = vmatpush.msra.mxu0 0.0
      %5467 = vmatpush.msra.mxu0 0.0
      %5468 = vmatpush.msra.mxu0 0.0
      %5469 = vmatpush.msra.mxu0 0.0
      %5470 = vmatpush.msra.mxu0 0.0
      %5471 = vmatpush.msra.mxu0 0.0
      %5472 = vmatpush.msra.mxu0 %v2498
      %5473 = vmatpush.msra.mxu0 %v2497
      %5474 = vmatmul.f32.gmra.mxu0 %v5302
      %v5475 = vpop.f32.mrf.mxu0
      %v5476 = vadd.f32 0.0, %v5475
      %5477 = vmatmul.f32.gmra.mxu0 %v5305
      %v5478 = vpop.f32.mrf.mxu0
      %v5479 = vadd.f32 0.0, %v5478
      %5480 = vmatmul.f32.gmra.mxu0 %v5308
      %v5481 = vpop.f32.mrf.mxu0
      %v5482 = vadd.f32 0.0, %v5481
      %5483 = vmatmul.f32.gmra.mxu0 %v5311
      %v5484 = vpop.f32.mrf.mxu0
      %v5485 = vadd.f32 0.0, %v5484
      %5486 = vdwg.mxu0
      %5487 = vmatpush.msra.mxu0 0.0
      %5488 = vmatpush.msra.mxu0 0.0
      %5489 = vmatpush.msra.mxu0 0.0
      %5490 = vmatpush.msra.mxu0 0.0
      %5491 = vmatpush.msra.mxu0 0.0
      %5492 = vmatpush.msra.mxu0 0.0
      %5493 = vmatpush.msra.mxu0 0.0
      %5494 = vmatpush.msra.mxu0 0.0
      %5495 = vmatpush.msra.mxu0 0.0
      %5496 = vmatpush.msra.mxu0 0.0
      %5497 = vmatpush.msra.mxu0 0.0
      %5498 = vmatpush.msra.mxu0 0.0
      %5499 = vmatpush.msra.mxu0 0.0
      %5500 = vmatpush.msra.mxu0 0.0
      %5501 = vmatpush.msra.mxu0 %v2524
      %5502 = vmatpush.msra.mxu0 %v2523
      %5503 = vmatmul.f32.gmra.mxu0 %v5302
      %v5504 = vpop.f32.mrf.mxu0
      %v5505 = vadd.f32 0.0, %v5504
      %5506 = vmatmul.f32.gmra.mxu0 %v5305
      %v5507 = vpop.f32.mrf.mxu0
      %v5508 = vadd.f32 0.0, %v5507
      %5509 = vmatmul.f32.gmra.mxu0 %v5308
      %v5510 = vpop.f32.mrf.mxu0
      %v5511 = vadd.f32 0.0, %v5510
      %5512 = vmatmul.f32.gmra.mxu0 %v5311
      %v5513 = vpop.f32.mrf.mxu0
      %v5514 = vadd.f32 0.0, %v5513
      %5515 = vdwg.mxu0
      %5516 = vmatpush.msra.mxu0 0.0
      %5517 = vmatpush.msra.mxu0 0.0
      %5518 = vmatpush.msra.mxu0 0.0
      %5519 = vmatpush.msra.mxu0 0.0
      %5520 = vmatpush.msra.mxu0 0.0
      %5521 = vmatpush.msra.mxu0 0.0
      %5522 = vmatpush.msra.mxu0 0.0
      %5523 = vmatpush.msra.mxu0 0.0
      %5524 = vmatpush.msra.mxu0 0.0
      %5525 = vmatpush.msra.mxu0 0.0
      %5526 = vmatpush.msra.mxu0 0.0
      %5527 = vmatpush.msra.mxu0 0.0
      %5528 = vmatpush.msra.mxu0 0.0
      %5529 = vmatpush.msra.mxu0 0.0
      %5530 = vmatpush.msra.mxu0 %v2550
      %5531 = vmatpush.msra.mxu0 %v2549
      %5532 = vmatmul.f32.gmra.mxu0 %v5302
      %v5533 = vpop.f32.mrf.mxu0
      %v5534 = vadd.f32 0.0, %v5533
      %5535 = vmatmul.f32.gmra.mxu0 %v5305
      %v5536 = vpop.f32.mrf.mxu0
      %v5537 = vadd.f32 0.0, %v5536
      %5538 = vmatmul.f32.gmra.mxu0 %v5308
      %v5539 = vpop.f32.mrf.mxu0
      %v5540 = vadd.f32 0.0, %v5539
      %5541 = vmatmul.f32.gmra.mxu0 %v5311
      %v5542 = vpop.f32.mrf.mxu0
      %v5543 = vadd.f32 0.0, %v5542
      %5544 = vdwg.mxu0
      %5545 = vmatpush.msra.mxu0 0.0
      %5546 = vmatpush.msra.mxu0 0.0
      %5547 = vmatpush.msra.mxu0 0.0
      %5548 = vmatpush.msra.mxu0 0.0
      %5549 = vmatpush.msra.mxu0 0.0
      %5550 = vmatpush.msra.mxu0 0.0
      %5551 = vmatpush.msra.mxu0 0.0
      %5552 = vmatpush.msra.mxu0 0.0
      %5553 = vmatpush.msra.mxu0 0.0
      %5554 = vmatpush.msra.mxu0 0.0
      %5555 = vmatpush.msra.mxu0 0.0
      %5556 = vmatpush.msra.mxu0 0.0
      %5557 = vmatpush.msra.mxu0 0.0
      %5558 = vmatpush.msra.mxu0 0.0
      %5559 = vmatpush.msra.mxu0 %v2576
      %5560 = vmatpush.msra.mxu0 %v2575
      %5561 = vmatmul.f32.gmra.mxu0 %v5302
      %v5562 = vpop.f32.mrf.mxu0
      %v5563 = vadd.f32 0.0, %v5562
      %5564 = vmatmul.f32.gmra.mxu0 %v5305
      %v5565 = vpop.f32.mrf.mxu0
      %v5566 = vadd.f32 0.0, %v5565
      %5567 = vmatmul.f32.gmra.mxu0 %v5308
      %v5568 = vpop.f32.mrf.mxu0
      %v5569 = vadd.f32 0.0, %v5568
      %5570 = vmatmul.f32.gmra.mxu0 %v5311
      %v5571 = vpop.f32.mrf.mxu0
      %v5572 = vadd.f32 0.0, %v5571
      %5573 = vdwg.mxu0
      %v5574 = vpack.c.bf16 %v5334, %v5331
      %v5575 = vpack.c.bf16 %v5340, %v5337
      %v5576 = vpack.c.bf16 %v5363, %v5360
      %v5577 = vpack.c.bf16 %v5369, %v5366
      %v5578 = vpack.c.bf16 %v5392, %v5389
      %v5579 = vpack.c.bf16 %v5398, %v5395
      %v5580 = vpack.c.bf16 %v5421, %v5418
      %v5581 = vpack.c.bf16 %v5427, %v5424
      %v5582 = vpack.c.bf16 %v5450, %v5447
      %v5583 = vpack.c.bf16 %v5456, %v5453
      %v5584 = vpack.c.bf16 %v5479, %v5476
      %v5585 = vpack.c.bf16 %v5485, %v5482
      %v5586 = vpack.c.bf16 %v5508, %v5505
      %v5587 = vpack.c.bf16 %v5514, %v5511
      %v5588 = vpack.c.bf16 %v5537, %v5534
      %v5589 = vpack.c.bf16 %v5543, %v5540
      %v5590 = vpack.c.bf16 %v5566, %v5563
      %v5591 = vpack.c.bf16 %v5572, %v5569
      %v5592 = vld [vmem:[%s39] sm:$0xff]
      %v5593 = vld [vmem:[%s39 + $0x8] sm:$0xf]
      %v5594 = vld [vmem:[%s39 + $0xc] sm:$0xff]
      %v5595 = vld [vmem:[%s39 + $0x14] sm:$0xf]
      %v5596 = vld [vmem:[%s39 + $0x18] sm:$0xff]
      %v5597 = vld [vmem:[%s39 + $0x20] sm:$0xf]
      %v5598 = vld [vmem:[%s39 + $0x24] sm:$0xff]
      %v5599 = vld [vmem:[%s39 + $0x2c] sm:$0xf]
      %v5600 = vld [vmem:[%s41] sm:$0xff]
      %v5601 = vld [vmem:[%s41 + $0x8] sm:$0xff]
      %v5602 = vld [vmem:[%s41 + $0x10] sm:$0xff]
      %v5603 = vld [vmem:[%s41 + $0x18] sm:$0xff]
      %5605 = vset.pattern.permute.xlu0 0
      %5606 = vperm.xlu0 %5605, %v5600
      %v5607 = vpop.permute.xlu0 %5606
      %5610 = vset.pattern.permute.xlu0 0
      %5611 = vperm.xlu0 %5610, %v5601
      %v5612 = vpop.permute.xlu0 %5611
      %5615 = vset.pattern.permute.xlu0 0
      %5616 = vperm.xlu0 %5615, %v5602
      %v5617 = vpop.permute.xlu0 %5616
      %5620 = vset.pattern.permute.xlu0 0
      %5621 = vperm.xlu0 %5620, %v5603
      %v5622 = vpop.permute.xlu0 %5621
      %v5632 = vunpack.c.l.b16 %v5592
      %v5633 = vunpack.c.h.b16 %v5592
      %v5634 = vunpack.c.l.b16 %v5593
      %v5635 = vunpack.c.l.b16 %v5594
      %v5636 = vunpack.c.h.b16 %v5594
      %v5637 = vunpack.c.l.b16 %v5595
      %v5638 = vunpack.c.l.b16 %v5596
      %v5639 = vunpack.c.h.b16 %v5596
      %v5640 = vunpack.c.l.b16 %v5597
      %v5641 = vunpack.c.l.b16 %v5598
      %v5642 = vunpack.c.h.b16 %v5598
      %v5643 = vunpack.c.l.b16 %v5599
      %v5644 = vpack.c.b16 %v5635, %v5632
      %v5645 = vpack.c.b16 %v5636, %v5633
      %v5646 = vpack.c.b16 %v5637, %v5634
      %v5647 = vpack.c.b16 %v5641, %v5638
      %v5648 = vpack.c.b16 %v5642, %v5639
      %v5649 = vpack.c.b16 %v5643, %v5640
      %v5655 = vsel %vm3056, %v5646, 0
      %v5658 = vsel %vm3056, %v5649, 0
      %5660 = vmatpush.bf16.msra.mxu0 %v5581
      %5661 = vmatpush.bf16.msra.mxu0 %v5580
      %5662 = vmatpush.bf16.msra.mxu0 %v5579
      %5663 = vmatpush.bf16.msra.mxu0 %v5578
      %5664 = vmatpush.bf16.msra.mxu0 %v5577
      %5665 = vmatpush.bf16.msra.mxu0 %v5576
      %5666 = vmatpush.bf16.msra.mxu0 %v5575
      %5667 = vmatpush.bf16.msra.mxu0 %v5574
      %5668 = vmatmul.bf16.gmra.mxu0 %v5644
      %v5669 = vpop.f32.mrf.mxu0
      %v5670 = vadd.f32 %v5607, %v5669
      %v5671 = vpop.f32.mrf.mxu0
      %v5672 = vadd.f32 %v5612, %v5671
      %5673 = vmatmul.bf16.gmra.mxu0 %v5647
      %v5674 = vpop.f32.mrf.mxu0
      %v5675 = vadd.f32 %v5617, %v5674
      %v5676 = vpop.f32.mrf.mxu0
      %v5677 = vadd.f32 %v5622, %v5676
      %5678 = vdwg.mxu0
      %5679 = vmatpush.bf16.msra.mxu0 %v5589
      %5680 = vmatpush.bf16.msra.mxu0 %v5588
      %5681 = vmatpush.bf16.msra.mxu0 %v5587
      %5682 = vmatpush.bf16.msra.mxu0 %v5586
      %5683 = vmatpush.bf16.msra.mxu0 %v5585
      %5684 = vmatpush.bf16.msra.mxu0 %v5584
      %5685 = vmatpush.bf16.msra.mxu0 %v5583
      %5686 = vmatpush.bf16.msra.mxu0 %v5582
      %5687 = vmatmul.bf16.gmra.mxu0 %v5645
      %v5688 = vpop.f32.mrf.mxu0
      %v5689 = vadd.f32 %v5670, %v5688
      %v5690 = vpop.f32.mrf.mxu0
      %v5691 = vadd.f32 %v5672, %v5690
      %5692 = vmatmul.bf16.gmra.mxu0 %v5648
      %v5693 = vpop.f32.mrf.mxu0
      %v5694 = vadd.f32 %v5675, %v5693
      %v5695 = vpop.f32.mrf.mxu0
      %v5696 = vadd.f32 %v5677, %v5695
      %5697 = vdwg.mxu0
      %5698 = vmatpush.bf16.msra.mxu0 0
      %5699 = vmatpush.bf16.msra.mxu0 0
      %5700 = vmatpush.bf16.msra.mxu0 0
      %5701 = vmatpush.bf16.msra.mxu0 0
      %5702 = vmatpush.bf16.msra.mxu0 0
      %5703 = vmatpush.bf16.msra.mxu0 0
      %5704 = vmatpush.bf16.msra.mxu0 %v5591
      %5705 = vmatpush.bf16.msra.mxu0 %v5590
      %5706 = vmatmul.bf16.gmra.mxu0 %v5655
      %v5707 = vpop.f32.mrf.mxu0
      %v5708 = vadd.f32 %v5689, %v5707
      %v5709 = vpop.f32.mrf.mxu0
      %v5710 = vadd.f32 %v5691, %v5709
      %5711 = vmatmul.bf16.gmra.mxu0 %v5658
      %v5712 = vpop.f32.mrf.mxu0
      %v5713 = vadd.f32 %v5694, %v5712
      %v5714 = vpop.f32.mrf.mxu0
      %v5715 = vadd.f32 %v5696, %v5714
      %5716 = vdwg.mxu0
      %v5717 = vmax.f32 %v5708, 0.0
      %v5718 = vmax.f32 %v5710, 0.0
      %v5719 = vmax.f32 %v5713, 0.0
      %v5720 = vmax.f32 %v5715, 0.0
      %v5721 = vld [vmem:[%s79] sm:$0xff]
      %v5722 = vld [vmem:[%s79 + $0x8] sm:$0xff]
      %v5724 = vsel %vm2188, %v5717, 0
      %v5727 = vsel %vm2188, %v5718, 0
      %v5730 = vsel %vm2188, %v5719, 0
      %v5733 = vsel %vm2188, %v5720, 0
      %5735 = vmatpush.msra.mxu0 0.0
      %5736 = vmatpush.msra.mxu0 0.0
      %5737 = vmatpush.msra.mxu0 0.0
      %5738 = vmatpush.msra.mxu0 0.0
      %5739 = vmatpush.msra.mxu0 0.0
      %5740 = vmatpush.msra.mxu0 0.0
      %5741 = vmatpush.msra.mxu0 0.0
      %5742 = vmatpush.msra.mxu0 0.0
      %5743 = vmatpush.msra.mxu0 0.0
      %5744 = vmatpush.msra.mxu0 0.0
      %5745 = vmatpush.msra.mxu0 0.0
      %5746 = vmatpush.msra.mxu0 0.0
      %5747 = vmatpush.msra.mxu0 0.0
      %5748 = vmatpush.msra.mxu0 0.0
      %5749 = vmatpush.msra.mxu0 %v5722
      %5750 = vmatpush.msra.mxu0 %v5721
      %5751 = vmatmul.f32.gmra.mxu0 %v5724
      %v5752 = vpop.f32.mrf.mxu0
      %v5753 = vadd.f32 0.0, %v5752
      %5754 = vmatmul.f32.gmra.mxu0 %v5727
      %v5755 = vpop.f32.mrf.mxu0
      %v5756 = vadd.f32 0.0, %v5755
      %5757 = vmatmul.f32.gmra.mxu0 %v5730
      %v5758 = vpop.f32.mrf.mxu0
      %v5759 = vadd.f32 0.0, %v5758
      %5760 = vmatmul.f32.gmra.mxu0 %v5733
      %v5761 = vpop.f32.mrf.mxu0
      %v5762 = vadd.f32 0.0, %v5761
      %5763 = vdwg.mxu0
      %v5764 = vadd.f32 %v5753, %v2220
      %v5765 = vadd.f32 %v5756, %v2221
      %v5767 = vsel %vm1641, %v5764, 0
      %v5770 = vsel %vm1641, %v5765, 0
      %v5773 = vsel %vm1641, %v5759, 0
      %v5776 = vsel %vm1641, %v5762, 0
      %5778 = vmatpush.msra.mxu0 0.0
      %5779 = vmatpush.msra.mxu0 0.0
      %5780 = vmatpush.msra.mxu0 0.0
      %5781 = vmatpush.msra.mxu0 0.0
      %5782 = vmatpush.msra.mxu0 0.0
      %5783 = vmatpush.msra.mxu0 0.0
      %5784 = vmatpush.msra.mxu0 0.0
      %5785 = vmatpush.msra.mxu0 0.0
      %5786 = vmatpush.msra.mxu0 %v1640
      %5787 = vmatpush.msra.mxu0 %v1639
      %5788 = vmatpush.msra.mxu0 %v1638
      %5789 = vmatpush.msra.mxu0 %v1637
      %5790 = vmatpush.msra.mxu0 %v1636
      %5791 = vmatpush.msra.mxu0 %v1635
      %5792 = vmatpush.msra.mxu0 %v1634
      %5793 = vmatpush.msra.mxu0 %v1633
      %5794 = vmatmul.f32.gmra.mxu0 %v5767
      %v5795 = vpop.f32.mrf.mxu0
      %v5796 = vadd.f32 0.0, %v5795
      %5797 = vmatmul.f32.gmra.mxu0 %v5770
      %v5798 = vpop.f32.mrf.mxu0
      %v5799 = vadd.f32 0.0, %v5798
      %5800 = vmatmul.f32.gmra.mxu0 %v5773
      %v5801 = vpop.f32.mrf.mxu0
      %v5802 = vadd.f32 0.0, %v5801
      %5803 = vmatmul.f32.gmra.mxu0 %v5776
      %v5804 = vpop.f32.mrf.mxu0
      %v5805 = vadd.f32 0.0, %v5804
      %5806 = vdwg.mxu0
      %5807 = vmatpush.msra.mxu0 0.0
      %5808 = vmatpush.msra.mxu0 0.0
      %5809 = vmatpush.msra.mxu0 0.0
      %5810 = vmatpush.msra.mxu0 0.0
      %5811 = vmatpush.msra.mxu0 0.0
      %5812 = vmatpush.msra.mxu0 0.0
      %5813 = vmatpush.msra.mxu0 0.0
      %5814 = vmatpush.msra.mxu0 0.0
      %5815 = vmatpush.msra.mxu0 %v1673
      %5816 = vmatpush.msra.mxu0 %v1672
      %5817 = vmatpush.msra.mxu0 %v1671
      %5818 = vmatpush.msra.mxu0 %v1670
      %5819 = vmatpush.msra.mxu0 %v1669
      %5820 = vmatpush.msra.mxu0 %v1668
      %5821 = vmatpush.msra.mxu0 %v1667
      %5822 = vmatpush.msra.mxu0 %v1666
      %5823 = vmatmul.f32.gmra.mxu0 %v5767
      %v5824 = vpop.f32.mrf.mxu0
      %v5825 = vadd.f32 0.0, %v5824
      %5826 = vmatmul.f32.gmra.mxu0 %v5770
      %v5827 = vpop.f32.mrf.mxu0
      %v5828 = vadd.f32 0.0, %v5827
      %5829 = vmatmul.f32.gmra.mxu0 %v5773
      %v5830 = vpop.f32.mrf.mxu0
      %v5831 = vadd.f32 0.0, %v5830
      %5832 = vmatmul.f32.gmra.mxu0 %v5776
      %v5833 = vpop.f32.mrf.mxu0
      %v5834 = vadd.f32 0.0, %v5833
      %5835 = vdwg.mxu0
      %5836 = vmatpush.msra.mxu0 0.0
      %5837 = vmatpush.msra.mxu0 0.0
      %5838 = vmatpush.msra.mxu0 0.0
      %5839 = vmatpush.msra.mxu0 0.0
      %5840 = vmatpush.msra.mxu0 0.0
      %5841 = vmatpush.msra.mxu0 0.0
      %5842 = vmatpush.msra.mxu0 0.0
      %5843 = vmatpush.msra.mxu0 0.0
      %5844 = vmatpush.msra.mxu0 %v1702
      %5845 = vmatpush.msra.mxu0 %v1701
      %5846 = vmatpush.msra.mxu0 %v1700
      %5847 = vmatpush.msra.mxu0 %v1699
      %5848 = vmatpush.msra.mxu0 %v1698
      %5849 = vmatpush.msra.mxu0 %v1697
      %5850 = vmatpush.msra.mxu0 %v1696
      %5851 = vmatpush.msra.mxu0 %v1695
      %5852 = vmatmul.f32.gmra.mxu0 %v5767
      %v5853 = vpop.f32.mrf.mxu0
      %v5854 = vadd.f32 0.0, %v5853
      %5855 = vmatmul.f32.gmra.mxu0 %v5770
      %v5856 = vpop.f32.mrf.mxu0
      %v5857 = vadd.f32 0.0, %v5856
      %5858 = vmatmul.f32.gmra.mxu0 %v5773
      %v5859 = vpop.f32.mrf.mxu0
      %v5860 = vadd.f32 0.0, %v5859
      %5861 = vmatmul.f32.gmra.mxu0 %v5776
      %v5862 = vpop.f32.mrf.mxu0
      %v5863 = vadd.f32 0.0, %v5862
      %5864 = vdwg.mxu0
      %5865 = vmatpush.msra.mxu0 0.0
      %5866 = vmatpush.msra.mxu0 0.0
      %5867 = vmatpush.msra.mxu0 0.0
      %5868 = vmatpush.msra.mxu0 0.0
      %5869 = vmatpush.msra.mxu0 0.0
      %5870 = vmatpush.msra.mxu0 0.0
      %5871 = vmatpush.msra.mxu0 0.0
      %5872 = vmatpush.msra.mxu0 0.0
      %5873 = vmatpush.msra.mxu0 %v1731
      %5874 = vmatpush.msra.mxu0 %v1730
      %5875 = vmatpush.msra.mxu0 %v1729
      %5876 = vmatpush.msra.mxu0 %v1728
      %5877 = vmatpush.msra.mxu0 %v1727
      %5878 = vmatpush.msra.mxu0 %v1726
      %5879 = vmatpush.msra.mxu0 %v1725
      %5880 = vmatpush.msra.mxu0 %v1724
      %5881 = vmatmul.f32.gmra.mxu0 %v5767
      %v5882 = vpop.f32.mrf.mxu0
      %v5883 = vadd.f32 0.0, %v5882
      %5884 = vmatmul.f32.gmra.mxu0 %v5770
      %v5885 = vpop.f32.mrf.mxu0
      %v5886 = vadd.f32 0.0, %v5885
      %5887 = vmatmul.f32.gmra.mxu0 %v5773
      %v5888 = vpop.f32.mrf.mxu0
      %v5889 = vadd.f32 0.0, %v5888
      %5890 = vmatmul.f32.gmra.mxu0 %v5776
      %v5891 = vpop.f32.mrf.mxu0
      %v5892 = vadd.f32 0.0, %v5891
      %5893 = vdwg.mxu0
      %5894 = vmatpush.msra.mxu0 0.0
      %5895 = vmatpush.msra.mxu0 0.0
      %5896 = vmatpush.msra.mxu0 0.0
      %5897 = vmatpush.msra.mxu0 0.0
      %5898 = vmatpush.msra.mxu0 0.0
      %5899 = vmatpush.msra.mxu0 0.0
      %5900 = vmatpush.msra.mxu0 0.0
      %5901 = vmatpush.msra.mxu0 0.0
      %5902 = vmatpush.msra.mxu0 %v1760
      %5903 = vmatpush.msra.mxu0 %v1759
      %5904 = vmatpush.msra.mxu0 %v1758
      %5905 = vmatpush.msra.mxu0 %v1757
      %5906 = vmatpush.msra.mxu0 %v1756
      %5907 = vmatpush.msra.mxu0 %v1755
      %5908 = vmatpush.msra.mxu0 %v1754
      %5909 = vmatpush.msra.mxu0 %v1753
      %5910 = vmatmul.f32.gmra.mxu0 %v5767
      %v5911 = vpop.f32.mrf.mxu0
      %v5912 = vadd.f32 0.0, %v5911
      %5913 = vmatmul.f32.gmra.mxu0 %v5770
      %v5914 = vpop.f32.mrf.mxu0
      %v5915 = vadd.f32 0.0, %v5914
      %5916 = vmatmul.f32.gmra.mxu0 %v5773
      %v5917 = vpop.f32.mrf.mxu0
      %v5918 = vadd.f32 0.0, %v5917
      %5919 = vmatmul.f32.gmra.mxu0 %v5776
      %v5920 = vpop.f32.mrf.mxu0
      %v5921 = vadd.f32 0.0, %v5920
      %5922 = vdwg.mxu0
      %5923 = vmatpush.msra.mxu0 0.0
      %5924 = vmatpush.msra.mxu0 0.0
      %5925 = vmatpush.msra.mxu0 0.0
      %5926 = vmatpush.msra.mxu0 0.0
      %5927 = vmatpush.msra.mxu0 0.0
      %5928 = vmatpush.msra.mxu0 0.0
      %5929 = vmatpush.msra.mxu0 0.0
      %5930 = vmatpush.msra.mxu0 0.0
      %5931 = vmatpush.msra.mxu0 %v1789
      %5932 = vmatpush.msra.mxu0 %v1788
      %5933 = vmatpush.msra.mxu0 %v1787
      %5934 = vmatpush.msra.mxu0 %v1786
      %5935 = vmatpush.msra.mxu0 %v1785
      %5936 = vmatpush.msra.mxu0 %v1784
      %5937 = vmatpush.msra.mxu0 %v1783
      %5938 = vmatpush.msra.mxu0 %v1782
      %5939 = vmatmul.f32.gmra.mxu0 %v5767
      %v5940 = vpop.f32.mrf.mxu0
      %v5941 = vadd.f32 0.0, %v5940
      %5942 = vmatmul.f32.gmra.mxu0 %v5770
      %v5943 = vpop.f32.mrf.mxu0
      %v5944 = vadd.f32 0.0, %v5943
      %5945 = vmatmul.f32.gmra.mxu0 %v5773
      %v5946 = vpop.f32.mrf.mxu0
      %v5947 = vadd.f32 0.0, %v5946
      %5948 = vmatmul.f32.gmra.mxu0 %v5776
      %v5949 = vpop.f32.mrf.mxu0
      %v5950 = vadd.f32 0.0, %v5949
      %5951 = vdwg.mxu0
      %5952 = vmatpush.msra.mxu0 0.0
      %5953 = vmatpush.msra.mxu0 0.0
      %5954 = vmatpush.msra.mxu0 0.0
      %5955 = vmatpush.msra.mxu0 0.0
      %5956 = vmatpush.msra.mxu0 0.0
      %5957 = vmatpush.msra.mxu0 0.0
      %5958 = vmatpush.msra.mxu0 0.0
      %5959 = vmatpush.msra.mxu0 0.0
      %5960 = vmatpush.msra.mxu0 %v1818
      %5961 = vmatpush.msra.mxu0 %v1817
      %5962 = vmatpush.msra.mxu0 %v1816
      %5963 = vmatpush.msra.mxu0 %v1815
      %5964 = vmatpush.msra.mxu0 %v1814
      %5965 = vmatpush.msra.mxu0 %v1813
      %5966 = vmatpush.msra.mxu0 %v1812
      %5967 = vmatpush.msra.mxu0 %v1811
      %5968 = vmatmul.f32.gmra.mxu0 %v5767
      %v5969 = vpop.f32.mrf.mxu0
      %v5970 = vadd.f32 0.0, %v5969
      %5971 = vmatmul.f32.gmra.mxu0 %v5770
      %v5972 = vpop.f32.mrf.mxu0
      %v5973 = vadd.f32 0.0, %v5972
      %5974 = vmatmul.f32.gmra.mxu0 %v5773
      %v5975 = vpop.f32.mrf.mxu0
      %v5976 = vadd.f32 0.0, %v5975
      %5977 = vmatmul.f32.gmra.mxu0 %v5776
      %v5978 = vpop.f32.mrf.mxu0
      %v5979 = vadd.f32 0.0, %v5978
      %5980 = vdwg.mxu0
      %5981 = vmatpush.msra.mxu0 0.0
      %5982 = vmatpush.msra.mxu0 0.0
      %5983 = vmatpush.msra.mxu0 0.0
      %5984 = vmatpush.msra.mxu0 0.0
      %5985 = vmatpush.msra.mxu0 0.0
      %5986 = vmatpush.msra.mxu0 0.0
      %5987 = vmatpush.msra.mxu0 0.0
      %5988 = vmatpush.msra.mxu0 0.0
      %5989 = vmatpush.msra.mxu0 %v1847
      %5990 = vmatpush.msra.mxu0 %v1846
      %5991 = vmatpush.msra.mxu0 %v1845
      %5992 = vmatpush.msra.mxu0 %v1844
      %5993 = vmatpush.msra.mxu0 %v1843
      %5994 = vmatpush.msra.mxu0 %v1842
      %5995 = vmatpush.msra.mxu0 %v1841
      %5996 = vmatpush.msra.mxu0 %v1840
      %5997 = vmatmul.f32.gmra.mxu0 %v5767
      %v5998 = vpop.f32.mrf.mxu0
      %v5999 = vadd.f32 0.0, %v5998
      %6000 = vmatmul.f32.gmra.mxu0 %v5770
      %v6001 = vpop.f32.mrf.mxu0
      %v6002 = vadd.f32 0.0, %v6001
      %6003 = vmatmul.f32.gmra.mxu0 %v5773
      %v6004 = vpop.f32.mrf.mxu0
      %v6005 = vadd.f32 0.0, %v6004
      %6006 = vmatmul.f32.gmra.mxu0 %v5776
      %v6007 = vpop.f32.mrf.mxu0
      %v6008 = vadd.f32 0.0, %v6007
      %6009 = vdwg.mxu0
      %6010 = vmatpush.msra.mxu0 0.0
      %6011 = vmatpush.msra.mxu0 0.0
      %6012 = vmatpush.msra.mxu0 0.0
      %6013 = vmatpush.msra.mxu0 0.0
      %6014 = vmatpush.msra.mxu0 0.0
      %6015 = vmatpush.msra.mxu0 0.0
      %6016 = vmatpush.msra.mxu0 0.0
      %6017 = vmatpush.msra.mxu0 0.0
      %6018 = vmatpush.msra.mxu0 %v1876
      %6019 = vmatpush.msra.mxu0 %v1875
      %6020 = vmatpush.msra.mxu0 %v1874
      %6021 = vmatpush.msra.mxu0 %v1873
      %6022 = vmatpush.msra.mxu0 %v1872
      %6023 = vmatpush.msra.mxu0 %v1871
      %6024 = vmatpush.msra.mxu0 %v1870
      %6025 = vmatpush.msra.mxu0 %v1869
      %6026 = vmatmul.f32.gmra.mxu0 %v5767
      %v6027 = vpop.f32.mrf.mxu0
      %v6028 = vadd.f32 0.0, %v6027
      %6029 = vmatmul.f32.gmra.mxu0 %v5770
      %v6030 = vpop.f32.mrf.mxu0
      %v6031 = vadd.f32 0.0, %v6030
      %6032 = vmatmul.f32.gmra.mxu0 %v5773
      %v6033 = vpop.f32.mrf.mxu0
      %v6034 = vadd.f32 0.0, %v6033
      %6035 = vmatmul.f32.gmra.mxu0 %v5776
      %v6036 = vpop.f32.mrf.mxu0
      %v6037 = vadd.f32 0.0, %v6036
      %6038 = vdwg.mxu0
      %v6039 = vpack.c.bf16 %v5799, %v5796
      %v6040 = vpack.c.bf16 %v5805, %v5802
      %v6041 = vpack.c.bf16 %v5828, %v5825
      %v6042 = vpack.c.bf16 %v5834, %v5831
      %v6043 = vpack.c.bf16 %v5857, %v5854
      %v6044 = vpack.c.bf16 %v5863, %v5860
      %v6045 = vpack.c.bf16 %v5886, %v5883
      %v6046 = vpack.c.bf16 %v5892, %v5889
      %v6047 = vpack.c.bf16 %v5915, %v5912
      %v6048 = vpack.c.bf16 %v5921, %v5918
      %v6049 = vpack.c.bf16 %v5944, %v5941
      %v6050 = vpack.c.bf16 %v5950, %v5947
      %v6051 = vpack.c.bf16 %v5973, %v5970
      %v6052 = vpack.c.bf16 %v5979, %v5976
      %v6053 = vpack.c.bf16 %v6002, %v5999
      %v6054 = vpack.c.bf16 %v6008, %v6005
      %v6055 = vpack.c.bf16 %v6031, %v6028
      %v6056 = vpack.c.bf16 %v6037, %v6034
      %v6057 = vld [vmem:[%s43] sm:$0xff]
      %v6058 = vld [vmem:[%s43 + $0x8] sm:$0xf]
      %v6059 = vld [vmem:[%s43 + $0xc] sm:$0xff]
      %v6060 = vld [vmem:[%s43 + $0x14] sm:$0xf]
      %v6061 = vld [vmem:[%s45] sm:$0xff]
      %v6062 = vld [vmem:[%s45 + $0x8] sm:$0xff]
      %6064 = vset.pattern.permute.xlu0 0
      %6065 = vperm.xlu0 %6064, %v6061
      %v6066 = vpop.permute.xlu0 %6065
      %6069 = vset.pattern.permute.xlu0 0
      %6070 = vperm.xlu0 %6069, %v6062
      %v6071 = vpop.permute.xlu0 %6070
      %v6077 = vunpack.c.l.b16 %v6057
      %v6078 = vunpack.c.h.b16 %v6057
      %v6079 = vunpack.c.l.b16 %v6058
      %v6080 = vunpack.c.l.b16 %v6059
      %v6081 = vunpack.c.h.b16 %v6059
      %v6082 = vunpack.c.l.b16 %v6060
      %v6083 = vpack.c.b16 %v6080, %v6077
      %v6084 = vpack.c.b16 %v6081, %v6078
      %v6085 = vpack.c.b16 %v6082, %v6079
      %v6089 = vsel %vm3056, %v6085, 0
      %6091 = vmatpush.bf16.msra.mxu0 %v6046
      %6092 = vmatpush.bf16.msra.mxu0 %v6045
      %6093 = vmatpush.bf16.msra.mxu0 %v6044
      %6094 = vmatpush.bf16.msra.mxu0 %v6043
      %6095 = vmatpush.bf16.msra.mxu0 %v6042
      %6096 = vmatpush.bf16.msra.mxu0 %v6041
      %6097 = vmatpush.bf16.msra.mxu0 %v6040
      %6098 = vmatpush.bf16.msra.mxu0 %v6039
      %6099 = vmatmul.bf16.gmra.mxu0 %v6083
      %v6100 = vpop.f32.mrf.mxu0
      %v6101 = vadd.f32 %v6066, %v6100
      %v6102 = vpop.f32.mrf.mxu0
      %v6103 = vadd.f32 %v6071, %v6102
      %6104 = vdwg.mxu0
      %6105 = vmatpush.bf16.msra.mxu0 %v6054
      %6106 = vmatpush.bf16.msra.mxu0 %v6053
      %6107 = vmatpush.bf16.msra.mxu0 %v6052
      %6108 = vmatpush.bf16.msra.mxu0 %v6051
      %6109 = vmatpush.bf16.msra.mxu0 %v6050
      %6110 = vmatpush.bf16.msra.mxu0 %v6049
      %6111 = vmatpush.bf16.msra.mxu0 %v6048
      %6112 = vmatpush.bf16.msra.mxu0 %v6047
      %6113 = vmatmul.bf16.gmra.mxu0 %v6084
      %v6114 = vpop.f32.mrf.mxu0
      %v6115 = vadd.f32 %v6101, %v6114
      %v6116 = vpop.f32.mrf.mxu0
      %v6117 = vadd.f32 %v6103, %v6116
      %6118 = vdwg.mxu0
      %6119 = vmatpush.bf16.msra.mxu0 0
      %6120 = vmatpush.bf16.msra.mxu0 0
      %6121 = vmatpush.bf16.msra.mxu0 0
      %6122 = vmatpush.bf16.msra.mxu0 0
      %6123 = vmatpush.bf16.msra.mxu0 0
      %6124 = vmatpush.bf16.msra.mxu0 0
      %6125 = vmatpush.bf16.msra.mxu0 %v6056
      %6126 = vmatpush.bf16.msra.mxu0 %v6055
      %6127 = vmatmul.bf16.gmra.mxu0 %v6089
      %v6128 = vpop.f32.mrf.mxu0
      %v6129 = vadd.f32 %v6115, %v6128
      %v6130 = vpop.f32.mrf.mxu0
      %v6131 = vadd.f32 %v6117, %v6130
      %6132 = vdwg.mxu0
      %v6133 = vmax.f32 %v6129, 0.0
      %v6134 = vmax.f32 %v6131, 0.0
      %v6136 = vsel %vm1641, %v6133, 0
      %v6139 = vsel %vm1641, %v6134, 0
      %6141 = vmatpush.msra.mxu0 0.0
      %6142 = vmatpush.msra.mxu0 0.0
      %6143 = vmatpush.msra.mxu0 0.0
      %6144 = vmatpush.msra.mxu0 0.0
      %6145 = vmatpush.msra.mxu0 0.0
      %6146 = vmatpush.msra.mxu0 0.0
      %6147 = vmatpush.msra.mxu0 0.0
      %6148 = vmatpush.msra.mxu0 0.0
      %6149 = vmatpush.msra.mxu0 %v1640
      %6150 = vmatpush.msra.mxu0 %v1639
      %6151 = vmatpush.msra.mxu0 %v1638
      %6152 = vmatpush.msra.mxu0 %v1637
      %6153 = vmatpush.msra.mxu0 %v1636
      %6154 = vmatpush.msra.mxu0 %v1635
      %6155 = vmatpush.msra.mxu0 %v1634
      %6156 = vmatpush.msra.mxu0 %v1633
      %6157 = vmatmul.f32.gmra.mxu0 %v6136
      %v6158 = vpop.f32.mrf.mxu0
      %v6159 = vadd.f32 0.0, %v6158
      %6160 = vmatmul.f32.gmra.mxu0 %v6139
      %v6161 = vpop.f32.mrf.mxu0
      %v6162 = vadd.f32 0.0, %v6161
      %6163 = vdwg.mxu0
      %6164 = vmatpush.msra.mxu0 0.0
      %6165 = vmatpush.msra.mxu0 0.0
      %6166 = vmatpush.msra.mxu0 0.0
      %6167 = vmatpush.msra.mxu0 0.0
      %6168 = vmatpush.msra.mxu0 0.0
      %6169 = vmatpush.msra.mxu0 0.0
      %6170 = vmatpush.msra.mxu0 0.0
      %6171 = vmatpush.msra.mxu0 0.0
      %6172 = vmatpush.msra.mxu0 %v1673
      %6173 = vmatpush.msra.mxu0 %v1672
      %6174 = vmatpush.msra.mxu0 %v1671
      %6175 = vmatpush.msra.mxu0 %v1670
      %6176 = vmatpush.msra.mxu0 %v1669
      %6177 = vmatpush.msra.mxu0 %v1668
      %6178 = vmatpush.msra.mxu0 %v1667
      %6179 = vmatpush.msra.mxu0 %v1666
      %6180 = vmatmul.f32.gmra.mxu0 %v6136
      %v6181 = vpop.f32.mrf.mxu0
      %v6182 = vadd.f32 0.0, %v6181
      %6183 = vmatmul.f32.gmra.mxu0 %v6139
      %v6184 = vpop.f32.mrf.mxu0
      %v6185 = vadd.f32 0.0, %v6184
      %6186 = vdwg.mxu0
      %6187 = vmatpush.msra.mxu0 0.0
      %6188 = vmatpush.msra.mxu0 0.0
      %6189 = vmatpush.msra.mxu0 0.0
      %6190 = vmatpush.msra.mxu0 0.0
      %6191 = vmatpush.msra.mxu0 0.0
      %6192 = vmatpush.msra.mxu0 0.0
      %6193 = vmatpush.msra.mxu0 0.0
      %6194 = vmatpush.msra.mxu0 0.0
      %6195 = vmatpush.msra.mxu0 %v1702
      %6196 = vmatpush.msra.mxu0 %v1701
      %6197 = vmatpush.msra.mxu0 %v1700
      %6198 = vmatpush.msra.mxu0 %v1699
      %6199 = vmatpush.msra.mxu0 %v1698
      %6200 = vmatpush.msra.mxu0 %v1697
      %6201 = vmatpush.msra.mxu0 %v1696
      %6202 = vmatpush.msra.mxu0 %v1695
      %6203 = vmatmul.f32.gmra.mxu0 %v6136
      %v6204 = vpop.f32.mrf.mxu0
      %v6205 = vadd.f32 0.0, %v6204
      %6206 = vmatmul.f32.gmra.mxu0 %v6139
      %v6207 = vpop.f32.mrf.mxu0
      %v6208 = vadd.f32 0.0, %v6207
      %6209 = vdwg.mxu0
      %6210 = vmatpush.msra.mxu0 0.0
      %6211 = vmatpush.msra.mxu0 0.0
      %6212 = vmatpush.msra.mxu0 0.0
      %6213 = vmatpush.msra.mxu0 0.0
      %6214 = vmatpush.msra.mxu0 0.0
      %6215 = vmatpush.msra.mxu0 0.0
      %6216 = vmatpush.msra.mxu0 0.0
      %6217 = vmatpush.msra.mxu0 0.0
      %6218 = vmatpush.msra.mxu0 %v1731
      %6219 = vmatpush.msra.mxu0 %v1730
      %6220 = vmatpush.msra.mxu0 %v1729
      %6221 = vmatpush.msra.mxu0 %v1728
      %6222 = vmatpush.msra.mxu0 %v1727
      %6223 = vmatpush.msra.mxu0 %v1726
      %6224 = vmatpush.msra.mxu0 %v1725
      %6225 = vmatpush.msra.mxu0 %v1724
      %6226 = vmatmul.f32.gmra.mxu0 %v6136
      %v6227 = vpop.f32.mrf.mxu0
      %v6228 = vadd.f32 0.0, %v6227
      %6229 = vmatmul.f32.gmra.mxu0 %v6139
      %v6230 = vpop.f32.mrf.mxu0
      %v6231 = vadd.f32 0.0, %v6230
      %6232 = vdwg.mxu0
      %6233 = vmatpush.msra.mxu0 0.0
      %6234 = vmatpush.msra.mxu0 0.0
      %6235 = vmatpush.msra.mxu0 0.0
      %6236 = vmatpush.msra.mxu0 0.0
      %6237 = vmatpush.msra.mxu0 0.0
      %6238 = vmatpush.msra.mxu0 0.0
      %6239 = vmatpush.msra.mxu0 0.0
      %6240 = vmatpush.msra.mxu0 0.0
      %6241 = vmatpush.msra.mxu0 %v1760
      %6242 = vmatpush.msra.mxu0 %v1759
      %6243 = vmatpush.msra.mxu0 %v1758
      %6244 = vmatpush.msra.mxu0 %v1757
      %6245 = vmatpush.msra.mxu0 %v1756
      %6246 = vmatpush.msra.mxu0 %v1755
      %6247 = vmatpush.msra.mxu0 %v1754
      %6248 = vmatpush.msra.mxu0 %v1753
      %6249 = vmatmul.f32.gmra.mxu0 %v6136
      %v6250 = vpop.f32.mrf.mxu0
      %v6251 = vadd.f32 0.0, %v6250
      %6252 = vmatmul.f32.gmra.mxu0 %v6139
      %v6253 = vpop.f32.mrf.mxu0
      %v6254 = vadd.f32 0.0, %v6253
      %6255 = vdwg.mxu0
      %6256 = vmatpush.msra.mxu0 0.0
      %6257 = vmatpush.msra.mxu0 0.0
      %6258 = vmatpush.msra.mxu0 0.0
      %6259 = vmatpush.msra.mxu0 0.0
      %6260 = vmatpush.msra.mxu0 0.0
      %6261 = vmatpush.msra.mxu0 0.0
      %6262 = vmatpush.msra.mxu0 0.0
      %6263 = vmatpush.msra.mxu0 0.0
      %6264 = vmatpush.msra.mxu0 %v1789
      %6265 = vmatpush.msra.mxu0 %v1788
      %6266 = vmatpush.msra.mxu0 %v1787
      %6267 = vmatpush.msra.mxu0 %v1786
      %6268 = vmatpush.msra.mxu0 %v1785
      %6269 = vmatpush.msra.mxu0 %v1784
      %6270 = vmatpush.msra.mxu0 %v1783
      %6271 = vmatpush.msra.mxu0 %v1782
      %6272 = vmatmul.f32.gmra.mxu0 %v6136
      %v6273 = vpop.f32.mrf.mxu0
      %v6274 = vadd.f32 0.0, %v6273
      %6275 = vmatmul.f32.gmra.mxu0 %v6139
      %v6276 = vpop.f32.mrf.mxu0
      %v6277 = vadd.f32 0.0, %v6276
      %6278 = vdwg.mxu0
      %6279 = vmatpush.msra.mxu0 0.0
      %6280 = vmatpush.msra.mxu0 0.0
      %6281 = vmatpush.msra.mxu0 0.0
      %6282 = vmatpush.msra.mxu0 0.0
      %6283 = vmatpush.msra.mxu0 0.0
      %6284 = vmatpush.msra.mxu0 0.0
      %6285 = vmatpush.msra.mxu0 0.0
      %6286 = vmatpush.msra.mxu0 0.0
      %6287 = vmatpush.msra.mxu0 %v1818
      %6288 = vmatpush.msra.mxu0 %v1817
      %6289 = vmatpush.msra.mxu0 %v1816
      %6290 = vmatpush.msra.mxu0 %v1815
      %6291 = vmatpush.msra.mxu0 %v1814
      %6292 = vmatpush.msra.mxu0 %v1813
      %6293 = vmatpush.msra.mxu0 %v1812
      %6294 = vmatpush.msra.mxu0 %v1811
      %6295 = vmatmul.f32.gmra.mxu0 %v6136
      %v6296 = vpop.f32.mrf.mxu0
      %v6297 = vadd.f32 0.0, %v6296
      %6298 = vmatmul.f32.gmra.mxu0 %v6139
      %v6299 = vpop.f32.mrf.mxu0
      %v6300 = vadd.f32 0.0, %v6299
      %6301 = vdwg.mxu0
      %6302 = vmatpush.msra.mxu0 0.0
      %6303 = vmatpush.msra.mxu0 0.0
      %6304 = vmatpush.msra.mxu0 0.0
      %6305 = vmatpush.msra.mxu0 0.0
      %6306 = vmatpush.msra.mxu0 0.0
      %6307 = vmatpush.msra.mxu0 0.0
      %6308 = vmatpush.msra.mxu0 0.0
      %6309 = vmatpush.msra.mxu0 0.0
      %6310 = vmatpush.msra.mxu0 %v1847
      %6311 = vmatpush.msra.mxu0 %v1846
      %6312 = vmatpush.msra.mxu0 %v1845
      %6313 = vmatpush.msra.mxu0 %v1844
      %6314 = vmatpush.msra.mxu0 %v1843
      %6315 = vmatpush.msra.mxu0 %v1842
      %6316 = vmatpush.msra.mxu0 %v1841
      %6317 = vmatpush.msra.mxu0 %v1840
      %6318 = vmatmul.f32.gmra.mxu0 %v6136
      %v6319 = vpop.f32.mrf.mxu0
      %v6320 = vadd.f32 0.0, %v6319
      %6321 = vmatmul.f32.gmra.mxu0 %v6139
      %v6322 = vpop.f32.mrf.mxu0
      %v6323 = vadd.f32 0.0, %v6322
      %6324 = vdwg.mxu0
      %6325 = vmatpush.msra.mxu0 0.0
      %6326 = vmatpush.msra.mxu0 0.0
      %6327 = vmatpush.msra.mxu0 0.0
      %6328 = vmatpush.msra.mxu0 0.0
      %6329 = vmatpush.msra.mxu0 0.0
      %6330 = vmatpush.msra.mxu0 0.0
      %6331 = vmatpush.msra.mxu0 0.0
      %6332 = vmatpush.msra.mxu0 0.0
      %6333 = vmatpush.msra.mxu0 %v1876
      %6334 = vmatpush.msra.mxu0 %v1875
      %6335 = vmatpush.msra.mxu0 %v1874
      %6336 = vmatpush.msra.mxu0 %v1873
      %6337 = vmatpush.msra.mxu0 %v1872
      %6338 = vmatpush.msra.mxu0 %v1871
      %6339 = vmatpush.msra.mxu0 %v1870
      %6340 = vmatpush.msra.mxu0 %v1869
      %6341 = vmatmul.f32.gmra.mxu0 %v6136
      %v6342 = vpop.f32.mrf.mxu0
      %v6343 = vadd.f32 0.0, %v6342
      %6344 = vmatmul.f32.gmra.mxu0 %v6139
      %v6345 = vpop.f32.mrf.mxu0
      %v6346 = vadd.f32 0.0, %v6345
      %6347 = vdwg.mxu0
      %v6348 = vpack.c.bf16 %v6162, %v6159
      %v6349 = vpack.c.bf16 %v6185, %v6182
      %v6350 = vpack.c.bf16 %v6208, %v6205
      %v6351 = vpack.c.bf16 %v6231, %v6228
      %v6352 = vpack.c.bf16 %v6254, %v6251
      %v6353 = vpack.c.bf16 %v6277, %v6274
      %v6354 = vpack.c.bf16 %v6300, %v6297
      %v6355 = vpack.c.bf16 %v6323, %v6320
      %v6356 = vpack.c.bf16 %v6346, %v6343
      %v6357 = vld [vmem:[%s47] sm:$0xff]
      %v6358 = vld [vmem:[%s47 + $0x8] sm:$0xff]
      %v6359 = vld [vmem:[%s49] sm:$0xff]
      %v6360 = vld [vmem:[%s49 + $0x8] sm:$0xff]
      %6362 = vset.pattern.permute.xlu0 0
      %6363 = vperm.xlu0 %6362, %v6359
      %v6364 = vpop.permute.xlu0 %6363
      %6367 = vset.pattern.permute.xlu0 0
      %6368 = vperm.xlu0 %6367, %v6360
      %v6369 = vpop.permute.xlu0 %6368
      %v6373 = vunpack.c.l.b16 %v6357
      %v6374 = vunpack.c.h.b16 %v6357
      %v6375 = vunpack.c.l.b16 %v6358
      %v6376 = vunpack.c.h.b16 %v6358
      %v6377 = vpack.c.b16 %v6375, %v6373
      %v6378 = vpack.c.b16 %v6376, %v6374
      %v6381 = vsel %vm2188, %v6378, 0
      %6383 = vmatpush.bf16.msra.mxu0 %v6355
      %6384 = vmatpush.bf16.msra.mxu0 %v6354
      %6385 = vmatpush.bf16.msra.mxu0 %v6353
      %6386 = vmatpush.bf16.msra.mxu0 %v6352
      %6387 = vmatpush.bf16.msra.mxu0 %v6351
      %6388 = vmatpush.bf16.msra.mxu0 %v6350
      %6389 = vmatpush.bf16.msra.mxu0 %v6349
      %6390 = vmatpush.bf16.msra.mxu0 %v6348
      %6391 = vmatmul.bf16.gmra.mxu0 %v6377
      %v6392 = vpop.f32.mrf.mxu0
      %v6393 = vadd.f32 %v6364, %v6392
      %v6394 = vpop.f32.mrf.mxu0
      %v6395 = vadd.f32 %v6369, %v6394
      %6396 = vdwg.mxu0
      %6397 = vmatpush.bf16.msra.mxu0 0
      %6398 = vmatpush.bf16.msra.mxu0 0
      %6399 = vmatpush.bf16.msra.mxu0 0
      %6400 = vmatpush.bf16.msra.mxu0 0
      %6401 = vmatpush.bf16.msra.mxu0 0
      %6402 = vmatpush.bf16.msra.mxu0 0
      %6403 = vmatpush.bf16.msra.mxu0 0
      %6404 = vmatpush.bf16.msra.mxu0 %v6356
      %6405 = vmatmul.bf16.gmra.mxu0 %v6381
      %v6406 = vpop.f32.mrf.mxu0
      %v6407 = vadd.f32 %v6393, %v6406
      %v6408 = vpop.f32.mrf.mxu0
      %v6409 = vadd.f32 %v6395, %v6408
      %6410 = vdwg.mxu0
      %v6411 = vmax.f32 %v6407, 0.0
      %v6412 = vmax.f32 %v6409, 0.0
      %v6413 = vld [vmem:[%s81] sm:$0xff]
      %v6414 = vld [vmem:[%s81 + $0x8] sm:$0xff]
      %v6415 = vld [vmem:[%s81 + $0x10] sm:$0xff]
      %v6416 = vld [vmem:[%s81 + $0x18] sm:$0xff]
      %v6417 = vld [vmem:[%s81 + $0x20] sm:$0xff]
      %v6418 = vld [vmem:[%s81 + $0x28] sm:$0xff]
      %v6419 = vld [vmem:[%s81 + $0x30] sm:$0xff]
      %v6420 = vld [vmem:[%s81 + $0x38] sm:$0xff]
      %v6421 = vld [vmem:[%s81 + $0x40] sm:$0xff]
      %v6422 = vld [vmem:[%s81 + $0x48] sm:$0xff]
      %v6423 = vld [vmem:[%s81 + $0x50] sm:$0xff]
      %v6424 = vld [vmem:[%s81 + $0x58] sm:$0xff]
      %v6425 = vld [vmem:[%s81 + $0x60] sm:$0xff]
      %v6426 = vld [vmem:[%s81 + $0x68] sm:$0xff]
      %v6427 = vld [vmem:[%s81 + $0x70] sm:$0xff]
      %v6428 = vld [vmem:[%s81 + $0x78] sm:$0xff]
      %v6430 = vsel %vm1641, %v6411, 0
      %v6433 = vsel %vm1641, %v6412, 0
      %6435 = vmatpush.msra.mxu0 0.0
      %6436 = vmatpush.msra.mxu0 0.0
      %6437 = vmatpush.msra.mxu0 0.0
      %6438 = vmatpush.msra.mxu0 0.0
      %6439 = vmatpush.msra.mxu0 0.0
      %6440 = vmatpush.msra.mxu0 0.0
      %6441 = vmatpush.msra.mxu0 0.0
      %6442 = vmatpush.msra.mxu0 0.0
      %6443 = vmatpush.msra.mxu0 %v6427
      %6444 = vmatpush.msra.mxu0 %v6425
      %6445 = vmatpush.msra.mxu0 %v6423
      %6446 = vmatpush.msra.mxu0 %v6421
      %6447 = vmatpush.msra.mxu0 %v6419
      %6448 = vmatpush.msra.mxu0 %v6417
      %6449 = vmatpush.msra.mxu0 %v6415
      %6450 = vmatpush.msra.mxu0 %v6413
      %6451 = vmatmul.f32.gmra.mxu0 %v6430
      %v6452 = vpop.f32.mrf.mxu0
      %v6453 = vadd.f32 0.0, %v6452
      %6454 = vmatmul.f32.gmra.mxu0 %v6433
      %v6455 = vpop.f32.mrf.mxu0
      %v6456 = vadd.f32 0.0, %v6455
      %6457 = vdwg.mxu0
      %6458 = vmatpush.msra.mxu0 0.0
      %6459 = vmatpush.msra.mxu0 0.0
      %6460 = vmatpush.msra.mxu0 0.0
      %6461 = vmatpush.msra.mxu0 0.0
      %6462 = vmatpush.msra.mxu0 0.0
      %6463 = vmatpush.msra.mxu0 0.0
      %6464 = vmatpush.msra.mxu0 0.0
      %6465 = vmatpush.msra.mxu0 0.0
      %6466 = vmatpush.msra.mxu0 %v6428
      %6467 = vmatpush.msra.mxu0 %v6426
      %6468 = vmatpush.msra.mxu0 %v6424
      %6469 = vmatpush.msra.mxu0 %v6422
      %6470 = vmatpush.msra.mxu0 %v6420
      %6471 = vmatpush.msra.mxu0 %v6418
      %6472 = vmatpush.msra.mxu0 %v6416
      %6473 = vmatpush.msra.mxu0 %v6414
      %6474 = vmatmul.f32.gmra.mxu0 %v6430
      %v6475 = vpop.f32.mrf.mxu0
      %v6476 = vadd.f32 0.0, %v6475
      %6477 = vmatmul.f32.gmra.mxu0 %v6433
      %v6478 = vpop.f32.mrf.mxu0
      %v6479 = vadd.f32 0.0, %v6478
      %6480 = vdwg.mxu0
      %v6481 = vadd.f32 %v6453, %v1543
      %v6482 = vadd.f32 %v6476, %v1544
      %6483 = vrot.lane.b32.xlu0 %v6481, 17
      %v6484 = vpop.permute.xlu0 %6483
      %6485 = vrot.lane.b32.xlu0 %v6456, 17
      %v6486 = vpop.permute.xlu0 %6485
      %6487 = vrot.lane.b32.xlu0 %v6482, 17
      %v6488 = vpop.permute.xlu0 %6487
      %6489 = vrot.lane.b32.xlu0 %v6479, 17
      %v6490 = vpop.permute.xlu0 %6489
      %v6491 = vsel %vm1248, %v6484, %v6488
      %v6492 = vsel %vm1248, %v6486, %v6490
      %v6493 = vsel %vm1248, %v6488, %v6484
      %v6494 = vsel %vm1248, %v6490, %v6486
      %v6495 = vmul.f32 %v6493, %v1253
      %v6496 = vmul.f32 %v6491, %v1254
      %v6497 = vmul.f32 %v6494, %v1253
      %v6498 = vmul.f32 %v6492, %v1254
      %6499 = vrot.lane.b32.xlu0 %v6481, 16
      %v6500 = vpop.permute.xlu0 %6499
      %6501 = vrot.lane.b32.xlu0 %v6456, 16
      %v6502 = vpop.permute.xlu0 %6501
      %6503 = vrot.lane.b32.xlu0 %v6482, 16
      %v6504 = vpop.permute.xlu0 %6503
      %6505 = vrot.lane.b32.xlu0 %v6479, 16
      %v6506 = vpop.permute.xlu0 %6505
      %v6507 = vsel %vm1263, %v6500, %v6504
      %v6508 = vsel %vm1263, %v6502, %v6506
      %v6509 = vsel %vm1263, %v6504, %v6500
      %v6510 = vsel %vm1263, %v6506, %v6502
      %v6511 = vmul.f32 %v6509, %v1269
      %v6512 = vmul.f32 %v6507, %v1270
      %v6513 = vmul.f32 %v6510, %v1269
      %v6514 = vmul.f32 %v6508, %v1270
      %6515 = vrot.lane.b32.xlu0 %v6481, 15
      %v6516 = vpop.permute.xlu0 %6515
      %6517 = vrot.lane.b32.xlu0 %v6456, 15
      %v6518 = vpop.permute.xlu0 %6517
      %6519 = vrot.lane.b32.xlu0 %v6482, 15
      %v6520 = vpop.permute.xlu0 %6519
      %6521 = vrot.lane.b32.xlu0 %v6479, 15
      %v6522 = vpop.permute.xlu0 %6521
      %v6523 = vsel %vm1279, %v6516, %v6520
      %v6524 = vsel %vm1279, %v6518, %v6522
      %v6525 = vsel %vm1279, %v6520, %v6516
      %v6526 = vsel %vm1279, %v6522, %v6518
      %v6527 = vmul.f32 %v6525, %v1285
      %v6528 = vmul.f32 %v6523, %v1286
      %v6529 = vmul.f32 %v6526, %v1285
      %v6530 = vmul.f32 %v6524, %v1286
      %6531 = vrot.lane.b32.xlu0 %v6481, 1
      %v6532 = vpop.permute.xlu0 %6531
      %6533 = vrot.lane.b32.xlu0 %v6456, 1
      %v6534 = vpop.permute.xlu0 %6533
      %6535 = vrot.lane.b32.xlu0 %v6482, 1
      %v6536 = vpop.permute.xlu0 %6535
      %6537 = vrot.lane.b32.xlu0 %v6479, 1
      %v6538 = vpop.permute.xlu0 %6537
      %v6539 = vsel %vm1295, %v6532, %v6536
      %v6540 = vsel %vm1295, %v6534, %v6538
      %v6541 = vsel %vm1295, %v6536, %v6532
      %v6542 = vsel %vm1295, %v6538, %v6534
      %v6543 = vmul.f32 %v6541, %v1301
      %v6544 = vmul.f32 %v6539, %v1302
      %v6545 = vmul.f32 %v6542, %v1301
      %v6546 = vmul.f32 %v6540, %v1302
      %6547 = vrot.lane.b32.xlu0 %v6481, 127
      %v6548 = vpop.permute.xlu0 %6547
      %6549 = vrot.lane.b32.xlu0 %v6456, 127
      %v6550 = vpop.permute.xlu0 %6549
      %6551 = vrot.lane.b32.xlu0 %v6482, 127
      %v6552 = vpop.permute.xlu0 %6551
      %6553 = vrot.lane.b32.xlu0 %v6479, 127
      %v6554 = vpop.permute.xlu0 %6553
      %v6555 = vsel %vm1311, %v6548, %v6552
      %v6556 = vsel %vm1311, %v6550, %v6554
      %v6557 = vsel %vm1311, %v6552, %v6548
      %v6558 = vsel %vm1311, %v6554, %v6550
      %v6559 = vmul.f32 %v6555, %v1317
      %v6560 = vmul.f32 %v6557, %v1318
      %v6561 = vmul.f32 %v6556, %v1317
      %v6562 = vmul.f32 %v6558, %v1318
      %6563 = vrot.lane.b32.xlu0 %v6481, 113
      %v6564 = vpop.permute.xlu0 %6563
      %6565 = vrot.lane.b32.xlu0 %v6456, 113
      %v6566 = vpop.permute.xlu0 %6565
      %6567 = vrot.lane.b32.xlu0 %v6482, 113
      %v6568 = vpop.permute.xlu0 %6567
      %6569 = vrot.lane.b32.xlu0 %v6479, 113
      %v6570 = vpop.permute.xlu0 %6569
      %v6571 = vsel %vm1327, %v6564, %v6568
      %v6572 = vsel %vm1327, %v6566, %v6570
      %v6573 = vsel %vm1327, %v6568, %v6564
      %v6574 = vsel %vm1327, %v6570, %v6566
      %v6575 = vmul.f32 %v6571, %v1333
      %v6576 = vmul.f32 %v6573, %v1334
      %v6577 = vmul.f32 %v6572, %v1333
      %v6578 = vmul.f32 %v6574, %v1334
      %6579 = vrot.lane.b32.xlu0 %v6481, 112
      %v6580 = vpop.permute.xlu0 %6579
      %6581 = vrot.lane.b32.xlu0 %v6456, 112
      %v6582 = vpop.permute.xlu0 %6581
      %6583 = vrot.lane.b32.xlu0 %v6482, 112
      %v6584 = vpop.permute.xlu0 %6583
      %6585 = vrot.lane.b32.xlu0 %v6479, 112
      %v6586 = vpop.permute.xlu0 %6585
      %v6587 = vsel %vm1343, %v6580, %v6584
      %v6588 = vsel %vm1343, %v6582, %v6586
      %v6589 = vsel %vm1343, %v6584, %v6580
      %v6590 = vsel %vm1343, %v6586, %v6582
      %v6591 = vmul.f32 %v6587, %v1349
      %v6592 = vmul.f32 %v6589, %v1350
      %v6593 = vmul.f32 %v6588, %v1349
      %v6594 = vmul.f32 %v6590, %v1350
      %6595 = vrot.lane.b32.xlu0 %v6481, 111
      %v6596 = vpop.permute.xlu0 %6595
      %6597 = vrot.lane.b32.xlu0 %v6456, 111
      %v6598 = vpop.permute.xlu0 %6597
      %6599 = vrot.lane.b32.xlu0 %v6482, 111
      %v6600 = vpop.permute.xlu0 %6599
      %6601 = vrot.lane.b32.xlu0 %v6479, 111
      %v6602 = vpop.permute.xlu0 %6601
      %v6603 = vsel %vm1359, %v6596, %v6600
      %v6604 = vsel %vm1359, %v6598, %v6602
      %v6605 = vsel %vm1359, %v6600, %v6596
      %v6606 = vsel %vm1359, %v6602, %v6598
      %v6607 = vmul.f32 %v6603, %v1365
      %v6608 = vmul.f32 %v6605, %v1366
      %v6609 = vmul.f32 %v6604, %v1365
      %v6610 = vmul.f32 %v6606, %v1366
      %v6611 = vpack.c.bf16 %v6497, %v6495
      %v6612 = vpack.c.bf16 %v6498, %v6496
      %v6613 = vpack.c.bf16 %v6513, %v6511
      %v6614 = vpack.c.bf16 %v6514, %v6512
      %v6615 = vpack.c.bf16 %v6529, %v6527
      %v6616 = vpack.c.bf16 %v6530, %v6528
      %v6617 = vpack.c.bf16 %v6545, %v6543
      %v6618 = vpack.c.bf16 %v6546, %v6544
      %v6619 = vpack.c.bf16 %v6456, %v6481
      %v6620 = vpack.c.bf16 %v6479, %v6482
      %v6621 = vpack.c.bf16 %v6561, %v6559
      %v6622 = vpack.c.bf16 %v6562, %v6560
      %v6623 = vpack.c.bf16 %v6577, %v6575
      %v6624 = vpack.c.bf16 %v6578, %v6576
      %v6625 = vpack.c.bf16 %v6593, %v6591
      %v6626 = vpack.c.bf16 %v6594, %v6592
      %v6627 = vpack.c.bf16 %v6609, %v6607
      %v6628 = vpack.c.bf16 %v6610, %v6608
      %v6629 = vld [vmem:[%s51] sm:$0xff]
      %v6630 = vld [vmem:[%s53] sm:$0xff]
      %6632 = vset.pattern.permute.xlu0 0
      %6633 = vperm.xlu0 %6632, %v6630
      %v6634 = vpop.permute.xlu0 %6633
      %v6637 = vunpack.c.l.b16 %v6629
      %v6638 = vunpack.c.h.b16 %v6629
      %v6639 = vpack.c.b16 %v6637, %v6637
      %v6640 = vpack.c.b16 %v6638, %v6638
      %v6643 = vsel %vm2188, %v6640, 0
      %6645 = vmatpush.bf16.msra.mxu0 %v6625
      %6646 = vmatpush.bf16.msra.mxu0 %v6623
      %6647 = vmatpush.bf16.msra.mxu0 %v6621
      %6648 = vmatpush.bf16.msra.mxu0 %v6619
      %6649 = vmatpush.bf16.msra.mxu0 %v6617
      %6650 = vmatpush.bf16.msra.mxu0 %v6615
      %6651 = vmatpush.bf16.msra.mxu0 %v6613
      %6652 = vmatpush.bf16.msra.mxu0 %v6611
      %6653 = vmatmul.bf16.gmra.mxu0 %v6639
      %v6654 = vpop.f32.mrf.mxu0
      %v6655 = vadd.f32 %v6634, %v6654
      %v6656 = vpop.f32.mrf.mxu0
      %6657 = vdwg.mxu0
      %6658 = vmatpush.bf16.msra.mxu0 0
      %6659 = vmatpush.bf16.msra.mxu0 0
      %6660 = vmatpush.bf16.msra.mxu0 0
      %6661 = vmatpush.bf16.msra.mxu0 0
      %6662 = vmatpush.bf16.msra.mxu0 0
      %6663 = vmatpush.bf16.msra.mxu0 0
      %6664 = vmatpush.bf16.msra.mxu0 0
      %6665 = vmatpush.bf16.msra.mxu0 %v6627
      %6666 = vmatmul.bf16.gmra.mxu0 %v6643
      %v6667 = vpop.f32.mrf.mxu0
      %v6668 = vadd.f32 %v6655, %v6667
      %v6669 = vpop.f32.mrf.mxu0
      %6670 = vdwg.mxu0
      %6671 = vmatpush.bf16.msra.mxu0 %v6626
      %6672 = vmatpush.bf16.msra.mxu0 %v6624
      %6673 = vmatpush.bf16.msra.mxu0 %v6622
      %6674 = vmatpush.bf16.msra.mxu0 %v6620
      %6675 = vmatpush.bf16.msra.mxu0 %v6618
      %6676 = vmatpush.bf16.msra.mxu0 %v6616
      %6677 = vmatpush.bf16.msra.mxu0 %v6614
      %6678 = vmatpush.bf16.msra.mxu0 %v6612
      %6679 = vmatmul.bf16.gmra.mxu0 %v6639
      %v6680 = vpop.f32.mrf.mxu0
      %v6681 = vadd.f32 %v6634, %v6680
      %v6682 = vpop.f32.mrf.mxu0
      %6683 = vdwg.mxu0
      %6684 = vmatpush.bf16.msra.mxu0 0
      %6685 = vmatpush.bf16.msra.mxu0 0
      %6686 = vmatpush.bf16.msra.mxu0 0
      %6687 = vmatpush.bf16.msra.mxu0 0
      %6688 = vmatpush.bf16.msra.mxu0 0
      %6689 = vmatpush.bf16.msra.mxu0 0
      %6690 = vmatpush.bf16.msra.mxu0 0
      %6691 = vmatpush.bf16.msra.mxu0 %v6628
      %6692 = vmatmul.bf16.gmra.mxu0 %v6643
      %v6693 = vpop.f32.mrf.mxu0
      %v6694 = vadd.f32 %v6681, %v6693
      %v6695 = vpop.f32.mrf.mxu0
      %6696 = vdwg.mxu0
      %v6697 = vmax.f32 %v6668, 0.0
      %v6698 = vmax.f32 %v6694, 0.0
      %6699 = vrot.lane.b32.xlu0 %v6697, 17
      %v6700 = vpop.permute.xlu0 %6699
      %6701 = vrot.lane.b32.xlu0 %v6698, 17
      %v6702 = vpop.permute.xlu0 %6701
      %v6703 = vsel %vm1248, %v6700, %v6702
      %v6704 = vsel %vm1248, %v6702, %v6700
      %v6705 = vmul.f32 %v6704, %v1253
      %v6706 = vmul.f32 %v6703, %v1254
      %6707 = vrot.lane.b32.xlu0 %v6697, 16
      %v6708 = vpop.permute.xlu0 %6707
      %6709 = vrot.lane.b32.xlu0 %v6698, 16
      %v6710 = vpop.permute.xlu0 %6709
      %v6711 = vsel %vm1263, %v6708, %v6710
      %v6712 = vsel %vm1263, %v6710, %v6708
      %v6713 = vmul.f32 %v6712, %v1269
      %v6714 = vmul.f32 %v6711, %v1270
      %6715 = vrot.lane.b32.xlu0 %v6697, 15
      %v6716 = vpop.permute.xlu0 %6715
      %6717 = vrot.lane.b32.xlu0 %v6698, 15
      %v6718 = vpop.permute.xlu0 %6717
      %v6719 = vsel %vm1279, %v6716, %v6718
      %v6720 = vsel %vm1279, %v6718, %v6716
      %v6721 = vmul.f32 %v6720, %v1285
      %v6722 = vmul.f32 %v6719, %v1286
      %6723 = vrot.lane.b32.xlu0 %v6697, 1
      %v6724 = vpop.permute.xlu0 %6723
      %6725 = vrot.lane.b32.xlu0 %v6698, 1
      %v6726 = vpop.permute.xlu0 %6725
      %v6727 = vsel %vm1295, %v6724, %v6726
      %v6728 = vsel %vm1295, %v6726, %v6724
      %v6729 = vmul.f32 %v6728, %v1301
      %v6730 = vmul.f32 %v6727, %v1302
      %6731 = vrot.lane.b32.xlu0 %v6697, 127
      %v6732 = vpop.permute.xlu0 %6731
      %6733 = vrot.lane.b32.xlu0 %v6698, 127
      %v6734 = vpop.permute.xlu0 %6733
      %v6735 = vsel %vm1311, %v6732, %v6734
      %v6736 = vsel %vm1311, %v6734, %v6732
      %v6737 = vmul.f32 %v6735, %v1317
      %v6738 = vmul.f32 %v6736, %v1318
      %6739 = vrot.lane.b32.xlu0 %v6697, 113
      %v6740 = vpop.permute.xlu0 %6739
      %6741 = vrot.lane.b32.xlu0 %v6698, 113
      %v6742 = vpop.permute.xlu0 %6741
      %v6743 = vsel %vm1327, %v6740, %v6742
      %v6744 = vsel %vm1327, %v6742, %v6740
      %v6745 = vmul.f32 %v6743, %v1333
      %v6746 = vmul.f32 %v6744, %v1334
      %6747 = vrot.lane.b32.xlu0 %v6697, 112
      %v6748 = vpop.permute.xlu0 %6747
      %6749 = vrot.lane.b32.xlu0 %v6698, 112
      %v6750 = vpop.permute.xlu0 %6749
      %v6751 = vsel %vm1343, %v6748, %v6750
      %v6752 = vsel %vm1343, %v6750, %v6748
      %v6753 = vmul.f32 %v6751, %v1349
      %v6754 = vmul.f32 %v6752, %v1350
      %6755 = vrot.lane.b32.xlu0 %v6697, 111
      %v6756 = vpop.permute.xlu0 %6755
      %6757 = vrot.lane.b32.xlu0 %v6698, 111
      %v6758 = vpop.permute.xlu0 %6757
      %v6759 = vsel %vm1359, %v6756, %v6758
      %v6760 = vsel %vm1359, %v6758, %v6756
      %v6761 = vmul.f32 %v6759, %v1365
      %v6762 = vmul.f32 %v6760, %v1366
      %v6763 = vpack.c.bf16 %v6713, %v6705
      %v6764 = vpack.c.bf16 %v6714, %v6706
      %v6765 = vpack.c.bf16 %v6729, %v6721
      %v6766 = vpack.c.bf16 %v6730, %v6722
      %v6767 = vpack.c.bf16 %v6737, %v6697
      %v6768 = vpack.c.bf16 %v6738, %v6698
      %v6769 = vpack.c.bf16 %v6753, %v6745
      %v6770 = vpack.c.bf16 %v6754, %v6746
      %v6771 = vpack.c.bf16 %v6761, %v6761
      %v6772 = vpack.c.bf16 %v6762, %v6762
      %v6773 = vld [vmem:[%s55] sm:$0xf]
      %v6774 = vld [vmem:[%s57] sm:$0xff]
      %6776 = vset.pattern.permute.xlu0 0
      %6777 = vperm.xlu0 %6776, %v6774
      %v6778 = vpop.permute.xlu0 %6777
      %v6781 = vsel %vm1388, %v6773, 0
      %v6784 = vsel %vm1392, %v6771, 0
      %v6787 = vsel %vm1392, %v6772, 0
      %6789 = vmatpush.bf16.msra.mxu0 0
      %6790 = vmatpush.bf16.msra.mxu0 0
      %6791 = vmatpush.bf16.msra.mxu0 0
      %6792 = vmatpush.bf16.msra.mxu0 %v6784
      %6793 = vmatpush.bf16.msra.mxu0 %v6769
      %6794 = vmatpush.bf16.msra.mxu0 %v6767
      %6795 = vmatpush.bf16.msra.mxu0 %v6765
      %6796 = vmatpush.bf16.msra.mxu0 %v6763
      %6797 = vmatmul.bf16.gmra.mxu0 %v6781
      %v6798 = vpop.f32.mrf.mxu0
      %v6799 = vadd.f32 %v6778, %v6798
      %v6800 = vpop.f32.mrf.mxu0
      %6801 = vdwg.mxu0
      %6802 = vmatpush.bf16.msra.mxu0 0
      %6803 = vmatpush.bf16.msra.mxu0 0
      %6804 = vmatpush.bf16.msra.mxu0 0
      %6805 = vmatpush.bf16.msra.mxu0 %v6787
      %6806 = vmatpush.bf16.msra.mxu0 %v6770
      %6807 = vmatpush.bf16.msra.mxu0 %v6768
      %6808 = vmatpush.bf16.msra.mxu0 %v6766
      %6809 = vmatpush.bf16.msra.mxu0 %v6764
      %6810 = vmatmul.bf16.gmra.mxu0 %v6781
      %v6811 = vpop.f32.mrf.mxu0
      %v6812 = vadd.f32 %v6778, %v6811
      %v6813 = vpop.f32.mrf.mxu0
      %6814 = vdwg.mxu0
      %v6815 = vmax.f32 %v6799, 0.0
      %v6816 = vmax.f32 %v6812, 0.0
      %v6817 = vld [vmem:[%s59] sm:$0xff]
      %v6818 = vld [vmem:[#allocation2] sm:$0x1]
      %6820 = vset.pattern.permute.xlu0 0
      %6821 = vperm.xlu0 %6820, %v6817
      %v6822 = vpop.permute.xlu0 %6821
      %v6824 = vmul.f32 %v6822, %v6815
      %v6825 = vmul.f32 %v6822, %v6816
      %v6826 = vrot.slane %v6824, 4
      %v6827 = vadd.f32 %v6824, %v6826
      %v6828 = vrot.slane %v6827, 2
      %v6829 = vadd.f32 %v6827, %v6828
      %v6830 = vrot.slane %v6829, 1
      %v6831 = vadd.f32 %v6829, %v6830
      %v6832 = vrot.slane %v6825, 4
      %v6833 = vadd.f32 %v6825, %v6832
      %v6834 = vrot.slane %v6833, 2
      %v6835 = vadd.f32 %v6833, %v6834
      %v6836 = vrot.slane %v6835, 1
      %v6837 = vadd.f32 %v6835, %v6836
      %6839 = vset.pattern.permute.xlu0 0
      %6840 = vperm.xlu0 %6839, %v6818
      %v6841 = vpop.permute.xlu0 %6840
      %v6843 = vperm.slane %v6841, 0
      %v6844 = vadd.f32 %v6831, %v6843
      %v6845 = vadd.f32 %v6837, %v6843
      %v6846 = vtanh.pop %v6844
      %v6847 = vtanh.pop %v6845
      %v6850 = vrot.slane %v6847, 7
      %vm6851 = vcmask 1040384
      %v6852 = vsel %vm6851, %v6846, %v6850
      %v6854 = vlaneseq
      %vm6855 = vcmp.ge.s32.totalorder %v6854, 0
      %vm6856 = vcmp.lt.s32.totalorder %v6854, 256
      %vm6857 = vmand %vm6855, %vm6856
      %6858 = vst.msk [vmem:[%s1238] sm:$0x3] %vm6857, %v6852
      %p6859 = scmp.lt.s32.totalorder %s96, 1
      %s6860 = scalar_select %p6859, %s96, 1
      %s6861 = smul.addr %s6860, 2
      %s6862 = scalar_lea.vmem %s83, %s6861
      // Predicated region
      $region185: #{risk_pred_unet.1} parent=183 // pred_check
        %p6863 = pneg %p980
      $region186: #{risk_pred_unet.1} parent=183 // pred_check_branch
        %6865 = sbr.rel (%p6863) target = $region188
      $region187: #{risk_pred_unet.1} parent=183 // pred_region
        _
      $region188: #{risk_pred_unet.1} parent=183 // pred_fallthru
        _
    $region184: #{risk_pred_unet.1} parent=5 // pred_fallthru
      _
    %p6866 = scmp.le.s32.totalorder 2, %s91
    // Predicated region
    $region189: #{risk_pred_unet.1} parent=5 // pred_check
      %p6867 = pneg %p6866
    $region190: #{risk_pred_unet.1} parent=5 // pred_check_branch
      %6869 = sbr.rel (%p6867) target = $region192
    $region191: #{risk_pred_unet.1} parent=5 // pred_region
      %s6870 = ssub.s32 %s91, 2
      // Predicated region
      $region193: #{risk_pred_unet.1} parent=191 // pred_check
        %p6871 = pneg %p986
      $region194: #{risk_pred_unet.1} parent=191 // pred_check_branch
        %6873 = sbr.rel (%p6871) target = $region196
      $region195: #{risk_pred_unet.1} parent=191 // pred_region
        %p6874 = scmp.lt.s32.totalorder %s97, 1
        %s6875 = scalar_select %p6874, %s97, 1
        %s6876 = smul.addr %s6875, 2
        %s6877 = scalar_lea.vmem %s83, %s6876
      $region196: #{risk_pred_unet.1} parent=191 // pred_fallthru
        _
    $region192: #{risk_pred_unet.1} parent=5 // pred_fallthru
      _
  $region6: #{risk_pred_unet.1} parent=0 // loop_footer
    %s95 = sadd.s32 1, %s91
  $region7: #{risk_pred_unet.1} parent=0 // loop_footer_branch
    %90 = sbr.rel target = $region3
  $region8: #{risk_pred_unet.1} parent=0 // loop_exit
    _

</llo_original>
